<compile_context>
chip_gen: v7x
topology: tpu7x:2x2x1
jax: 0.10.0
libtpu: 0.0.40
codegen_flags: <defaults>
</compile_context>

<pallas_src>
import functools

import jax
import jax.numpy as jnp
from jax import lax
from jax.experimental import pallas as pl
from jax.experimental.pallas import tpu as pltpu


KH, KW = 30, 4   # conv kernel size (both convs)
SH, SW = 2, 2    # conv strides (both convs)


def _conv_out(n, k, s):
    return (n - k) // s + 1


def _round_up(n, m):
    return (n + m - 1) // m * m


# --------------------------- parameter preparation ---------------------------

def prepare_params(params, image_height, image_width):
    """One-time (outside jit) conversion of PyTorch-layout params into the
    fused-kernel layout (bf16 weights, packed biases/heads)."""
    f32, bf16 = jnp.float32, jnp.bfloat16
    conv1_w = params["conv1_w"].astype(f32)        # (C1, 1, KH, KW)
    conv2_w = params["conv2_w"].astype(f32)        # (C2, C1, KH, KW)
    C1, C2 = conv1_w.shape[0], conv2_w.shape[0]

    Ho1 = _conv_out(image_height, KH, SH)
    Wo1 = _conv_out(image_width, KW, SW)
    T = _conv_out(Ho1, KH, SH)
    Wo2 = _conv_out(Wo1, KW, SW)
    assert Ho1 >= KH and Wo1 >= KW and T >= 1 and Wo2 >= 1, "input too small"
    assert KH % 2 == 0, "parity split assumes even conv kernel height"

    NJ = (KH - 1) // 2 + T                       # conv1 rows per parity plane
    WCOLS = SW * (SW * (Wo2 - 1) + (KW - 1)) + (KW - 1) + 1
    assert WCOLS <= image_width
    assert SH * (SH * (NJ - 1) + 1) + KH - 1 <= image_height - 1

    # conv1 "wide window" weight: one matmul produces, per (b, conv1-row), the
    # Wo2*KW*C1-lane row holding every conv1 activation conv2 needs, in lane
    # order (conv2 window wo, conv2 kw, channel).
    w1_s = jnp.transpose(conv1_w[:, 0], (1, 2, 0))            # (KH, KW, C1)
    W1w = jnp.zeros((KH, WCOLS, Wo2, KW, C1), f32)
    for wo in range(Wo2):
        for kw in range(KW):
            for kw1 in range(KW):
                wcol = SW * (SW * wo + kw) + kw1
                W1w = W1w.at[:, wcol, wo, kw, :].set(w1_s[:, kw1, :])
    W1w = W1w.reshape(KH * WCOLS, Wo2 * KW * C1).astype(bf16)  # (420, 256)

    # COMPACT conv2 per-kh-tap weight (no block-diagonal zero padding).
    W2c = jnp.transpose(conv2_w, (2, 3, 1, 0)).reshape(
        KH, KW * C1, C2).astype(bf16)                           # (30, 128, 64)

    H = params["lstm_w_hh_l0"].shape[1]
    Fin = Wo2 * C2
    assert params["lstm_w_ih_l0"].shape[1] == Fin

    # One packed LSTM weight block, rows = [wih0 ; whh0 ; wih1 ; whh1].
    lstm_w = jnp.concatenate(
        [params["lstm_w_ih_l0"].T, params["lstm_w_hh_l0"].T,
         params["lstm_w_ih_l1"].T, params["lstm_w_hh_l1"].T],
        axis=0).astype(bf16)                                    # (Fin+3H, 4H)

    # Packed head weights: rows [0:H) = dnn1.T, rows [H:H+DH) = output.T.
    wd = params["dnn1_w"].T.astype(f32)            # (H, DH)
    wout = params["out_w"].T.astype(f32)           # (DH, num_classes)
    DH = wd.shape[1]
    num_classes = wout.shape[1]
    WH = max(DH, num_classes)
    head_w = jnp.zeros((H + DH, WH), f32)
    head_w = head_w.at[:H, :DH].set(wd)
    head_w = head_w.at[H:H + DH, :num_classes].set(wout)
    head_w = head_w.astype(bf16)

    # All biases packed into one f32 row, each segment 128-lane aligned.
    segs = {
        "b1": jnp.tile(params["conv1_b"].astype(f32), Wo2 * KW),
        "b2": jnp.tile(params["conv2_b"].astype(f32), Wo2),
        "l0": (params["lstm_b_ih_l0"] + params["lstm_b_hh_l0"]).astype(f32),
        "l1": (params["lstm_b_ih_l1"] + params["lstm_b_hh_l1"]).astype(f32),
        "d": params["dnn1_b"].astype(f32),
        "o": params["out_b"].astype(f32),
    }
    offs, cur = {}, 0
    for k, v in segs.items():
        offs[k] = cur
        cur += _round_up(int(v.shape[0]), 128)
    biases = jnp.zeros((1, cur), f32)
    for k, v in segs.items():
        biases = biases.at[0, offs[k]:offs[k] + v.shape[0]].set(v)

    prep = {"W1w": W1w, "W2c": W2c, "lstm_w": lstm_w, "head_w": head_w,
            "biases": biases}
    dims = dict(C1=C1, C2=C2, Ho1=Ho1, Wo1=Wo1, T=T, Wo2=Wo2, NJ=NJ,
                WCOLS=WCOLS, H=H, Fin=Fin, DH=DH, WH=WH,
                num_classes=num_classes, offs=offs)
    return prep, dims


# --------------------------------- kernel ------------------------------------

def _fused_kernel(dims, Bp,
                  p1, w1w, biases, head_w, w2c_hbm, lstm_hbm,   # inputs
                  out_ref,                                       # output
                  y1_ref, w2c_v, lstm_v, sem):                   # scratch
    f32, bf16 = jnp.float32, jnp.bfloat16
    T, NJ, Wo2, H = dims["T"], dims["NJ"], dims["Wo2"], dims["H"]
    C1, C2, Fin, DH = dims["C1"], dims["C2"], dims["Fin"], dims["DH"]
    num_classes = dims["num_classes"]
    offs = dims["offs"]
    KWC1 = KW * C1
    TB = T * Bp

    # ---- kick off weight DMAs so they overlap the conv1 matmul --------------
    cp_w2 = pltpu.make_async_copy(w2c_hbm, w2c_v, sem.at[0])
    cp_lw = pltpu.make_async_copy(lstm_hbm, lstm_v, sem.at[1])
    cp_w2.start()
    cp_lw.start()

    # ---- conv1 (+ReLU): one lane-dense matmul into bf16 VMEM scratch --------
    b1 = biases[:, offs["b1"]:offs["b1"] + Wo2 * KW * C1]
    y1 = jnp.dot(p1[...], w1w[...], preferred_element_type=f32) + b1
    y1_ref[...] = jnp.maximum(y1, 0.0).astype(bf16)

    # ---- conv2 (+ReLU): KH taps, compact weights, independent acc chains ----
    # Rows of y1 are ordered (parity, j, b) with b padded to a multiple of 8,
    # so each tap slice starts on a sublane-tile boundary.
    cp_w2.wait()
    NACC = 4
    accs = [[jnp.zeros((TB, C2), f32) for _ in range(NACC)]
            for _ in range(Wo2)]
    for kh in range(KH):
        par, m = kh % 2, kh // 2
        s = (par * NJ + m) * Bp                      # multiple of 8
        lhs = y1_ref[s:s + TB, :]                    # (T*Bp, Wo2*KW*C1) bf16
        w_kh = w2c_v[kh]                             # (KW*C1, C2) bf16
        for wo in range(Wo2):
            part = lhs[:, wo * KWC1:(wo + 1) * KWC1]
            accs[wo][kh % NACC] = accs[wo][kh % NACC] + jnp.dot(
                part, w_kh, preferred_element_type=f32)

    def _tree_sum(xs):
        while len(xs) > 1:
            nxt = [xs[i] + xs[i + 1] for i in range(0, len(xs) - 1, 2)]
            if len(xs) % 2:
                nxt.append(xs[-1])
            xs = nxt
        return xs[0]

    b2 = biases[:, offs["b2"]:offs["b2"] + Wo2 * C2]
    x_seq = jnp.concatenate([_tree_sum(accs[wo]) for wo in range(Wo2)], axis=1)
    x_seq = jnp.maximum(x_seq + b2, 0.0).astype(bf16)   # (T*Bp, Fin), rows (t,b)

    # ---- 2-layer LSTM, interleaved by timestep -------------------------------
    cp_lw.wait()
    bl0 = biases[:, offs["l0"]:offs["l0"] + 4 * H]
    bl1 = biases[:, offs["l1"]:offs["l1"] + 4 * H]
    # layer-1 input projection hoisted out of the recurrence (one matmul).
    xp1 = jnp.dot(x_seq, lstm_v[0:Fin, :], preferred_element_type=f32) + bl0

    def gates(g, c):
        i_g = jax.nn.sigmoid(g[:, 0 * H:1 * H])
        f_g = jax.nn.sigmoid(g[:, 1 * H:2 * H])
        g_g = jnp.tanh(g[:, 2 * H:3 * H])
        o_g = jax.nn.sigmoid(g[:, 3 * H:4 * H])
        c_new = f_g * c + i_g * g_g
        return o_g * jnp.tanh(c_new), c_new

    h1b = jnp.zeros((Bp, H), bf16)
    h2b = jnp.zeros((Bp, H), bf16)
    c1 = jnp.zeros((Bp, H), f32)
    c2 = jnp.zeros((Bp, H), f32)
    hsum = jnp.zeros((Bp, H), f32)
    # TODO(synk): LSTM inter-layer dropout(0.2) is identity in eval mode; not modeled.
    for t in range(T):
        # layer-1 step t
        g1 = xp1[t * Bp:(t + 1) * Bp, :] + jnp.dot(
            h1b, lstm_v[Fin:Fin + H, :], preferred_element_type=f32)
        h1, c1 = gates(g1, c1)
        h1b = h1.astype(bf16)
        # layer-2 step t starts as soon as h1_t is ready; its input and hidden
        # projections are one fused matmul against the stacked [wih1; whh1].
        g2 = jnp.dot(jnp.concatenate([h1b, h2b], axis=1),
                     lstm_v[Fin + H:Fin + 3 * H, :],
                     preferred_element_type=f32) + bl1
        h2, c2 = gates(g2, c2)
        h2b = h2.astype(bf16)
        hsum = hsum + h2

    # ---- mean over time (running sum) + dnn1 + output -------------------------
    hmean = (hsum * (1.0 / T)).astype(bf16)
    bd = biases[:, offs["d"]:offs["d"] + DH]
    bo = biases[:, offs["o"]:offs["o"] + num_classes]
    d1 = jnp.dot(hmean, head_w[0:H, 0:DH], preferred_element_type=f32) + bd
    # TODO(synk): nn.Dropout(0.5) is identity in eval mode; training RNG dropout not modeled.
    logits = jnp.dot(d1.astype(bf16), head_w[H:H + DH, :],
                     preferred_element_type=f32)
    out_ref[...] = logits[:, :num_classes] + bo


# -------------------------------- wrapper ------------------------------------

def speech_res_model_forward(x, prep, dims):
    B = x.shape[0]
    T, NJ, WCOLS, C1, C2 = (dims["T"], dims["NJ"], dims["WCOLS"],
                            dims["C1"], dims["C2"])
    Wo2, H, Fin = dims["Wo2"], dims["H"], dims["Fin"]
    num_classes = dims["num_classes"]
    Bp = max(_round_up(B, 8), 8)           # sublane-aligned padded batch

    # conv1 im2col over the "wide" windows; rows ordered (parity, j, b) so each
    # conv2 kh-tap inside the kernel is one contiguous 8-row-aligned slice.
    # TODO(synk): fold this small XLA fusion into the kernel if it ever shows up
    # as a comparable launch cost in xprof (it is ~240 KB, bf16).
    x2d = x[:, 0, :, :WCOLS].astype(jnp.float32)        # (B, Himg, WCOLS)
    if Bp > B:
        x2d = jnp.pad(x2d, ((0, Bp - B), (0, 0), (0, 0)))
    rows = (SH * SH * jnp.arange(NJ)[None, :, None]
            + SH * jnp.arange(2)[:, None, None]
            + jnp.arange(KH)[None, None, :])            # (2, NJ, KH)
    patches = x2d[:, rows, :]                           # (Bp, 2, NJ, KH, WCOLS)
    patches = jnp.transpose(patches, (1, 2, 0, 3, 4)).reshape(
        2 * NJ * Bp, KH * WCOLS).astype(jnp.bfloat16)

    kernel = functools.partial(_fused_kernel, dims, Bp)
    vmem = pltpu.MemorySpace.VMEM
    out = pl.pallas_call(
        kernel,
        out_shape=jax.ShapeDtypeStruct((Bp, num_classes), jnp.float32),
        in_specs=[pl.BlockSpec(memory_space=vmem),      # patches
                  pl.BlockSpec(memory_space=vmem),      # W1w
                  pl.BlockSpec(memory_space=vmem),      # packed biases
                  pl.BlockSpec(memory_space=vmem),      # packed head weights
                  pl.BlockSpec(memory_space=pl.ANY),    # conv2 taps (manual DMA)
                  pl.BlockSpec(memory_space=pl.ANY)],   # LSTM weights (manual DMA)
        out_specs=pl.BlockSpec(memory_space=vmem),
        scratch_shapes=[
            pltpu.VMEM((2 * NJ * Bp, Wo2 * KW * C1), jnp.bfloat16),  # conv1 acts
            pltpu.VMEM((KH, KW * C1, C2), jnp.bfloat16),             # conv2 w
            pltpu.VMEM((Fin + 3 * H, 4 * H), jnp.bfloat16),          # lstm w
            pltpu.SemaphoreType.DMA((2,)),
        ],
        compiler_params=pltpu.CompilerParams(
            vmem_limit_bytes=16 * 1024 * 1024),
    )(patches, prep["W1w"], prep["biases"], prep["head_w"],
      prep["W2c"], prep["lstm_w"])
    return out[:B]


# ----------------------- pure-JAX reference (for checking) -------------------

def reference_forward(x, params):
    hp = lax.Precision.HIGHEST
    y = lax.conv_general_dilated(x, params["conv1_w"], (SH, SW), "VALID",
                                 dimension_numbers=("NCHW", "OIHW", "NCHW"),
                                 precision=hp)
    y = jax.nn.relu(y + params["conv1_b"][None, :, None, None])
    y = lax.conv_general_dilated(y, params["conv2_w"], (SH, SW), "VALID",
                                 dimension_numbers=("NCHW", "OIHW", "NCHW"),
                                 precision=hp)
    y = jax.nn.relu(y + params["conv2_b"][None, :, None, None])
    B_, C_, T_, W_ = y.shape
    y = jnp.transpose(y, (0, 2, 3, 1)).reshape(B_, T_, W_ * C_)
    y = jnp.transpose(y, (1, 0, 2))                                # (T, B, F)

    def lstm(xseq, w_ih, w_hh, b_ih, b_hh):
        Tn, Bn, _ = xseq.shape
        Hn = w_hh.shape[1]
        h = jnp.zeros((Bn, Hn), jnp.float32)
        c = jnp.zeros((Bn, Hn), jnp.float32)
        outs = []
        for t in range(Tn):
            g = (jnp.dot(xseq[t], w_ih.T, precision=hp) + b_ih
                 + jnp.dot(h, w_hh.T, precision=hp) + b_hh)
            i = jax.nn.sigmoid(g[:, :Hn])
            f = jax.nn.sigmoid(g[:, Hn:2 * Hn])
            gg = jnp.tanh(g[:, 2 * Hn:3 * Hn])
            o = jax.nn.sigmoid(g[:, 3 * Hn:])
            c = f * c + i * gg
            h = o * jnp.tanh(c)
            outs.append(h)
        return jnp.stack(outs, 0)

    y = lstm(y, params["lstm_w_ih_l0"], params["lstm_w_hh_l0"],
             params["lstm_b_ih_l0"], params["lstm_b_hh_l0"])
    y = lstm(y, params["lstm_w_ih_l1"], params["lstm_w_hh_l1"],
             params["lstm_b_ih_l1"], params["lstm_b_hh_l1"])
    m = jnp.mean(jnp.transpose(y, (1, 0, 2)), axis=1)
    d = jnp.dot(m, params["dnn1_w"].T, precision=hp) + params["dnn1_b"]
    return jnp.dot(d, params["out_w"].T, precision=hp) + params["out_b"]


# ---------------------------------- main --------------------------------------

if __name__ == "__main__":
    B, H_img, W_img = 2, 100, 16
    num_classes = 12
    hidden = 128

    ho1 = _conv_out(H_img, KH, SH)       # 36
    wo1 = _conv_out(W_img, KW, SW)       # 7
    t_steps = _conv_out(ho1, KH, SH)     # 4
    wo2 = _conv_out(wo1, KW, SW)         # 2
    lstm_in = 64 * wo2                   # 128

    key = jax.random.PRNGKey(0)
    ks = jax.random.split(key, 17)

    def init(k, shape, scale=0.05):
        return scale * jax.random.normal(k, shape, jnp.float32)

    params = {
        "conv1_w": init(ks[0], (32, 1, KH, KW)),
        "conv1_b": init(ks[1], (32,)),
        "conv2_w": init(ks[2], (64, 32, KH, KW)),
        "conv2_b": init(ks[3], (64,)),
        "lstm_w_ih_l0": init(ks[4], (4 * hidden, lstm_in)),
        "lstm_w_hh_l0": init(ks[5], (4 * hidden, hidden)),
        "lstm_b_ih_l0": init(ks[6], (4 * hidden,)),
        "lstm_b_hh_l0": init(ks[7], (4 * hidden,)),
        "lstm_w_ih_l1": init(ks[8], (4 * hidden, hidden)),
        "lstm_w_hh_l1": init(ks[9], (4 * hidden, hidden)),
        "lstm_b_ih_l1": init(ks[10], (4 * hidden,)),
        "lstm_b_hh_l1": init(ks[11], (4 * hidden,)),
        "dnn1_w": init(ks[12], (64, hidden)),
        "dnn1_b": init(ks[13], (64,)),
        "out_w": init(ks[14], (num_classes, 64)),
        "out_b": init(ks[15], (num_classes,)),
    }

    x = jax.random.normal(ks[16], (B, 1, H_img, W_img), jnp.float32)

    prep, dims = prepare_params(params, H_img, W_img)
    fwd = jax.jit(lambda inp, p: speech_res_model_forward(inp, p, dims))

    logits = jax.block_until_ready(fwd(x, prep))
    ref = jax.block_until_ready(jax.jit(reference_forward)(x, params))

    assert logits.shape == (B, num_classes), logits.shape
    assert bool(jnp.all(jnp.isfinite(logits)))
    err = float(jnp.max(jnp.abs(logits - ref)))
    assert err < 2e-2, f"mismatch vs pure-JAX reference: max abs err = {err}"
    print("KERNEL_OK")
</pallas_src>

<mosaic_0001>
module attributes {stable_mosaic.version = 11 : i64} {
  func.func @_fused_kernel(%arg0: memref<288x420xbf16, #tpu.memory_space<vmem>>, %arg1: memref<420x256xbf16, #tpu.memory_space<vmem>>, %arg2: memref<1x1664xf32, #tpu.memory_space<vmem>>, %arg3: memref<192x64xbf16, #tpu.memory_space<vmem>>, %arg4: memref<30x128x64xbf16, #tpu.memory_space<any>>, %arg5: memref<512x512xbf16, #tpu.memory_space<any>>, %arg6: memref<8x12xf32, #tpu.memory_space<vmem>>, %arg7: memref<288x256xbf16, #tpu.memory_space<vmem>>, %arg8: memref<30x128x64xbf16, #tpu.memory_space<vmem>>, %arg9: memref<512x512xbf16, #tpu.memory_space<vmem>>, %arg10: memref<2x!tpu.dma_semaphore, #tpu.memory_space<semaphore_mem>>) attributes {dimension_semantics = [], scalar_prefetch = 0 : i64, scratch_operands = 4 : i64, tpu.core_type = #tpu.core_type<tc>} {
    %c0_i32 = arith.constant 0 : i32
    %0 = tpu.memref_slice %arg10[%c0_i32] : memref<2x!tpu.dma_semaphore, #tpu.memory_space<semaphore_mem>> -> memref<1x!tpu.dma_semaphore, #tpu.memory_space<semaphore_mem>>
    %1 = tpu.memref_squeeze %0 : memref<1x!tpu.dma_semaphore, #tpu.memory_space<semaphore_mem>> -> memref<!tpu.dma_semaphore, #tpu.memory_space<semaphore_mem>>
    tpu.enqueue_dma source(%arg4 : memref<30x128x64xbf16, #tpu.memory_space<any>>) target(%arg8 : memref<30x128x64xbf16, #tpu.memory_space<vmem>>) target_semaphore(%1 : memref<!tpu.dma_semaphore, #tpu.memory_space<semaphore_mem>>)
    %c1_i32 = arith.constant 1 : i32
    %2 = tpu.memref_slice %arg10[%c1_i32] : memref<2x!tpu.dma_semaphore, #tpu.memory_space<semaphore_mem>> -> memref<1x!tpu.dma_semaphore, #tpu.memory_space<semaphore_mem>>
    %3 = tpu.memref_squeeze %2 : memref<1x!tpu.dma_semaphore, #tpu.memory_space<semaphore_mem>> -> memref<!tpu.dma_semaphore, #tpu.memory_space<semaphore_mem>>
    tpu.enqueue_dma source(%arg5 : memref<512x512xbf16, #tpu.memory_space<any>>) target(%arg9 : memref<512x512xbf16, #tpu.memory_space<vmem>>) target_semaphore(%3 : memref<!tpu.dma_semaphore, #tpu.memory_space<semaphore_mem>>)
    %c0 = arith.constant 0 : index
    %c0_0 = arith.constant 0 : index
    %4 = vector.load %arg2[%c0, %c0_0] : memref<1x1664xf32, #tpu.memory_space<vmem>>, vector<1x256xf32>
    %c0_1 = arith.constant 0 : index
    %c0_2 = arith.constant 0 : index
    %5 = vector.load %arg0[%c0_1, %c0_2] : memref<288x420xbf16, #tpu.memory_space<vmem>>, vector<288x420xbf16>
    %c0_3 = arith.constant 0 : index
    %c0_4 = arith.constant 0 : index
    %6 = vector.load %arg1[%c0_3, %c0_4] : memref<420x256xbf16, #tpu.memory_space<vmem>>, vector<420x256xbf16>
    %cst = arith.constant dense<0.000000e+00> : vector<288x256xf32>
    %7 = tpu.matmul %5, %6, %cst {dimension_numbers = #tpu.dot_dimension_numbers<[1], [0], [0], [1], [0, 0, 1, 1], [], []>} : vector<288x420xbf16>, vector<420x256xbf16>, vector<288x256xf32> -> vector<288x256xf32>
    %8 = vector.broadcast %4 : vector<1x256xf32> to vector<288x256xf32>
    %9 = arith.addf %7, %8 : vector<288x256xf32>
    %cst_5 = arith.constant 0.000000e+00 : f32
    %10 = vector.broadcast %cst_5 : f32 to vector<288x256xf32>
    %11 = arith.maximumf %9, %10 : vector<288x256xf32>
    %12 = arith.truncf %11 : vector<288x256xf32> to vector<288x256xbf16>
    %c0_6 = arith.constant 0 : index
    %c0_7 = arith.constant 0 : index
    %13 = vector.load %arg7[%c0_6, %c0_7] : memref<288x256xbf16, #tpu.memory_space<vmem>>, vector<288x256xbf16>
    tpu.vector_store %arg7[%c0_6, %c0_7], %12 {strides = array<i32>} : memref<288x256xbf16, #tpu.memory_space<vmem>>, vector<288x256xbf16>,
    %c0_i32_8 = arith.constant 0 : i32
    %14 = tpu.memref_slice %arg10[%c0_i32_8] : memref<2x!tpu.dma_semaphore, #tpu.memory_space<semaphore_mem>> -> memref<1x!tpu.dma_semaphore, #tpu.memory_space<semaphore_mem>>
    %15 = tpu.memref_squeeze %14 : memref<1x!tpu.dma_semaphore, #tpu.memory_space<semaphore_mem>> -> memref<!tpu.dma_semaphore, #tpu.memory_space<semaphore_mem>>
    tpu.wait_dma2 semaphore(%15 : memref<!tpu.dma_semaphore, #tpu.memory_space<semaphore_mem>>) src(%arg4 : memref<30x128x64xbf16, #tpu.memory_space<any>>) dst(%arg8 : memref<30x128x64xbf16, #tpu.memory_space<vmem>>)
    %cst_9 = arith.constant 0.000000e+00 : f32
    %16 = vector.broadcast %cst_9 : f32 to vector<32x64xf32>
    %cst_10 = arith.constant 0.000000e+00 : f32
    %17 = vector.broadcast %cst_10 : f32 to vector<32x64xf32>
    %cst_11 = arith.constant 0.000000e+00 : f32
    %18 = vector.broadcast %cst_11 : f32 to vector<32x64xf32>
    %cst_12 = arith.constant 0.000000e+00 : f32
    %19 = vector.broadcast %cst_12 : f32 to vector<32x64xf32>
    %cst_13 = arith.constant 0.000000e+00 : f32
    %20 = vector.broadcast %cst_13 : f32 to vector<32x64xf32>
    %cst_14 = arith.constant 0.000000e+00 : f32
    %21 = vector.broadcast %cst_14 : f32 to vector<32x64xf32>
    %cst_15 = arith.constant 0.000000e+00 : f32
    %22 = vector.broadcast %cst_15 : f32 to vector<32x64xf32>
    %cst_16 = arith.constant 0.000000e+00 : f32
    %23 = vector.broadcast %cst_16 : f32 to vector<32x64xf32>
    %c0_17 = arith.constant 0 : index
    %c0_18 = arith.constant 0 : index
    %24 = vector.load %arg7[%c0_17, %c0_18] : memref<288x256xbf16, #tpu.memory_space<vmem>>, vector<32x256xbf16>
    %c0_19 = arith.constant 0 : index
    %c0_20 = arith.constant 0 : index
    %c0_21 = arith.constant 0 : index
    %25 = vector.load %arg8[%c0_19, %c0_20, %c0_21] : memref<30x128x64xbf16, #tpu.memory_space<vmem>>, vector<1x128x64xbf16>
    %26 = vector.shape_cast %25 : vector<1x128x64xbf16> to vector<128x64xbf16>
    %27 = vector.extract_strided_slice %24 {offsets = [0, 0], sizes = [32, 128], strides = [1, 1]} : vector<32x256xbf16> to vector<32x128xbf16>
    %cst_22 = arith.constant dense<0.000000e+00> : vector<32x64xf32>
    %28 = tpu.matmul %27, %26, %cst_22 {dimension_numbers = #tpu.dot_dimension_numbers<[1], [0], [0], [1], [0, 0, 1, 1], [], []>} : vector<32x128xbf16>, vector<128x64xbf16>, vector<32x64xf32> -> vector<32x64xf32>
    %29 = arith.addf %16, %28 : vector<32x64xf32>
    %30 = vector.extract_strided_slice %24 {offsets = [0, 128], sizes = [32, 128], strides = [1, 1]} : vector<32x256xbf16> to vector<32x128xbf16>
    %cst_23 = arith.constant dense<0.000000e+00> : vector<32x64xf32>
    %31 = tpu.matmul %30, %26, %cst_23 {dimension_numbers = #tpu.dot_dimension_numbers<[1], [0], [0], [1], [0, 0, 1, 1], [], []>} : vector<32x128xbf16>, vector<128x64xbf16>, vector<32x64xf32> -> vector<32x64xf32>
    %32 = arith.addf %20, %31 : vector<32x64xf32>
    %c144 = arith.constant 144 : index
    %c0_24 = arith.constant 0 : index
    %33 = vector.load %arg7[%c144, %c0_24] : memref<288x256xbf16, #tpu.memory_space<vmem>>, vector<32x256xbf16>
    %c1 = arith.constant 1 : index
    %c0_25 = arith.constant 0 : index
    %c0_26 = arith.constant 0 : index
    %34 = vector.load %arg8[%c1, %c0_25, %c0_26] : memref<30x128x64xbf16, #tpu.memory_space<vmem>>, vector<1x128x64xbf16>
    %35 = vector.shape_cast %34 : vector<1x128x64xbf16> to vector<128x64xbf16>
    %36 = vector.extract_strided_slice %33 {offsets = [0, 0], sizes = [32, 128], strides = [1, 1]} : vector<32x256xbf16> to vector<32x128xbf16>
    %cst_27 = arith.constant dense<0.000000e+00> : vector<32x64xf32>
    %37 = tpu.matmul %36, %35, %cst_27 {dimension_numbers = #tpu.dot_dimension_numbers<[1], [0], [0], [1], [0, 0, 1, 1], [], []>} : vector<32x128xbf16>, vector<128x64xbf16>, vector<32x64xf32> -> vector<32x64xf32>
    %38 = arith.addf %17, %37 : vector<32x64xf32>
    %39 = vector.extract_strided_slice %33 {offsets = [0, 128], sizes = [32, 128], strides = [1, 1]} : vector<32x256xbf16> to vector<32x128xbf16>
    %cst_28 = arith.constant dense<0.000000e+00> : vector<32x64xf32>
    %40 = tpu.matmul %39, %35, %cst_28 {dimension_numbers = #tpu.dot_dimension_numbers<[1], [0], [0], [1], [0, 0, 1, 1], [], []>} : vector<32x128xbf16>, vector<128x64xbf16>, vector<32x64xf32> -> vector<32x64xf32>
    %41 = arith.addf %21, %40 : vector<32x64xf32>
    %c8 = arith.constant 8 : index
    %c0_29 = arith.constant 0 : index
    %42 = vector.load %arg7[%c8, %c0_29] : memref<288x256xbf16, #tpu.memory_space<vmem>>, vector<32x256xbf16>
    %c2 = arith.constant 2 : index
    %c0_30 = arith.constant 0 : index
    %c0_31 = arith.constant 0 : index
    %43 = vector.load %arg8[%c2, %c0_30, %c0_31] : memref<30x128x64xbf16, #tpu.memory_space<vmem>>, vector<1x128x64xbf16>
    %44 = vector.shape_cast %43 : vector<1x128x64xbf16> to vector<128x64xbf16>
    %45 = vector.extract_strided_slice %42 {offsets = [0, 0], sizes = [32, 128], strides = [1, 1]} : vector<32x256xbf16> to vector<32x128xbf16>
    %cst_32 = arith.constant dense<0.000000e+00> : vector<32x64xf32>
    %46 = tpu.matmul %45, %44, %cst_32 {dimension_numbers = #tpu.dot_dimension_numbers<[1], [0], [0], [1], [0, 0, 1, 1], [], []>} : vector<32x128xbf16>, vector<128x64xbf16>, vector<32x64xf32> -> vector<32x64xf32>
    %47 = arith.addf %18, %46 : vector<32x64xf32>
    %48 = vector.extract_strided_slice %42 {offsets = [0, 128], sizes = [32, 128], strides = [1, 1]} : vector<32x256xbf16> to vector<32x128xbf16>
    %cst_33 = arith.constant dense<0.000000e+00> : vector<32x64xf32>
    %49 = tpu.matmul %48, %44, %cst_33 {dimension_numbers = #tpu.dot_dimension_numbers<[1], [0], [0], [1], [0, 0, 1, 1], [], []>} : vector<32x128xbf16>, vector<128x64xbf16>, vector<32x64xf32> -> vector<32x64xf32>
    %50 = arith.addf %22, %49 : vector<32x64xf32>
    %c152 = arith.constant 152 : index
    %c0_34 = arith.constant 0 : index
    %51 = vector.load %arg7[%c152, %c0_34] : memref<288x256xbf16, #tpu.memory_space<vmem>>, vector<32x256xbf16>
    %c3 = arith.constant 3 : index
    %c0_35 = arith.constant 0 : index
    %c0_36 = arith.constant 0 : index
    %52 = vector.load %arg8[%c3, %c0_35, %c0_36] : memref<30x128x64xbf16, #tpu.memory_space<vmem>>, vector<1x128x64xbf16>
    %53 = vector.shape_cast %52 : vector<1x128x64xbf16> to vector<128x64xbf16>
    %54 = vector.extract_strided_slice %51 {offsets = [0, 0], sizes = [32, 128], strides = [1, 1]} : vector<32x256xbf16> to vector<32x128xbf16>
    %cst_37 = arith.constant dense<0.000000e+00> : vector<32x64xf32>
    %55 = tpu.matmul %54, %53, %cst_37 {dimension_numbers = #tpu.dot_dimension_numbers<[1], [0], [0], [1], [0, 0, 1, 1], [], []>} : vector<32x128xbf16>, vector<128x64xbf16>, vector<32x64xf32> -> vector<32x64xf32>
    %56 = arith.addf %19, %55 : vector<32x64xf32>
    %57 = vector.extract_strided_slice %51 {offsets = [0, 128], sizes = [32, 128], strides = [1, 1]} : vector<32x256xbf16> to vector<32x128xbf16>
    %cst_38 = arith.constant dense<0.000000e+00> : vector<32x64xf32>
    %58 = tpu.matmul %57, %53, %cst_38 {dimension_numbers = #tpu.dot_dimension_numbers<[1], [0], [0], [1], [0, 0, 1, 1], [], []>} : vector<32x128xbf16>, vector<128x64xbf16>, vector<32x64xf32> -> vector<32x64xf32>
    %59 = arith.addf %23, %58 : vector<32x64xf32>
    %c16 = arith.constant 16 : index
    %c0_39 = arith.constant 0 : index
    %60 = vector.load %arg7[%c16, %c0_39] : memref<288x256xbf16, #tpu.memory_space<vmem>>, vector<32x256xbf16>
    %c4 = arith.constant 4 : index
    %c0_40 = arith.constant 0 : index
    %c0_41 = arith.constant 0 : index
    %61 = vector.load %arg8[%c4, %c0_40, %c0_41] : memref<30x128x64xbf16, #tpu.memory_space<vmem>>, vector<1x128x64xbf16>
    %62 = vector.shape_cast %61 : vector<1x128x64xbf16> to vector<128x64xbf16>
    %63 = vector.extract_strided_slice %60 {offsets = [0, 0], sizes = [32, 128], strides = [1, 1]} : vector<32x256xbf16> to vector<32x128xbf16>
    %cst_42 = arith.constant dense<0.000000e+00> : vector<32x64xf32>
    %64 = tpu.matmul %63, %62, %cst_42 {dimension_numbers = #tpu.dot_dimension_numbers<[1], [0], [0], [1], [0, 0, 1, 1], [], []>} : vector<32x128xbf16>, vector<128x64xbf16>, vector<32x64xf32> -> vector<32x64xf32>
    %65 = arith.addf %29, %64 : vector<32x64xf32>
    %66 = vector.extract_strided_slice %60 {offsets = [0, 128], sizes = [32, 128], strides = [1, 1]} : vector<32x256xbf16> to vector<32x128xbf16>
    %cst_43 = arith.constant dense<0.000000e+00> : vector<32x64xf32>
    %67 = tpu.matmul %66, %62, %cst_43 {dimension_numbers = #tpu.dot_dimension_numbers<[1], [0], [0], [1], [0, 0, 1, 1], [], []>} : vector<32x128xbf16>, vector<128x64xbf16>, vector<32x64xf32> -> vector<32x64xf32>
    %68 = arith.addf %32, %67 : vector<32x64xf32>
    %c160 = arith.constant 160 : index
    %c0_44 = arith.constant 0 : index
    %69 = vector.load %arg7[%c160, %c0_44] : memref<288x256xbf16, #tpu.memory_space<vmem>>, vector<32x256xbf16>
    %c5 = arith.constant 5 : index
    %c0_45 = arith.constant 0 : index
    %c0_46 = arith.constant 0 : index
    %70 = vector.load %arg8[%c5, %c0_45, %c0_46] : memref<30x128x64xbf16, #tpu.memory_space<vmem>>, vector<1x128x64xbf16>
    %71 = vector.shape_cast %70 : vector<1x128x64xbf16> to vector<128x64xbf16>
    %72 = vector.extract_strided_slice %69 {offsets = [0, 0], sizes = [32, 128], strides = [1, 1]} : vector<32x256xbf16> to vector<32x128xbf16>
    %cst_47 = arith.constant dense<0.000000e+00> : vector<32x64xf32>
    %73 = tpu.matmul %72, %71, %cst_47 {dimension_numbers = #tpu.dot_dimension_numbers<[1], [0], [0], [1], [0, 0, 1, 1], [], []>} : vector<32x128xbf16>, vector<128x64xbf16>, vector<32x64xf32> -> vector<32x64xf32>
    %74 = arith.addf %38, %73 : vector<32x64xf32>
    %75 = vector.extract_strided_slice %69 {offsets = [0, 128], sizes = [32, 128], strides = [1, 1]} : vector<32x256xbf16> to vector<32x128xbf16>
    %cst_48 = arith.constant dense<0.000000e+00> : vector<32x64xf32>
    %76 = tpu.matmul %75, %71, %cst_48 {dimension_numbers = #tpu.dot_dimension_numbers<[1], [0], [0], [1], [0, 0, 1, 1], [], []>} : vector<32x128xbf16>, vector<128x64xbf16>, vector<32x64xf32> -> vector<32x64xf32>
    %77 = arith.addf %41, %76 : vector<32x64xf32>
    %c24 = arith.constant 24 : index
    %c0_49 = arith.constant 0 : index
    %78 = vector.load %arg7[%c24, %c0_49] : memref<288x256xbf16, #tpu.memory_space<vmem>>, vector<32x256xbf16>
    %c6 = arith.constant 6 : index
    %c0_50 = arith.constant 0 : index
    %c0_51 = arith.constant 0 : index
    %79 = vector.load %arg8[%c6, %c0_50, %c0_51] : memref<30x128x64xbf16, #tpu.memory_space<vmem>>, vector<1x128x64xbf16>
    %80 = vector.shape_cast %79 : vector<1x128x64xbf16> to vector<128x64xbf16>
    %81 = vector.extract_strided_slice %78 {offsets = [0, 0], sizes = [32, 128], strides = [1, 1]} : vector<32x256xbf16> to vector<32x128xbf16>
    %cst_52 = arith.constant dense<0.000000e+00> : vector<32x64xf32>
    %82 = tpu.matmul %81, %80, %cst_52 {dimension_numbers = #tpu.dot_dimension_numbers<[1], [0], [0], [1], [0, 0, 1, 1], [], []>} : vector<32x128xbf16>, vector<128x64xbf16>, vector<32x64xf32> -> vector<32x64xf32>
    %83 = arith.addf %47, %82 : vector<32x64xf32>
    %84 = vector.extract_strided_slice %78 {offsets = [0, 128], sizes = [32, 128], strides = [1, 1]} : vector<32x256xbf16> to vector<32x128xbf16>
    %cst_53 = arith.constant dense<0.000000e+00> : vector<32x64xf32>
    %85 = tpu.matmul %84, %80, %cst_53 {dimension_numbers = #tpu.dot_dimension_numbers<[1], [0], [0], [1], [0, 0, 1, 1], [], []>} : vector<32x128xbf16>, vector<128x64xbf16>, vector<32x64xf32> -> vector<32x64xf32>
    %86 = arith.addf %50, %85 : vector<32x64xf32>
    %c168 = arith.constant 168 : index
    %c0_54 = arith.constant 0 : index
    %87 = vector.load %arg7[%c168, %c0_54] : memref<288x256xbf16, #tpu.memory_space<vmem>>, vector<32x256xbf16>
    %c7 = arith.constant 7 : index
    %c0_55 = arith.constant 0 : index
    %c0_56 = arith.constant 0 : index
    %88 = vector.load %arg8[%c7, %c0_55, %c0_56] : memref<30x128x64xbf16, #tpu.memory_space<vmem>>, vector<1x128x64xbf16>
    %89 = vector.shape_cast %88 : vector<1x128x64xbf16> to vector<128x64xbf16>
    %90 = vector.extract_strided_slice %87 {offsets = [0, 0], sizes = [32, 128], strides = [1, 1]} : vector<32x256xbf16> to vector<32x128xbf16>
    %cst_57 = arith.constant dense<0.000000e+00> : vector<32x64xf32>
    %91 = tpu.matmul %90, %89, %cst_57 {dimension_numbers = #tpu.dot_dimension_numbers<[1], [0], [0], [1], [0, 0, 1, 1], [], []>} : vector<32x128xbf16>, vector<128x64xbf16>, vector<32x64xf32> -> vector<32x64xf32>
    %92 = arith.addf %56, %91 : vector<32x64xf32>
    %93 = vector.extract_strided_slice %87 {offsets = [0, 128], sizes = [32, 128], strides = [1, 1]} : vector<32x256xbf16> to vector<32x128xbf16>
    %cst_58 = arith.constant dense<0.000000e+00> : vector<32x64xf32>
    %94 = tpu.matmul %93, %89, %cst_58 {dimension_numbers = #tpu.dot_dimension_numbers<[1], [0], [0], [1], [0, 0, 1, 1], [], []>} : vector<32x128xbf16>, vector<128x64xbf16>, vector<32x64xf32> -> vector<32x64xf32>
    %95 = arith.addf %59, %94 : vector<32x64xf32>
    %c32 = arith.constant 32 : index
    %c0_59 = arith.constant 0 : index
    %96 = vector.load %arg7[%c32, %c0_59] : memref<288x256xbf16, #tpu.memory_space<vmem>>, vector<32x256xbf16>
    %c8_60 = arith.constant 8 : index
    %c0_61 = arith.constant 0 : index
    %c0_62 = arith.constant 0 : index
    %97 = vector.load %arg8[%c8_60, %c0_61, %c0_62] : memref<30x128x64xbf16, #tpu.memory_space<vmem>>, vector<1x128x64xbf16>
    %98 = vector.shape_cast %97 : vector<1x128x64xbf16> to vector<128x64xbf16>
    %99 = vector.extract_strided_slice %96 {offsets = [0, 0], sizes = [32, 128], strides = [1, 1]} : vector<32x256xbf16> to vector<32x128xbf16>
    %cst_63 = arith.constant dense<0.000000e+00> : vector<32x64xf32>
    %100 = tpu.matmul %99, %98, %cst_63 {dimension_numbers = #tpu.dot_dimension_numbers<[1], [0], [0], [1], [0, 0, 1, 1], [], []>} : vector<32x128xbf16>, vector<128x64xbf16>, vector<32x64xf32> -> vector<32x64xf32>
    %101 = arith.addf %65, %100 : vector<32x64xf32>
    %102 = vector.extract_strided_slice %96 {offsets = [0, 128], sizes = [32, 128], strides = [1, 1]} : vector<32x256xbf16> to vector<32x128xbf16>
    %cst_64 = arith.constant dense<0.000000e+00> : vector<32x64xf32>
    %103 = tpu.matmul %102, %98, %cst_64 {dimension_numbers = #tpu.dot_dimension_numbers<[1], [0], [0], [1], [0, 0, 1, 1], [], []>} : vector<32x128xbf16>, vector<128x64xbf16>, vector<32x64xf32> -> vector<32x64xf32>
    %104 = arith.addf %68, %103 : vector<32x64xf32>
    %c176 = arith.constant 176 : index
    %c0_65 = arith.constant 0 : index
    %105 = vector.load %arg7[%c176, %c0_65] : memref<288x256xbf16, #tpu.memory_space<vmem>>, vector<32x256xbf16>
    %c9 = arith.constant 9 : index
    %c0_66 = arith.constant 0 : index
    %c0_67 = arith.constant 0 : index
    %106 = vector.load %arg8[%c9, %c0_66, %c0_67] : memref<30x128x64xbf16, #tpu.memory_space<vmem>>, vector<1x128x64xbf16>
    %107 = vector.shape_cast %106 : vector<1x128x64xbf16> to vector<128x64xbf16>
    %108 = vector.extract_strided_slice %105 {offsets = [0, 0], sizes = [32, 128], strides = [1, 1]} : vector<32x256xbf16> to vector<32x128xbf16>
    %cst_68 = arith.constant dense<0.000000e+00> : vector<32x64xf32>
    %109 = tpu.matmul %108, %107, %cst_68 {dimension_numbers = #tpu.dot_dimension_numbers<[1], [0], [0], [1], [0, 0, 1, 1], [], []>} : vector<32x128xbf16>, vector<128x64xbf16>, vector<32x64xf32> -> vector<32x64xf32>
    %110 = arith.addf %74, %109 : vector<32x64xf32>
    %111 = vector.extract_strided_slice %105 {offsets = [0, 128], sizes = [32, 128], strides = [1, 1]} : vector<32x256xbf16> to vector<32x128xbf16>
    %cst_69 = arith.constant dense<0.000000e+00> : vector<32x64xf32>
    %112 = tpu.matmul %111, %107, %cst_69 {dimension_numbers = #tpu.dot_dimension_numbers<[1], [0], [0], [1], [0, 0, 1, 1], [], []>} : vector<32x128xbf16>, vector<128x64xbf16>, vector<32x64xf32> -> vector<32x64xf32>
    %113 = arith.addf %77, %112 : vector<32x64xf32>
    %c40 = arith.constant 40 : index
    %c0_70 = arith.constant 0 : index
    %114 = vector.load %arg7[%c40, %c0_70] : memref<288x256xbf16, #tpu.memory_space<vmem>>, vector<32x256xbf16>
    %c10 = arith.constant 10 : index
    %c0_71 = arith.constant 0 : index
    %c0_72 = arith.constant 0 : index
    %115 = vector.load %arg8[%c10, %c0_71, %c0_72] : memref<30x128x64xbf16, #tpu.memory_space<vmem>>, vector<1x128x64xbf16>
    %116 = vector.shape_cast %115 : vector<1x128x64xbf16> to vector<128x64xbf16>
    %117 = vector.extract_strided_slice %114 {offsets = [0, 0], sizes = [32, 128], strides = [1, 1]} : vector<32x256xbf16> to vector<32x128xbf16>
    %cst_73 = arith.constant dense<0.000000e+00> : vector<32x64xf32>
    %118 = tpu.matmul %117, %116, %cst_73 {dimension_numbers = #tpu.dot_dimension_numbers<[1], [0], [0], [1], [0, 0, 1, 1], [], []>} : vector<32x128xbf16>, vector<128x64xbf16>, vector<32x64xf32> -> vector<32x64xf32>
    %119 = arith.addf %83, %118 : vector<32x64xf32>
    %120 = vector.extract_strided_slice %114 {offsets = [0, 128], sizes = [32, 128], strides = [1, 1]} : vector<32x256xbf16> to vector<32x128xbf16>
    %cst_74 = arith.constant dense<0.000000e+00> : vector<32x64xf32>
    %121 = tpu.matmul %120, %116, %cst_74 {dimension_numbers = #tpu.dot_dimension_numbers<[1], [0], [0], [1], [0, 0, 1, 1], [], []>} : vector<32x128xbf16>, vector<128x64xbf16>, vector<32x64xf32> -> vector<32x64xf32>
    %122 = arith.addf %86, %121 : vector<32x64xf32>
    %c184 = arith.constant 184 : index
    %c0_75 = arith.constant 0 : index
    %123 = vector.load %arg7[%c184, %c0_75] : memref<288x256xbf16, #tpu.memory_space<vmem>>, vector<32x256xbf16>
    %c11 = arith.constant 11 : index
    %c0_76 = arith.constant 0 : index
    %c0_77 = arith.constant 0 : index
    %124 = vector.load %arg8[%c11, %c0_76, %c0_77] : memref<30x128x64xbf16, #tpu.memory_space<vmem>>, vector<1x128x64xbf16>
    %125 = vector.shape_cast %124 : vector<1x128x64xbf16> to vector<128x64xbf16>
    %126 = vector.extract_strided_slice %123 {offsets = [0, 0], sizes = [32, 128], strides = [1, 1]} : vector<32x256xbf16> to vector<32x128xbf16>
    %cst_78 = arith.constant dense<0.000000e+00> : vector<32x64xf32>
    %127 = tpu.matmul %126, %125, %cst_78 {dimension_numbers = #tpu.dot_dimension_numbers<[1], [0], [0], [1], [0, 0, 1, 1], [], []>} : vector<32x128xbf16>, vector<128x64xbf16>, vector<32x64xf32> -> vector<32x64xf32>
    %128 = arith.addf %92, %127 : vector<32x64xf32>
    %129 = vector.extract_strided_slice %123 {offsets = [0, 128], sizes = [32, 128], strides = [1, 1]} : vector<32x256xbf16> to vector<32x128xbf16>
    %cst_79 = arith.constant dense<0.000000e+00> : vector<32x64xf32>
    %130 = tpu.matmul %129, %125, %cst_79 {dimension_numbers = #tpu.dot_dimension_numbers<[1], [0], [0], [1], [0, 0, 1, 1], [], []>} : vector<32x128xbf16>, vector<128x64xbf16>, vector<32x64xf32> -> vector<32x64xf32>
    %131 = arith.addf %95, %130 : vector<32x64xf32>
    %c48 = arith.constant 48 : index
    %c0_80 = arith.constant 0 : index
    %132 = vector.load %arg7[%c48, %c0_80] : memref<288x256xbf16, #tpu.memory_space<vmem>>, vector<32x256xbf16>
    %c12 = arith.constant 12 : index
    %c0_81 = arith.constant 0 : index
    %c0_82 = arith.constant 0 : index
    %133 = vector.load %arg8[%c12, %c0_81, %c0_82] : memref<30x128x64xbf16, #tpu.memory_space<vmem>>, vector<1x128x64xbf16>
    %134 = vector.shape_cast %133 : vector<1x128x64xbf16> to vector<128x64xbf16>
    %135 = vector.extract_strided_slice %132 {offsets = [0, 0], sizes = [32, 128], strides = [1, 1]} : vector<32x256xbf16> to vector<32x128xbf16>
    %cst_83 = arith.constant dense<0.000000e+00> : vector<32x64xf32>
    %136 = tpu.matmul %135, %134, %cst_83 {dimension_numbers = #tpu.dot_dimension_numbers<[1], [0], [0], [1], [0, 0, 1, 1], [], []>} : vector<32x128xbf16>, vector<128x64xbf16>, vector<32x64xf32> -> vector<32x64xf32>
    %137 = arith.addf %101, %136 : vector<32x64xf32>
    %138 = vector.extract_strided_slice %132 {offsets = [0, 128], sizes = [32, 128], strides = [1, 1]} : vector<32x256xbf16> to vector<32x128xbf16>
    %cst_84 = arith.constant dense<0.000000e+00> : vector<32x64xf32>
    %139 = tpu.matmul %138, %134, %cst_84 {dimension_numbers = #tpu.dot_dimension_numbers<[1], [0], [0], [1], [0, 0, 1, 1], [], []>} : vector<32x128xbf16>, vector<128x64xbf16>, vector<32x64xf32> -> vector<32x64xf32>
    %140 = arith.addf %104, %139 : vector<32x64xf32>
    %c192 = arith.constant 192 : index
    %c0_85 = arith.constant 0 : index
    %141 = vector.load %arg7[%c192, %c0_85] : memref<288x256xbf16, #tpu.memory_space<vmem>>, vector<32x256xbf16>
    %c13 = arith.constant 13 : index
    %c0_86 = arith.constant 0 : index
    %c0_87 = arith.constant 0 : index
    %142 = vector.load %arg8[%c13, %c0_86, %c0_87] : memref<30x128x64xbf16, #tpu.memory_space<vmem>>, vector<1x128x64xbf16>
    %143 = vector.shape_cast %142 : vector<1x128x64xbf16> to vector<128x64xbf16>
    %144 = vector.extract_strided_slice %141 {offsets = [0, 0], sizes = [32, 128], strides = [1, 1]} : vector<32x256xbf16> to vector<32x128xbf16>
    %cst_88 = arith.constant dense<0.000000e+00> : vector<32x64xf32>
    %145 = tpu.matmul %144, %143, %cst_88 {dimension_numbers = #tpu.dot_dimension_numbers<[1], [0], [0], [1], [0, 0, 1, 1], [], []>} : vector<32x128xbf16>, vector<128x64xbf16>, vector<32x64xf32> -> vector<32x64xf32>
    %146 = arith.addf %110, %145 : vector<32x64xf32>
    %147 = vector.extract_strided_slice %141 {offsets = [0, 128], sizes = [32, 128], strides = [1, 1]} : vector<32x256xbf16> to vector<32x128xbf16>
    %cst_89 = arith.constant dense<0.000000e+00> : vector<32x64xf32>
    %148 = tpu.matmul %147, %143, %cst_89 {dimension_numbers = #tpu.dot_dimension_numbers<[1], [0], [0], [1], [0, 0, 1, 1], [], []>} : vector<32x128xbf16>, vector<128x64xbf16>, vector<32x64xf32> -> vector<32x64xf32>
    %149 = arith.addf %113, %148 : vector<32x64xf32>
    %c56 = arith.constant 56 : index
    %c0_90 = arith.constant 0 : index
    %150 = vector.load %arg7[%c56, %c0_90] : memref<288x256xbf16, #tpu.memory_space<vmem>>, vector<32x256xbf16>
    %c14 = arith.constant 14 : index
    %c0_91 = arith.constant 0 : index
    %c0_92 = arith.constant 0 : index
    %151 = vector.load %arg8[%c14, %c0_91, %c0_92] : memref<30x128x64xbf16, #tpu.memory_space<vmem>>, vector<1x128x64xbf16>
    %152 = vector.shape_cast %151 : vector<1x128x64xbf16> to vector<128x64xbf16>
    %153 = vector.extract_strided_slice %150 {offsets = [0, 0], sizes = [32, 128], strides = [1, 1]} : vector<32x256xbf16> to vector<32x128xbf16>
    %cst_93 = arith.constant dense<0.000000e+00> : vector<32x64xf32>
    %154 = tpu.matmul %153, %152, %cst_93 {dimension_numbers = #tpu.dot_dimension_numbers<[1], [0], [0], [1], [0, 0, 1, 1], [], []>} : vector<32x128xbf16>, vector<128x64xbf16>, vector<32x64xf32> -> vector<32x64xf32>
    %155 = arith.addf %119, %154 : vector<32x64xf32>
    %156 = vector.extract_strided_slice %150 {offsets = [0, 128], sizes = [32, 128], strides = [1, 1]} : vector<32x256xbf16> to vector<32x128xbf16>
    %cst_94 = arith.constant dense<0.000000e+00> : vector<32x64xf32>
    %157 = tpu.matmul %156, %152, %cst_94 {dimension_numbers = #tpu.dot_dimension_numbers<[1], [0], [0], [1], [0, 0, 1, 1], [], []>} : vector<32x128xbf16>, vector<128x64xbf16>, vector<32x64xf32> -> vector<32x64xf32>
    %158 = arith.addf %122, %157 : vector<32x64xf32>
    %c200 = arith.constant 200 : index
    %c0_95 = arith.constant 0 : index
    %159 = vector.load %arg7[%c200, %c0_95] : memref<288x256xbf16, #tpu.memory_space<vmem>>, vector<32x256xbf16>
    %c15 = arith.constant 15 : index
    %c0_96 = arith.constant 0 : index
    %c0_97 = arith.constant 0 : index
    %160 = vector.load %arg8[%c15, %c0_96, %c0_97] : memref<30x128x64xbf16, #tpu.memory_space<vmem>>, vector<1x128x64xbf16>
    %161 = vector.shape_cast %160 : vector<1x128x64xbf16> to vector<128x64xbf16>
    %162 = vector.extract_strided_slice %159 {offsets = [0, 0], sizes = [32, 128], strides = [1, 1]} : vector<32x256xbf16> to vector<32x128xbf16>
    %cst_98 = arith.constant dense<0.000000e+00> : vector<32x64xf32>
    %163 = tpu.matmul %162, %161, %cst_98 {dimension_numbers = #tpu.dot_dimension_numbers<[1], [0], [0], [1], [0, 0, 1, 1], [], []>} : vector<32x128xbf16>, vector<128x64xbf16>, vector<32x64xf32> -> vector<32x64xf32>
    %164 = arith.addf %128, %163 : vector<32x64xf32>
    %165 = vector.extract_strided_slice %159 {offsets = [0, 128], sizes = [32, 128], strides = [1, 1]} : vector<32x256xbf16> to vector<32x128xbf16>
    %cst_99 = arith.constant dense<0.000000e+00> : vector<32x64xf32>
    %166 = tpu.matmul %165, %161, %cst_99 {dimension_numbers = #tpu.dot_dimension_numbers<[1], [0], [0], [1], [0, 0, 1, 1], [], []>} : vector<32x128xbf16>, vector<128x64xbf16>, vector<32x64xf32> -> vector<32x64xf32>
    %167 = arith.addf %131, %166 : vector<32x64xf32>
    %c64 = arith.constant 64 : index
    %c0_100 = arith.constant 0 : index
    %168 = vector.load %arg7[%c64, %c0_100] : memref<288x256xbf16, #tpu.memory_space<vmem>>, vector<32x256xbf16>
    %c16_101 = arith.constant 16 : index
    %c0_102 = arith.constant 0 : index
    %c0_103 = arith.constant 0 : index
    %169 = vector.load %arg8[%c16_101, %c0_102, %c0_103] : memref<30x128x64xbf16, #tpu.memory_space<vmem>>, vector<1x128x64xbf16>
    %170 = vector.shape_cast %169 : vector<1x128x64xbf16> to vector<128x64xbf16>
    %171 = vector.extract_strided_slice %168 {offsets = [0, 0], sizes = [32, 128], strides = [1, 1]} : vector<32x256xbf16> to vector<32x128xbf16>
    %cst_104 = arith.constant dense<0.000000e+00> : vector<32x64xf32>
    %172 = tpu.matmul %171, %170, %cst_104 {dimension_numbers = #tpu.dot_dimension_numbers<[1], [0], [0], [1], [0, 0, 1, 1], [], []>} : vector<32x128xbf16>, vector<128x64xbf16>, vector<32x64xf32> -> vector<32x64xf32>
    %173 = arith.addf %137, %172 : vector<32x64xf32>
    %174 = vector.extract_strided_slice %168 {offsets = [0, 128], sizes = [32, 128], strides = [1, 1]} : vector<32x256xbf16> to vector<32x128xbf16>
    %cst_105 = arith.constant dense<0.000000e+00> : vector<32x64xf32>
    %175 = tpu.matmul %174, %170, %cst_105 {dimension_numbers = #tpu.dot_dimension_numbers<[1], [0], [0], [1], [0, 0, 1, 1], [], []>} : vector<32x128xbf16>, vector<128x64xbf16>, vector<32x64xf32> -> vector<32x64xf32>
    %176 = arith.addf %140, %175 : vector<32x64xf32>
    %c208 = arith.constant 208 : index
    %c0_106 = arith.constant 0 : index
    %177 = vector.load %arg7[%c208, %c0_106] : memref<288x256xbf16, #tpu.memory_space<vmem>>, vector<32x256xbf16>
    %c17 = arith.constant 17 : index
    %c0_107 = arith.constant 0 : index
    %c0_108 = arith.constant 0 : index
    %178 = vector.load %arg8[%c17, %c0_107, %c0_108] : memref<30x128x64xbf16, #tpu.memory_space<vmem>>, vector<1x128x64xbf16>
    %179 = vector.shape_cast %178 : vector<1x128x64xbf16> to vector<128x64xbf16>
    %180 = vector.extract_strided_slice %177 {offsets = [0, 0], sizes = [32, 128], strides = [1, 1]} : vector<32x256xbf16> to vector<32x128xbf16>
    %cst_109 = arith.constant dense<0.000000e+00> : vector<32x64xf32>
    %181 = tpu.matmul %180, %179, %cst_109 {dimension_numbers = #tpu.dot_dimension_numbers<[1], [0], [0], [1], [0, 0, 1, 1], [], []>} : vector<32x128xbf16>, vector<128x64xbf16>, vector<32x64xf32> -> vector<32x64xf32>
    %182 = arith.addf %146, %181 : vector<32x64xf32>
    %183 = vector.extract_strided_slice %177 {offsets = [0, 128], sizes = [32, 128], strides = [1, 1]} : vector<32x256xbf16> to vector<32x128xbf16>
    %cst_110 = arith.constant dense<0.000000e+00> : vector<32x64xf32>
    %184 = tpu.matmul %183, %179, %cst_110 {dimension_numbers = #tpu.dot_dimension_numbers<[1], [0], [0], [1], [0, 0, 1, 1], [], []>} : vector<32x128xbf16>, vector<128x64xbf16>, vector<32x64xf32> -> vector<32x64xf32>
    %185 = arith.addf %149, %184 : vector<32x64xf32>
    %c72 = arith.constant 72 : index
    %c0_111 = arith.constant 0 : index
    %186 = vector.load %arg7[%c72, %c0_111] : memref<288x256xbf16, #tpu.memory_space<vmem>>, vector<32x256xbf16>
    %c18 = arith.constant 18 : index
    %c0_112 = arith.constant 0 : index
    %c0_113 = arith.constant 0 : index
    %187 = vector.load %arg8[%c18, %c0_112, %c0_113] : memref<30x128x64xbf16, #tpu.memory_space<vmem>>, vector<1x128x64xbf16>
    %188 = vector.shape_cast %187 : vector<1x128x64xbf16> to vector<128x64xbf16>
    %189 = vector.extract_strided_slice %186 {offsets = [0, 0], sizes = [32, 128], strides = [1, 1]} : vector<32x256xbf16> to vector<32x128xbf16>
    %cst_114 = arith.constant dense<0.000000e+00> : vector<32x64xf32>
    %190 = tpu.matmul %189, %188, %cst_114 {dimension_numbers = #tpu.dot_dimension_numbers<[1], [0], [0], [1], [0, 0, 1, 1], [], []>} : vector<32x128xbf16>, vector<128x64xbf16>, vector<32x64xf32> -> vector<32x64xf32>
    %191 = arith.addf %155, %190 : vector<32x64xf32>
    %192 = vector.extract_strided_slice %186 {offsets = [0, 128], sizes = [32, 128], strides = [1, 1]} : vector<32x256xbf16> to vector<32x128xbf16>
    %cst_115 = arith.constant dense<0.000000e+00> : vector<32x64xf32>
    %193 = tpu.matmul %192, %188, %cst_115 {dimension_numbers = #tpu.dot_dimension_numbers<[1], [0], [0], [1], [0, 0, 1, 1], [], []>} : vector<32x128xbf16>, vector<128x64xbf16>, vector<32x64xf32> -> vector<32x64xf32>
    %194 = arith.addf %158, %193 : vector<32x64xf32>
    %c216 = arith.constant 216 : index
    %c0_116 = arith.constant 0 : index
    %195 = vector.load %arg7[%c216, %c0_116] : memref<288x256xbf16, #tpu.memory_space<vmem>>, vector<32x256xbf16>
    %c19 = arith.constant 19 : index
    %c0_117 = arith.constant 0 : index
    %c0_118 = arith.constant 0 : index
    %196 = vector.load %arg8[%c19, %c0_117, %c0_118] : memref<30x128x64xbf16, #tpu.memory_space<vmem>>, vector<1x128x64xbf16>
    %197 = vector.shape_cast %196 : vector<1x128x64xbf16> to vector<128x64xbf16>
    %198 = vector.extract_strided_slice %195 {offsets = [0, 0], sizes = [32, 128], strides = [1, 1]} : vector<32x256xbf16> to vector<32x128xbf16>
    %cst_119 = arith.constant dense<0.000000e+00> : vector<32x64xf32>
    %199 = tpu.matmul %198, %197, %cst_119 {dimension_numbers = #tpu.dot_dimension_numbers<[1], [0], [0], [1], [0, 0, 1, 1], [], []>} : vector<32x128xbf16>, vector<128x64xbf16>, vector<32x64xf32> -> vector<32x64xf32>
    %200 = arith.addf %164, %199 : vector<32x64xf32>
    %201 = vector.extract_strided_slice %195 {offsets = [0, 128], sizes = [32, 128], strides = [1, 1]} : vector<32x256xbf16> to vector<32x128xbf16>
    %cst_120 = arith.constant dense<0.000000e+00> : vector<32x64xf32>
    %202 = tpu.matmul %201, %197, %cst_120 {dimension_numbers = #tpu.dot_dimension_numbers<[1], [0], [0], [1], [0, 0, 1, 1], [], []>} : vector<32x128xbf16>, vector<128x64xbf16>, vector<32x64xf32> -> vector<32x64xf32>
    %203 = arith.addf %167, %202 : vector<32x64xf32>
    %c80 = arith.constant 80 : index
    %c0_121 = arith.constant 0 : index
    %204 = vector.load %arg7[%c80, %c0_121] : memref<288x256xbf16, #tpu.memory_space<vmem>>, vector<32x256xbf16>
    %c20 = arith.constant 20 : index
    %c0_122 = arith.constant 0 : index
    %c0_123 = arith.constant 0 : index
    %205 = vector.load %arg8[%c20, %c0_122, %c0_123] : memref<30x128x64xbf16, #tpu.memory_space<vmem>>, vector<1x128x64xbf16>
    %206 = vector.shape_cast %205 : vector<1x128x64xbf16> to vector<128x64xbf16>
    %207 = vector.extract_strided_slice %204 {offsets = [0, 0], sizes = [32, 128], strides = [1, 1]} : vector<32x256xbf16> to vector<32x128xbf16>
    %cst_124 = arith.constant dense<0.000000e+00> : vector<32x64xf32>
    %208 = tpu.matmul %207, %206, %cst_124 {dimension_numbers = #tpu.dot_dimension_numbers<[1], [0], [0], [1], [0, 0, 1, 1], [], []>} : vector<32x128xbf16>, vector<128x64xbf16>, vector<32x64xf32> -> vector<32x64xf32>
    %209 = arith.addf %173, %208 : vector<32x64xf32>
    %210 = vector.extract_strided_slice %204 {offsets = [0, 128], sizes = [32, 128], strides = [1, 1]} : vector<32x256xbf16> to vector<32x128xbf16>
    %cst_125 = arith.constant dense<0.000000e+00> : vector<32x64xf32>
    %211 = tpu.matmul %210, %206, %cst_125 {dimension_numbers = #tpu.dot_dimension_numbers<[1], [0], [0], [1], [0, 0, 1, 1], [], []>} : vector<32x128xbf16>, vector<128x64xbf16>, vector<32x64xf32> -> vector<32x64xf32>
    %212 = arith.addf %176, %211 : vector<32x64xf32>
    %c224 = arith.constant 224 : index
    %c0_126 = arith.constant 0 : index
    %213 = vector.load %arg7[%c224, %c0_126] : memref<288x256xbf16, #tpu.memory_space<vmem>>, vector<32x256xbf16>
    %c21 = arith.constant 21 : index
    %c0_127 = arith.constant 0 : index
    %c0_128 = arith.constant 0 : index
    %214 = vector.load %arg8[%c21, %c0_127, %c0_128] : memref<30x128x64xbf16, #tpu.memory_space<vmem>>, vector<1x128x64xbf16>
    %215 = vector.shape_cast %214 : vector<1x128x64xbf16> to vector<128x64xbf16>
    %216 = vector.extract_strided_slice %213 {offsets = [0, 0], sizes = [32, 128], strides = [1, 1]} : vector<32x256xbf16> to vector<32x128xbf16>
    %cst_129 = arith.constant dense<0.000000e+00> : vector<32x64xf32>
    %217 = tpu.matmul %216, %215, %cst_129 {dimension_numbers = #tpu.dot_dimension_numbers<[1], [0], [0], [1], [0, 0, 1, 1], [], []>} : vector<32x128xbf16>, vector<128x64xbf16>, vector<32x64xf32> -> vector<32x64xf32>
    %218 = arith.addf %182, %217 : vector<32x64xf32>
    %219 = vector.extract_strided_slice %213 {offsets = [0, 128], sizes = [32, 128], strides = [1, 1]} : vector<32x256xbf16> to vector<32x128xbf16>
    %cst_130 = arith.constant dense<0.000000e+00> : vector<32x64xf32>
    %220 = tpu.matmul %219, %215, %cst_130 {dimension_numbers = #tpu.dot_dimension_numbers<[1], [0], [0], [1], [0, 0, 1, 1], [], []>} : vector<32x128xbf16>, vector<128x64xbf16>, vector<32x64xf32> -> vector<32x64xf32>
    %221 = arith.addf %185, %220 : vector<32x64xf32>
    %c88 = arith.constant 88 : index
    %c0_131 = arith.constant 0 : index
    %222 = vector.load %arg7[%c88, %c0_131] : memref<288x256xbf16, #tpu.memory_space<vmem>>, vector<32x256xbf16>
    %c22 = arith.constant 22 : index
    %c0_132 = arith.constant 0 : index
    %c0_133 = arith.constant 0 : index
    %223 = vector.load %arg8[%c22, %c0_132, %c0_133] : memref<30x128x64xbf16, #tpu.memory_space<vmem>>, vector<1x128x64xbf16>
    %224 = vector.shape_cast %223 : vector<1x128x64xbf16> to vector<128x64xbf16>
    %225 = vector.extract_strided_slice %222 {offsets = [0, 0], sizes = [32, 128], strides = [1, 1]} : vector<32x256xbf16> to vector<32x128xbf16>
    %cst_134 = arith.constant dense<0.000000e+00> : vector<32x64xf32>
    %226 = tpu.matmul %225, %224, %cst_134 {dimension_numbers = #tpu.dot_dimension_numbers<[1], [0], [0], [1], [0, 0, 1, 1], [], []>} : vector<32x128xbf16>, vector<128x64xbf16>, vector<32x64xf32> -> vector<32x64xf32>
    %227 = arith.addf %191, %226 : vector<32x64xf32>
    %228 = vector.extract_strided_slice %222 {offsets = [0, 128], sizes = [32, 128], strides = [1, 1]} : vector<32x256xbf16> to vector<32x128xbf16>
    %cst_135 = arith.constant dense<0.000000e+00> : vector<32x64xf32>
    %229 = tpu.matmul %228, %224, %cst_135 {dimension_numbers = #tpu.dot_dimension_numbers<[1], [0], [0], [1], [0, 0, 1, 1], [], []>} : vector<32x128xbf16>, vector<128x64xbf16>, vector<32x64xf32> -> vector<32x64xf32>
    %230 = arith.addf %194, %229 : vector<32x64xf32>
    %c232 = arith.constant 232 : index
    %c0_136 = arith.constant 0 : index
    %231 = vector.load %arg7[%c232, %c0_136] : memref<288x256xbf16, #tpu.memory_space<vmem>>, vector<32x256xbf16>
    %c23 = arith.constant 23 : index
    %c0_137 = arith.constant 0 : index
    %c0_138 = arith.constant 0 : index
    %232 = vector.load %arg8[%c23, %c0_137, %c0_138] : memref<30x128x64xbf16, #tpu.memory_space<vmem>>, vector<1x128x64xbf16>
    %233 = vector.shape_cast %232 : vector<1x128x64xbf16> to vector<128x64xbf16>
    %234 = vector.extract_strided_slice %231 {offsets = [0, 0], sizes = [32, 128], strides = [1, 1]} : vector<32x256xbf16> to vector<32x128xbf16>
    %cst_139 = arith.constant dense<0.000000e+00> : vector<32x64xf32>
    %235 = tpu.matmul %234, %233, %cst_139 {dimension_numbers = #tpu.dot_dimension_numbers<[1], [0], [0], [1], [0, 0, 1, 1], [], []>} : vector<32x128xbf16>, vector<128x64xbf16>, vector<32x64xf32> -> vector<32x64xf32>
    %236 = arith.addf %200, %235 : vector<32x64xf32>
    %237 = vector.extract_strided_slice %231 {offsets = [0, 128], sizes = [32, 128], strides = [1, 1]} : vector<32x256xbf16> to vector<32x128xbf16>
    %cst_140 = arith.constant dense<0.000000e+00> : vector<32x64xf32>
    %238 = tpu.matmul %237, %233, %cst_140 {dimension_numbers = #tpu.dot_dimension_numbers<[1], [0], [0], [1], [0, 0, 1, 1], [], []>} : vector<32x128xbf16>, vector<128x64xbf16>, vector<32x64xf32> -> vector<32x64xf32>
    %239 = arith.addf %203, %238 : vector<32x64xf32>
    %c96 = arith.constant 96 : index
    %c0_141 = arith.constant 0 : index
    %240 = vector.load %arg7[%c96, %c0_141] : memref<288x256xbf16, #tpu.memory_space<vmem>>, vector<32x256xbf16>
    %c24_142 = arith.constant 24 : index
    %c0_143 = arith.constant 0 : index
    %c0_144 = arith.constant 0 : index
    %241 = vector.load %arg8[%c24_142, %c0_143, %c0_144] : memref<30x128x64xbf16, #tpu.memory_space<vmem>>, vector<1x128x64xbf16>
    %242 = vector.shape_cast %241 : vector<1x128x64xbf16> to vector<128x64xbf16>
    %243 = vector.extract_strided_slice %240 {offsets = [0, 0], sizes = [32, 128], strides = [1, 1]} : vector<32x256xbf16> to vector<32x128xbf16>
    %cst_145 = arith.constant dense<0.000000e+00> : vector<32x64xf32>
    %244 = tpu.matmul %243, %242, %cst_145 {dimension_numbers = #tpu.dot_dimension_numbers<[1], [0], [0], [1], [0, 0, 1, 1], [], []>} : vector<32x128xbf16>, vector<128x64xbf16>, vector<32x64xf32> -> vector<32x64xf32>
    %245 = arith.addf %209, %244 : vector<32x64xf32>
    %246 = vector.extract_strided_slice %240 {offsets = [0, 128], sizes = [32, 128], strides = [1, 1]} : vector<32x256xbf16> to vector<32x128xbf16>
    %cst_146 = arith.constant dense<0.000000e+00> : vector<32x64xf32>
    %247 = tpu.matmul %246, %242, %cst_146 {dimension_numbers = #tpu.dot_dimension_numbers<[1], [0], [0], [1], [0, 0, 1, 1], [], []>} : vector<32x128xbf16>, vector<128x64xbf16>, vector<32x64xf32> -> vector<32x64xf32>
    %248 = arith.addf %212, %247 : vector<32x64xf32>
    %c240 = arith.constant 240 : index
    %c0_147 = arith.constant 0 : index
    %249 = vector.load %arg7[%c240, %c0_147] : memref<288x256xbf16, #tpu.memory_space<vmem>>, vector<32x256xbf16>
    %c25 = arith.constant 25 : index
    %c0_148 = arith.constant 0 : index
    %c0_149 = arith.constant 0 : index
    %250 = vector.load %arg8[%c25, %c0_148, %c0_149] : memref<30x128x64xbf16, #tpu.memory_space<vmem>>, vector<1x128x64xbf16>
    %251 = vector.shape_cast %250 : vector<1x128x64xbf16> to vector<128x64xbf16>
    %252 = vector.extract_strided_slice %249 {offsets = [0, 0], sizes = [32, 128], strides = [1, 1]} : vector<32x256xbf16> to vector<32x128xbf16>
    %cst_150 = arith.constant dense<0.000000e+00> : vector<32x64xf32>
    %253 = tpu.matmul %252, %251, %cst_150 {dimension_numbers = #tpu.dot_dimension_numbers<[1], [0], [0], [1], [0, 0, 1, 1], [], []>} : vector<32x128xbf16>, vector<128x64xbf16>, vector<32x64xf32> -> vector<32x64xf32>
    %254 = arith.addf %218, %253 : vector<32x64xf32>
    %255 = vector.extract_strided_slice %249 {offsets = [0, 128], sizes = [32, 128], strides = [1, 1]} : vector<32x256xbf16> to vector<32x128xbf16>
    %cst_151 = arith.constant dense<0.000000e+00> : vector<32x64xf32>
    %256 = tpu.matmul %255, %251, %cst_151 {dimension_numbers = #tpu.dot_dimension_numbers<[1], [0], [0], [1], [0, 0, 1, 1], [], []>} : vector<32x128xbf16>, vector<128x64xbf16>, vector<32x64xf32> -> vector<32x64xf32>
    %257 = arith.addf %221, %256 : vector<32x64xf32>
    %c104 = arith.constant 104 : index
    %c0_152 = arith.constant 0 : index
    %258 = vector.load %arg7[%c104, %c0_152] : memref<288x256xbf16, #tpu.memory_space<vmem>>, vector<32x256xbf16>
    %c26 = arith.constant 26 : index
    %c0_153 = arith.constant 0 : index
    %c0_154 = arith.constant 0 : index
    %259 = vector.load %arg8[%c26, %c0_153, %c0_154] : memref<30x128x64xbf16, #tpu.memory_space<vmem>>, vector<1x128x64xbf16>
    %260 = vector.shape_cast %259 : vector<1x128x64xbf16> to vector<128x64xbf16>
    %261 = vector.extract_strided_slice %258 {offsets = [0, 0], sizes = [32, 128], strides = [1, 1]} : vector<32x256xbf16> to vector<32x128xbf16>
    %cst_155 = arith.constant dense<0.000000e+00> : vector<32x64xf32>
    %262 = tpu.matmul %261, %260, %cst_155 {dimension_numbers = #tpu.dot_dimension_numbers<[1], [0], [0], [1], [0, 0, 1, 1], [], []>} : vector<32x128xbf16>, vector<128x64xbf16>, vector<32x64xf32> -> vector<32x64xf32>
    %263 = arith.addf %227, %262 : vector<32x64xf32>
    %264 = vector.extract_strided_slice %258 {offsets = [0, 128], sizes = [32, 128], strides = [1, 1]} : vector<32x256xbf16> to vector<32x128xbf16>
    %cst_156 = arith.constant dense<0.000000e+00> : vector<32x64xf32>
    %265 = tpu.matmul %264, %260, %cst_156 {dimension_numbers = #tpu.dot_dimension_numbers<[1], [0], [0], [1], [0, 0, 1, 1], [], []>} : vector<32x128xbf16>, vector<128x64xbf16>, vector<32x64xf32> -> vector<32x64xf32>
    %266 = arith.addf %230, %265 : vector<32x64xf32>
    %c248 = arith.constant 248 : index
    %c0_157 = arith.constant 0 : index
    %267 = vector.load %arg7[%c248, %c0_157] : memref<288x256xbf16, #tpu.memory_space<vmem>>, vector<32x256xbf16>
    %c27 = arith.constant 27 : index
    %c0_158 = arith.constant 0 : index
    %c0_159 = arith.constant 0 : index
    %268 = vector.load %arg8[%c27, %c0_158, %c0_159] : memref<30x128x64xbf16, #tpu.memory_space<vmem>>, vector<1x128x64xbf16>
    %269 = vector.shape_cast %268 : vector<1x128x64xbf16> to vector<128x64xbf16>
    %270 = vector.extract_strided_slice %267 {offsets = [0, 0], sizes = [32, 128], strides = [1, 1]} : vector<32x256xbf16> to vector<32x128xbf16>
    %cst_160 = arith.constant dense<0.000000e+00> : vector<32x64xf32>
    %271 = tpu.matmul %270, %269, %cst_160 {dimension_numbers = #tpu.dot_dimension_numbers<[1], [0], [0], [1], [0, 0, 1, 1], [], []>} : vector<32x128xbf16>, vector<128x64xbf16>, vector<32x64xf32> -> vector<32x64xf32>
    %272 = arith.addf %236, %271 : vector<32x64xf32>
    %273 = vector.extract_strided_slice %267 {offsets = [0, 128], sizes = [32, 128], strides = [1, 1]} : vector<32x256xbf16> to vector<32x128xbf16>
    %cst_161 = arith.constant dense<0.000000e+00> : vector<32x64xf32>
    %274 = tpu.matmul %273, %269, %cst_161 {dimension_numbers = #tpu.dot_dimension_numbers<[1], [0], [0], [1], [0, 0, 1, 1], [], []>} : vector<32x128xbf16>, vector<128x64xbf16>, vector<32x64xf32> -> vector<32x64xf32>
    %275 = arith.addf %239, %274 : vector<32x64xf32>
    %c112 = arith.constant 112 : index
    %c0_162 = arith.constant 0 : index
    %276 = vector.load %arg7[%c112, %c0_162] : memref<288x256xbf16, #tpu.memory_space<vmem>>, vector<32x256xbf16>
    %c28 = arith.constant 28 : index
    %c0_163 = arith.constant 0 : index
    %c0_164 = arith.constant 0 : index
    %277 = vector.load %arg8[%c28, %c0_163, %c0_164] : memref<30x128x64xbf16, #tpu.memory_space<vmem>>, vector<1x128x64xbf16>
    %278 = vector.shape_cast %277 : vector<1x128x64xbf16> to vector<128x64xbf16>
    %279 = vector.extract_strided_slice %276 {offsets = [0, 0], sizes = [32, 128], strides = [1, 1]} : vector<32x256xbf16> to vector<32x128xbf16>
    %cst_165 = arith.constant dense<0.000000e+00> : vector<32x64xf32>
    %280 = tpu.matmul %279, %278, %cst_165 {dimension_numbers = #tpu.dot_dimension_numbers<[1], [0], [0], [1], [0, 0, 1, 1], [], []>} : vector<32x128xbf16>, vector<128x64xbf16>, vector<32x64xf32> -> vector<32x64xf32>
    %281 = arith.addf %245, %280 : vector<32x64xf32>
    %282 = vector.extract_strided_slice %276 {offsets = [0, 128], sizes = [32, 128], strides = [1, 1]} : vector<32x256xbf16> to vector<32x128xbf16>
    %cst_166 = arith.constant dense<0.000000e+00> : vector<32x64xf32>
    %283 = tpu.matmul %282, %278, %cst_166 {dimension_numbers = #tpu.dot_dimension_numbers<[1], [0], [0], [1], [0, 0, 1, 1], [], []>} : vector<32x128xbf16>, vector<128x64xbf16>, vector<32x64xf32> -> vector<32x64xf32>
    %284 = arith.addf %248, %283 : vector<32x64xf32>
    %c256 = arith.constant 256 : index
    %c0_167 = arith.constant 0 : index
    %285 = vector.load %arg7[%c256, %c0_167] : memref<288x256xbf16, #tpu.memory_space<vmem>>, vector<32x256xbf16>
    %c29 = arith.constant 29 : index
    %c0_168 = arith.constant 0 : index
    %c0_169 = arith.constant 0 : index
    %286 = vector.load %arg8[%c29, %c0_168, %c0_169] : memref<30x128x64xbf16, #tpu.memory_space<vmem>>, vector<1x128x64xbf16>
    %287 = vector.shape_cast %286 : vector<1x128x64xbf16> to vector<128x64xbf16>
    %288 = vector.extract_strided_slice %285 {offsets = [0, 0], sizes = [32, 128], strides = [1, 1]} : vector<32x256xbf16> to vector<32x128xbf16>
    %cst_170 = arith.constant dense<0.000000e+00> : vector<32x64xf32>
    %289 = tpu.matmul %288, %287, %cst_170 {dimension_numbers = #tpu.dot_dimension_numbers<[1], [0], [0], [1], [0, 0, 1, 1], [], []>} : vector<32x128xbf16>, vector<128x64xbf16>, vector<32x64xf32> -> vector<32x64xf32>
    %290 = arith.addf %254, %289 : vector<32x64xf32>
    %291 = vector.extract_strided_slice %285 {offsets = [0, 128], sizes = [32, 128], strides = [1, 1]} : vector<32x256xbf16> to vector<32x128xbf16>
    %cst_171 = arith.constant dense<0.000000e+00> : vector<32x64xf32>
    %292 = tpu.matmul %291, %287, %cst_171 {dimension_numbers = #tpu.dot_dimension_numbers<[1], [0], [0], [1], [0, 0, 1, 1], [], []>} : vector<32x128xbf16>, vector<128x64xbf16>, vector<32x64xf32> -> vector<32x64xf32>
    %293 = arith.addf %257, %292 : vector<32x64xf32>
    %c0_172 = arith.constant 0 : index
    %c256_173 = arith.constant 256 : index
    %294 = vector.load %arg2[%c0_172, %c256_173] : memref<1x1664xf32, #tpu.memory_space<vmem>>, vector<1x128xf32>
    %295 = arith.addf %281, %290 : vector<32x64xf32>
    %296 = arith.addf %263, %272 : vector<32x64xf32>
    %297 = arith.addf %295, %296 : vector<32x64xf32>
    %298 = arith.addf %284, %293 : vector<32x64xf32>
    %299 = arith.addf %266, %275 : vector<32x64xf32>
    %300 = arith.addf %298, %299 : vector<32x64xf32>
    %301 = tpu.concatenate %297, %300 in 1 : vector<32x64xf32>, vector<32x64xf32> -> vector<32x128xf32>
    %302 = vector.broadcast %294 : vector<1x128xf32> to vector<32x128xf32>
    %303 = arith.addf %301, %302 : vector<32x128xf32>
    %cst_174 = arith.constant 0.000000e+00 : f32
    %304 = vector.broadcast %cst_174 : f32 to vector<32x128xf32>
    %305 = arith.maximumf %303, %304 : vector<32x128xf32>
    %306 = arith.truncf %305 : vector<32x128xf32> to vector<32x128xbf16>
    %c1_i32_175 = arith.constant 1 : i32
    %307 = tpu.memref_slice %arg10[%c1_i32_175] : memref<2x!tpu.dma_semaphore, #tpu.memory_space<semaphore_mem>> -> memref<1x!tpu.dma_semaphore, #tpu.memory_space<semaphore_mem>>
    %308 = tpu.memref_squeeze %307 : memref<1x!tpu.dma_semaphore, #tpu.memory_space<semaphore_mem>> -> memref<!tpu.dma_semaphore, #tpu.memory_space<semaphore_mem>>
    tpu.wait_dma2 semaphore(%308 : memref<!tpu.dma_semaphore, #tpu.memory_space<semaphore_mem>>) src(%arg5 : memref<512x512xbf16, #tpu.memory_space<any>>) dst(%arg9 : memref<512x512xbf16, #tpu.memory_space<vmem>>)
    %c0_176 = arith.constant 0 : index
    %c384 = arith.constant 384 : index
    %309 = vector.load %arg2[%c0_176, %c384] : memref<1x1664xf32, #tpu.memory_space<vmem>>, vector<1x512xf32>
    %c0_177 = arith.constant 0 : index
    %c896 = arith.constant 896 : index
    %310 = vector.load %arg2[%c0_177, %c896] : memref<1x1664xf32, #tpu.memory_space<vmem>>, vector<1x512xf32>
    %c0_178 = arith.constant 0 : index
    %c0_179 = arith.constant 0 : index
    %311 = vector.load %arg9[%c0_178, %c0_179] : memref<512x512xbf16, #tpu.memory_space<vmem>>, vector<128x512xbf16>
    %cst_180 = arith.constant dense<0.000000e+00> : vector<32x512xf32>
    %312 = tpu.matmul %306, %311, %cst_180 {dimension_numbers = #tpu.dot_dimension_numbers<[1], [0], [0], [1], [0, 0, 1, 1], [], []>} : vector<32x128xbf16>, vector<128x512xbf16>, vector<32x512xf32> -> vector<32x512xf32>
    %313 = vector.broadcast %309 : vector<1x512xf32> to vector<32x512xf32>
    %314 = arith.addf %312, %313 : vector<32x512xf32>
    %cst_181 = arith.constant 0.000000e+00 : bf16
    %315 = vector.broadcast %cst_181 : bf16 to vector<8x128xbf16>
    %cst_182 = arith.constant 0.000000e+00 : bf16
    %316 = vector.broadcast %cst_182 : bf16 to vector<8x128xbf16>
    %cst_183 = arith.constant 0.000000e+00 : f32
    %317 = vector.broadcast %cst_183 : f32 to vector<8x128xf32>
    %cst_184 = arith.constant 0.000000e+00 : f32
    %318 = vector.broadcast %cst_184 : f32 to vector<8x128xf32>
    %cst_185 = arith.constant 0.000000e+00 : f32
    %319 = vector.broadcast %cst_185 : f32 to vector<8x128xf32>
    %320 = vector.extract_strided_slice %314 {offsets = [0, 0], sizes = [8, 512], strides = [1, 1]} : vector<32x512xf32> to vector<8x512xf32>
    %c128 = arith.constant 128 : index
    %c0_186 = arith.constant 0 : index
    %321 = vector.load %arg9[%c128, %c0_186] : memref<512x512xbf16, #tpu.memory_space<vmem>>, vector<128x512xbf16>
    %cst_187 = arith.constant dense<0.000000e+00> : vector<8x512xf32>
    %322 = tpu.matmul %315, %321, %cst_187 {dimension_numbers = #tpu.dot_dimension_numbers<[1], [0], [0], [1], [0, 0, 1, 1], [], []>} : vector<8x128xbf16>, vector<128x512xbf16>, vector<8x512xf32> -> vector<8x512xf32>
    %323 = arith.addf %320, %322 : vector<8x512xf32>
    %324 = vector.extract_strided_slice %323 {offsets = [0, 0], sizes = [8, 128], strides = [1, 1]} : vector<8x512xf32> to vector<8x128xf32>
    %325 = arith.negf %324 : vector<8x128xf32>
    %326 = math.exp %325 : vector<8x128xf32>
    %cst_188 = arith.constant 1.000000e+00 : f32
    %327 = vector.broadcast %cst_188 : f32 to vector<8x128xf32>
    %328 = arith.addf %327, %326 : vector<8x128xf32>
    %329 = arith.divf %327, %328 : vector<8x128xf32>
    %330 = vector.extract_strided_slice %323 {offsets = [0, 128], sizes = [8, 128], strides = [1, 1]} : vector<8x512xf32> to vector<8x128xf32>
    %331 = arith.negf %330 : vector<8x128xf32>
    %332 = math.exp %331 : vector<8x128xf32>
    %cst_189 = arith.constant 1.000000e+00 : f32
    %333 = vector.broadcast %cst_189 : f32 to vector<8x128xf32>
    %334 = arith.addf %333, %332 : vector<8x128xf32>
    %335 = arith.divf %333, %334 : vector<8x128xf32>
    %336 = vector.extract_strided_slice %323 {offsets = [0, 256], sizes = [8, 128], strides = [1, 1]} : vector<8x512xf32> to vector<8x128xf32>
    %337 = math.tanh %336 : vector<8x128xf32>
    %338 = vector.extract_strided_slice %323 {offsets = [0, 384], sizes = [8, 128], strides = [1, 1]} : vector<8x512xf32> to vector<8x128xf32>
    %339 = arith.negf %338 : vector<8x128xf32>
    %340 = math.exp %339 : vector<8x128xf32>
    %cst_190 = arith.constant 1.000000e+00 : f32
    %341 = vector.broadcast %cst_190 : f32 to vector<8x128xf32>
    %342 = arith.addf %341, %340 : vector<8x128xf32>
    %343 = arith.divf %341, %342 : vector<8x128xf32>
    %344 = arith.mulf %335, %317 : vector<8x128xf32>
    %345 = arith.mulf %329, %337 : vector<8x128xf32>
    %346 = arith.addf %344, %345 : vector<8x128xf32>
    %347 = math.tanh %346 : vector<8x128xf32>
    %348 = arith.mulf %343, %347 : vector<8x128xf32>
    %349 = arith.truncf %348 : vector<8x128xf32> to vector<8x128xbf16>
    %350 = tpu.concatenate %349, %316 in 1 : vector<8x128xbf16>, vector<8x128xbf16> -> vector<8x256xbf16>
    %c256_191 = arith.constant 256 : index
    %c0_192 = arith.constant 0 : index
    %351 = vector.load %arg9[%c256_191, %c0_192] : memref<512x512xbf16, #tpu.memory_space<vmem>>, vector<256x512xbf16>
    %cst_193 = arith.constant dense<0.000000e+00> : vector<8x512xf32>
    %352 = tpu.matmul %350, %351, %cst_193 {dimension_numbers = #tpu.dot_dimension_numbers<[1], [0], [0], [1], [0, 0, 1, 1], [], []>} : vector<8x256xbf16>, vector<256x512xbf16>, vector<8x512xf32> -> vector<8x512xf32>
    %353 = vector.broadcast %310 : vector<1x512xf32> to vector<8x512xf32>
    %354 = arith.addf %352, %353 : vector<8x512xf32>
    %355 = vector.extract_strided_slice %354 {offsets = [0, 0], sizes = [8, 128], strides = [1, 1]} : vector<8x512xf32> to vector<8x128xf32>
    %356 = arith.negf %355 : vector<8x128xf32>
    %357 = math.exp %356 : vector<8x128xf32>
    %cst_194 = arith.constant 1.000000e+00 : f32
    %358 = vector.broadcast %cst_194 : f32 to vector<8x128xf32>
    %359 = arith.addf %358, %357 : vector<8x128xf32>
    %360 = arith.divf %358, %359 : vector<8x128xf32>
    %361 = vector.extract_strided_slice %354 {offsets = [0, 128], sizes = [8, 128], strides = [1, 1]} : vector<8x512xf32> to vector<8x128xf32>
    %362 = arith.negf %361 : vector<8x128xf32>
    %363 = math.exp %362 : vector<8x128xf32>
    %cst_195 = arith.constant 1.000000e+00 : f32
    %364 = vector.broadcast %cst_195 : f32 to vector<8x128xf32>
    %365 = arith.addf %364, %363 : vector<8x128xf32>
    %366 = arith.divf %364, %365 : vector<8x128xf32>
    %367 = vector.extract_strided_slice %354 {offsets = [0, 256], sizes = [8, 128], strides = [1, 1]} : vector<8x512xf32> to vector<8x128xf32>
    %368 = math.tanh %367 : vector<8x128xf32>
    %369 = vector.extract_strided_slice %354 {offsets = [0, 384], sizes = [8, 128], strides = [1, 1]} : vector<8x512xf32> to vector<8x128xf32>
    %370 = arith.negf %369 : vector<8x128xf32>
    %371 = math.exp %370 : vector<8x128xf32>
    %cst_196 = arith.constant 1.000000e+00 : f32
    %372 = vector.broadcast %cst_196 : f32 to vector<8x128xf32>
    %373 = arith.addf %372, %371 : vector<8x128xf32>
    %374 = arith.divf %372, %373 : vector<8x128xf32>
    %375 = arith.mulf %366, %318 : vector<8x128xf32>
    %376 = arith.mulf %360, %368 : vector<8x128xf32>
    %377 = arith.addf %375, %376 : vector<8x128xf32>
    %378 = math.tanh %377 : vector<8x128xf32>
    %379 = arith.mulf %374, %378 : vector<8x128xf32>
    %380 = arith.truncf %379 : vector<8x128xf32> to vector<8x128xbf16>
    %381 = arith.addf %319, %379 : vector<8x128xf32>
    %382 = vector.extract_strided_slice %314 {offsets = [8, 0], sizes = [8, 512], strides = [1, 1]} : vector<32x512xf32> to vector<8x512xf32>
    %c128_197 = arith.constant 128 : index
    %c0_198 = arith.constant 0 : index
    %383 = vector.load %arg9[%c128_197, %c0_198] : memref<512x512xbf16, #tpu.memory_space<vmem>>, vector<128x512xbf16>
    %cst_199 = arith.constant dense<0.000000e+00> : vector<8x512xf32>
    %384 = tpu.matmul %349, %383, %cst_199 {dimension_numbers = #tpu.dot_dimension_numbers<[1], [0], [0], [1], [0, 0, 1, 1], [], []>} : vector<8x128xbf16>, vector<128x512xbf16>, vector<8x512xf32> -> vector<8x512xf32>
    %385 = arith.addf %382, %384 : vector<8x512xf32>
    %386 = vector.extract_strided_slice %385 {offsets = [0, 0], sizes = [8, 128], strides = [1, 1]} : vector<8x512xf32> to vector<8x128xf32>
    %387 = arith.negf %386 : vector<8x128xf32>
    %388 = math.exp %387 : vector<8x128xf32>
    %cst_200 = arith.constant 1.000000e+00 : f32
    %389 = vector.broadcast %cst_200 : f32 to vector<8x128xf32>
    %390 = arith.addf %389, %388 : vector<8x128xf32>
    %391 = arith.divf %389, %390 : vector<8x128xf32>
    %392 = vector.extract_strided_slice %385 {offsets = [0, 128], sizes = [8, 128], strides = [1, 1]} : vector<8x512xf32> to vector<8x128xf32>
    %393 = arith.negf %392 : vector<8x128xf32>
    %394 = math.exp %393 : vector<8x128xf32>
    %cst_201 = arith.constant 1.000000e+00 : f32
    %395 = vector.broadcast %cst_201 : f32 to vector<8x128xf32>
    %396 = arith.addf %395, %394 : vector<8x128xf32>
    %397 = arith.divf %395, %396 : vector<8x128xf32>
    %398 = vector.extract_strided_slice %385 {offsets = [0, 256], sizes = [8, 128], strides = [1, 1]} : vector<8x512xf32> to vector<8x128xf32>
    %399 = math.tanh %398 : vector<8x128xf32>
    %400 = vector.extract_strided_slice %385 {offsets = [0, 384], sizes = [8, 128], strides = [1, 1]} : vector<8x512xf32> to vector<8x128xf32>
    %401 = arith.negf %400 : vector<8x128xf32>
    %402 = math.exp %401 : vector<8x128xf32>
    %cst_202 = arith.constant 1.000000e+00 : f32
    %403 = vector.broadcast %cst_202 : f32 to vector<8x128xf32>
    %404 = arith.addf %403, %402 : vector<8x128xf32>
    %405 = arith.divf %403, %404 : vector<8x128xf32>
    %406 = arith.mulf %397, %346 : vector<8x128xf32>
    %407 = arith.mulf %391, %399 : vector<8x128xf32>
    %408 = arith.addf %406, %407 : vector<8x128xf32>
    %409 = math.tanh %408 : vector<8x128xf32>
    %410 = arith.mulf %405, %409 : vector<8x128xf32>
    %411 = arith.truncf %410 : vector<8x128xf32> to vector<8x128xbf16>
    %412 = tpu.concatenate %411, %380 in 1 : vector<8x128xbf16>, vector<8x128xbf16> -> vector<8x256xbf16>
    %c256_203 = arith.constant 256 : index
    %c0_204 = arith.constant 0 : index
    %413 = vector.load %arg9[%c256_203, %c0_204] : memref<512x512xbf16, #tpu.memory_space<vmem>>, vector<256x512xbf16>
    %cst_205 = arith.constant dense<0.000000e+00> : vector<8x512xf32>
    %414 = tpu.matmul %412, %413, %cst_205 {dimension_numbers = #tpu.dot_dimension_numbers<[1], [0], [0], [1], [0, 0, 1, 1], [], []>} : vector<8x256xbf16>, vector<256x512xbf16>, vector<8x512xf32> -> vector<8x512xf32>
    %415 = vector.broadcast %310 : vector<1x512xf32> to vector<8x512xf32>
    %416 = arith.addf %414, %415 : vector<8x512xf32>
    %417 = vector.extract_strided_slice %416 {offsets = [0, 0], sizes = [8, 128], strides = [1, 1]} : vector<8x512xf32> to vector<8x128xf32>
    %418 = arith.negf %417 : vector<8x128xf32>
    %419 = math.exp %418 : vector<8x128xf32>
    %cst_206 = arith.constant 1.000000e+00 : f32
    %420 = vector.broadcast %cst_206 : f32 to vector<8x128xf32>
    %421 = arith.addf %420, %419 : vector<8x128xf32>
    %422 = arith.divf %420, %421 : vector<8x128xf32>
    %423 = vector.extract_strided_slice %416 {offsets = [0, 128], sizes = [8, 128], strides = [1, 1]} : vector<8x512xf32> to vector<8x128xf32>
    %424 = arith.negf %423 : vector<8x128xf32>
    %425 = math.exp %424 : vector<8x128xf32>
    %cst_207 = arith.constant 1.000000e+00 : f32
    %426 = vector.broadcast %cst_207 : f32 to vector<8x128xf32>
    %427 = arith.addf %426, %425 : vector<8x128xf32>
    %428 = arith.divf %426, %427 : vector<8x128xf32>
    %429 = vector.extract_strided_slice %416 {offsets = [0, 256], sizes = [8, 128], strides = [1, 1]} : vector<8x512xf32> to vector<8x128xf32>
    %430 = math.tanh %429 : vector<8x128xf32>
    %431 = vector.extract_strided_slice %416 {offsets = [0, 384], sizes = [8, 128], strides = [1, 1]} : vector<8x512xf32> to vector<8x128xf32>
    %432 = arith.negf %431 : vector<8x128xf32>
    %433 = math.exp %432 : vector<8x128xf32>
    %cst_208 = arith.constant 1.000000e+00 : f32
    %434 = vector.broadcast %cst_208 : f32 to vector<8x128xf32>
    %435 = arith.addf %434, %433 : vector<8x128xf32>
    %436 = arith.divf %434, %435 : vector<8x128xf32>
    %437 = arith.mulf %428, %377 : vector<8x128xf32>
    %438 = arith.mulf %422, %430 : vector<8x128xf32>
    %439 = arith.addf %437, %438 : vector<8x128xf32>
    %440 = math.tanh %439 : vector<8x128xf32>
    %441 = arith.mulf %436, %440 : vector<8x128xf32>
    %442 = arith.truncf %441 : vector<8x128xf32> to vector<8x128xbf16>
    %443 = arith.addf %381, %441 : vector<8x128xf32>
    %444 = vector.extract_strided_slice %314 {offsets = [16, 0], sizes = [8, 512], strides = [1, 1]} : vector<32x512xf32> to vector<8x512xf32>
    %c128_209 = arith.constant 128 : index
    %c0_210 = arith.constant 0 : index
    %445 = vector.load %arg9[%c128_209, %c0_210] : memref<512x512xbf16, #tpu.memory_space<vmem>>, vector<128x512xbf16>
    %cst_211 = arith.constant dense<0.000000e+00> : vector<8x512xf32>
    %446 = tpu.matmul %411, %445, %cst_211 {dimension_numbers = #tpu.dot_dimension_numbers<[1], [0], [0], [1], [0, 0, 1, 1], [], []>} : vector<8x128xbf16>, vector<128x512xbf16>, vector<8x512xf32> -> vector<8x512xf32>
    %447 = arith.addf %444, %446 : vector<8x512xf32>
    %448 = vector.extract_strided_slice %447 {offsets = [0, 0], sizes = [8, 128], strides = [1, 1]} : vector<8x512xf32> to vector<8x128xf32>
    %449 = arith.negf %448 : vector<8x128xf32>
    %450 = math.exp %449 : vector<8x128xf32>
    %cst_212 = arith.constant 1.000000e+00 : f32
    %451 = vector.broadcast %cst_212 : f32 to vector<8x128xf32>
    %452 = arith.addf %451, %450 : vector<8x128xf32>
    %453 = arith.divf %451, %452 : vector<8x128xf32>
    %454 = vector.extract_strided_slice %447 {offsets = [0, 128], sizes = [8, 128], strides = [1, 1]} : vector<8x512xf32> to vector<8x128xf32>
    %455 = arith.negf %454 : vector<8x128xf32>
    %456 = math.exp %455 : vector<8x128xf32>
    %cst_213 = arith.constant 1.000000e+00 : f32
    %457 = vector.broadcast %cst_213 : f32 to vector<8x128xf32>
    %458 = arith.addf %457, %456 : vector<8x128xf32>
    %459 = arith.divf %457, %458 : vector<8x128xf32>
    %460 = vector.extract_strided_slice %447 {offsets = [0, 256], sizes = [8, 128], strides = [1, 1]} : vector<8x512xf32> to vector<8x128xf32>
    %461 = math.tanh %460 : vector<8x128xf32>
    %462 = vector.extract_strided_slice %447 {offsets = [0, 384], sizes = [8, 128], strides = [1, 1]} : vector<8x512xf32> to vector<8x128xf32>
    %463 = arith.negf %462 : vector<8x128xf32>
    %464 = math.exp %463 : vector<8x128xf32>
    %cst_214 = arith.constant 1.000000e+00 : f32
    %465 = vector.broadcast %cst_214 : f32 to vector<8x128xf32>
    %466 = arith.addf %465, %464 : vector<8x128xf32>
    %467 = arith.divf %465, %466 : vector<8x128xf32>
    %468 = arith.mulf %459, %408 : vector<8x128xf32>
    %469 = arith.mulf %453, %461 : vector<8x128xf32>
    %470 = arith.addf %468, %469 : vector<8x128xf32>
    %471 = math.tanh %470 : vector<8x128xf32>
    %472 = arith.mulf %467, %471 : vector<8x128xf32>
    %473 = arith.truncf %472 : vector<8x128xf32> to vector<8x128xbf16>
    %474 = tpu.concatenate %473, %442 in 1 : vector<8x128xbf16>, vector<8x128xbf16> -> vector<8x256xbf16>
    %c256_215 = arith.constant 256 : index
    %c0_216 = arith.constant 0 : index
    %475 = vector.load %arg9[%c256_215, %c0_216] : memref<512x512xbf16, #tpu.memory_space<vmem>>, vector<256x512xbf16>
    %cst_217 = arith.constant dense<0.000000e+00> : vector<8x512xf32>
    %476 = tpu.matmul %474, %475, %cst_217 {dimension_numbers = #tpu.dot_dimension_numbers<[1], [0], [0], [1], [0, 0, 1, 1], [], []>} : vector<8x256xbf16>, vector<256x512xbf16>, vector<8x512xf32> -> vector<8x512xf32>
    %477 = vector.broadcast %310 : vector<1x512xf32> to vector<8x512xf32>
    %478 = arith.addf %476, %477 : vector<8x512xf32>
    %479 = vector.extract_strided_slice %478 {offsets = [0, 0], sizes = [8, 128], strides = [1, 1]} : vector<8x512xf32> to vector<8x128xf32>
    %480 = arith.negf %479 : vector<8x128xf32>
    %481 = math.exp %480 : vector<8x128xf32>
    %cst_218 = arith.constant 1.000000e+00 : f32
    %482 = vector.broadcast %cst_218 : f32 to vector<8x128xf32>
    %483 = arith.addf %482, %481 : vector<8x128xf32>
    %484 = arith.divf %482, %483 : vector<8x128xf32>
    %485 = vector.extract_strided_slice %478 {offsets = [0, 128], sizes = [8, 128], strides = [1, 1]} : vector<8x512xf32> to vector<8x128xf32>
    %486 = arith.negf %485 : vector<8x128xf32>
    %487 = math.exp %486 : vector<8x128xf32>
    %cst_219 = arith.constant 1.000000e+00 : f32
    %488 = vector.broadcast %cst_219 : f32 to vector<8x128xf32>
    %489 = arith.addf %488, %487 : vector<8x128xf32>
    %490 = arith.divf %488, %489 : vector<8x128xf32>
    %491 = vector.extract_strided_slice %478 {offsets = [0, 256], sizes = [8, 128], strides = [1, 1]} : vector<8x512xf32> to vector<8x128xf32>
    %492 = math.tanh %491 : vector<8x128xf32>
    %493 = vector.extract_strided_slice %478 {offsets = [0, 384], sizes = [8, 128], strides = [1, 1]} : vector<8x512xf32> to vector<8x128xf32>
    %494 = arith.negf %493 : vector<8x128xf32>
    %495 = math.exp %494 : vector<8x128xf32>
    %cst_220 = arith.constant 1.000000e+00 : f32
    %496 = vector.broadcast %cst_220 : f32 to vector<8x128xf32>
    %497 = arith.addf %496, %495 : vector<8x128xf32>
    %498 = arith.divf %496, %497 : vector<8x128xf32>
    %499 = arith.mulf %490, %439 : vector<8x128xf32>
    %500 = arith.mulf %484, %492 : vector<8x128xf32>
    %501 = arith.addf %499, %500 : vector<8x128xf32>
    %502 = math.tanh %501 : vector<8x128xf32>
    %503 = arith.mulf %498, %502 : vector<8x128xf32>
    %504 = arith.truncf %503 : vector<8x128xf32> to vector<8x128xbf16>
    %505 = arith.addf %443, %503 : vector<8x128xf32>
    %506 = vector.extract_strided_slice %314 {offsets = [24, 0], sizes = [8, 512], strides = [1, 1]} : vector<32x512xf32> to vector<8x512xf32>
    %c128_221 = arith.constant 128 : index
    %c0_222 = arith.constant 0 : index
    %507 = vector.load %arg9[%c128_221, %c0_222] : memref<512x512xbf16, #tpu.memory_space<vmem>>, vector<128x512xbf16>
    %cst_223 = arith.constant dense<0.000000e+00> : vector<8x512xf32>
    %508 = tpu.matmul %473, %507, %cst_223 {dimension_numbers = #tpu.dot_dimension_numbers<[1], [0], [0], [1], [0, 0, 1, 1], [], []>} : vector<8x128xbf16>, vector<128x512xbf16>, vector<8x512xf32> -> vector<8x512xf32>
    %509 = arith.addf %506, %508 : vector<8x512xf32>
    %510 = vector.extract_strided_slice %509 {offsets = [0, 0], sizes = [8, 128], strides = [1, 1]} : vector<8x512xf32> to vector<8x128xf32>
    %511 = arith.negf %510 : vector<8x128xf32>
    %512 = math.exp %511 : vector<8x128xf32>
    %cst_224 = arith.constant 1.000000e+00 : f32
    %513 = vector.broadcast %cst_224 : f32 to vector<8x128xf32>
    %514 = arith.addf %513, %512 : vector<8x128xf32>
    %515 = arith.divf %513, %514 : vector<8x128xf32>
    %516 = vector.extract_strided_slice %509 {offsets = [0, 128], sizes = [8, 128], strides = [1, 1]} : vector<8x512xf32> to vector<8x128xf32>
    %517 = arith.negf %516 : vector<8x128xf32>
    %518 = math.exp %517 : vector<8x128xf32>
    %cst_225 = arith.constant 1.000000e+00 : f32
    %519 = vector.broadcast %cst_225 : f32 to vector<8x128xf32>
    %520 = arith.addf %519, %518 : vector<8x128xf32>
    %521 = arith.divf %519, %520 : vector<8x128xf32>
    %522 = vector.extract_strided_slice %509 {offsets = [0, 256], sizes = [8, 128], strides = [1, 1]} : vector<8x512xf32> to vector<8x128xf32>
    %523 = math.tanh %522 : vector<8x128xf32>
    %524 = vector.extract_strided_slice %509 {offsets = [0, 384], sizes = [8, 128], strides = [1, 1]} : vector<8x512xf32> to vector<8x128xf32>
    %525 = arith.negf %524 : vector<8x128xf32>
    %526 = math.exp %525 : vector<8x128xf32>
    %cst_226 = arith.constant 1.000000e+00 : f32
    %527 = vector.broadcast %cst_226 : f32 to vector<8x128xf32>
    %528 = arith.addf %527, %526 : vector<8x128xf32>
    %529 = arith.divf %527, %528 : vector<8x128xf32>
    %530 = arith.mulf %521, %470 : vector<8x128xf32>
    %531 = arith.mulf %515, %523 : vector<8x128xf32>
    %532 = arith.addf %530, %531 : vector<8x128xf32>
    %533 = math.tanh %532 : vector<8x128xf32>
    %534 = arith.mulf %529, %533 : vector<8x128xf32>
    %535 = arith.truncf %534 : vector<8x128xf32> to vector<8x128xbf16>
    %536 = tpu.concatenate %535, %504 in 1 : vector<8x128xbf16>, vector<8x128xbf16> -> vector<8x256xbf16>
    %c256_227 = arith.constant 256 : index
    %c0_228 = arith.constant 0 : index
    %537 = vector.load %arg9[%c256_227, %c0_228] : memref<512x512xbf16, #tpu.memory_space<vmem>>, vector<256x512xbf16>
    %cst_229 = arith.constant dense<0.000000e+00> : vector<8x512xf32>
    %538 = tpu.matmul %536, %537, %cst_229 {dimension_numbers = #tpu.dot_dimension_numbers<[1], [0], [0], [1], [0, 0, 1, 1], [], []>} : vector<8x256xbf16>, vector<256x512xbf16>, vector<8x512xf32> -> vector<8x512xf32>
    %539 = vector.broadcast %310 : vector<1x512xf32> to vector<8x512xf32>
    %540 = arith.addf %538, %539 : vector<8x512xf32>
    %541 = vector.extract_strided_slice %540 {offsets = [0, 0], sizes = [8, 128], strides = [1, 1]} : vector<8x512xf32> to vector<8x128xf32>
    %542 = arith.negf %541 : vector<8x128xf32>
    %543 = math.exp %542 : vector<8x128xf32>
    %cst_230 = arith.constant 1.000000e+00 : f32
    %544 = vector.broadcast %cst_230 : f32 to vector<8x128xf32>
    %545 = arith.addf %544, %543 : vector<8x128xf32>
    %546 = arith.divf %544, %545 : vector<8x128xf32>
    %547 = vector.extract_strided_slice %540 {offsets = [0, 128], sizes = [8, 128], strides = [1, 1]} : vector<8x512xf32> to vector<8x128xf32>
    %548 = arith.negf %547 : vector<8x128xf32>
    %549 = math.exp %548 : vector<8x128xf32>
    %cst_231 = arith.constant 1.000000e+00 : f32
    %550 = vector.broadcast %cst_231 : f32 to vector<8x128xf32>
    %551 = arith.addf %550, %549 : vector<8x128xf32>
    %552 = arith.divf %550, %551 : vector<8x128xf32>
    %553 = vector.extract_strided_slice %540 {offsets = [0, 256], sizes = [8, 128], strides = [1, 1]} : vector<8x512xf32> to vector<8x128xf32>
    %554 = math.tanh %553 : vector<8x128xf32>
    %555 = vector.extract_strided_slice %540 {offsets = [0, 384], sizes = [8, 128], strides = [1, 1]} : vector<8x512xf32> to vector<8x128xf32>
    %556 = arith.negf %555 : vector<8x128xf32>
    %557 = math.exp %556 : vector<8x128xf32>
    %cst_232 = arith.constant 1.000000e+00 : f32
    %558 = vector.broadcast %cst_232 : f32 to vector<8x128xf32>
    %559 = arith.addf %558, %557 : vector<8x128xf32>
    %560 = arith.divf %558, %559 : vector<8x128xf32>
    %561 = arith.mulf %552, %501 : vector<8x128xf32>
    %562 = arith.mulf %546, %554 : vector<8x128xf32>
    %563 = arith.addf %561, %562 : vector<8x128xf32>
    %564 = math.tanh %563 : vector<8x128xf32>
    %565 = arith.mulf %560, %564 : vector<8x128xf32>
    %566 = arith.addf %505, %565 : vector<8x128xf32>
    %cst_233 = arith.constant 2.500000e-01 : f32
    %567 = vector.broadcast %cst_233 : f32 to vector<8x128xf32>
    %568 = arith.mulf %566, %567 : vector<8x128xf32>
    %569 = arith.truncf %568 : vector<8x128xf32> to vector<8x128xbf16>
    %c0_234 = arith.constant 0 : index
    %c1408 = arith.constant 1408 : index
    %570 = vector.load %arg2[%c0_234, %c1408] : memref<1x1664xf32, #tpu.memory_space<vmem>>, vector<1x64xf32>
    %c0_235 = arith.constant 0 : index
    %c1536 = arith.constant 1536 : index
    %571 = vector.load %arg2[%c0_235, %c1536] : memref<1x1664xf32, #tpu.memory_space<vmem>>, vector<1x12xf32>
    %c0_236 = arith.constant 0 : index
    %c0_237 = arith.constant 0 : index
    %572 = vector.load %arg3[%c0_236, %c0_237] : memref<192x64xbf16, #tpu.memory_space<vmem>>, vector<128x64xbf16>
    %cst_238 = arith.constant dense<0.000000e+00> : vector<8x64xf32>
    %573 = tpu.matmul %569, %572, %cst_238 {dimension_numbers = #tpu.dot_dimension_numbers<[1], [0], [0], [1], [0, 0, 1, 1], [], []>} : vector<8x128xbf16>, vector<128x64xbf16>, vector<8x64xf32> -> vector<8x64xf32>
    %574 = vector.broadcast %570 : vector<1x64xf32> to vector<8x64xf32>
    %575 = arith.addf %573, %574 : vector<8x64xf32>
    %576 = arith.truncf %575 : vector<8x64xf32> to vector<8x64xbf16>
    %c128_239 = arith.constant 128 : index
    %c0_240 = arith.constant 0 : index
    %577 = vector.load %arg3[%c128_239, %c0_240] : memref<192x64xbf16, #tpu.memory_space<vmem>>, vector<64x64xbf16>
    %cst_241 = arith.constant dense<0.000000e+00> : vector<8x64xf32>
    %578 = tpu.matmul %576, %577, %cst_241 {dimension_numbers = #tpu.dot_dimension_numbers<[1], [0], [0], [1], [0, 0, 1, 1], [], []>} : vector<8x64xbf16>, vector<64x64xbf16>, vector<8x64xf32> -> vector<8x64xf32>
    %579 = vector.extract_strided_slice %578 {offsets = [0, 0], sizes = [8, 12], strides = [1, 1]} : vector<8x64xf32> to vector<8x12xf32>
    %580 = vector.broadcast %571 : vector<1x12xf32> to vector<8x12xf32>
    %581 = arith.addf %579, %580 : vector<8x12xf32>
    %c0_242 = arith.constant 0 : index
    %c0_243 = arith.constant 0 : index
    %582 = vector.load %arg6[%c0_242, %c0_243] : memref<8x12xf32, #tpu.memory_space<vmem>>, vector<8x12xf32>
    tpu.vector_store %arg6[%c0_242, %c0_243], %581 {strides = array<i32>} : memref<8x12xf32, #tpu.memory_space<vmem>>, vector<8x12xf32>,
    return
  }
}

</mosaic_0001>

<llo_original>
// kernel: _lambda_.1
$region0: #{_lambda_.1}
  #allocation0 [shape = 'u32[]', space=smem, size = 0x4, offset = 0x4, fixed_abs, tag = 'smem constant byte address 0x4 - core index']
  #allocation1 [shape = 'u32[144,128]{1,0:T(1,128)}', space=vmem, size = 0x12000, scoped, tag = 'internal scratch']
  #allocation2 [shape = 'bf16[288,256]{1,0:T(16,128)(2,1)}', space=vmem, size = 0x24000, scoped, tag = 'scratch operand']
  #allocation3 [shape = 'bf16[30,128,64]{2,1,0:T(16,128)(2,1)}', space=vmem, size = 0xf0000, scoped, tag = 'scratch operand']
  #allocation4 [shape = 'bf16[512,512]{1,0:T(16,128)(2,1)}', space=vmem, size = 0x80000, scoped, tag = 'scratch operand']
  #allocation5 [shape = 's32[2]{0}', space=sflag, size = 0x8, scoped, tag = 'scratch operand']
  #allocation6 [shape = 's32[]', space=sflag, size = 0x4, offset = 0, fixed_abs, tag = 'sflag constant byte address 0x0 - dummy sync flag']
  #allocation7 [shape = 's32[]', space=sflag, size = 0x4, offset = 0, fixed_abs, tag = 'sflag constant byte address 0x0 - dummy sync flag']
  %s0 = inlined_call_operand.vmem [shape: bf16[288,420], index: 0, kind: input, shape index: {}]
  %s1 = inlined_call_operand.vmem [shape: bf16[420,256], index: 1, kind: input, shape index: {}]
  %s2 = inlined_call_operand.vmem [shape: f32[1,1664], index: 2, kind: input, shape index: {}]
  %s3 = inlined_call_operand.vmem [shape: bf16[192,64], index: 3, kind: input, shape index: {}]
  %s4 = inlined_call_operand.vmem [shape: bf16[30,128,64], index: 4, kind: input, shape index: {}]
  %s5 = inlined_call_operand.vmem [shape: bf16[512,512], index: 5, kind: input, shape index: {}]
  %s6 = inlined_call_operand.vmem [shape: f32[8,12], index: 6, kind: output, shape index: {}]
  %s7 = sld [smem:[#allocation0]]
  $region97: #{_lambda_.1} parent=0
    _
  %s9 = ssub.s32 1, %s7
  %s10 = scalar_select 0, %s9, %s7
  // Predicated region
  $region2: #{_lambda_.1} parent=0 // pred_check
    _
  $region3: #{_lambda_.1} parent=0 // pred_check_branch
    %12 = sbr.rel (0) target = $region5
  $region4: #{_lambda_.1} parent=0 // pred_region
    _
  $region5: #{_lambda_.1} parent=0 // pred_fallthru
    _
  // Predicated region
  $region6: #{_lambda_.1} parent=0 // pred_check
    _
  $region7: #{_lambda_.1} parent=0 // pred_check_branch
    %14 = sbr.rel (0) target = $region9
  $region8: #{_lambda_.1} parent=0 // pred_region
    _
  $region9: #{_lambda_.1} parent=0 // pred_fallthru
    _
  // Predicated region
  $region10: #{_lambda_.1} parent=0 // pred_check
    _
  $region11: #{_lambda_.1} parent=0 // pred_check_branch
    %16 = sbr.rel (0) target = $region13
  $region12: #{_lambda_.1} parent=0 // pred_region
    _
  $region13: #{_lambda_.1} parent=0 // pred_fallthru
    _
  // Predicated region
  $region14: #{_lambda_.1} parent=0 // pred_check
    _
  $region15: #{_lambda_.1} parent=0 // pred_check_branch
    %18 = sbr.rel (0) target = $region17
  $region16: #{_lambda_.1} parent=0 // pred_region
    _
  $region17: #{_lambda_.1} parent=0 // pred_fallthru
    _
  %p21 = scmp.lt.u32.totalorder 1920, 8
  %p22 = pneg %p21
  // Predicated region
  $region18: #{_lambda_.1} parent=0 // pred_check
    _
  $region19: #{_lambda_.1} parent=0 // pred_check_branch
    %24 = sbr.rel (%p21) target = $region21
  $region20: #{_lambda_.1} parent=0 // pred_region
    %s39 = sand.u32 1920, 7
    %p40 = scmp.eq.s32.totalorder %s39, 0
    // Predicated region
    $region33: #{_lambda_.1} parent=20 // pred_check
      %p41 = pneg %p40
    $region34: #{_lambda_.1} parent=20 // pred_check_branch
      %43 = sbr.rel (%p41) target = $region36
    $region35: #{_lambda_.1} parent=20 // pred_region
      loop: start=0, step=1, limit=1
      $region37: #{_lambda_.1} parent=35 // loop_pre_header
        _
      $region38: #{_lambda_.1} parent=35 // loop_header
        %s45 = sphi 0, %s49
        %p46 = scmp.ge.s32.totalorder %s45, 1
        %s50 = sphi %s4, %s4
        %s51 = sphi [#allocation3], [#allocation3]
      $region39: #{_lambda_.1} parent=35 // loop_header_branch
        %48 = sbr.rel (%p46) target = $region43
      $region40: #{_lambda_.1} parent=35 // loop_body
        %v52 = vld [vmem:[%s50] sm:$0xff]
        %53 = vst [vmem:[%s51] sm:$0xff] %v52
        %v54 = vld [vmem:[%s50 + $0x8] sm:$0xff]
        %55 = vst [vmem:[%s51 + $0x8] sm:$0xff] %v54
        %v56 = vld [vmem:[%s50 + $0x10] sm:$0xff]
        %57 = vst [vmem:[%s51 + $0x10] sm:$0xff] %v56
        %v58 = vld [vmem:[%s50 + $0x18] sm:$0xff]
        %59 = vst [vmem:[%s51 + $0x18] sm:$0xff] %v58
        %v60 = vld [vmem:[%s50 + $0x20] sm:$0xff]
        %61 = vst [vmem:[%s51 + $0x20] sm:$0xff] %v60
        %v62 = vld [vmem:[%s50 + $0x28] sm:$0xff]
        %63 = vst [vmem:[%s51 + $0x28] sm:$0xff] %v62
        %v64 = vld [vmem:[%s50 + $0x30] sm:$0xff]
        %65 = vst [vmem:[%s51 + $0x30] sm:$0xff] %v64
        %v66 = vld [vmem:[%s50 + $0x38] sm:$0xff]
        %67 = vst [vmem:[%s51 + $0x38] sm:$0xff] %v66
        %v68 = vld [vmem:[%s50 + $0x40] sm:$0xff]
        %69 = vst [vmem:[%s51 + $0x40] sm:$0xff] %v68
        %v70 = vld [vmem:[%s50 + $0x48] sm:$0xff]
        %71 = vst [vmem:[%s51 + $0x48] sm:$0xff] %v70
        %v72 = vld [vmem:[%s50 + $0x50] sm:$0xff]
        %73 = vst [vmem:[%s51 + $0x50] sm:$0xff] %v72
        %v74 = vld [vmem:[%s50 + $0x58] sm:$0xff]
        %75 = vst [vmem:[%s51 + $0x58] sm:$0xff] %v74
        %v76 = vld [vmem:[%s50 + $0x60] sm:$0xff]
        %77 = vst [vmem:[%s51 + $0x60] sm:$0xff] %v76
        %v78 = vld [vmem:[%s50 + $0x68] sm:$0xff]
        %79 = vst [vmem:[%s51 + $0x68] sm:$0xff] %v78
        %v80 = vld [vmem:[%s50 + $0x70] sm:$0xff]
        %81 = vst [vmem:[%s51 + $0x70] sm:$0xff] %v80
        %v82 = vld [vmem:[%s50 + $0x78] sm:$0xff]
        %83 = vst [vmem:[%s51 + $0x78] sm:$0xff] %v82
        %v84 = vld [vmem:[%s50 + $0x80] sm:$0xff]
        %85 = vst [vmem:[%s51 + $0x80] sm:$0xff] %v84
        %v86 = vld [vmem:[%s50 + $0x88] sm:$0xff]
        %87 = vst [vmem:[%s51 + $0x88] sm:$0xff] %v86
        %v88 = vld [vmem:[%s50 + $0x90] sm:$0xff]
        %89 = vst [vmem:[%s51 + $0x90] sm:$0xff] %v88
        %v90 = vld [vmem:[%s50 + $0x98] sm:$0xff]
        %91 = vst [vmem:[%s51 + $0x98] sm:$0xff] %v90
        %v92 = vld [vmem:[%s50 + $0xa0] sm:$0xff]
        %93 = vst [vmem:[%s51 + $0xa0] sm:$0xff] %v92
        %v94 = vld [vmem:[%s50 + $0xa8] sm:$0xff]
        %95 = vst [vmem:[%s51 + $0xa8] sm:$0xff] %v94
        %v96 = vld [vmem:[%s50 + $0xb0] sm:$0xff]
        %97 = vst [vmem:[%s51 + $0xb0] sm:$0xff] %v96
        %v98 = vld [vmem:[%s50 + $0xb8] sm:$0xff]
        %99 = vst [vmem:[%s51 + $0xb8] sm:$0xff] %v98
        %v100 = vld [vmem:[%s50 + $0xc0] sm:$0xff]
        %101 = vst [vmem:[%s51 + $0xc0] sm:$0xff] %v100
        %v102 = vld [vmem:[%s50 + $0xc8] sm:$0xff]
        %103 = vst [vmem:[%s51 + $0xc8] sm:$0xff] %v102
        %v104 = vld [vmem:[%s50 + $0xd0] sm:$0xff]
        %105 = vst [vmem:[%s51 + $0xd0] sm:$0xff] %v104
        %v106 = vld [vmem:[%s50 + $0xd8] sm:$0xff]
        %107 = vst [vmem:[%s51 + $0xd8] sm:$0xff] %v106
        %v108 = vld [vmem:[%s50 + $0xe0] sm:$0xff]
        %109 = vst [vmem:[%s51 + $0xe0] sm:$0xff] %v108
        %v110 = vld [vmem:[%s50 + $0xe8] sm:$0xff]
        %111 = vst [vmem:[%s51 + $0xe8] sm:$0xff] %v110
        %v112 = vld [vmem:[%s50 + $0xf0] sm:$0xff]
        %113 = vst [vmem:[%s51 + $0xf0] sm:$0xff] %v112
        %v114 = vld [vmem:[%s50 + $0xf8] sm:$0xff]
        %115 = vst [vmem:[%s51 + $0xf8] sm:$0xff] %v114
        %v116 = vld [vmem:[%s50 + $0x100] sm:$0xff]
        %117 = vst [vmem:[%s51 + $0x100] sm:$0xff] %v116
        %v118 = vld [vmem:[%s50 + $0x108] sm:$0xff]
        %119 = vst [vmem:[%s51 + $0x108] sm:$0xff] %v118
        %v120 = vld [vmem:[%s50 + $0x110] sm:$0xff]
        %121 = vst [vmem:[%s51 + $0x110] sm:$0xff] %v120
        %v122 = vld [vmem:[%s50 + $0x118] sm:$0xff]
        %123 = vst [vmem:[%s51 + $0x118] sm:$0xff] %v122
        %v124 = vld [vmem:[%s50 + $0x120] sm:$0xff]
        %125 = vst [vmem:[%s51 + $0x120] sm:$0xff] %v124
        %v126 = vld [vmem:[%s50 + $0x128] sm:$0xff]
        %127 = vst [vmem:[%s51 + $0x128] sm:$0xff] %v126
        %v128 = vld [vmem:[%s50 + $0x130] sm:$0xff]
        %129 = vst [vmem:[%s51 + $0x130] sm:$0xff] %v128
        %v130 = vld [vmem:[%s50 + $0x138] sm:$0xff]
        %131 = vst [vmem:[%s51 + $0x138] sm:$0xff] %v130
        %v132 = vld [vmem:[%s50 + $0x140] sm:$0xff]
        %133 = vst [vmem:[%s51 + $0x140] sm:$0xff] %v132
        %v134 = vld [vmem:[%s50 + $0x148] sm:$0xff]
        %135 = vst [vmem:[%s51 + $0x148] sm:$0xff] %v134
        %v136 = vld [vmem:[%s50 + $0x150] sm:$0xff]
        %137 = vst [vmem:[%s51 + $0x150] sm:$0xff] %v136
        %v138 = vld [vmem:[%s50 + $0x158] sm:$0xff]
        %139 = vst [vmem:[%s51 + $0x158] sm:$0xff] %v138
        %v140 = vld [vmem:[%s50 + $0x160] sm:$0xff]
        %141 = vst [vmem:[%s51 + $0x160] sm:$0xff] %v140
        %v142 = vld [vmem:[%s50 + $0x168] sm:$0xff]
        %143 = vst [vmem:[%s51 + $0x168] sm:$0xff] %v142
        %v144 = vld [vmem:[%s50 + $0x170] sm:$0xff]
        %145 = vst [vmem:[%s51 + $0x170] sm:$0xff] %v144
        %v146 = vld [vmem:[%s50 + $0x178] sm:$0xff]
        %147 = vst [vmem:[%s51 + $0x178] sm:$0xff] %v146
        %v148 = vld [vmem:[%s50 + $0x180] sm:$0xff]
        %149 = vst [vmem:[%s51 + $0x180] sm:$0xff] %v148
        %v150 = vld [vmem:[%s50 + $0x188] sm:$0xff]
        %151 = vst [vmem:[%s51 + $0x188] sm:$0xff] %v150
        %v152 = vld [vmem:[%s50 + $0x190] sm:$0xff]
        %153 = vst [vmem:[%s51 + $0x190] sm:$0xff] %v152
        %v154 = vld [vmem:[%s50 + $0x198] sm:$0xff]
        %155 = vst [vmem:[%s51 + $0x198] sm:$0xff] %v154
        %v156 = vld [vmem:[%s50 + $0x1a0] sm:$0xff]
        %157 = vst [vmem:[%s51 + $0x1a0] sm:$0xff] %v156
        %v158 = vld [vmem:[%s50 + $0x1a8] sm:$0xff]
        %159 = vst [vmem:[%s51 + $0x1a8] sm:$0xff] %v158
        %v160 = vld [vmem:[%s50 + $0x1b0] sm:$0xff]
        %161 = vst [vmem:[%s51 + $0x1b0] sm:$0xff] %v160
        %v162 = vld [vmem:[%s50 + $0x1b8] sm:$0xff]
        %163 = vst [vmem:[%s51 + $0x1b8] sm:$0xff] %v162
        %v164 = vld [vmem:[%s50 + $0x1c0] sm:$0xff]
        %165 = vst [vmem:[%s51 + $0x1c0] sm:$0xff] %v164
        %v166 = vld [vmem:[%s50 + $0x1c8] sm:$0xff]
        %167 = vst [vmem:[%s51 + $0x1c8] sm:$0xff] %v166
        %v168 = vld [vmem:[%s50 + $0x1d0] sm:$0xff]
        %169 = vst [vmem:[%s51 + $0x1d0] sm:$0xff] %v168
        %v170 = vld [vmem:[%s50 + $0x1d8] sm:$0xff]
        %171 = vst [vmem:[%s51 + $0x1d8] sm:$0xff] %v170
        %v172 = vld [vmem:[%s50 + $0x1e0] sm:$0xff]
        %173 = vst [vmem:[%s51 + $0x1e0] sm:$0xff] %v172
        %v174 = vld [vmem:[%s50 + $0x1e8] sm:$0xff]
        %175 = vst [vmem:[%s51 + $0x1e8] sm:$0xff] %v174
        %v176 = vld [vmem:[%s50 + $0x1f0] sm:$0xff]
        %177 = vst [vmem:[%s51 + $0x1f0] sm:$0xff] %v176
        %v178 = vld [vmem:[%s50 + $0x1f8] sm:$0xff]
        %179 = vst [vmem:[%s51 + $0x1f8] sm:$0xff] %v178
        %v180 = vld [vmem:[%s50 + $0x200] sm:$0xff]
        %181 = vst [vmem:[%s51 + $0x200] sm:$0xff] %v180
        %v182 = vld [vmem:[%s50 + $0x208] sm:$0xff]
        %183 = vst [vmem:[%s51 + $0x208] sm:$0xff] %v182
        %v184 = vld [vmem:[%s50 + $0x210] sm:$0xff]
        %185 = vst [vmem:[%s51 + $0x210] sm:$0xff] %v184
        %v186 = vld [vmem:[%s50 + $0x218] sm:$0xff]
        %187 = vst [vmem:[%s51 + $0x218] sm:$0xff] %v186
        %v188 = vld [vmem:[%s50 + $0x220] sm:$0xff]
        %189 = vst [vmem:[%s51 + $0x220] sm:$0xff] %v188
        %v190 = vld [vmem:[%s50 + $0x228] sm:$0xff]
        %191 = vst [vmem:[%s51 + $0x228] sm:$0xff] %v190
        %v192 = vld [vmem:[%s50 + $0x230] sm:$0xff]
        %193 = vst [vmem:[%s51 + $0x230] sm:$0xff] %v192
        %v194 = vld [vmem:[%s50 + $0x238] sm:$0xff]
        %195 = vst [vmem:[%s51 + $0x238] sm:$0xff] %v194
        %v196 = vld [vmem:[%s50 + $0x240] sm:$0xff]
        %197 = vst [vmem:[%s51 + $0x240] sm:$0xff] %v196
        %v198 = vld [vmem:[%s50 + $0x248] sm:$0xff]
        %199 = vst [vmem:[%s51 + $0x248] sm:$0xff] %v198
        %v200 = vld [vmem:[%s50 + $0x250] sm:$0xff]
        %201 = vst [vmem:[%s51 + $0x250] sm:$0xff] %v200
        %v202 = vld [vmem:[%s50 + $0x258] sm:$0xff]
        %203 = vst [vmem:[%s51 + $0x258] sm:$0xff] %v202
        %v204 = vld [vmem:[%s50 + $0x260] sm:$0xff]
        %205 = vst [vmem:[%s51 + $0x260] sm:$0xff] %v204
        %v206 = vld [vmem:[%s50 + $0x268] sm:$0xff]
        %207 = vst [vmem:[%s51 + $0x268] sm:$0xff] %v206
        %v208 = vld [vmem:[%s50 + $0x270] sm:$0xff]
        %209 = vst [vmem:[%s51 + $0x270] sm:$0xff] %v208
        %v210 = vld [vmem:[%s50 + $0x278] sm:$0xff]
        %211 = vst [vmem:[%s51 + $0x278] sm:$0xff] %v210
        %v212 = vld [vmem:[%s50 + $0x280] sm:$0xff]
        %213 = vst [vmem:[%s51 + $0x280] sm:$0xff] %v212
        %v214 = vld [vmem:[%s50 + $0x288] sm:$0xff]
        %215 = vst [vmem:[%s51 + $0x288] sm:$0xff] %v214
        %v216 = vld [vmem:[%s50 + $0x290] sm:$0xff]
        %217 = vst [vmem:[%s51 + $0x290] sm:$0xff] %v216
        %v218 = vld [vmem:[%s50 + $0x298] sm:$0xff]
        %219 = vst [vmem:[%s51 + $0x298] sm:$0xff] %v218
        %v220 = vld [vmem:[%s50 + $0x2a0] sm:$0xff]
        %221 = vst [vmem:[%s51 + $0x2a0] sm:$0xff] %v220
        %v222 = vld [vmem:[%s50 + $0x2a8] sm:$0xff]
        %223 = vst [vmem:[%s51 + $0x2a8] sm:$0xff] %v222
        %v224 = vld [vmem:[%s50 + $0x2b0] sm:$0xff]
        %225 = vst [vmem:[%s51 + $0x2b0] sm:$0xff] %v224
        %v226 = vld [vmem:[%s50 + $0x2b8] sm:$0xff]
        %227 = vst [vmem:[%s51 + $0x2b8] sm:$0xff] %v226
        %v228 = vld [vmem:[%s50 + $0x2c0] sm:$0xff]
        %229 = vst [vmem:[%s51 + $0x2c0] sm:$0xff] %v228
        %v230 = vld [vmem:[%s50 + $0x2c8] sm:$0xff]
        %231 = vst [vmem:[%s51 + $0x2c8] sm:$0xff] %v230
        %v232 = vld [vmem:[%s50 + $0x2d0] sm:$0xff]
        %233 = vst [vmem:[%s51 + $0x2d0] sm:$0xff] %v232
        %v234 = vld [vmem:[%s50 + $0x2d8] sm:$0xff]
        %235 = vst [vmem:[%s51 + $0x2d8] sm:$0xff] %v234
        %v236 = vld [vmem:[%s50 + $0x2e0] sm:$0xff]
        %237 = vst [vmem:[%s51 + $0x2e0] sm:$0xff] %v236
        %v238 = vld [vmem:[%s50 + $0x2e8] sm:$0xff]
        %239 = vst [vmem:[%s51 + $0x2e8] sm:$0xff] %v238
        %v240 = vld [vmem:[%s50 + $0x2f0] sm:$0xff]
        %241 = vst [vmem:[%s51 + $0x2f0] sm:$0xff] %v240
        %v242 = vld [vmem:[%s50 + $0x2f8] sm:$0xff]
        %243 = vst [vmem:[%s51 + $0x2f8] sm:$0xff] %v242
        %v244 = vld [vmem:[%s50 + $0x300] sm:$0xff]
        %245 = vst [vmem:[%s51 + $0x300] sm:$0xff] %v244
        %v246 = vld [vmem:[%s50 + $0x308] sm:$0xff]
        %247 = vst [vmem:[%s51 + $0x308] sm:$0xff] %v246
        %v248 = vld [vmem:[%s50 + $0x310] sm:$0xff]
        %249 = vst [vmem:[%s51 + $0x310] sm:$0xff] %v248
        %v250 = vld [vmem:[%s50 + $0x318] sm:$0xff]
        %251 = vst [vmem:[%s51 + $0x318] sm:$0xff] %v250
        %v252 = vld [vmem:[%s50 + $0x320] sm:$0xff]
        %253 = vst [vmem:[%s51 + $0x320] sm:$0xff] %v252
        %v254 = vld [vmem:[%s50 + $0x328] sm:$0xff]
        %255 = vst [vmem:[%s51 + $0x328] sm:$0xff] %v254
        %v256 = vld [vmem:[%s50 + $0x330] sm:$0xff]
        %257 = vst [vmem:[%s51 + $0x330] sm:$0xff] %v256
        %v258 = vld [vmem:[%s50 + $0x338] sm:$0xff]
        %259 = vst [vmem:[%s51 + $0x338] sm:$0xff] %v258
        %v260 = vld [vmem:[%s50 + $0x340] sm:$0xff]
        %261 = vst [vmem:[%s51 + $0x340] sm:$0xff] %v260
        %v262 = vld [vmem:[%s50 + $0x348] sm:$0xff]
        %263 = vst [vmem:[%s51 + $0x348] sm:$0xff] %v262
        %v264 = vld [vmem:[%s50 + $0x350] sm:$0xff]
        %265 = vst [vmem:[%s51 + $0x350] sm:$0xff] %v264
        %v266 = vld [vmem:[%s50 + $0x358] sm:$0xff]
        %267 = vst [vmem:[%s51 + $0x358] sm:$0xff] %v266
        %v268 = vld [vmem:[%s50 + $0x360] sm:$0xff]
        %269 = vst [vmem:[%s51 + $0x360] sm:$0xff] %v268
        %v270 = vld [vmem:[%s50 + $0x368] sm:$0xff]
        %271 = vst [vmem:[%s51 + $0x368] sm:$0xff] %v270
        %v272 = vld [vmem:[%s50 + $0x370] sm:$0xff]
        %273 = vst [vmem:[%s51 + $0x370] sm:$0xff] %v272
        %v274 = vld [vmem:[%s50 + $0x378] sm:$0xff]
        %275 = vst [vmem:[%s51 + $0x378] sm:$0xff] %v274
        %v276 = vld [vmem:[%s50 + $0x380] sm:$0xff]
        %277 = vst [vmem:[%s51 + $0x380] sm:$0xff] %v276
        %v278 = vld [vmem:[%s50 + $0x388] sm:$0xff]
        %279 = vst [vmem:[%s51 + $0x388] sm:$0xff] %v278
        %v280 = vld [vmem:[%s50 + $0x390] sm:$0xff]
        %281 = vst [vmem:[%s51 + $0x390] sm:$0xff] %v280
        %v282 = vld [vmem:[%s50 + $0x398] sm:$0xff]
        %283 = vst [vmem:[%s51 + $0x398] sm:$0xff] %v282
        %v284 = vld [vmem:[%s50 + $0x3a0] sm:$0xff]
        %285 = vst [vmem:[%s51 + $0x3a0] sm:$0xff] %v284
        %v286 = vld [vmem:[%s50 + $0x3a8] sm:$0xff]
        %287 = vst [vmem:[%s51 + $0x3a8] sm:$0xff] %v286
        %v288 = vld [vmem:[%s50 + $0x3b0] sm:$0xff]
        %289 = vst [vmem:[%s51 + $0x3b0] sm:$0xff] %v288
        %v290 = vld [vmem:[%s50 + $0x3b8] sm:$0xff]
        %291 = vst [vmem:[%s51 + $0x3b8] sm:$0xff] %v290
        %v292 = vld [vmem:[%s50 + $0x3c0] sm:$0xff]
        %293 = vst [vmem:[%s51 + $0x3c0] sm:$0xff] %v292
        %v294 = vld [vmem:[%s50 + $0x3c8] sm:$0xff]
        %295 = vst [vmem:[%s51 + $0x3c8] sm:$0xff] %v294
        %v296 = vld [vmem:[%s50 + $0x3d0] sm:$0xff]
        %297 = vst [vmem:[%s51 + $0x3d0] sm:$0xff] %v296
        %v298 = vld [vmem:[%s50 + $0x3d8] sm:$0xff]
        %299 = vst [vmem:[%s51 + $0x3d8] sm:$0xff] %v298
        %v300 = vld [vmem:[%s50 + $0x3e0] sm:$0xff]
        %301 = vst [vmem:[%s51 + $0x3e0] sm:$0xff] %v300
        %v302 = vld [vmem:[%s50 + $0x3e8] sm:$0xff]
        %303 = vst [vmem:[%s51 + $0x3e8] sm:$0xff] %v302
        %v304 = vld [vmem:[%s50 + $0x3f0] sm:$0xff]
        %305 = vst [vmem:[%s51 + $0x3f0] sm:$0xff] %v304
        %v306 = vld [vmem:[%s50 + $0x3f8] sm:$0xff]
        %307 = vst [vmem:[%s51 + $0x3f8] sm:$0xff] %v306
        %v308 = vld [vmem:[%s50 + $0x400] sm:$0xff]
        %309 = vst [vmem:[%s51 + $0x400] sm:$0xff] %v308
        %v310 = vld [vmem:[%s50 + $0x408] sm:$0xff]
        %311 = vst [vmem:[%s51 + $0x408] sm:$0xff] %v310
        %v312 = vld [vmem:[%s50 + $0x410] sm:$0xff]
        %313 = vst [vmem:[%s51 + $0x410] sm:$0xff] %v312
        %v314 = vld [vmem:[%s50 + $0x418] sm:$0xff]
        %315 = vst [vmem:[%s51 + $0x418] sm:$0xff] %v314
        %v316 = vld [vmem:[%s50 + $0x420] sm:$0xff]
        %317 = vst [vmem:[%s51 + $0x420] sm:$0xff] %v316
        %v318 = vld [vmem:[%s50 + $0x428] sm:$0xff]
        %319 = vst [vmem:[%s51 + $0x428] sm:$0xff] %v318
        %v320 = vld [vmem:[%s50 + $0x430] sm:$0xff]
        %321 = vst [vmem:[%s51 + $0x430] sm:$0xff] %v320
        %v322 = vld [vmem:[%s50 + $0x438] sm:$0xff]
        %323 = vst [vmem:[%s51 + $0x438] sm:$0xff] %v322
        %v324 = vld [vmem:[%s50 + $0x440] sm:$0xff]
        %325 = vst [vmem:[%s51 + $0x440] sm:$0xff] %v324
        %v326 = vld [vmem:[%s50 + $0x448] sm:$0xff]
        %327 = vst [vmem:[%s51 + $0x448] sm:$0xff] %v326
        %v328 = vld [vmem:[%s50 + $0x450] sm:$0xff]
        %329 = vst [vmem:[%s51 + $0x450] sm:$0xff] %v328
        %v330 = vld [vmem:[%s50 + $0x458] sm:$0xff]
        %331 = vst [vmem:[%s51 + $0x458] sm:$0xff] %v330
        %v332 = vld [vmem:[%s50 + $0x460] sm:$0xff]
        %333 = vst [vmem:[%s51 + $0x460] sm:$0xff] %v332
        %v334 = vld [vmem:[%s50 + $0x468] sm:$0xff]
        %335 = vst [vmem:[%s51 + $0x468] sm:$0xff] %v334
        %v336 = vld [vmem:[%s50 + $0x470] sm:$0xff]
        %337 = vst [vmem:[%s51 + $0x470] sm:$0xff] %v336
        %v338 = vld [vmem:[%s50 + $0x478] sm:$0xff]
        %339 = vst [vmem:[%s51 + $0x478] sm:$0xff] %v338
        %v340 = vld [vmem:[%s50 + $0x480] sm:$0xff]
        %341 = vst [vmem:[%s51 + $0x480] sm:$0xff] %v340
        %v342 = vld [vmem:[%s50 + $0x488] sm:$0xff]
        %343 = vst [vmem:[%s51 + $0x488] sm:$0xff] %v342
        %v344 = vld [vmem:[%s50 + $0x490] sm:$0xff]
        %345 = vst [vmem:[%s51 + $0x490] sm:$0xff] %v344
        %v346 = vld [vmem:[%s50 + $0x498] sm:$0xff]
        %347 = vst [vmem:[%s51 + $0x498] sm:$0xff] %v346
        %v348 = vld [vmem:[%s50 + $0x4a0] sm:$0xff]
        %349 = vst [vmem:[%s51 + $0x4a0] sm:$0xff] %v348
        %v350 = vld [vmem:[%s50 + $0x4a8] sm:$0xff]
        %351 = vst [vmem:[%s51 + $0x4a8] sm:$0xff] %v350
        %v352 = vld [vmem:[%s50 + $0x4b0] sm:$0xff]
        %353 = vst [vmem:[%s51 + $0x4b0] sm:$0xff] %v352
        %v354 = vld [vmem:[%s50 + $0x4b8] sm:$0xff]
        %355 = vst [vmem:[%s51 + $0x4b8] sm:$0xff] %v354
        %v356 = vld [vmem:[%s50 + $0x4c0] sm:$0xff]
        %357 = vst [vmem:[%s51 + $0x4c0] sm:$0xff] %v356
        %v358 = vld [vmem:[%s50 + $0x4c8] sm:$0xff]
        %359 = vst [vmem:[%s51 + $0x4c8] sm:$0xff] %v358
        %v360 = vld [vmem:[%s50 + $0x4d0] sm:$0xff]
        %361 = vst [vmem:[%s51 + $0x4d0] sm:$0xff] %v360
        %v362 = vld [vmem:[%s50 + $0x4d8] sm:$0xff]
        %363 = vst [vmem:[%s51 + $0x4d8] sm:$0xff] %v362
        %v364 = vld [vmem:[%s50 + $0x4e0] sm:$0xff]
        %365 = vst [vmem:[%s51 + $0x4e0] sm:$0xff] %v364
        %v366 = vld [vmem:[%s50 + $0x4e8] sm:$0xff]
        %367 = vst [vmem:[%s51 + $0x4e8] sm:$0xff] %v366
        %v368 = vld [vmem:[%s50 + $0x4f0] sm:$0xff]
        %369 = vst [vmem:[%s51 + $0x4f0] sm:$0xff] %v368
        %v370 = vld [vmem:[%s50 + $0x4f8] sm:$0xff]
        %371 = vst [vmem:[%s51 + $0x4f8] sm:$0xff] %v370
        %v372 = vld [vmem:[%s50 + $0x500] sm:$0xff]
        %373 = vst [vmem:[%s51 + $0x500] sm:$0xff] %v372
        %v374 = vld [vmem:[%s50 + $0x508] sm:$0xff]
        %375 = vst [vmem:[%s51 + $0x508] sm:$0xff] %v374
        %v376 = vld [vmem:[%s50 + $0x510] sm:$0xff]
        %377 = vst [vmem:[%s51 + $0x510] sm:$0xff] %v376
        %v378 = vld [vmem:[%s50 + $0x518] sm:$0xff]
        %379 = vst [vmem:[%s51 + $0x518] sm:$0xff] %v378
        %v380 = vld [vmem:[%s50 + $0x520] sm:$0xff]
        %381 = vst [vmem:[%s51 + $0x520] sm:$0xff] %v380
        %v382 = vld [vmem:[%s50 + $0x528] sm:$0xff]
        %383 = vst [vmem:[%s51 + $0x528] sm:$0xff] %v382
        %v384 = vld [vmem:[%s50 + $0x530] sm:$0xff]
        %385 = vst [vmem:[%s51 + $0x530] sm:$0xff] %v384
        %v386 = vld [vmem:[%s50 + $0x538] sm:$0xff]
        %387 = vst [vmem:[%s51 + $0x538] sm:$0xff] %v386
        %v388 = vld [vmem:[%s50 + $0x540] sm:$0xff]
        %389 = vst [vmem:[%s51 + $0x540] sm:$0xff] %v388
        %v390 = vld [vmem:[%s50 + $0x548] sm:$0xff]
        %391 = vst [vmem:[%s51 + $0x548] sm:$0xff] %v390
        %v392 = vld [vmem:[%s50 + $0x550] sm:$0xff]
        %393 = vst [vmem:[%s51 + $0x550] sm:$0xff] %v392
        %v394 = vld [vmem:[%s50 + $0x558] sm:$0xff]
        %395 = vst [vmem:[%s51 + $0x558] sm:$0xff] %v394
        %v396 = vld [vmem:[%s50 + $0x560] sm:$0xff]
        %397 = vst [vmem:[%s51 + $0x560] sm:$0xff] %v396
        %v398 = vld [vmem:[%s50 + $0x568] sm:$0xff]
        %399 = vst [vmem:[%s51 + $0x568] sm:$0xff] %v398
        %v400 = vld [vmem:[%s50 + $0x570] sm:$0xff]
        %401 = vst [vmem:[%s51 + $0x570] sm:$0xff] %v400
        %v402 = vld [vmem:[%s50 + $0x578] sm:$0xff]
        %403 = vst [vmem:[%s51 + $0x578] sm:$0xff] %v402
        %v404 = vld [vmem:[%s50 + $0x580] sm:$0xff]
        %405 = vst [vmem:[%s51 + $0x580] sm:$0xff] %v404
        %v406 = vld [vmem:[%s50 + $0x588] sm:$0xff]
        %407 = vst [vmem:[%s51 + $0x588] sm:$0xff] %v406
        %v408 = vld [vmem:[%s50 + $0x590] sm:$0xff]
        %409 = vst [vmem:[%s51 + $0x590] sm:$0xff] %v408
        %v410 = vld [vmem:[%s50 + $0x598] sm:$0xff]
        %411 = vst [vmem:[%s51 + $0x598] sm:$0xff] %v410
        %v412 = vld [vmem:[%s50 + $0x5a0] sm:$0xff]
        %413 = vst [vmem:[%s51 + $0x5a0] sm:$0xff] %v412
        %v414 = vld [vmem:[%s50 + $0x5a8] sm:$0xff]
        %415 = vst [vmem:[%s51 + $0x5a8] sm:$0xff] %v414
        %v416 = vld [vmem:[%s50 + $0x5b0] sm:$0xff]
        %417 = vst [vmem:[%s51 + $0x5b0] sm:$0xff] %v416
        %v418 = vld [vmem:[%s50 + $0x5b8] sm:$0xff]
        %419 = vst [vmem:[%s51 + $0x5b8] sm:$0xff] %v418
        %v420 = vld [vmem:[%s50 + $0x5c0] sm:$0xff]
        %421 = vst [vmem:[%s51 + $0x5c0] sm:$0xff] %v420
        %v422 = vld [vmem:[%s50 + $0x5c8] sm:$0xff]
        %423 = vst [vmem:[%s51 + $0x5c8] sm:$0xff] %v422
        %v424 = vld [vmem:[%s50 + $0x5d0] sm:$0xff]
        %425 = vst [vmem:[%s51 + $0x5d0] sm:$0xff] %v424
        %v426 = vld [vmem:[%s50 + $0x5d8] sm:$0xff]
        %427 = vst [vmem:[%s51 + $0x5d8] sm:$0xff] %v426
        %v428 = vld [vmem:[%s50 + $0x5e0] sm:$0xff]
        %429 = vst [vmem:[%s51 + $0x5e0] sm:$0xff] %v428
        %v430 = vld [vmem:[%s50 + $0x5e8] sm:$0xff]
        %431 = vst [vmem:[%s51 + $0x5e8] sm:$0xff] %v430
        %v432 = vld [vmem:[%s50 + $0x5f0] sm:$0xff]
        %433 = vst [vmem:[%s51 + $0x5f0] sm:$0xff] %v432
        %v434 = vld [vmem:[%s50 + $0x5f8] sm:$0xff]
        %435 = vst [vmem:[%s51 + $0x5f8] sm:$0xff] %v434
        %v436 = vld [vmem:[%s50 + $0x600] sm:$0xff]
        %437 = vst [vmem:[%s51 + $0x600] sm:$0xff] %v436
        %v438 = vld [vmem:[%s50 + $0x608] sm:$0xff]
        %439 = vst [vmem:[%s51 + $0x608] sm:$0xff] %v438
        %v440 = vld [vmem:[%s50 + $0x610] sm:$0xff]
        %441 = vst [vmem:[%s51 + $0x610] sm:$0xff] %v440
        %v442 = vld [vmem:[%s50 + $0x618] sm:$0xff]
        %443 = vst [vmem:[%s51 + $0x618] sm:$0xff] %v442
        %v444 = vld [vmem:[%s50 + $0x620] sm:$0xff]
        %445 = vst [vmem:[%s51 + $0x620] sm:$0xff] %v444
        %v446 = vld [vmem:[%s50 + $0x628] sm:$0xff]
        %447 = vst [vmem:[%s51 + $0x628] sm:$0xff] %v446
        %v448 = vld [vmem:[%s50 + $0x630] sm:$0xff]
        %449 = vst [vmem:[%s51 + $0x630] sm:$0xff] %v448
        %v450 = vld [vmem:[%s50 + $0x638] sm:$0xff]
        %451 = vst [vmem:[%s51 + $0x638] sm:$0xff] %v450
        %v452 = vld [vmem:[%s50 + $0x640] sm:$0xff]
        %453 = vst [vmem:[%s51 + $0x640] sm:$0xff] %v452
        %v454 = vld [vmem:[%s50 + $0x648] sm:$0xff]
        %455 = vst [vmem:[%s51 + $0x648] sm:$0xff] %v454
        %v456 = vld [vmem:[%s50 + $0x650] sm:$0xff]
        %457 = vst [vmem:[%s51 + $0x650] sm:$0xff] %v456
        %v458 = vld [vmem:[%s50 + $0x658] sm:$0xff]
        %459 = vst [vmem:[%s51 + $0x658] sm:$0xff] %v458
        %v460 = vld [vmem:[%s50 + $0x660] sm:$0xff]
        %461 = vst [vmem:[%s51 + $0x660] sm:$0xff] %v460
        %v462 = vld [vmem:[%s50 + $0x668] sm:$0xff]
        %463 = vst [vmem:[%s51 + $0x668] sm:$0xff] %v462
        %v464 = vld [vmem:[%s50 + $0x670] sm:$0xff]
        %465 = vst [vmem:[%s51 + $0x670] sm:$0xff] %v464
        %v466 = vld [vmem:[%s50 + $0x678] sm:$0xff]
        %467 = vst [vmem:[%s51 + $0x678] sm:$0xff] %v466
        %v468 = vld [vmem:[%s50 + $0x680] sm:$0xff]
        %469 = vst [vmem:[%s51 + $0x680] sm:$0xff] %v468
        %v470 = vld [vmem:[%s50 + $0x688] sm:$0xff]
        %471 = vst [vmem:[%s51 + $0x688] sm:$0xff] %v470
        %v472 = vld [vmem:[%s50 + $0x690] sm:$0xff]
        %473 = vst [vmem:[%s51 + $0x690] sm:$0xff] %v472
        %v474 = vld [vmem:[%s50 + $0x698] sm:$0xff]
        %475 = vst [vmem:[%s51 + $0x698] sm:$0xff] %v474
        %v476 = vld [vmem:[%s50 + $0x6a0] sm:$0xff]
        %477 = vst [vmem:[%s51 + $0x6a0] sm:$0xff] %v476
        %v478 = vld [vmem:[%s50 + $0x6a8] sm:$0xff]
        %479 = vst [vmem:[%s51 + $0x6a8] sm:$0xff] %v478
        %v480 = vld [vmem:[%s50 + $0x6b0] sm:$0xff]
        %481 = vst [vmem:[%s51 + $0x6b0] sm:$0xff] %v480
        %v482 = vld [vmem:[%s50 + $0x6b8] sm:$0xff]
        %483 = vst [vmem:[%s51 + $0x6b8] sm:$0xff] %v482
        %v484 = vld [vmem:[%s50 + $0x6c0] sm:$0xff]
        %485 = vst [vmem:[%s51 + $0x6c0] sm:$0xff] %v484
        %v486 = vld [vmem:[%s50 + $0x6c8] sm:$0xff]
        %487 = vst [vmem:[%s51 + $0x6c8] sm:$0xff] %v486
        %v488 = vld [vmem:[%s50 + $0x6d0] sm:$0xff]
        %489 = vst [vmem:[%s51 + $0x6d0] sm:$0xff] %v488
        %v490 = vld [vmem:[%s50 + $0x6d8] sm:$0xff]
        %491 = vst [vmem:[%s51 + $0x6d8] sm:$0xff] %v490
        %v492 = vld [vmem:[%s50 + $0x6e0] sm:$0xff]
        %493 = vst [vmem:[%s51 + $0x6e0] sm:$0xff] %v492
        %v494 = vld [vmem:[%s50 + $0x6e8] sm:$0xff]
        %495 = vst [vmem:[%s51 + $0x6e8] sm:$0xff] %v494
        %v496 = vld [vmem:[%s50 + $0x6f0] sm:$0xff]
        %497 = vst [vmem:[%s51 + $0x6f0] sm:$0xff] %v496
        %v498 = vld [vmem:[%s50 + $0x6f8] sm:$0xff]
        %499 = vst [vmem:[%s51 + $0x6f8] sm:$0xff] %v498
        %v500 = vld [vmem:[%s50 + $0x700] sm:$0xff]
        %501 = vst [vmem:[%s51 + $0x700] sm:$0xff] %v500
        %v502 = vld [vmem:[%s50 + $0x708] sm:$0xff]
        %503 = vst [vmem:[%s51 + $0x708] sm:$0xff] %v502
        %v504 = vld [vmem:[%s50 + $0x710] sm:$0xff]
        %505 = vst [vmem:[%s51 + $0x710] sm:$0xff] %v504
        %v506 = vld [vmem:[%s50 + $0x718] sm:$0xff]
        %507 = vst [vmem:[%s51 + $0x718] sm:$0xff] %v506
        %v508 = vld [vmem:[%s50 + $0x720] sm:$0xff]
        %509 = vst [vmem:[%s51 + $0x720] sm:$0xff] %v508
        %v510 = vld [vmem:[%s50 + $0x728] sm:$0xff]
        %511 = vst [vmem:[%s51 + $0x728] sm:$0xff] %v510
        %v512 = vld [vmem:[%s50 + $0x730] sm:$0xff]
        %513 = vst [vmem:[%s51 + $0x730] sm:$0xff] %v512
        %v514 = vld [vmem:[%s50 + $0x738] sm:$0xff]
        %515 = vst [vmem:[%s51 + $0x738] sm:$0xff] %v514
        %v516 = vld [vmem:[%s50 + $0x740] sm:$0xff]
        %517 = vst [vmem:[%s51 + $0x740] sm:$0xff] %v516
        %v518 = vld [vmem:[%s50 + $0x748] sm:$0xff]
        %519 = vst [vmem:[%s51 + $0x748] sm:$0xff] %v518
        %v520 = vld [vmem:[%s50 + $0x750] sm:$0xff]
        %521 = vst [vmem:[%s51 + $0x750] sm:$0xff] %v520
        %v522 = vld [vmem:[%s50 + $0x758] sm:$0xff]
        %523 = vst [vmem:[%s51 + $0x758] sm:$0xff] %v522
        %v524 = vld [vmem:[%s50 + $0x760] sm:$0xff]
        %525 = vst [vmem:[%s51 + $0x760] sm:$0xff] %v524
        %v526 = vld [vmem:[%s50 + $0x768] sm:$0xff]
        %527 = vst [vmem:[%s51 + $0x768] sm:$0xff] %v526
        %v528 = vld [vmem:[%s50 + $0x770] sm:$0xff]
        %529 = vst [vmem:[%s51 + $0x770] sm:$0xff] %v528
        %v530 = vld [vmem:[%s50 + $0x778] sm:$0xff]
        %531 = vst [vmem:[%s51 + $0x778] sm:$0xff] %v530
      $region41: #{_lambda_.1} parent=35 // loop_footer
        %s49 = sadd.s32 1, %s45
      $region42: #{_lambda_.1} parent=35 // loop_footer_branch
        %44 = sbr.rel target = $region38
      $region43: #{_lambda_.1} parent=35 // loop_exit
        _
    $region36: #{_lambda_.1} parent=20 // pred_fallthru
      _
    %p532 = pneg %p40
    // Predicated region
    $region44: #{_lambda_.1} parent=20 // pred_check
      _
    $region45: #{_lambda_.1} parent=20 // pred_check_branch
      %534 = sbr.rel (%p40) target = $region47
    $region46: #{_lambda_.1} parent=20 // pred_region
      %s535 = sand.u32 1920, 7
    $region47: #{_lambda_.1} parent=20 // pred_fallthru
      _
  $region21: #{_lambda_.1} parent=0 // pred_fallthru
    _
  // Predicated region
  $region22: #{_lambda_.1} parent=0 // pred_check
    %p25 = pneg %p21
  $region23: #{_lambda_.1} parent=0 // pred_check_branch
    %27 = sbr.rel (%p25) target = $region25
  $region24: #{_lambda_.1} parent=0 // pred_region
    %s28 = sshllo.u32 0, 1920
    loop: start=0, step=1, limit=1
    $region26: #{_lambda_.1} parent=24 // loop_pre_header
      _
    $region27: #{_lambda_.1} parent=24 // loop_header
      %s30 = sphi 0, %s34
      %p31 = scmp.ge.s32.totalorder %s30, 1
      %s35 = sphi %s4, %s4
      %s36 = sphi [#allocation3], [#allocation3]
    $region28: #{_lambda_.1} parent=24 // loop_header_branch
      %33 = sbr.rel (%p31) target = $region32
    $region29: #{_lambda_.1} parent=24 // loop_body
      %v37 = vld [vmem:[%s35] sm:%s28]
      %38 = vst [vmem:[%s36] sm:%s28] %v37
    $region30: #{_lambda_.1} parent=24 // loop_footer
      %s34 = sadd.s32 1, %s30
    $region31: #{_lambda_.1} parent=24 // loop_footer_branch
      %29 = sbr.rel target = $region27
    $region32: #{_lambda_.1} parent=24 // loop_exit
      _
  $region25: #{_lambda_.1} parent=0 // pred_fallthru
    _
  // Predicated region
  $region48: #{_lambda_.1} parent=0 // pred_check
    _
  $region49: #{_lambda_.1} parent=0 // pred_check_branch
    %538 = sbr.rel (0) target = $region51
  $region50: #{_lambda_.1} parent=0 // pred_region
    %539 = vsyncadd [#allocation5], 30720
  $region51: #{_lambda_.1} parent=0 // pred_fallthru
    _
  %s540 = scalar_lea.sflag [#allocation5], 1
  %p542 = scmp.lt.u32.totalorder 4, 8
  %p543 = pneg %p542
  // Predicated region
  $region52: #{_lambda_.1} parent=0 // pred_check
    _
  $region53: #{_lambda_.1} parent=0 // pred_check_branch
    %545 = sbr.rel (%p542) target = $region55
  $region54: #{_lambda_.1} parent=0 // pred_region
    %s1070 = sand.u32 4, 7
    %p1071 = scmp.eq.s32.totalorder %s1070, 0
    %p1072 = pneg %p1071
    // Predicated region
    $region67: #{_lambda_.1} parent=54 // pred_check
      _
    $region68: #{_lambda_.1} parent=54 // pred_check_branch
      %1074 = sbr.rel (%p1071) target = $region70
    $region69: #{_lambda_.1} parent=54 // pred_region
      %s1075 = sand.u32 4, 7
      %s1076 = ssub.s32 4, %s1075
      %s1077 = scalar_lea.vmem %s5, %s1076
      %s1078 = ssub.s32 4, %s1075
      %s1079 = scalar_lea.vmem [#allocation4], %s1078
      loop: start=0, step=1, limit=1
      $region71: #{_lambda_.1} parent=69 // loop_pre_header
        _
      $region72: #{_lambda_.1} parent=69 // loop_header
        %s1081 = sphi 0, %s1085
        %p1082 = scmp.ge.s32.totalorder %s1081, 1
        %s1086 = sphi %s5, %s5
        %s1087 = sphi [#allocation4], [#allocation4]
      $region73: #{_lambda_.1} parent=69 // loop_header_branch
        %1084 = sbr.rel (%p1082) target = $region77
      $region74: #{_lambda_.1} parent=69 // loop_body
        _
      $region75: #{_lambda_.1} parent=69 // loop_footer
        %s1085 = sadd.s32 1, %s1081
      $region76: #{_lambda_.1} parent=69 // loop_footer_branch
        %1080 = sbr.rel target = $region72
      $region77: #{_lambda_.1} parent=69 // loop_exit
        _
      %s1088 = sshllo.u32 0, %s1075
      loop: start=0, step=1, limit=1
      $region78: #{_lambda_.1} parent=69 // loop_pre_header
        _
      $region79: #{_lambda_.1} parent=69 // loop_header
        %s1090 = sphi 0, %s1094
        %p1091 = scmp.ge.s32.totalorder %s1090, 1
        %s1095 = sphi %s1077, %s1077
        %s1096 = sphi %s1079, %s1079
      $region80: #{_lambda_.1} parent=69 // loop_header_branch
        %1093 = sbr.rel (%p1091) target = $region84
      $region81: #{_lambda_.1} parent=69 // loop_body
        %v1097 = vld [vmem:[%s1095] sm:%s1088]
        %1098 = vst [vmem:[%s1096] sm:%s1088] %v1097
        %v1099 = vld [vmem:[%s1095 + $0x10] sm:%s1088]
        %1100 = vst [vmem:[%s1096 + $0x4] sm:%s1088] %v1099
        %v1101 = vld [vmem:[%s1095 + $0x4] sm:%s1088]
        %1102 = vst [vmem:[%s1096 + $0x8] sm:%s1088] %v1101
        %v1103 = vld [vmem:[%s1095 + $0x14] sm:%s1088]
        %1104 = vst [vmem:[%s1096 + $0xc] sm:%s1088] %v1103
        %v1105 = vld [vmem:[%s1095 + $0x8] sm:%s1088]
        %1106 = vst [vmem:[%s1096 + $0x10] sm:%s1088] %v1105
        %v1107 = vld [vmem:[%s1095 + $0x18] sm:%s1088]
        %1108 = vst [vmem:[%s1096 + $0x14] sm:%s1088] %v1107
        %v1109 = vld [vmem:[%s1095 + $0xc] sm:%s1088]
        %1110 = vst [vmem:[%s1096 + $0x18] sm:%s1088] %v1109
        %v1111 = vld [vmem:[%s1095 + $0x1c] sm:%s1088]
        %1112 = vst [vmem:[%s1096 + $0x1c] sm:%s1088] %v1111
        %v1113 = vld [vmem:[%s1095 + $0x20] sm:%s1088]
        %1114 = vst [vmem:[%s1096 + $0x20] sm:%s1088] %v1113
        %v1115 = vld [vmem:[%s1095 + $0x30] sm:%s1088]
        %1116 = vst [vmem:[%s1096 + $0x24] sm:%s1088] %v1115
        %v1117 = vld [vmem:[%s1095 + $0x24] sm:%s1088]
        %1118 = vst [vmem:[%s1096 + $0x28] sm:%s1088] %v1117
        %v1119 = vld [vmem:[%s1095 + $0x34] sm:%s1088]
        %1120 = vst [vmem:[%s1096 + $0x2c] sm:%s1088] %v1119
        %v1121 = vld [vmem:[%s1095 + $0x28] sm:%s1088]
        %1122 = vst [vmem:[%s1096 + $0x30] sm:%s1088] %v1121
        %v1123 = vld [vmem:[%s1095 + $0x38] sm:%s1088]
        %1124 = vst [vmem:[%s1096 + $0x34] sm:%s1088] %v1123
        %v1125 = vld [vmem:[%s1095 + $0x2c] sm:%s1088]
        %1126 = vst [vmem:[%s1096 + $0x38] sm:%s1088] %v1125
        %v1127 = vld [vmem:[%s1095 + $0x3c] sm:%s1088]
        %1128 = vst [vmem:[%s1096 + $0x3c] sm:%s1088] %v1127
        %v1129 = vld [vmem:[%s1095 + $0x40] sm:%s1088]
        %1130 = vst [vmem:[%s1096 + $0x40] sm:%s1088] %v1129
        %v1131 = vld [vmem:[%s1095 + $0x50] sm:%s1088]
        %1132 = vst [vmem:[%s1096 + $0x44] sm:%s1088] %v1131
        %v1133 = vld [vmem:[%s1095 + $0x44] sm:%s1088]
        %1134 = vst [vmem:[%s1096 + $0x48] sm:%s1088] %v1133
        %v1135 = vld [vmem:[%s1095 + $0x54] sm:%s1088]
        %1136 = vst [vmem:[%s1096 + $0x4c] sm:%s1088] %v1135
        %v1137 = vld [vmem:[%s1095 + $0x48] sm:%s1088]
        %1138 = vst [vmem:[%s1096 + $0x50] sm:%s1088] %v1137
        %v1139 = vld [vmem:[%s1095 + $0x58] sm:%s1088]
        %1140 = vst [vmem:[%s1096 + $0x54] sm:%s1088] %v1139
        %v1141 = vld [vmem:[%s1095 + $0x4c] sm:%s1088]
        %1142 = vst [vmem:[%s1096 + $0x58] sm:%s1088] %v1141
        %v1143 = vld [vmem:[%s1095 + $0x5c] sm:%s1088]
        %1144 = vst [vmem:[%s1096 + $0x5c] sm:%s1088] %v1143
        %v1145 = vld [vmem:[%s1095 + $0x60] sm:%s1088]
        %1146 = vst [vmem:[%s1096 + $0x60] sm:%s1088] %v1145
        %v1147 = vld [vmem:[%s1095 + $0x70] sm:%s1088]
        %1148 = vst [vmem:[%s1096 + $0x64] sm:%s1088] %v1147
        %v1149 = vld [vmem:[%s1095 + $0x64] sm:%s1088]
        %1150 = vst [vmem:[%s1096 + $0x68] sm:%s1088] %v1149
        %v1151 = vld [vmem:[%s1095 + $0x74] sm:%s1088]
        %1152 = vst [vmem:[%s1096 + $0x6c] sm:%s1088] %v1151
        %v1153 = vld [vmem:[%s1095 + $0x68] sm:%s1088]
        %1154 = vst [vmem:[%s1096 + $0x70] sm:%s1088] %v1153
        %v1155 = vld [vmem:[%s1095 + $0x78] sm:%s1088]
        %1156 = vst [vmem:[%s1096 + $0x74] sm:%s1088] %v1155
        %v1157 = vld [vmem:[%s1095 + $0x6c] sm:%s1088]
        %1158 = vst [vmem:[%s1096 + $0x78] sm:%s1088] %v1157
        %v1159 = vld [vmem:[%s1095 + $0x7c] sm:%s1088]
        %1160 = vst [vmem:[%s1096 + $0x7c] sm:%s1088] %v1159
        %v1161 = vld [vmem:[%s1095 + $0x80] sm:%s1088]
        %1162 = vst [vmem:[%s1096 + $0x80] sm:%s1088] %v1161
        %v1163 = vld [vmem:[%s1095 + $0x90] sm:%s1088]
        %1164 = vst [vmem:[%s1096 + $0x84] sm:%s1088] %v1163
        %v1165 = vld [vmem:[%s1095 + $0x84] sm:%s1088]
        %1166 = vst [vmem:[%s1096 + $0x88] sm:%s1088] %v1165
        %v1167 = vld [vmem:[%s1095 + $0x94] sm:%s1088]
        %1168 = vst [vmem:[%s1096 + $0x8c] sm:%s1088] %v1167
        %v1169 = vld [vmem:[%s1095 + $0x88] sm:%s1088]
        %1170 = vst [vmem:[%s1096 + $0x90] sm:%s1088] %v1169
        %v1171 = vld [vmem:[%s1095 + $0x98] sm:%s1088]
        %1172 = vst [vmem:[%s1096 + $0x94] sm:%s1088] %v1171
        %v1173 = vld [vmem:[%s1095 + $0x8c] sm:%s1088]
        %1174 = vst [vmem:[%s1096 + $0x98] sm:%s1088] %v1173
        %v1175 = vld [vmem:[%s1095 + $0x9c] sm:%s1088]
        %1176 = vst [vmem:[%s1096 + $0x9c] sm:%s1088] %v1175
        %v1177 = vld [vmem:[%s1095 + $0xa0] sm:%s1088]
        %1178 = vst [vmem:[%s1096 + $0xa0] sm:%s1088] %v1177
        %v1179 = vld [vmem:[%s1095 + $0xb0] sm:%s1088]
        %1180 = vst [vmem:[%s1096 + $0xa4] sm:%s1088] %v1179
        %v1181 = vld [vmem:[%s1095 + $0xa4] sm:%s1088]
        %1182 = vst [vmem:[%s1096 + $0xa8] sm:%s1088] %v1181
        %v1183 = vld [vmem:[%s1095 + $0xb4] sm:%s1088]
        %1184 = vst [vmem:[%s1096 + $0xac] sm:%s1088] %v1183
        %v1185 = vld [vmem:[%s1095 + $0xa8] sm:%s1088]
        %1186 = vst [vmem:[%s1096 + $0xb0] sm:%s1088] %v1185
        %v1187 = vld [vmem:[%s1095 + $0xb8] sm:%s1088]
        %1188 = vst [vmem:[%s1096 + $0xb4] sm:%s1088] %v1187
        %v1189 = vld [vmem:[%s1095 + $0xac] sm:%s1088]
        %1190 = vst [vmem:[%s1096 + $0xb8] sm:%s1088] %v1189
        %v1191 = vld [vmem:[%s1095 + $0xbc] sm:%s1088]
        %1192 = vst [vmem:[%s1096 + $0xbc] sm:%s1088] %v1191
        %v1193 = vld [vmem:[%s1095 + $0xc0] sm:%s1088]
        %1194 = vst [vmem:[%s1096 + $0xc0] sm:%s1088] %v1193
        %v1195 = vld [vmem:[%s1095 + $0xd0] sm:%s1088]
        %1196 = vst [vmem:[%s1096 + $0xc4] sm:%s1088] %v1195
        %v1197 = vld [vmem:[%s1095 + $0xc4] sm:%s1088]
        %1198 = vst [vmem:[%s1096 + $0xc8] sm:%s1088] %v1197
        %v1199 = vld [vmem:[%s1095 + $0xd4] sm:%s1088]
        %1200 = vst [vmem:[%s1096 + $0xcc] sm:%s1088] %v1199
        %v1201 = vld [vmem:[%s1095 + $0xc8] sm:%s1088]
        %1202 = vst [vmem:[%s1096 + $0xd0] sm:%s1088] %v1201
        %v1203 = vld [vmem:[%s1095 + $0xd8] sm:%s1088]
        %1204 = vst [vmem:[%s1096 + $0xd4] sm:%s1088] %v1203
        %v1205 = vld [vmem:[%s1095 + $0xcc] sm:%s1088]
        %1206 = vst [vmem:[%s1096 + $0xd8] sm:%s1088] %v1205
        %v1207 = vld [vmem:[%s1095 + $0xdc] sm:%s1088]
        %1208 = vst [vmem:[%s1096 + $0xdc] sm:%s1088] %v1207
        %v1209 = vld [vmem:[%s1095 + $0xe0] sm:%s1088]
        %1210 = vst [vmem:[%s1096 + $0xe0] sm:%s1088] %v1209
        %v1211 = vld [vmem:[%s1095 + $0xf0] sm:%s1088]
        %1212 = vst [vmem:[%s1096 + $0xe4] sm:%s1088] %v1211
        %v1213 = vld [vmem:[%s1095 + $0xe4] sm:%s1088]
        %1214 = vst [vmem:[%s1096 + $0xe8] sm:%s1088] %v1213
        %v1215 = vld [vmem:[%s1095 + $0xf4] sm:%s1088]
        %1216 = vst [vmem:[%s1096 + $0xec] sm:%s1088] %v1215
        %v1217 = vld [vmem:[%s1095 + $0xe8] sm:%s1088]
        %1218 = vst [vmem:[%s1096 + $0xf0] sm:%s1088] %v1217
        %v1219 = vld [vmem:[%s1095 + $0xf8] sm:%s1088]
        %1220 = vst [vmem:[%s1096 + $0xf4] sm:%s1088] %v1219
        %v1221 = vld [vmem:[%s1095 + $0xec] sm:%s1088]
        %1222 = vst [vmem:[%s1096 + $0xf8] sm:%s1088] %v1221
        %v1223 = vld [vmem:[%s1095 + $0xfc] sm:%s1088]
        %1224 = vst [vmem:[%s1096 + $0xfc] sm:%s1088] %v1223
        %v1225 = vld [vmem:[%s1095 + $0x100] sm:%s1088]
        %1226 = vst [vmem:[%s1096 + $0x100] sm:%s1088] %v1225
        %v1227 = vld [vmem:[%s1095 + $0x110] sm:%s1088]
        %1228 = vst [vmem:[%s1096 + $0x104] sm:%s1088] %v1227
        %v1229 = vld [vmem:[%s1095 + $0x104] sm:%s1088]
        %1230 = vst [vmem:[%s1096 + $0x108] sm:%s1088] %v1229
        %v1231 = vld [vmem:[%s1095 + $0x114] sm:%s1088]
        %1232 = vst [vmem:[%s1096 + $0x10c] sm:%s1088] %v1231
        %v1233 = vld [vmem:[%s1095 + $0x108] sm:%s1088]
        %1234 = vst [vmem:[%s1096 + $0x110] sm:%s1088] %v1233
        %v1235 = vld [vmem:[%s1095 + $0x118] sm:%s1088]
        %1236 = vst [vmem:[%s1096 + $0x114] sm:%s1088] %v1235
        %v1237 = vld [vmem:[%s1095 + $0x10c] sm:%s1088]
        %1238 = vst [vmem:[%s1096 + $0x118] sm:%s1088] %v1237
        %v1239 = vld [vmem:[%s1095 + $0x11c] sm:%s1088]
        %1240 = vst [vmem:[%s1096 + $0x11c] sm:%s1088] %v1239
        %v1241 = vld [vmem:[%s1095 + $0x120] sm:%s1088]
        %1242 = vst [vmem:[%s1096 + $0x120] sm:%s1088] %v1241
        %v1243 = vld [vmem:[%s1095 + $0x130] sm:%s1088]
        %1244 = vst [vmem:[%s1096 + $0x124] sm:%s1088] %v1243
        %v1245 = vld [vmem:[%s1095 + $0x124] sm:%s1088]
        %1246 = vst [vmem:[%s1096 + $0x128] sm:%s1088] %v1245
        %v1247 = vld [vmem:[%s1095 + $0x134] sm:%s1088]
        %1248 = vst [vmem:[%s1096 + $0x12c] sm:%s1088] %v1247
        %v1249 = vld [vmem:[%s1095 + $0x128] sm:%s1088]
        %1250 = vst [vmem:[%s1096 + $0x130] sm:%s1088] %v1249
        %v1251 = vld [vmem:[%s1095 + $0x138] sm:%s1088]
        %1252 = vst [vmem:[%s1096 + $0x134] sm:%s1088] %v1251
        %v1253 = vld [vmem:[%s1095 + $0x12c] sm:%s1088]
        %1254 = vst [vmem:[%s1096 + $0x138] sm:%s1088] %v1253
        %v1255 = vld [vmem:[%s1095 + $0x13c] sm:%s1088]
        %1256 = vst [vmem:[%s1096 + $0x13c] sm:%s1088] %v1255
        %v1257 = vld [vmem:[%s1095 + $0x140] sm:%s1088]
        %1258 = vst [vmem:[%s1096 + $0x140] sm:%s1088] %v1257
        %v1259 = vld [vmem:[%s1095 + $0x150] sm:%s1088]
        %1260 = vst [vmem:[%s1096 + $0x144] sm:%s1088] %v1259
        %v1261 = vld [vmem:[%s1095 + $0x144] sm:%s1088]
        %1262 = vst [vmem:[%s1096 + $0x148] sm:%s1088] %v1261
        %v1263 = vld [vmem:[%s1095 + $0x154] sm:%s1088]
        %1264 = vst [vmem:[%s1096 + $0x14c] sm:%s1088] %v1263
        %v1265 = vld [vmem:[%s1095 + $0x148] sm:%s1088]
        %1266 = vst [vmem:[%s1096 + $0x150] sm:%s1088] %v1265
        %v1267 = vld [vmem:[%s1095 + $0x158] sm:%s1088]
        %1268 = vst [vmem:[%s1096 + $0x154] sm:%s1088] %v1267
        %v1269 = vld [vmem:[%s1095 + $0x14c] sm:%s1088]
        %1270 = vst [vmem:[%s1096 + $0x158] sm:%s1088] %v1269
        %v1271 = vld [vmem:[%s1095 + $0x15c] sm:%s1088]
        %1272 = vst [vmem:[%s1096 + $0x15c] sm:%s1088] %v1271
        %v1273 = vld [vmem:[%s1095 + $0x160] sm:%s1088]
        %1274 = vst [vmem:[%s1096 + $0x160] sm:%s1088] %v1273
        %v1275 = vld [vmem:[%s1095 + $0x170] sm:%s1088]
        %1276 = vst [vmem:[%s1096 + $0x164] sm:%s1088] %v1275
        %v1277 = vld [vmem:[%s1095 + $0x164] sm:%s1088]
        %1278 = vst [vmem:[%s1096 + $0x168] sm:%s1088] %v1277
        %v1279 = vld [vmem:[%s1095 + $0x174] sm:%s1088]
        %1280 = vst [vmem:[%s1096 + $0x16c] sm:%s1088] %v1279
        %v1281 = vld [vmem:[%s1095 + $0x168] sm:%s1088]
        %1282 = vst [vmem:[%s1096 + $0x170] sm:%s1088] %v1281
        %v1283 = vld [vmem:[%s1095 + $0x178] sm:%s1088]
        %1284 = vst [vmem:[%s1096 + $0x174] sm:%s1088] %v1283
        %v1285 = vld [vmem:[%s1095 + $0x16c] sm:%s1088]
        %1286 = vst [vmem:[%s1096 + $0x178] sm:%s1088] %v1285
        %v1287 = vld [vmem:[%s1095 + $0x17c] sm:%s1088]
        %1288 = vst [vmem:[%s1096 + $0x17c] sm:%s1088] %v1287
        %v1289 = vld [vmem:[%s1095 + $0x180] sm:%s1088]
        %1290 = vst [vmem:[%s1096 + $0x180] sm:%s1088] %v1289
        %v1291 = vld [vmem:[%s1095 + $0x190] sm:%s1088]
        %1292 = vst [vmem:[%s1096 + $0x184] sm:%s1088] %v1291
        %v1293 = vld [vmem:[%s1095 + $0x184] sm:%s1088]
        %1294 = vst [vmem:[%s1096 + $0x188] sm:%s1088] %v1293
        %v1295 = vld [vmem:[%s1095 + $0x194] sm:%s1088]
        %1296 = vst [vmem:[%s1096 + $0x18c] sm:%s1088] %v1295
        %v1297 = vld [vmem:[%s1095 + $0x188] sm:%s1088]
        %1298 = vst [vmem:[%s1096 + $0x190] sm:%s1088] %v1297
        %v1299 = vld [vmem:[%s1095 + $0x198] sm:%s1088]
        %1300 = vst [vmem:[%s1096 + $0x194] sm:%s1088] %v1299
        %v1301 = vld [vmem:[%s1095 + $0x18c] sm:%s1088]
        %1302 = vst [vmem:[%s1096 + $0x198] sm:%s1088] %v1301
        %v1303 = vld [vmem:[%s1095 + $0x19c] sm:%s1088]
        %1304 = vst [vmem:[%s1096 + $0x19c] sm:%s1088] %v1303
        %v1305 = vld [vmem:[%s1095 + $0x1a0] sm:%s1088]
        %1306 = vst [vmem:[%s1096 + $0x1a0] sm:%s1088] %v1305
        %v1307 = vld [vmem:[%s1095 + $0x1b0] sm:%s1088]
        %1308 = vst [vmem:[%s1096 + $0x1a4] sm:%s1088] %v1307
        %v1309 = vld [vmem:[%s1095 + $0x1a4] sm:%s1088]
        %1310 = vst [vmem:[%s1096 + $0x1a8] sm:%s1088] %v1309
        %v1311 = vld [vmem:[%s1095 + $0x1b4] sm:%s1088]
        %1312 = vst [vmem:[%s1096 + $0x1ac] sm:%s1088] %v1311
        %v1313 = vld [vmem:[%s1095 + $0x1a8] sm:%s1088]
        %1314 = vst [vmem:[%s1096 + $0x1b0] sm:%s1088] %v1313
        %v1315 = vld [vmem:[%s1095 + $0x1b8] sm:%s1088]
        %1316 = vst [vmem:[%s1096 + $0x1b4] sm:%s1088] %v1315
        %v1317 = vld [vmem:[%s1095 + $0x1ac] sm:%s1088]
        %1318 = vst [vmem:[%s1096 + $0x1b8] sm:%s1088] %v1317
        %v1319 = vld [vmem:[%s1095 + $0x1bc] sm:%s1088]
        %1320 = vst [vmem:[%s1096 + $0x1bc] sm:%s1088] %v1319
        %v1321 = vld [vmem:[%s1095 + $0x1c0] sm:%s1088]
        %1322 = vst [vmem:[%s1096 + $0x1c0] sm:%s1088] %v1321
        %v1323 = vld [vmem:[%s1095 + $0x1d0] sm:%s1088]
        %1324 = vst [vmem:[%s1096 + $0x1c4] sm:%s1088] %v1323
        %v1325 = vld [vmem:[%s1095 + $0x1c4] sm:%s1088]
        %1326 = vst [vmem:[%s1096 + $0x1c8] sm:%s1088] %v1325
        %v1327 = vld [vmem:[%s1095 + $0x1d4] sm:%s1088]
        %1328 = vst [vmem:[%s1096 + $0x1cc] sm:%s1088] %v1327
        %v1329 = vld [vmem:[%s1095 + $0x1c8] sm:%s1088]
        %1330 = vst [vmem:[%s1096 + $0x1d0] sm:%s1088] %v1329
        %v1331 = vld [vmem:[%s1095 + $0x1d8] sm:%s1088]
        %1332 = vst [vmem:[%s1096 + $0x1d4] sm:%s1088] %v1331
        %v1333 = vld [vmem:[%s1095 + $0x1cc] sm:%s1088]
        %1334 = vst [vmem:[%s1096 + $0x1d8] sm:%s1088] %v1333
        %v1335 = vld [vmem:[%s1095 + $0x1dc] sm:%s1088]
        %1336 = vst [vmem:[%s1096 + $0x1dc] sm:%s1088] %v1335
        %v1337 = vld [vmem:[%s1095 + $0x1e0] sm:%s1088]
        %1338 = vst [vmem:[%s1096 + $0x1e0] sm:%s1088] %v1337
        %v1339 = vld [vmem:[%s1095 + $0x1f0] sm:%s1088]
        %1340 = vst [vmem:[%s1096 + $0x1e4] sm:%s1088] %v1339
        %v1341 = vld [vmem:[%s1095 + $0x1e4] sm:%s1088]
        %1342 = vst [vmem:[%s1096 + $0x1e8] sm:%s1088] %v1341
        %v1343 = vld [vmem:[%s1095 + $0x1f4] sm:%s1088]
        %1344 = vst [vmem:[%s1096 + $0x1ec] sm:%s1088] %v1343
        %v1345 = vld [vmem:[%s1095 + $0x1e8] sm:%s1088]
        %1346 = vst [vmem:[%s1096 + $0x1f0] sm:%s1088] %v1345
        %v1347 = vld [vmem:[%s1095 + $0x1f8] sm:%s1088]
        %1348 = vst [vmem:[%s1096 + $0x1f4] sm:%s1088] %v1347
        %v1349 = vld [vmem:[%s1095 + $0x1ec] sm:%s1088]
        %1350 = vst [vmem:[%s1096 + $0x1f8] sm:%s1088] %v1349
        %v1351 = vld [vmem:[%s1095 + $0x1fc] sm:%s1088]
        %1352 = vst [vmem:[%s1096 + $0x1fc] sm:%s1088] %v1351
        %v1353 = vld [vmem:[%s1095 + $0x200] sm:%s1088]
        %1354 = vst [vmem:[%s1096 + $0x200] sm:%s1088] %v1353
        %v1355 = vld [vmem:[%s1095 + $0x210] sm:%s1088]
        %1356 = vst [vmem:[%s1096 + $0x204] sm:%s1088] %v1355
        %v1357 = vld [vmem:[%s1095 + $0x204] sm:%s1088]
        %1358 = vst [vmem:[%s1096 + $0x208] sm:%s1088] %v1357
        %v1359 = vld [vmem:[%s1095 + $0x214] sm:%s1088]
        %1360 = vst [vmem:[%s1096 + $0x20c] sm:%s1088] %v1359
        %v1361 = vld [vmem:[%s1095 + $0x208] sm:%s1088]
        %1362 = vst [vmem:[%s1096 + $0x210] sm:%s1088] %v1361
        %v1363 = vld [vmem:[%s1095 + $0x218] sm:%s1088]
        %1364 = vst [vmem:[%s1096 + $0x214] sm:%s1088] %v1363
        %v1365 = vld [vmem:[%s1095 + $0x20c] sm:%s1088]
        %1366 = vst [vmem:[%s1096 + $0x218] sm:%s1088] %v1365
        %v1367 = vld [vmem:[%s1095 + $0x21c] sm:%s1088]
        %1368 = vst [vmem:[%s1096 + $0x21c] sm:%s1088] %v1367
        %v1369 = vld [vmem:[%s1095 + $0x220] sm:%s1088]
        %1370 = vst [vmem:[%s1096 + $0x220] sm:%s1088] %v1369
        %v1371 = vld [vmem:[%s1095 + $0x230] sm:%s1088]
        %1372 = vst [vmem:[%s1096 + $0x224] sm:%s1088] %v1371
        %v1373 = vld [vmem:[%s1095 + $0x224] sm:%s1088]
        %1374 = vst [vmem:[%s1096 + $0x228] sm:%s1088] %v1373
        %v1375 = vld [vmem:[%s1095 + $0x234] sm:%s1088]
        %1376 = vst [vmem:[%s1096 + $0x22c] sm:%s1088] %v1375
        %v1377 = vld [vmem:[%s1095 + $0x228] sm:%s1088]
        %1378 = vst [vmem:[%s1096 + $0x230] sm:%s1088] %v1377
        %v1379 = vld [vmem:[%s1095 + $0x238] sm:%s1088]
        %1380 = vst [vmem:[%s1096 + $0x234] sm:%s1088] %v1379
        %v1381 = vld [vmem:[%s1095 + $0x22c] sm:%s1088]
        %1382 = vst [vmem:[%s1096 + $0x238] sm:%s1088] %v1381
        %v1383 = vld [vmem:[%s1095 + $0x23c] sm:%s1088]
        %1384 = vst [vmem:[%s1096 + $0x23c] sm:%s1088] %v1383
        %v1385 = vld [vmem:[%s1095 + $0x240] sm:%s1088]
        %1386 = vst [vmem:[%s1096 + $0x240] sm:%s1088] %v1385
        %v1387 = vld [vmem:[%s1095 + $0x250] sm:%s1088]
        %1388 = vst [vmem:[%s1096 + $0x244] sm:%s1088] %v1387
        %v1389 = vld [vmem:[%s1095 + $0x244] sm:%s1088]
        %1390 = vst [vmem:[%s1096 + $0x248] sm:%s1088] %v1389
        %v1391 = vld [vmem:[%s1095 + $0x254] sm:%s1088]
        %1392 = vst [vmem:[%s1096 + $0x24c] sm:%s1088] %v1391
        %v1393 = vld [vmem:[%s1095 + $0x248] sm:%s1088]
        %1394 = vst [vmem:[%s1096 + $0x250] sm:%s1088] %v1393
        %v1395 = vld [vmem:[%s1095 + $0x258] sm:%s1088]
        %1396 = vst [vmem:[%s1096 + $0x254] sm:%s1088] %v1395
        %v1397 = vld [vmem:[%s1095 + $0x24c] sm:%s1088]
        %1398 = vst [vmem:[%s1096 + $0x258] sm:%s1088] %v1397
        %v1399 = vld [vmem:[%s1095 + $0x25c] sm:%s1088]
        %1400 = vst [vmem:[%s1096 + $0x25c] sm:%s1088] %v1399
        %v1401 = vld [vmem:[%s1095 + $0x260] sm:%s1088]
        %1402 = vst [vmem:[%s1096 + $0x260] sm:%s1088] %v1401
        %v1403 = vld [vmem:[%s1095 + $0x270] sm:%s1088]
        %1404 = vst [vmem:[%s1096 + $0x264] sm:%s1088] %v1403
        %v1405 = vld [vmem:[%s1095 + $0x264] sm:%s1088]
        %1406 = vst [vmem:[%s1096 + $0x268] sm:%s1088] %v1405
        %v1407 = vld [vmem:[%s1095 + $0x274] sm:%s1088]
        %1408 = vst [vmem:[%s1096 + $0x26c] sm:%s1088] %v1407
        %v1409 = vld [vmem:[%s1095 + $0x268] sm:%s1088]
        %1410 = vst [vmem:[%s1096 + $0x270] sm:%s1088] %v1409
        %v1411 = vld [vmem:[%s1095 + $0x278] sm:%s1088]
        %1412 = vst [vmem:[%s1096 + $0x274] sm:%s1088] %v1411
        %v1413 = vld [vmem:[%s1095 + $0x26c] sm:%s1088]
        %1414 = vst [vmem:[%s1096 + $0x278] sm:%s1088] %v1413
        %v1415 = vld [vmem:[%s1095 + $0x27c] sm:%s1088]
        %1416 = vst [vmem:[%s1096 + $0x27c] sm:%s1088] %v1415
        %v1417 = vld [vmem:[%s1095 + $0x280] sm:%s1088]
        %1418 = vst [vmem:[%s1096 + $0x280] sm:%s1088] %v1417
        %v1419 = vld [vmem:[%s1095 + $0x290] sm:%s1088]
        %1420 = vst [vmem:[%s1096 + $0x284] sm:%s1088] %v1419
        %v1421 = vld [vmem:[%s1095 + $0x284] sm:%s1088]
        %1422 = vst [vmem:[%s1096 + $0x288] sm:%s1088] %v1421
        %v1423 = vld [vmem:[%s1095 + $0x294] sm:%s1088]
        %1424 = vst [vmem:[%s1096 + $0x28c] sm:%s1088] %v1423
        %v1425 = vld [vmem:[%s1095 + $0x288] sm:%s1088]
        %1426 = vst [vmem:[%s1096 + $0x290] sm:%s1088] %v1425
        %v1427 = vld [vmem:[%s1095 + $0x298] sm:%s1088]
        %1428 = vst [vmem:[%s1096 + $0x294] sm:%s1088] %v1427
        %v1429 = vld [vmem:[%s1095 + $0x28c] sm:%s1088]
        %1430 = vst [vmem:[%s1096 + $0x298] sm:%s1088] %v1429
        %v1431 = vld [vmem:[%s1095 + $0x29c] sm:%s1088]
        %1432 = vst [vmem:[%s1096 + $0x29c] sm:%s1088] %v1431
        %v1433 = vld [vmem:[%s1095 + $0x2a0] sm:%s1088]
        %1434 = vst [vmem:[%s1096 + $0x2a0] sm:%s1088] %v1433
        %v1435 = vld [vmem:[%s1095 + $0x2b0] sm:%s1088]
        %1436 = vst [vmem:[%s1096 + $0x2a4] sm:%s1088] %v1435
        %v1437 = vld [vmem:[%s1095 + $0x2a4] sm:%s1088]
        %1438 = vst [vmem:[%s1096 + $0x2a8] sm:%s1088] %v1437
        %v1439 = vld [vmem:[%s1095 + $0x2b4] sm:%s1088]
        %1440 = vst [vmem:[%s1096 + $0x2ac] sm:%s1088] %v1439
        %v1441 = vld [vmem:[%s1095 + $0x2a8] sm:%s1088]
        %1442 = vst [vmem:[%s1096 + $0x2b0] sm:%s1088] %v1441
        %v1443 = vld [vmem:[%s1095 + $0x2b8] sm:%s1088]
        %1444 = vst [vmem:[%s1096 + $0x2b4] sm:%s1088] %v1443
        %v1445 = vld [vmem:[%s1095 + $0x2ac] sm:%s1088]
        %1446 = vst [vmem:[%s1096 + $0x2b8] sm:%s1088] %v1445
        %v1447 = vld [vmem:[%s1095 + $0x2bc] sm:%s1088]
        %1448 = vst [vmem:[%s1096 + $0x2bc] sm:%s1088] %v1447
        %v1449 = vld [vmem:[%s1095 + $0x2c0] sm:%s1088]
        %1450 = vst [vmem:[%s1096 + $0x2c0] sm:%s1088] %v1449
        %v1451 = vld [vmem:[%s1095 + $0x2d0] sm:%s1088]
        %1452 = vst [vmem:[%s1096 + $0x2c4] sm:%s1088] %v1451
        %v1453 = vld [vmem:[%s1095 + $0x2c4] sm:%s1088]
        %1454 = vst [vmem:[%s1096 + $0x2c8] sm:%s1088] %v1453
        %v1455 = vld [vmem:[%s1095 + $0x2d4] sm:%s1088]
        %1456 = vst [vmem:[%s1096 + $0x2cc] sm:%s1088] %v1455
        %v1457 = vld [vmem:[%s1095 + $0x2c8] sm:%s1088]
        %1458 = vst [vmem:[%s1096 + $0x2d0] sm:%s1088] %v1457
        %v1459 = vld [vmem:[%s1095 + $0x2d8] sm:%s1088]
        %1460 = vst [vmem:[%s1096 + $0x2d4] sm:%s1088] %v1459
        %v1461 = vld [vmem:[%s1095 + $0x2cc] sm:%s1088]
        %1462 = vst [vmem:[%s1096 + $0x2d8] sm:%s1088] %v1461
        %v1463 = vld [vmem:[%s1095 + $0x2dc] sm:%s1088]
        %1464 = vst [vmem:[%s1096 + $0x2dc] sm:%s1088] %v1463
        %v1465 = vld [vmem:[%s1095 + $0x2e0] sm:%s1088]
        %1466 = vst [vmem:[%s1096 + $0x2e0] sm:%s1088] %v1465
        %v1467 = vld [vmem:[%s1095 + $0x2f0] sm:%s1088]
        %1468 = vst [vmem:[%s1096 + $0x2e4] sm:%s1088] %v1467
        %v1469 = vld [vmem:[%s1095 + $0x2e4] sm:%s1088]
        %1470 = vst [vmem:[%s1096 + $0x2e8] sm:%s1088] %v1469
        %v1471 = vld [vmem:[%s1095 + $0x2f4] sm:%s1088]
        %1472 = vst [vmem:[%s1096 + $0x2ec] sm:%s1088] %v1471
        %v1473 = vld [vmem:[%s1095 + $0x2e8] sm:%s1088]
        %1474 = vst [vmem:[%s1096 + $0x2f0] sm:%s1088] %v1473
        %v1475 = vld [vmem:[%s1095 + $0x2f8] sm:%s1088]
        %1476 = vst [vmem:[%s1096 + $0x2f4] sm:%s1088] %v1475
        %v1477 = vld [vmem:[%s1095 + $0x2ec] sm:%s1088]
        %1478 = vst [vmem:[%s1096 + $0x2f8] sm:%s1088] %v1477
        %v1479 = vld [vmem:[%s1095 + $0x2fc] sm:%s1088]
        %1480 = vst [vmem:[%s1096 + $0x2fc] sm:%s1088] %v1479
        %v1481 = vld [vmem:[%s1095 + $0x300] sm:%s1088]
        %1482 = vst [vmem:[%s1096 + $0x300] sm:%s1088] %v1481
        %v1483 = vld [vmem:[%s1095 + $0x310] sm:%s1088]
        %1484 = vst [vmem:[%s1096 + $0x304] sm:%s1088] %v1483
        %v1485 = vld [vmem:[%s1095 + $0x304] sm:%s1088]
        %1486 = vst [vmem:[%s1096 + $0x308] sm:%s1088] %v1485
        %v1487 = vld [vmem:[%s1095 + $0x314] sm:%s1088]
        %1488 = vst [vmem:[%s1096 + $0x30c] sm:%s1088] %v1487
        %v1489 = vld [vmem:[%s1095 + $0x308] sm:%s1088]
        %1490 = vst [vmem:[%s1096 + $0x310] sm:%s1088] %v1489
        %v1491 = vld [vmem:[%s1095 + $0x318] sm:%s1088]
        %1492 = vst [vmem:[%s1096 + $0x314] sm:%s1088] %v1491
        %v1493 = vld [vmem:[%s1095 + $0x30c] sm:%s1088]
        %1494 = vst [vmem:[%s1096 + $0x318] sm:%s1088] %v1493
        %v1495 = vld [vmem:[%s1095 + $0x31c] sm:%s1088]
        %1496 = vst [vmem:[%s1096 + $0x31c] sm:%s1088] %v1495
        %v1497 = vld [vmem:[%s1095 + $0x320] sm:%s1088]
        %1498 = vst [vmem:[%s1096 + $0x320] sm:%s1088] %v1497
        %v1499 = vld [vmem:[%s1095 + $0x330] sm:%s1088]
        %1500 = vst [vmem:[%s1096 + $0x324] sm:%s1088] %v1499
        %v1501 = vld [vmem:[%s1095 + $0x324] sm:%s1088]
        %1502 = vst [vmem:[%s1096 + $0x328] sm:%s1088] %v1501
        %v1503 = vld [vmem:[%s1095 + $0x334] sm:%s1088]
        %1504 = vst [vmem:[%s1096 + $0x32c] sm:%s1088] %v1503
        %v1505 = vld [vmem:[%s1095 + $0x328] sm:%s1088]
        %1506 = vst [vmem:[%s1096 + $0x330] sm:%s1088] %v1505
        %v1507 = vld [vmem:[%s1095 + $0x338] sm:%s1088]
        %1508 = vst [vmem:[%s1096 + $0x334] sm:%s1088] %v1507
        %v1509 = vld [vmem:[%s1095 + $0x32c] sm:%s1088]
        %1510 = vst [vmem:[%s1096 + $0x338] sm:%s1088] %v1509
        %v1511 = vld [vmem:[%s1095 + $0x33c] sm:%s1088]
        %1512 = vst [vmem:[%s1096 + $0x33c] sm:%s1088] %v1511
        %v1513 = vld [vmem:[%s1095 + $0x340] sm:%s1088]
        %1514 = vst [vmem:[%s1096 + $0x340] sm:%s1088] %v1513
        %v1515 = vld [vmem:[%s1095 + $0x350] sm:%s1088]
        %1516 = vst [vmem:[%s1096 + $0x344] sm:%s1088] %v1515
        %v1517 = vld [vmem:[%s1095 + $0x344] sm:%s1088]
        %1518 = vst [vmem:[%s1096 + $0x348] sm:%s1088] %v1517
        %v1519 = vld [vmem:[%s1095 + $0x354] sm:%s1088]
        %1520 = vst [vmem:[%s1096 + $0x34c] sm:%s1088] %v1519
        %v1521 = vld [vmem:[%s1095 + $0x348] sm:%s1088]
        %1522 = vst [vmem:[%s1096 + $0x350] sm:%s1088] %v1521
        %v1523 = vld [vmem:[%s1095 + $0x358] sm:%s1088]
        %1524 = vst [vmem:[%s1096 + $0x354] sm:%s1088] %v1523
        %v1525 = vld [vmem:[%s1095 + $0x34c] sm:%s1088]
        %1526 = vst [vmem:[%s1096 + $0x358] sm:%s1088] %v1525
        %v1527 = vld [vmem:[%s1095 + $0x35c] sm:%s1088]
        %1528 = vst [vmem:[%s1096 + $0x35c] sm:%s1088] %v1527
        %v1529 = vld [vmem:[%s1095 + $0x360] sm:%s1088]
        %1530 = vst [vmem:[%s1096 + $0x360] sm:%s1088] %v1529
        %v1531 = vld [vmem:[%s1095 + $0x370] sm:%s1088]
        %1532 = vst [vmem:[%s1096 + $0x364] sm:%s1088] %v1531
        %v1533 = vld [vmem:[%s1095 + $0x364] sm:%s1088]
        %1534 = vst [vmem:[%s1096 + $0x368] sm:%s1088] %v1533
        %v1535 = vld [vmem:[%s1095 + $0x374] sm:%s1088]
        %1536 = vst [vmem:[%s1096 + $0x36c] sm:%s1088] %v1535
        %v1537 = vld [vmem:[%s1095 + $0x368] sm:%s1088]
        %1538 = vst [vmem:[%s1096 + $0x370] sm:%s1088] %v1537
        %v1539 = vld [vmem:[%s1095 + $0x378] sm:%s1088]
        %1540 = vst [vmem:[%s1096 + $0x374] sm:%s1088] %v1539
        %v1541 = vld [vmem:[%s1095 + $0x36c] sm:%s1088]
        %1542 = vst [vmem:[%s1096 + $0x378] sm:%s1088] %v1541
        %v1543 = vld [vmem:[%s1095 + $0x37c] sm:%s1088]
        %1544 = vst [vmem:[%s1096 + $0x37c] sm:%s1088] %v1543
        %v1545 = vld [vmem:[%s1095 + $0x380] sm:%s1088]
        %1546 = vst [vmem:[%s1096 + $0x380] sm:%s1088] %v1545
        %v1547 = vld [vmem:[%s1095 + $0x390] sm:%s1088]
        %1548 = vst [vmem:[%s1096 + $0x384] sm:%s1088] %v1547
        %v1549 = vld [vmem:[%s1095 + $0x384] sm:%s1088]
        %1550 = vst [vmem:[%s1096 + $0x388] sm:%s1088] %v1549
        %v1551 = vld [vmem:[%s1095 + $0x394] sm:%s1088]
        %1552 = vst [vmem:[%s1096 + $0x38c] sm:%s1088] %v1551
        %v1553 = vld [vmem:[%s1095 + $0x388] sm:%s1088]
        %1554 = vst [vmem:[%s1096 + $0x390] sm:%s1088] %v1553
        %v1555 = vld [vmem:[%s1095 + $0x398] sm:%s1088]
        %1556 = vst [vmem:[%s1096 + $0x394] sm:%s1088] %v1555
        %v1557 = vld [vmem:[%s1095 + $0x38c] sm:%s1088]
        %1558 = vst [vmem:[%s1096 + $0x398] sm:%s1088] %v1557
        %v1559 = vld [vmem:[%s1095 + $0x39c] sm:%s1088]
        %1560 = vst [vmem:[%s1096 + $0x39c] sm:%s1088] %v1559
        %v1561 = vld [vmem:[%s1095 + $0x3a0] sm:%s1088]
        %1562 = vst [vmem:[%s1096 + $0x3a0] sm:%s1088] %v1561
        %v1563 = vld [vmem:[%s1095 + $0x3b0] sm:%s1088]
        %1564 = vst [vmem:[%s1096 + $0x3a4] sm:%s1088] %v1563
        %v1565 = vld [vmem:[%s1095 + $0x3a4] sm:%s1088]
        %1566 = vst [vmem:[%s1096 + $0x3a8] sm:%s1088] %v1565
        %v1567 = vld [vmem:[%s1095 + $0x3b4] sm:%s1088]
        %1568 = vst [vmem:[%s1096 + $0x3ac] sm:%s1088] %v1567
        %v1569 = vld [vmem:[%s1095 + $0x3a8] sm:%s1088]
        %1570 = vst [vmem:[%s1096 + $0x3b0] sm:%s1088] %v1569
        %v1571 = vld [vmem:[%s1095 + $0x3b8] sm:%s1088]
        %1572 = vst [vmem:[%s1096 + $0x3b4] sm:%s1088] %v1571
        %v1573 = vld [vmem:[%s1095 + $0x3ac] sm:%s1088]
        %1574 = vst [vmem:[%s1096 + $0x3b8] sm:%s1088] %v1573
        %v1575 = vld [vmem:[%s1095 + $0x3bc] sm:%s1088]
        %1576 = vst [vmem:[%s1096 + $0x3bc] sm:%s1088] %v1575
        %v1577 = vld [vmem:[%s1095 + $0x3c0] sm:%s1088]
        %1578 = vst [vmem:[%s1096 + $0x3c0] sm:%s1088] %v1577
        %v1579 = vld [vmem:[%s1095 + $0x3d0] sm:%s1088]
        %1580 = vst [vmem:[%s1096 + $0x3c4] sm:%s1088] %v1579
        %v1581 = vld [vmem:[%s1095 + $0x3c4] sm:%s1088]
        %1582 = vst [vmem:[%s1096 + $0x3c8] sm:%s1088] %v1581
        %v1583 = vld [vmem:[%s1095 + $0x3d4] sm:%s1088]
        %1584 = vst [vmem:[%s1096 + $0x3cc] sm:%s1088] %v1583
        %v1585 = vld [vmem:[%s1095 + $0x3c8] sm:%s1088]
        %1586 = vst [vmem:[%s1096 + $0x3d0] sm:%s1088] %v1585
        %v1587 = vld [vmem:[%s1095 + $0x3d8] sm:%s1088]
        %1588 = vst [vmem:[%s1096 + $0x3d4] sm:%s1088] %v1587
        %v1589 = vld [vmem:[%s1095 + $0x3cc] sm:%s1088]
        %1590 = vst [vmem:[%s1096 + $0x3d8] sm:%s1088] %v1589
        %v1591 = vld [vmem:[%s1095 + $0x3dc] sm:%s1088]
        %1592 = vst [vmem:[%s1096 + $0x3dc] sm:%s1088] %v1591
        %v1593 = vld [vmem:[%s1095 + $0x3e0] sm:%s1088]
        %1594 = vst [vmem:[%s1096 + $0x3e0] sm:%s1088] %v1593
        %v1595 = vld [vmem:[%s1095 + $0x3f0] sm:%s1088]
        %1596 = vst [vmem:[%s1096 + $0x3e4] sm:%s1088] %v1595
        %v1597 = vld [vmem:[%s1095 + $0x3e4] sm:%s1088]
        %1598 = vst [vmem:[%s1096 + $0x3e8] sm:%s1088] %v1597
        %v1599 = vld [vmem:[%s1095 + $0x3f4] sm:%s1088]
        %1600 = vst [vmem:[%s1096 + $0x3ec] sm:%s1088] %v1599
        %v1601 = vld [vmem:[%s1095 + $0x3e8] sm:%s1088]
        %1602 = vst [vmem:[%s1096 + $0x3f0] sm:%s1088] %v1601
        %v1603 = vld [vmem:[%s1095 + $0x3f8] sm:%s1088]
        %1604 = vst [vmem:[%s1096 + $0x3f4] sm:%s1088] %v1603
        %v1605 = vld [vmem:[%s1095 + $0x3ec] sm:%s1088]
        %1606 = vst [vmem:[%s1096 + $0x3f8] sm:%s1088] %v1605
        %v1607 = vld [vmem:[%s1095 + $0x3fc] sm:%s1088]
        %1608 = vst [vmem:[%s1096 + $0x3fc] sm:%s1088] %v1607
      $region82: #{_lambda_.1} parent=69 // loop_footer
        %s1094 = sadd.s32 1, %s1090
      $region83: #{_lambda_.1} parent=69 // loop_footer_branch
        %1089 = sbr.rel target = $region79
      $region84: #{_lambda_.1} parent=69 // loop_exit
        _
    $region70: #{_lambda_.1} parent=54 // pred_fallthru
      _
  $region55: #{_lambda_.1} parent=0 // pred_fallthru
    _
  // Predicated region
  $region56: #{_lambda_.1} parent=0 // pred_check
    %p546 = pneg %p542
  $region57: #{_lambda_.1} parent=0 // pred_check_branch
    %548 = sbr.rel (%p546) target = $region59
  $region58: #{_lambda_.1} parent=0 // pred_region
    %s549 = sshllo.u32 0, 4
    loop: start=0, step=1, limit=1
    $region60: #{_lambda_.1} parent=58 // loop_pre_header
      _
    $region61: #{_lambda_.1} parent=58 // loop_header
      %s551 = sphi 0, %s555
      %p552 = scmp.ge.s32.totalorder %s551, 1
      %s556 = sphi %s5, %s5
      %s557 = sphi [#allocation4], [#allocation4]
    $region62: #{_lambda_.1} parent=58 // loop_header_branch
      %554 = sbr.rel (%p552) target = $region66
    $region63: #{_lambda_.1} parent=58 // loop_body
      %v558 = vld [vmem:[%s556] sm:%s549]
      %559 = vst [vmem:[%s557] sm:%s549] %v558
      %v560 = vld [vmem:[%s556 + $0x10] sm:%s549]
      %561 = vst [vmem:[%s557 + $0x4] sm:%s549] %v560
      %v562 = vld [vmem:[%s556 + $0x4] sm:%s549]
      %563 = vst [vmem:[%s557 + $0x8] sm:%s549] %v562
      %v564 = vld [vmem:[%s556 + $0x14] sm:%s549]
      %565 = vst [vmem:[%s557 + $0xc] sm:%s549] %v564
      %v566 = vld [vmem:[%s556 + $0x8] sm:%s549]
      %567 = vst [vmem:[%s557 + $0x10] sm:%s549] %v566
      %v568 = vld [vmem:[%s556 + $0x18] sm:%s549]
      %569 = vst [vmem:[%s557 + $0x14] sm:%s549] %v568
      %v570 = vld [vmem:[%s556 + $0xc] sm:%s549]
      %571 = vst [vmem:[%s557 + $0x18] sm:%s549] %v570
      %v572 = vld [vmem:[%s556 + $0x1c] sm:%s549]
      %573 = vst [vmem:[%s557 + $0x1c] sm:%s549] %v572
      %v574 = vld [vmem:[%s556 + $0x20] sm:%s549]
      %575 = vst [vmem:[%s557 + $0x20] sm:%s549] %v574
      %v576 = vld [vmem:[%s556 + $0x30] sm:%s549]
      %577 = vst [vmem:[%s557 + $0x24] sm:%s549] %v576
      %v578 = vld [vmem:[%s556 + $0x24] sm:%s549]
      %579 = vst [vmem:[%s557 + $0x28] sm:%s549] %v578
      %v580 = vld [vmem:[%s556 + $0x34] sm:%s549]
      %581 = vst [vmem:[%s557 + $0x2c] sm:%s549] %v580
      %v582 = vld [vmem:[%s556 + $0x28] sm:%s549]
      %583 = vst [vmem:[%s557 + $0x30] sm:%s549] %v582
      %v584 = vld [vmem:[%s556 + $0x38] sm:%s549]
      %585 = vst [vmem:[%s557 + $0x34] sm:%s549] %v584
      %v586 = vld [vmem:[%s556 + $0x2c] sm:%s549]
      %587 = vst [vmem:[%s557 + $0x38] sm:%s549] %v586
      %v588 = vld [vmem:[%s556 + $0x3c] sm:%s549]
      %589 = vst [vmem:[%s557 + $0x3c] sm:%s549] %v588
      %v590 = vld [vmem:[%s556 + $0x40] sm:%s549]
      %591 = vst [vmem:[%s557 + $0x40] sm:%s549] %v590
      %v592 = vld [vmem:[%s556 + $0x50] sm:%s549]
      %593 = vst [vmem:[%s557 + $0x44] sm:%s549] %v592
      %v594 = vld [vmem:[%s556 + $0x44] sm:%s549]
      %595 = vst [vmem:[%s557 + $0x48] sm:%s549] %v594
      %v596 = vld [vmem:[%s556 + $0x54] sm:%s549]
      %597 = vst [vmem:[%s557 + $0x4c] sm:%s549] %v596
      %v598 = vld [vmem:[%s556 + $0x48] sm:%s549]
      %599 = vst [vmem:[%s557 + $0x50] sm:%s549] %v598
      %v600 = vld [vmem:[%s556 + $0x58] sm:%s549]
      %601 = vst [vmem:[%s557 + $0x54] sm:%s549] %v600
      %v602 = vld [vmem:[%s556 + $0x4c] sm:%s549]
      %603 = vst [vmem:[%s557 + $0x58] sm:%s549] %v602
      %v604 = vld [vmem:[%s556 + $0x5c] sm:%s549]
      %605 = vst [vmem:[%s557 + $0x5c] sm:%s549] %v604
      %v606 = vld [vmem:[%s556 + $0x60] sm:%s549]
      %607 = vst [vmem:[%s557 + $0x60] sm:%s549] %v606
      %v608 = vld [vmem:[%s556 + $0x70] sm:%s549]
      %609 = vst [vmem:[%s557 + $0x64] sm:%s549] %v608
      %v610 = vld [vmem:[%s556 + $0x64] sm:%s549]
      %611 = vst [vmem:[%s557 + $0x68] sm:%s549] %v610
      %v612 = vld [vmem:[%s556 + $0x74] sm:%s549]
      %613 = vst [vmem:[%s557 + $0x6c] sm:%s549] %v612
      %v614 = vld [vmem:[%s556 + $0x68] sm:%s549]
      %615 = vst [vmem:[%s557 + $0x70] sm:%s549] %v614
      %v616 = vld [vmem:[%s556 + $0x78] sm:%s549]
      %617 = vst [vmem:[%s557 + $0x74] sm:%s549] %v616
      %v618 = vld [vmem:[%s556 + $0x6c] sm:%s549]
      %619 = vst [vmem:[%s557 + $0x78] sm:%s549] %v618
      %v620 = vld [vmem:[%s556 + $0x7c] sm:%s549]
      %621 = vst [vmem:[%s557 + $0x7c] sm:%s549] %v620
      %v622 = vld [vmem:[%s556 + $0x80] sm:%s549]
      %623 = vst [vmem:[%s557 + $0x80] sm:%s549] %v622
      %v624 = vld [vmem:[%s556 + $0x90] sm:%s549]
      %625 = vst [vmem:[%s557 + $0x84] sm:%s549] %v624
      %v626 = vld [vmem:[%s556 + $0x84] sm:%s549]
      %627 = vst [vmem:[%s557 + $0x88] sm:%s549] %v626
      %v628 = vld [vmem:[%s556 + $0x94] sm:%s549]
      %629 = vst [vmem:[%s557 + $0x8c] sm:%s549] %v628
      %v630 = vld [vmem:[%s556 + $0x88] sm:%s549]
      %631 = vst [vmem:[%s557 + $0x90] sm:%s549] %v630
      %v632 = vld [vmem:[%s556 + $0x98] sm:%s549]
      %633 = vst [vmem:[%s557 + $0x94] sm:%s549] %v632
      %v634 = vld [vmem:[%s556 + $0x8c] sm:%s549]
      %635 = vst [vmem:[%s557 + $0x98] sm:%s549] %v634
      %v636 = vld [vmem:[%s556 + $0x9c] sm:%s549]
      %637 = vst [vmem:[%s557 + $0x9c] sm:%s549] %v636
      %v638 = vld [vmem:[%s556 + $0xa0] sm:%s549]
      %639 = vst [vmem:[%s557 + $0xa0] sm:%s549] %v638
      %v640 = vld [vmem:[%s556 + $0xb0] sm:%s549]
      %641 = vst [vmem:[%s557 + $0xa4] sm:%s549] %v640
      %v642 = vld [vmem:[%s556 + $0xa4] sm:%s549]
      %643 = vst [vmem:[%s557 + $0xa8] sm:%s549] %v642
      %v644 = vld [vmem:[%s556 + $0xb4] sm:%s549]
      %645 = vst [vmem:[%s557 + $0xac] sm:%s549] %v644
      %v646 = vld [vmem:[%s556 + $0xa8] sm:%s549]
      %647 = vst [vmem:[%s557 + $0xb0] sm:%s549] %v646
      %v648 = vld [vmem:[%s556 + $0xb8] sm:%s549]
      %649 = vst [vmem:[%s557 + $0xb4] sm:%s549] %v648
      %v650 = vld [vmem:[%s556 + $0xac] sm:%s549]
      %651 = vst [vmem:[%s557 + $0xb8] sm:%s549] %v650
      %v652 = vld [vmem:[%s556 + $0xbc] sm:%s549]
      %653 = vst [vmem:[%s557 + $0xbc] sm:%s549] %v652
      %v654 = vld [vmem:[%s556 + $0xc0] sm:%s549]
      %655 = vst [vmem:[%s557 + $0xc0] sm:%s549] %v654
      %v656 = vld [vmem:[%s556 + $0xd0] sm:%s549]
      %657 = vst [vmem:[%s557 + $0xc4] sm:%s549] %v656
      %v658 = vld [vmem:[%s556 + $0xc4] sm:%s549]
      %659 = vst [vmem:[%s557 + $0xc8] sm:%s549] %v658
      %v660 = vld [vmem:[%s556 + $0xd4] sm:%s549]
      %661 = vst [vmem:[%s557 + $0xcc] sm:%s549] %v660
      %v662 = vld [vmem:[%s556 + $0xc8] sm:%s549]
      %663 = vst [vmem:[%s557 + $0xd0] sm:%s549] %v662
      %v664 = vld [vmem:[%s556 + $0xd8] sm:%s549]
      %665 = vst [vmem:[%s557 + $0xd4] sm:%s549] %v664
      %v666 = vld [vmem:[%s556 + $0xcc] sm:%s549]
      %667 = vst [vmem:[%s557 + $0xd8] sm:%s549] %v666
      %v668 = vld [vmem:[%s556 + $0xdc] sm:%s549]
      %669 = vst [vmem:[%s557 + $0xdc] sm:%s549] %v668
      %v670 = vld [vmem:[%s556 + $0xe0] sm:%s549]
      %671 = vst [vmem:[%s557 + $0xe0] sm:%s549] %v670
      %v672 = vld [vmem:[%s556 + $0xf0] sm:%s549]
      %673 = vst [vmem:[%s557 + $0xe4] sm:%s549] %v672
      %v674 = vld [vmem:[%s556 + $0xe4] sm:%s549]
      %675 = vst [vmem:[%s557 + $0xe8] sm:%s549] %v674
      %v676 = vld [vmem:[%s556 + $0xf4] sm:%s549]
      %677 = vst [vmem:[%s557 + $0xec] sm:%s549] %v676
      %v678 = vld [vmem:[%s556 + $0xe8] sm:%s549]
      %679 = vst [vmem:[%s557 + $0xf0] sm:%s549] %v678
      %v680 = vld [vmem:[%s556 + $0xf8] sm:%s549]
      %681 = vst [vmem:[%s557 + $0xf4] sm:%s549] %v680
      %v682 = vld [vmem:[%s556 + $0xec] sm:%s549]
      %683 = vst [vmem:[%s557 + $0xf8] sm:%s549] %v682
      %v684 = vld [vmem:[%s556 + $0xfc] sm:%s549]
      %685 = vst [vmem:[%s557 + $0xfc] sm:%s549] %v684
      %v686 = vld [vmem:[%s556 + $0x100] sm:%s549]
      %687 = vst [vmem:[%s557 + $0x100] sm:%s549] %v686
      %v688 = vld [vmem:[%s556 + $0x110] sm:%s549]
      %689 = vst [vmem:[%s557 + $0x104] sm:%s549] %v688
      %v690 = vld [vmem:[%s556 + $0x104] sm:%s549]
      %691 = vst [vmem:[%s557 + $0x108] sm:%s549] %v690
      %v692 = vld [vmem:[%s556 + $0x114] sm:%s549]
      %693 = vst [vmem:[%s557 + $0x10c] sm:%s549] %v692
      %v694 = vld [vmem:[%s556 + $0x108] sm:%s549]
      %695 = vst [vmem:[%s557 + $0x110] sm:%s549] %v694
      %v696 = vld [vmem:[%s556 + $0x118] sm:%s549]
      %697 = vst [vmem:[%s557 + $0x114] sm:%s549] %v696
      %v698 = vld [vmem:[%s556 + $0x10c] sm:%s549]
      %699 = vst [vmem:[%s557 + $0x118] sm:%s549] %v698
      %v700 = vld [vmem:[%s556 + $0x11c] sm:%s549]
      %701 = vst [vmem:[%s557 + $0x11c] sm:%s549] %v700
      %v702 = vld [vmem:[%s556 + $0x120] sm:%s549]
      %703 = vst [vmem:[%s557 + $0x120] sm:%s549] %v702
      %v704 = vld [vmem:[%s556 + $0x130] sm:%s549]
      %705 = vst [vmem:[%s557 + $0x124] sm:%s549] %v704
      %v706 = vld [vmem:[%s556 + $0x124] sm:%s549]
      %707 = vst [vmem:[%s557 + $0x128] sm:%s549] %v706
      %v708 = vld [vmem:[%s556 + $0x134] sm:%s549]
      %709 = vst [vmem:[%s557 + $0x12c] sm:%s549] %v708
      %v710 = vld [vmem:[%s556 + $0x128] sm:%s549]
      %711 = vst [vmem:[%s557 + $0x130] sm:%s549] %v710
      %v712 = vld [vmem:[%s556 + $0x138] sm:%s549]
      %713 = vst [vmem:[%s557 + $0x134] sm:%s549] %v712
      %v714 = vld [vmem:[%s556 + $0x12c] sm:%s549]
      %715 = vst [vmem:[%s557 + $0x138] sm:%s549] %v714
      %v716 = vld [vmem:[%s556 + $0x13c] sm:%s549]
      %717 = vst [vmem:[%s557 + $0x13c] sm:%s549] %v716
      %v718 = vld [vmem:[%s556 + $0x140] sm:%s549]
      %719 = vst [vmem:[%s557 + $0x140] sm:%s549] %v718
      %v720 = vld [vmem:[%s556 + $0x150] sm:%s549]
      %721 = vst [vmem:[%s557 + $0x144] sm:%s549] %v720
      %v722 = vld [vmem:[%s556 + $0x144] sm:%s549]
      %723 = vst [vmem:[%s557 + $0x148] sm:%s549] %v722
      %v724 = vld [vmem:[%s556 + $0x154] sm:%s549]
      %725 = vst [vmem:[%s557 + $0x14c] sm:%s549] %v724
      %v726 = vld [vmem:[%s556 + $0x148] sm:%s549]
      %727 = vst [vmem:[%s557 + $0x150] sm:%s549] %v726
      %v728 = vld [vmem:[%s556 + $0x158] sm:%s549]
      %729 = vst [vmem:[%s557 + $0x154] sm:%s549] %v728
      %v730 = vld [vmem:[%s556 + $0x14c] sm:%s549]
      %731 = vst [vmem:[%s557 + $0x158] sm:%s549] %v730
      %v732 = vld [vmem:[%s556 + $0x15c] sm:%s549]
      %733 = vst [vmem:[%s557 + $0x15c] sm:%s549] %v732
      %v734 = vld [vmem:[%s556 + $0x160] sm:%s549]
      %735 = vst [vmem:[%s557 + $0x160] sm:%s549] %v734
      %v736 = vld [vmem:[%s556 + $0x170] sm:%s549]
      %737 = vst [vmem:[%s557 + $0x164] sm:%s549] %v736
      %v738 = vld [vmem:[%s556 + $0x164] sm:%s549]
      %739 = vst [vmem:[%s557 + $0x168] sm:%s549] %v738
      %v740 = vld [vmem:[%s556 + $0x174] sm:%s549]
      %741 = vst [vmem:[%s557 + $0x16c] sm:%s549] %v740
      %v742 = vld [vmem:[%s556 + $0x168] sm:%s549]
      %743 = vst [vmem:[%s557 + $0x170] sm:%s549] %v742
      %v744 = vld [vmem:[%s556 + $0x178] sm:%s549]
      %745 = vst [vmem:[%s557 + $0x174] sm:%s549] %v744
      %v746 = vld [vmem:[%s556 + $0x16c] sm:%s549]
      %747 = vst [vmem:[%s557 + $0x178] sm:%s549] %v746
      %v748 = vld [vmem:[%s556 + $0x17c] sm:%s549]
      %749 = vst [vmem:[%s557 + $0x17c] sm:%s549] %v748
      %v750 = vld [vmem:[%s556 + $0x180] sm:%s549]
      %751 = vst [vmem:[%s557 + $0x180] sm:%s549] %v750
      %v752 = vld [vmem:[%s556 + $0x190] sm:%s549]
      %753 = vst [vmem:[%s557 + $0x184] sm:%s549] %v752
      %v754 = vld [vmem:[%s556 + $0x184] sm:%s549]
      %755 = vst [vmem:[%s557 + $0x188] sm:%s549] %v754
      %v756 = vld [vmem:[%s556 + $0x194] sm:%s549]
      %757 = vst [vmem:[%s557 + $0x18c] sm:%s549] %v756
      %v758 = vld [vmem:[%s556 + $0x188] sm:%s549]
      %759 = vst [vmem:[%s557 + $0x190] sm:%s549] %v758
      %v760 = vld [vmem:[%s556 + $0x198] sm:%s549]
      %761 = vst [vmem:[%s557 + $0x194] sm:%s549] %v760
      %v762 = vld [vmem:[%s556 + $0x18c] sm:%s549]
      %763 = vst [vmem:[%s557 + $0x198] sm:%s549] %v762
      %v764 = vld [vmem:[%s556 + $0x19c] sm:%s549]
      %765 = vst [vmem:[%s557 + $0x19c] sm:%s549] %v764
      %v766 = vld [vmem:[%s556 + $0x1a0] sm:%s549]
      %767 = vst [vmem:[%s557 + $0x1a0] sm:%s549] %v766
      %v768 = vld [vmem:[%s556 + $0x1b0] sm:%s549]
      %769 = vst [vmem:[%s557 + $0x1a4] sm:%s549] %v768
      %v770 = vld [vmem:[%s556 + $0x1a4] sm:%s549]
      %771 = vst [vmem:[%s557 + $0x1a8] sm:%s549] %v770
      %v772 = vld [vmem:[%s556 + $0x1b4] sm:%s549]
      %773 = vst [vmem:[%s557 + $0x1ac] sm:%s549] %v772
      %v774 = vld [vmem:[%s556 + $0x1a8] sm:%s549]
      %775 = vst [vmem:[%s557 + $0x1b0] sm:%s549] %v774
      %v776 = vld [vmem:[%s556 + $0x1b8] sm:%s549]
      %777 = vst [vmem:[%s557 + $0x1b4] sm:%s549] %v776
      %v778 = vld [vmem:[%s556 + $0x1ac] sm:%s549]
      %779 = vst [vmem:[%s557 + $0x1b8] sm:%s549] %v778
      %v780 = vld [vmem:[%s556 + $0x1bc] sm:%s549]
      %781 = vst [vmem:[%s557 + $0x1bc] sm:%s549] %v780
      %v782 = vld [vmem:[%s556 + $0x1c0] sm:%s549]
      %783 = vst [vmem:[%s557 + $0x1c0] sm:%s549] %v782
      %v784 = vld [vmem:[%s556 + $0x1d0] sm:%s549]
      %785 = vst [vmem:[%s557 + $0x1c4] sm:%s549] %v784
      %v786 = vld [vmem:[%s556 + $0x1c4] sm:%s549]
      %787 = vst [vmem:[%s557 + $0x1c8] sm:%s549] %v786
      %v788 = vld [vmem:[%s556 + $0x1d4] sm:%s549]
      %789 = vst [vmem:[%s557 + $0x1cc] sm:%s549] %v788
      %v790 = vld [vmem:[%s556 + $0x1c8] sm:%s549]
      %791 = vst [vmem:[%s557 + $0x1d0] sm:%s549] %v790
      %v792 = vld [vmem:[%s556 + $0x1d8] sm:%s549]
      %793 = vst [vmem:[%s557 + $0x1d4] sm:%s549] %v792
      %v794 = vld [vmem:[%s556 + $0x1cc] sm:%s549]
      %795 = vst [vmem:[%s557 + $0x1d8] sm:%s549] %v794
      %v796 = vld [vmem:[%s556 + $0x1dc] sm:%s549]
      %797 = vst [vmem:[%s557 + $0x1dc] sm:%s549] %v796
      %v798 = vld [vmem:[%s556 + $0x1e0] sm:%s549]
      %799 = vst [vmem:[%s557 + $0x1e0] sm:%s549] %v798
      %v800 = vld [vmem:[%s556 + $0x1f0] sm:%s549]
      %801 = vst [vmem:[%s557 + $0x1e4] sm:%s549] %v800
      %v802 = vld [vmem:[%s556 + $0x1e4] sm:%s549]
      %803 = vst [vmem:[%s557 + $0x1e8] sm:%s549] %v802
      %v804 = vld [vmem:[%s556 + $0x1f4] sm:%s549]
      %805 = vst [vmem:[%s557 + $0x1ec] sm:%s549] %v804
      %v806 = vld [vmem:[%s556 + $0x1e8] sm:%s549]
      %807 = vst [vmem:[%s557 + $0x1f0] sm:%s549] %v806
      %v808 = vld [vmem:[%s556 + $0x1f8] sm:%s549]
      %809 = vst [vmem:[%s557 + $0x1f4] sm:%s549] %v808
      %v810 = vld [vmem:[%s556 + $0x1ec] sm:%s549]
      %811 = vst [vmem:[%s557 + $0x1f8] sm:%s549] %v810
      %v812 = vld [vmem:[%s556 + $0x1fc] sm:%s549]
      %813 = vst [vmem:[%s557 + $0x1fc] sm:%s549] %v812
      %v814 = vld [vmem:[%s556 + $0x200] sm:%s549]
      %815 = vst [vmem:[%s557 + $0x200] sm:%s549] %v814
      %v816 = vld [vmem:[%s556 + $0x210] sm:%s549]
      %817 = vst [vmem:[%s557 + $0x204] sm:%s549] %v816
      %v818 = vld [vmem:[%s556 + $0x204] sm:%s549]
      %819 = vst [vmem:[%s557 + $0x208] sm:%s549] %v818
      %v820 = vld [vmem:[%s556 + $0x214] sm:%s549]
      %821 = vst [vmem:[%s557 + $0x20c] sm:%s549] %v820
      %v822 = vld [vmem:[%s556 + $0x208] sm:%s549]
      %823 = vst [vmem:[%s557 + $0x210] sm:%s549] %v822
      %v824 = vld [vmem:[%s556 + $0x218] sm:%s549]
      %825 = vst [vmem:[%s557 + $0x214] sm:%s549] %v824
      %v826 = vld [vmem:[%s556 + $0x20c] sm:%s549]
      %827 = vst [vmem:[%s557 + $0x218] sm:%s549] %v826
      %v828 = vld [vmem:[%s556 + $0x21c] sm:%s549]
      %829 = vst [vmem:[%s557 + $0x21c] sm:%s549] %v828
      %v830 = vld [vmem:[%s556 + $0x220] sm:%s549]
      %831 = vst [vmem:[%s557 + $0x220] sm:%s549] %v830
      %v832 = vld [vmem:[%s556 + $0x230] sm:%s549]
      %833 = vst [vmem:[%s557 + $0x224] sm:%s549] %v832
      %v834 = vld [vmem:[%s556 + $0x224] sm:%s549]
      %835 = vst [vmem:[%s557 + $0x228] sm:%s549] %v834
      %v836 = vld [vmem:[%s556 + $0x234] sm:%s549]
      %837 = vst [vmem:[%s557 + $0x22c] sm:%s549] %v836
      %v838 = vld [vmem:[%s556 + $0x228] sm:%s549]
      %839 = vst [vmem:[%s557 + $0x230] sm:%s549] %v838
      %v840 = vld [vmem:[%s556 + $0x238] sm:%s549]
      %841 = vst [vmem:[%s557 + $0x234] sm:%s549] %v840
      %v842 = vld [vmem:[%s556 + $0x22c] sm:%s549]
      %843 = vst [vmem:[%s557 + $0x238] sm:%s549] %v842
      %v844 = vld [vmem:[%s556 + $0x23c] sm:%s549]
      %845 = vst [vmem:[%s557 + $0x23c] sm:%s549] %v844
      %v846 = vld [vmem:[%s556 + $0x240] sm:%s549]
      %847 = vst [vmem:[%s557 + $0x240] sm:%s549] %v846
      %v848 = vld [vmem:[%s556 + $0x250] sm:%s549]
      %849 = vst [vmem:[%s557 + $0x244] sm:%s549] %v848
      %v850 = vld [vmem:[%s556 + $0x244] sm:%s549]
      %851 = vst [vmem:[%s557 + $0x248] sm:%s549] %v850
      %v852 = vld [vmem:[%s556 + $0x254] sm:%s549]
      %853 = vst [vmem:[%s557 + $0x24c] sm:%s549] %v852
      %v854 = vld [vmem:[%s556 + $0x248] sm:%s549]
      %855 = vst [vmem:[%s557 + $0x250] sm:%s549] %v854
      %v856 = vld [vmem:[%s556 + $0x258] sm:%s549]
      %857 = vst [vmem:[%s557 + $0x254] sm:%s549] %v856
      %v858 = vld [vmem:[%s556 + $0x24c] sm:%s549]
      %859 = vst [vmem:[%s557 + $0x258] sm:%s549] %v858
      %v860 = vld [vmem:[%s556 + $0x25c] sm:%s549]
      %861 = vst [vmem:[%s557 + $0x25c] sm:%s549] %v860
      %v862 = vld [vmem:[%s556 + $0x260] sm:%s549]
      %863 = vst [vmem:[%s557 + $0x260] sm:%s549] %v862
      %v864 = vld [vmem:[%s556 + $0x270] sm:%s549]
      %865 = vst [vmem:[%s557 + $0x264] sm:%s549] %v864
      %v866 = vld [vmem:[%s556 + $0x264] sm:%s549]
      %867 = vst [vmem:[%s557 + $0x268] sm:%s549] %v866
      %v868 = vld [vmem:[%s556 + $0x274] sm:%s549]
      %869 = vst [vmem:[%s557 + $0x26c] sm:%s549] %v868
      %v870 = vld [vmem:[%s556 + $0x268] sm:%s549]
      %871 = vst [vmem:[%s557 + $0x270] sm:%s549] %v870
      %v872 = vld [vmem:[%s556 + $0x278] sm:%s549]
      %873 = vst [vmem:[%s557 + $0x274] sm:%s549] %v872
      %v874 = vld [vmem:[%s556 + $0x26c] sm:%s549]
      %875 = vst [vmem:[%s557 + $0x278] sm:%s549] %v874
      %v876 = vld [vmem:[%s556 + $0x27c] sm:%s549]
      %877 = vst [vmem:[%s557 + $0x27c] sm:%s549] %v876
      %v878 = vld [vmem:[%s556 + $0x280] sm:%s549]
      %879 = vst [vmem:[%s557 + $0x280] sm:%s549] %v878
      %v880 = vld [vmem:[%s556 + $0x290] sm:%s549]
      %881 = vst [vmem:[%s557 + $0x284] sm:%s549] %v880
      %v882 = vld [vmem:[%s556 + $0x284] sm:%s549]
      %883 = vst [vmem:[%s557 + $0x288] sm:%s549] %v882
      %v884 = vld [vmem:[%s556 + $0x294] sm:%s549]
      %885 = vst [vmem:[%s557 + $0x28c] sm:%s549] %v884
      %v886 = vld [vmem:[%s556 + $0x288] sm:%s549]
      %887 = vst [vmem:[%s557 + $0x290] sm:%s549] %v886
      %v888 = vld [vmem:[%s556 + $0x298] sm:%s549]
      %889 = vst [vmem:[%s557 + $0x294] sm:%s549] %v888
      %v890 = vld [vmem:[%s556 + $0x28c] sm:%s549]
      %891 = vst [vmem:[%s557 + $0x298] sm:%s549] %v890
      %v892 = vld [vmem:[%s556 + $0x29c] sm:%s549]
      %893 = vst [vmem:[%s557 + $0x29c] sm:%s549] %v892
      %v894 = vld [vmem:[%s556 + $0x2a0] sm:%s549]
      %895 = vst [vmem:[%s557 + $0x2a0] sm:%s549] %v894
      %v896 = vld [vmem:[%s556 + $0x2b0] sm:%s549]
      %897 = vst [vmem:[%s557 + $0x2a4] sm:%s549] %v896
      %v898 = vld [vmem:[%s556 + $0x2a4] sm:%s549]
      %899 = vst [vmem:[%s557 + $0x2a8] sm:%s549] %v898
      %v900 = vld [vmem:[%s556 + $0x2b4] sm:%s549]
      %901 = vst [vmem:[%s557 + $0x2ac] sm:%s549] %v900
      %v902 = vld [vmem:[%s556 + $0x2a8] sm:%s549]
      %903 = vst [vmem:[%s557 + $0x2b0] sm:%s549] %v902
      %v904 = vld [vmem:[%s556 + $0x2b8] sm:%s549]
      %905 = vst [vmem:[%s557 + $0x2b4] sm:%s549] %v904
      %v906 = vld [vmem:[%s556 + $0x2ac] sm:%s549]
      %907 = vst [vmem:[%s557 + $0x2b8] sm:%s549] %v906
      %v908 = vld [vmem:[%s556 + $0x2bc] sm:%s549]
      %909 = vst [vmem:[%s557 + $0x2bc] sm:%s549] %v908
      %v910 = vld [vmem:[%s556 + $0x2c0] sm:%s549]
      %911 = vst [vmem:[%s557 + $0x2c0] sm:%s549] %v910
      %v912 = vld [vmem:[%s556 + $0x2d0] sm:%s549]
      %913 = vst [vmem:[%s557 + $0x2c4] sm:%s549] %v912
      %v914 = vld [vmem:[%s556 + $0x2c4] sm:%s549]
      %915 = vst [vmem:[%s557 + $0x2c8] sm:%s549] %v914
      %v916 = vld [vmem:[%s556 + $0x2d4] sm:%s549]
      %917 = vst [vmem:[%s557 + $0x2cc] sm:%s549] %v916
      %v918 = vld [vmem:[%s556 + $0x2c8] sm:%s549]
      %919 = vst [vmem:[%s557 + $0x2d0] sm:%s549] %v918
      %v920 = vld [vmem:[%s556 + $0x2d8] sm:%s549]
      %921 = vst [vmem:[%s557 + $0x2d4] sm:%s549] %v920
      %v922 = vld [vmem:[%s556 + $0x2cc] sm:%s549]
      %923 = vst [vmem:[%s557 + $0x2d8] sm:%s549] %v922
      %v924 = vld [vmem:[%s556 + $0x2dc] sm:%s549]
      %925 = vst [vmem:[%s557 + $0x2dc] sm:%s549] %v924
      %v926 = vld [vmem:[%s556 + $0x2e0] sm:%s549]
      %927 = vst [vmem:[%s557 + $0x2e0] sm:%s549] %v926
      %v928 = vld [vmem:[%s556 + $0x2f0] sm:%s549]
      %929 = vst [vmem:[%s557 + $0x2e4] sm:%s549] %v928
      %v930 = vld [vmem:[%s556 + $0x2e4] sm:%s549]
      %931 = vst [vmem:[%s557 + $0x2e8] sm:%s549] %v930
      %v932 = vld [vmem:[%s556 + $0x2f4] sm:%s549]
      %933 = vst [vmem:[%s557 + $0x2ec] sm:%s549] %v932
      %v934 = vld [vmem:[%s556 + $0x2e8] sm:%s549]
      %935 = vst [vmem:[%s557 + $0x2f0] sm:%s549] %v934
      %v936 = vld [vmem:[%s556 + $0x2f8] sm:%s549]
      %937 = vst [vmem:[%s557 + $0x2f4] sm:%s549] %v936
      %v938 = vld [vmem:[%s556 + $0x2ec] sm:%s549]
      %939 = vst [vmem:[%s557 + $0x2f8] sm:%s549] %v938
      %v940 = vld [vmem:[%s556 + $0x2fc] sm:%s549]
      %941 = vst [vmem:[%s557 + $0x2fc] sm:%s549] %v940
      %v942 = vld [vmem:[%s556 + $0x300] sm:%s549]
      %943 = vst [vmem:[%s557 + $0x300] sm:%s549] %v942
      %v944 = vld [vmem:[%s556 + $0x310] sm:%s549]
      %945 = vst [vmem:[%s557 + $0x304] sm:%s549] %v944
      %v946 = vld [vmem:[%s556 + $0x304] sm:%s549]
      %947 = vst [vmem:[%s557 + $0x308] sm:%s549] %v946
      %v948 = vld [vmem:[%s556 + $0x314] sm:%s549]
      %949 = vst [vmem:[%s557 + $0x30c] sm:%s549] %v948
      %v950 = vld [vmem:[%s556 + $0x308] sm:%s549]
      %951 = vst [vmem:[%s557 + $0x310] sm:%s549] %v950
      %v952 = vld [vmem:[%s556 + $0x318] sm:%s549]
      %953 = vst [vmem:[%s557 + $0x314] sm:%s549] %v952
      %v954 = vld [vmem:[%s556 + $0x30c] sm:%s549]
      %955 = vst [vmem:[%s557 + $0x318] sm:%s549] %v954
      %v956 = vld [vmem:[%s556 + $0x31c] sm:%s549]
      %957 = vst [vmem:[%s557 + $0x31c] sm:%s549] %v956
      %v958 = vld [vmem:[%s556 + $0x320] sm:%s549]
      %959 = vst [vmem:[%s557 + $0x320] sm:%s549] %v958
      %v960 = vld [vmem:[%s556 + $0x330] sm:%s549]
      %961 = vst [vmem:[%s557 + $0x324] sm:%s549] %v960
      %v962 = vld [vmem:[%s556 + $0x324] sm:%s549]
      %963 = vst [vmem:[%s557 + $0x328] sm:%s549] %v962
      %v964 = vld [vmem:[%s556 + $0x334] sm:%s549]
      %965 = vst [vmem:[%s557 + $0x32c] sm:%s549] %v964
      %v966 = vld [vmem:[%s556 + $0x328] sm:%s549]
      %967 = vst [vmem:[%s557 + $0x330] sm:%s549] %v966
      %v968 = vld [vmem:[%s556 + $0x338] sm:%s549]
      %969 = vst [vmem:[%s557 + $0x334] sm:%s549] %v968
      %v970 = vld [vmem:[%s556 + $0x32c] sm:%s549]
      %971 = vst [vmem:[%s557 + $0x338] sm:%s549] %v970
      %v972 = vld [vmem:[%s556 + $0x33c] sm:%s549]
      %973 = vst [vmem:[%s557 + $0x33c] sm:%s549] %v972
      %v974 = vld [vmem:[%s556 + $0x340] sm:%s549]
      %975 = vst [vmem:[%s557 + $0x340] sm:%s549] %v974
      %v976 = vld [vmem:[%s556 + $0x350] sm:%s549]
      %977 = vst [vmem:[%s557 + $0x344] sm:%s549] %v976
      %v978 = vld [vmem:[%s556 + $0x344] sm:%s549]
      %979 = vst [vmem:[%s557 + $0x348] sm:%s549] %v978
      %v980 = vld [vmem:[%s556 + $0x354] sm:%s549]
      %981 = vst [vmem:[%s557 + $0x34c] sm:%s549] %v980
      %v982 = vld [vmem:[%s556 + $0x348] sm:%s549]
      %983 = vst [vmem:[%s557 + $0x350] sm:%s549] %v982
      %v984 = vld [vmem:[%s556 + $0x358] sm:%s549]
      %985 = vst [vmem:[%s557 + $0x354] sm:%s549] %v984
      %v986 = vld [vmem:[%s556 + $0x34c] sm:%s549]
      %987 = vst [vmem:[%s557 + $0x358] sm:%s549] %v986
      %v988 = vld [vmem:[%s556 + $0x35c] sm:%s549]
      %989 = vst [vmem:[%s557 + $0x35c] sm:%s549] %v988
      %v990 = vld [vmem:[%s556 + $0x360] sm:%s549]
      %991 = vst [vmem:[%s557 + $0x360] sm:%s549] %v990
      %v992 = vld [vmem:[%s556 + $0x370] sm:%s549]
      %993 = vst [vmem:[%s557 + $0x364] sm:%s549] %v992
      %v994 = vld [vmem:[%s556 + $0x364] sm:%s549]
      %995 = vst [vmem:[%s557 + $0x368] sm:%s549] %v994
      %v996 = vld [vmem:[%s556 + $0x374] sm:%s549]
      %997 = vst [vmem:[%s557 + $0x36c] sm:%s549] %v996
      %v998 = vld [vmem:[%s556 + $0x368] sm:%s549]
      %999 = vst [vmem:[%s557 + $0x370] sm:%s549] %v998
      %v1000 = vld [vmem:[%s556 + $0x378] sm:%s549]
      %1001 = vst [vmem:[%s557 + $0x374] sm:%s549] %v1000
      %v1002 = vld [vmem:[%s556 + $0x36c] sm:%s549]
      %1003 = vst [vmem:[%s557 + $0x378] sm:%s549] %v1002
      %v1004 = vld [vmem:[%s556 + $0x37c] sm:%s549]
      %1005 = vst [vmem:[%s557 + $0x37c] sm:%s549] %v1004
      %v1006 = vld [vmem:[%s556 + $0x380] sm:%s549]
      %1007 = vst [vmem:[%s557 + $0x380] sm:%s549] %v1006
      %v1008 = vld [vmem:[%s556 + $0x390] sm:%s549]
      %1009 = vst [vmem:[%s557 + $0x384] sm:%s549] %v1008
      %v1010 = vld [vmem:[%s556 + $0x384] sm:%s549]
      %1011 = vst [vmem:[%s557 + $0x388] sm:%s549] %v1010
      %v1012 = vld [vmem:[%s556 + $0x394] sm:%s549]
      %1013 = vst [vmem:[%s557 + $0x38c] sm:%s549] %v1012
      %v1014 = vld [vmem:[%s556 + $0x388] sm:%s549]
      %1015 = vst [vmem:[%s557 + $0x390] sm:%s549] %v1014
      %v1016 = vld [vmem:[%s556 + $0x398] sm:%s549]
      %1017 = vst [vmem:[%s557 + $0x394] sm:%s549] %v1016
      %v1018 = vld [vmem:[%s556 + $0x38c] sm:%s549]
      %1019 = vst [vmem:[%s557 + $0x398] sm:%s549] %v1018
      %v1020 = vld [vmem:[%s556 + $0x39c] sm:%s549]
      %1021 = vst [vmem:[%s557 + $0x39c] sm:%s549] %v1020
      %v1022 = vld [vmem:[%s556 + $0x3a0] sm:%s549]
      %1023 = vst [vmem:[%s557 + $0x3a0] sm:%s549] %v1022
      %v1024 = vld [vmem:[%s556 + $0x3b0] sm:%s549]
      %1025 = vst [vmem:[%s557 + $0x3a4] sm:%s549] %v1024
      %v1026 = vld [vmem:[%s556 + $0x3a4] sm:%s549]
      %1027 = vst [vmem:[%s557 + $0x3a8] sm:%s549] %v1026
      %v1028 = vld [vmem:[%s556 + $0x3b4] sm:%s549]
      %1029 = vst [vmem:[%s557 + $0x3ac] sm:%s549] %v1028
      %v1030 = vld [vmem:[%s556 + $0x3a8] sm:%s549]
      %1031 = vst [vmem:[%s557 + $0x3b0] sm:%s549] %v1030
      %v1032 = vld [vmem:[%s556 + $0x3b8] sm:%s549]
      %1033 = vst [vmem:[%s557 + $0x3b4] sm:%s549] %v1032
      %v1034 = vld [vmem:[%s556 + $0x3ac] sm:%s549]
      %1035 = vst [vmem:[%s557 + $0x3b8] sm:%s549] %v1034
      %v1036 = vld [vmem:[%s556 + $0x3bc] sm:%s549]
      %1037 = vst [vmem:[%s557 + $0x3bc] sm:%s549] %v1036
      %v1038 = vld [vmem:[%s556 + $0x3c0] sm:%s549]
      %1039 = vst [vmem:[%s557 + $0x3c0] sm:%s549] %v1038
      %v1040 = vld [vmem:[%s556 + $0x3d0] sm:%s549]
      %1041 = vst [vmem:[%s557 + $0x3c4] sm:%s549] %v1040
      %v1042 = vld [vmem:[%s556 + $0x3c4] sm:%s549]
      %1043 = vst [vmem:[%s557 + $0x3c8] sm:%s549] %v1042
      %v1044 = vld [vmem:[%s556 + $0x3d4] sm:%s549]
      %1045 = vst [vmem:[%s557 + $0x3cc] sm:%s549] %v1044
      %v1046 = vld [vmem:[%s556 + $0x3c8] sm:%s549]
      %1047 = vst [vmem:[%s557 + $0x3d0] sm:%s549] %v1046
      %v1048 = vld [vmem:[%s556 + $0x3d8] sm:%s549]
      %1049 = vst [vmem:[%s557 + $0x3d4] sm:%s549] %v1048
      %v1050 = vld [vmem:[%s556 + $0x3cc] sm:%s549]
      %1051 = vst [vmem:[%s557 + $0x3d8] sm:%s549] %v1050
      %v1052 = vld [vmem:[%s556 + $0x3dc] sm:%s549]
      %1053 = vst [vmem:[%s557 + $0x3dc] sm:%s549] %v1052
      %v1054 = vld [vmem:[%s556 + $0x3e0] sm:%s549]
      %1055 = vst [vmem:[%s557 + $0x3e0] sm:%s549] %v1054
      %v1056 = vld [vmem:[%s556 + $0x3f0] sm:%s549]
      %1057 = vst [vmem:[%s557 + $0x3e4] sm:%s549] %v1056
      %v1058 = vld [vmem:[%s556 + $0x3e4] sm:%s549]
      %1059 = vst [vmem:[%s557 + $0x3e8] sm:%s549] %v1058
      %v1060 = vld [vmem:[%s556 + $0x3f4] sm:%s549]
      %1061 = vst [vmem:[%s557 + $0x3ec] sm:%s549] %v1060
      %v1062 = vld [vmem:[%s556 + $0x3e8] sm:%s549]
      %1063 = vst [vmem:[%s557 + $0x3f0] sm:%s549] %v1062
      %v1064 = vld [vmem:[%s556 + $0x3f8] sm:%s549]
      %1065 = vst [vmem:[%s557 + $0x3f4] sm:%s549] %v1064
      %v1066 = vld [vmem:[%s556 + $0x3ec] sm:%s549]
      %1067 = vst [vmem:[%s557 + $0x3f8] sm:%s549] %v1066
      %v1068 = vld [vmem:[%s556 + $0x3fc] sm:%s549]
      %1069 = vst [vmem:[%s557 + $0x3fc] sm:%s549] %v1068
    $region64: #{_lambda_.1} parent=58 // loop_footer
      %s555 = sadd.s32 1, %s551
    $region65: #{_lambda_.1} parent=58 // loop_footer_branch
      %550 = sbr.rel target = $region61
    $region66: #{_lambda_.1} parent=58 // loop_exit
      _
  $region59: #{_lambda_.1} parent=0 // pred_fallthru
    _
  // Predicated region
  $region85: #{_lambda_.1} parent=0 // pred_check
    _
  $region86: #{_lambda_.1} parent=0 // pred_check_branch
    %1611 = sbr.rel (0) target = $region88
  $region87: #{_lambda_.1} parent=0 // pred_region
    %1612 = vsyncadd %s540, 16384
  $region88: #{_lambda_.1} parent=0 // pred_fallthru
    _
  %v1613 = vld [vmem:[%s2] sm:$0x3]
  %v1614 = vld [vmem:[%s0] sm:$0xff]
  %v1615 = vld [vmem:[%s0 + $0x8] sm:$0xff]
  %v1616 = vld [vmem:[%s0 + $0x10] sm:$0xff]
  %v1617 = vld [vmem:[%s0 + $0x18] sm:$0xff]
  %v1618 = vld [vmem:[%s0 + $0x20] sm:$0xff]
  %v1619 = vld [vmem:[%s0 + $0x28] sm:$0xff]
  %v1620 = vld [vmem:[%s0 + $0x30] sm:$0xff]
  %v1621 = vld [vmem:[%s0 + $0x38] sm:$0xff]
  %v1622 = vld [vmem:[%s0 + $0x40] sm:$0xff]
  %v1623 = vld [vmem:[%s0 + $0x48] sm:$0xff]
  %v1624 = vld [vmem:[%s0 + $0x50] sm:$0xff]
  %v1625 = vld [vmem:[%s0 + $0x58] sm:$0xff]
  %v1626 = vld [vmem:[%s0 + $0x60] sm:$0xff]
  %v1627 = vld [vmem:[%s0 + $0x68] sm:$0xff]
  %v1628 = vld [vmem:[%s0 + $0x70] sm:$0xff]
  %v1629 = vld [vmem:[%s0 + $0x78] sm:$0xff]
  %v1630 = vld [vmem:[%s0 + $0x80] sm:$0xff]
  %v1631 = vld [vmem:[%s0 + $0x88] sm:$0xff]
  %v1632 = vld [vmem:[%s0 + $0x90] sm:$0xff]
  %v1633 = vld [vmem:[%s0 + $0x98] sm:$0xff]
  %v1634 = vld [vmem:[%s0 + $0xa0] sm:$0xff]
  %v1635 = vld [vmem:[%s0 + $0xa8] sm:$0xff]
  %v1636 = vld [vmem:[%s0 + $0xb0] sm:$0xff]
  %v1637 = vld [vmem:[%s0 + $0xb8] sm:$0xff]
  %v1638 = vld [vmem:[%s0 + $0xc0] sm:$0xff]
  %v1639 = vld [vmem:[%s0 + $0xc8] sm:$0xff]
  %v1640 = vld [vmem:[%s0 + $0xd0] sm:$0xff]
  %v1641 = vld [vmem:[%s0 + $0xd8] sm:$0xff]
  %v1642 = vld [vmem:[%s0 + $0xe0] sm:$0xff]
  %v1643 = vld [vmem:[%s0 + $0xe8] sm:$0xff]
  %v1644 = vld [vmem:[%s0 + $0xf0] sm:$0xff]
  %v1645 = vld [vmem:[%s0 + $0xf8] sm:$0xff]
  %v1646 = vld [vmem:[%s0 + $0x100] sm:$0xff]
  %v1647 = vld [vmem:[%s0 + $0x108] sm:$0xff]
  %v1648 = vld [vmem:[%s0 + $0x110] sm:$0xff]
  %v1649 = vld [vmem:[%s0 + $0x118] sm:$0xff]
  %v1650 = vld [vmem:[%s0 + $0x120] sm:$0xff]
  %v1651 = vld [vmem:[%s0 + $0x128] sm:$0xff]
  %v1652 = vld [vmem:[%s0 + $0x130] sm:$0xff]
  %v1653 = vld [vmem:[%s0 + $0x138] sm:$0xff]
  %v1654 = vld [vmem:[%s0 + $0x140] sm:$0xff]
  %v1655 = vld [vmem:[%s0 + $0x148] sm:$0xff]
  %v1656 = vld [vmem:[%s0 + $0x150] sm:$0xff]
  %v1657 = vld [vmem:[%s0 + $0x158] sm:$0xff]
  %v1658 = vld [vmem:[%s0 + $0x160] sm:$0xff]
  %v1659 = vld [vmem:[%s0 + $0x168] sm:$0xff]
  %v1660 = vld [vmem:[%s0 + $0x170] sm:$0xff]
  %v1661 = vld [vmem:[%s0 + $0x178] sm:$0xff]
  %v1662 = vld [vmem:[%s0 + $0x180] sm:$0xff]
  %v1663 = vld [vmem:[%s0 + $0x188] sm:$0xff]
  %v1664 = vld [vmem:[%s0 + $0x190] sm:$0xff]
  %v1665 = vld [vmem:[%s0 + $0x198] sm:$0xff]
  %v1666 = vld [vmem:[%s0 + $0x1a0] sm:$0xff]
  %v1667 = vld [vmem:[%s0 + $0x1a8] sm:$0xff]
  %v1668 = vld [vmem:[%s0 + $0x1b0] sm:$0xff]
  %v1669 = vld [vmem:[%s0 + $0x1b8] sm:$0xff]
  %v1670 = vld [vmem:[%s0 + $0x1c0] sm:$0xff]
  %v1671 = vld [vmem:[%s0 + $0x1c8] sm:$0xff]
  %v1672 = vld [vmem:[%s0 + $0x1d0] sm:$0xff]
  %v1673 = vld [vmem:[%s0 + $0x1d8] sm:$0xff]
  %v1674 = vld [vmem:[%s0 + $0x1e0] sm:$0xff]
  %v1675 = vld [vmem:[%s0 + $0x1e8] sm:$0xff]
  %v1676 = vld [vmem:[%s0 + $0x1f0] sm:$0xff]
  %v1677 = vld [vmem:[%s0 + $0x1f8] sm:$0xff]
  %v1678 = vld [vmem:[%s0 + $0x200] sm:$0xff]
  %v1679 = vld [vmem:[%s0 + $0x208] sm:$0xff]
  %v1680 = vld [vmem:[%s0 + $0x210] sm:$0xff]
  %v1681 = vld [vmem:[%s0 + $0x218] sm:$0xff]
  %v1682 = vld [vmem:[%s0 + $0x220] sm:$0xff]
  %v1683 = vld [vmem:[%s0 + $0x228] sm:$0xff]
  %v1684 = vld [vmem:[%s0 + $0x230] sm:$0xff]
  %v1685 = vld [vmem:[%s0 + $0x238] sm:$0xff]
  %v1686 = vld [vmem:[%s1] sm:$0xff]
  %v1687 = vld [vmem:[%s1 + $0x8] sm:$0xff]
  %v1688 = vld [vmem:[%s1 + $0x10] sm:$0xff]
  %v1689 = vld [vmem:[%s1 + $0x18] sm:$0xff]
  %v1690 = vld [vmem:[%s1 + $0x20] sm:$0xff]
  %v1691 = vld [vmem:[%s1 + $0x28] sm:$0xff]
  %v1692 = vld [vmem:[%s1 + $0x30] sm:$0xff]
  %v1693 = vld [vmem:[%s1 + $0x38] sm:$0xff]
  %v1694 = vld [vmem:[%s1 + $0x40] sm:$0xff]
  %v1695 = vld [vmem:[%s1 + $0x48] sm:$0xff]
  %v1696 = vld [vmem:[%s1 + $0x50] sm:$0xff]
  %v1697 = vld [vmem:[%s1 + $0x58] sm:$0xff]
  %v1698 = vld [vmem:[%s1 + $0x60] sm:$0xff]
  %v1699 = vld [vmem:[%s1 + $0x68] sm:$0xff]
  %v1700 = vld [vmem:[%s1 + $0x70] sm:$0xff]
  %v1701 = vld [vmem:[%s1 + $0x78] sm:$0xff]
  %v1702 = vld [vmem:[%s1 + $0x80] sm:$0xff]
  %v1703 = vld [vmem:[%s1 + $0x88] sm:$0xff]
  %v1704 = vld [vmem:[%s1 + $0x90] sm:$0xff]
  %v1705 = vld [vmem:[%s1 + $0x98] sm:$0xff]
  %v1706 = vld [vmem:[%s1 + $0xa0] sm:$0xff]
  %v1707 = vld [vmem:[%s1 + $0xa8] sm:$0xff]
  %v1708 = vld [vmem:[%s1 + $0xb0] sm:$0xff]
  %v1709 = vld [vmem:[%s1 + $0xb8] sm:$0xff]
  %v1710 = vld [vmem:[%s1 + $0xc0] sm:$0xff]
  %v1711 = vld [vmem:[%s1 + $0xc8] sm:$0xff]
  %v1712 = vld [vmem:[%s1 + $0xd0] sm:$0xff]
  %v1713 = vld [vmem:[%s1 + $0xd8] sm:$0xff]
  %v1714 = vld [vmem:[%s1 + $0xe0] sm:$0xff]
  %v1715 = vld [vmem:[%s1 + $0xe8] sm:$0xff]
  %v1716 = vld [vmem:[%s1 + $0xf0] sm:$0xff]
  %v1717 = vld [vmem:[%s1 + $0xf8] sm:$0xff]
  %v1718 = vld [vmem:[%s1 + $0x100] sm:$0xff]
  %v1719 = vld [vmem:[%s1 + $0x108] sm:$0xff]
  %v1720 = vld [vmem:[%s1 + $0x110] sm:$0xff]
  %v1721 = vld [vmem:[%s1 + $0x118] sm:$0xff]
  %v1722 = vld [vmem:[%s1 + $0x120] sm:$0xff]
  %v1723 = vld [vmem:[%s1 + $0x128] sm:$0xff]
  %v1724 = vld [vmem:[%s1 + $0x130] sm:$0xff]
  %v1725 = vld [vmem:[%s1 + $0x138] sm:$0xff]
  %v1726 = vld [vmem:[%s1 + $0x140] sm:$0xff]
  %v1727 = vld [vmem:[%s1 + $0x148] sm:$0xff]
  %v1728 = vld [vmem:[%s1 + $0x150] sm:$0xff]
  %v1729 = vld [vmem:[%s1 + $0x158] sm:$0xff]
  %v1730 = vld [vmem:[%s1 + $0x160] sm:$0xff]
  %v1731 = vld [vmem:[%s1 + $0x168] sm:$0xff]
  %v1732 = vld [vmem:[%s1 + $0x170] sm:$0xff]
  %v1733 = vld [vmem:[%s1 + $0x178] sm:$0xff]
  %v1734 = vld [vmem:[%s1 + $0x180] sm:$0xff]
  %v1735 = vld [vmem:[%s1 + $0x188] sm:$0xff]
  %v1736 = vld [vmem:[%s1 + $0x190] sm:$0xff]
  %v1737 = vld [vmem:[%s1 + $0x198] sm:$0xff]
  %v1738 = vld [vmem:[%s1 + $0x1a0] sm:$0x33]
  %v1740 = vlaneseq
  %v1741 = vshrl.u32 %v1740, 7
  %v1742 = vsub.s32 0, %v1741
  %v1743 = vrot.slane %v1613, %v1742
  %v1744 = vlaneseq
  %v1745 = vshrl.u32 %v1744, 7
  %v1746 = vsub.s32 1, %v1745
  %v1747 = vrot.slane %v1613, %v1746
  %v1822 = vunpack.c.l.b16 %v1614
  %v1823 = vunpack.c.h.b16 %v1614
  %v1824 = vunpack.c.l.b16 %v1615
  %v1825 = vunpack.c.h.b16 %v1615
  %v1826 = vunpack.c.l.b16 %v1616
  %v1827 = vunpack.c.h.b16 %v1616
  %v1828 = vunpack.c.l.b16 %v1617
  %v1829 = vunpack.c.h.b16 %v1617
  %v1830 = vunpack.c.l.b16 %v1618
  %v1831 = vunpack.c.h.b16 %v1618
  %v1832 = vunpack.c.l.b16 %v1619
  %v1833 = vunpack.c.h.b16 %v1619
  %v1834 = vunpack.c.l.b16 %v1620
  %v1835 = vunpack.c.h.b16 %v1620
  %v1836 = vunpack.c.l.b16 %v1621
  %v1837 = vunpack.c.h.b16 %v1621
  %v1838 = vunpack.c.l.b16 %v1622
  %v1839 = vunpack.c.h.b16 %v1622
  %v1840 = vunpack.c.l.b16 %v1623
  %v1841 = vunpack.c.h.b16 %v1623
  %v1842 = vunpack.c.l.b16 %v1624
  %v1843 = vunpack.c.h.b16 %v1624
  %v1844 = vunpack.c.l.b16 %v1625
  %v1845 = vunpack.c.h.b16 %v1625
  %v1846 = vunpack.c.l.b16 %v1626
  %v1847 = vunpack.c.h.b16 %v1626
  %v1848 = vunpack.c.l.b16 %v1627
  %v1849 = vunpack.c.h.b16 %v1627
  %v1850 = vunpack.c.l.b16 %v1628
  %v1851 = vunpack.c.h.b16 %v1628
  %v1852 = vunpack.c.l.b16 %v1629
  %v1853 = vunpack.c.h.b16 %v1629
  %v1854 = vunpack.c.l.b16 %v1630
  %v1855 = vunpack.c.h.b16 %v1630
  %v1856 = vunpack.c.l.b16 %v1631
  %v1857 = vunpack.c.h.b16 %v1631
  %v1858 = vunpack.c.l.b16 %v1632
  %v1859 = vunpack.c.h.b16 %v1632
  %v1860 = vunpack.c.l.b16 %v1633
  %v1861 = vunpack.c.h.b16 %v1633
  %v1862 = vunpack.c.l.b16 %v1634
  %v1863 = vunpack.c.h.b16 %v1634
  %v1864 = vunpack.c.l.b16 %v1635
  %v1865 = vunpack.c.h.b16 %v1635
  %v1866 = vunpack.c.l.b16 %v1636
  %v1867 = vunpack.c.h.b16 %v1636
  %v1868 = vunpack.c.l.b16 %v1637
  %v1869 = vunpack.c.h.b16 %v1637
  %v1870 = vunpack.c.l.b16 %v1638
  %v1871 = vunpack.c.h.b16 %v1638
  %v1872 = vunpack.c.l.b16 %v1639
  %v1873 = vunpack.c.h.b16 %v1639
  %v1874 = vunpack.c.l.b16 %v1640
  %v1875 = vunpack.c.h.b16 %v1640
  %v1876 = vunpack.c.l.b16 %v1641
  %v1877 = vunpack.c.h.b16 %v1641
  %v1878 = vunpack.c.l.b16 %v1642
  %v1879 = vunpack.c.h.b16 %v1642
  %v1880 = vunpack.c.l.b16 %v1643
  %v1881 = vunpack.c.h.b16 %v1643
  %v1882 = vunpack.c.l.b16 %v1644
  %v1883 = vunpack.c.h.b16 %v1644
  %v1884 = vunpack.c.l.b16 %v1645
  %v1885 = vunpack.c.h.b16 %v1645
  %v1886 = vunpack.c.l.b16 %v1646
  %v1887 = vunpack.c.h.b16 %v1646
  %v1888 = vunpack.c.l.b16 %v1647
  %v1889 = vunpack.c.h.b16 %v1647
  %v1890 = vunpack.c.l.b16 %v1648
  %v1891 = vunpack.c.h.b16 %v1648
  %v1892 = vunpack.c.l.b16 %v1649
  %v1893 = vunpack.c.h.b16 %v1649
  %v1894 = vunpack.c.l.b16 %v1650
  %v1895 = vunpack.c.h.b16 %v1650
  %v1896 = vunpack.c.l.b16 %v1651
  %v1897 = vunpack.c.h.b16 %v1651
  %v1898 = vunpack.c.l.b16 %v1652
  %v1899 = vunpack.c.h.b16 %v1652
  %v1900 = vunpack.c.l.b16 %v1653
  %v1901 = vunpack.c.h.b16 %v1653
  %v1902 = vunpack.c.l.b16 %v1654
  %v1903 = vunpack.c.h.b16 %v1654
  %v1904 = vunpack.c.l.b16 %v1655
  %v1905 = vunpack.c.h.b16 %v1655
  %v1906 = vunpack.c.l.b16 %v1656
  %v1907 = vunpack.c.h.b16 %v1656
  %v1908 = vunpack.c.l.b16 %v1657
  %v1909 = vunpack.c.h.b16 %v1657
  %v1910 = vunpack.c.l.b16 %v1658
  %v1911 = vunpack.c.h.b16 %v1658
  %v1912 = vunpack.c.l.b16 %v1659
  %v1913 = vunpack.c.h.b16 %v1659
  %v1914 = vunpack.c.l.b16 %v1660
  %v1915 = vunpack.c.h.b16 %v1660
  %v1916 = vunpack.c.l.b16 %v1661
  %v1917 = vunpack.c.h.b16 %v1661
  %v1918 = vunpack.c.l.b16 %v1662
  %v1919 = vunpack.c.h.b16 %v1662
  %v1920 = vunpack.c.l.b16 %v1663
  %v1921 = vunpack.c.h.b16 %v1663
  %v1922 = vunpack.c.l.b16 %v1664
  %v1923 = vunpack.c.h.b16 %v1664
  %v1924 = vunpack.c.l.b16 %v1665
  %v1925 = vunpack.c.h.b16 %v1665
  %v1926 = vunpack.c.l.b16 %v1666
  %v1927 = vunpack.c.h.b16 %v1666
  %v1928 = vunpack.c.l.b16 %v1667
  %v1929 = vunpack.c.h.b16 %v1667
  %v1930 = vunpack.c.l.b16 %v1668
  %v1931 = vunpack.c.h.b16 %v1668
  %v1932 = vunpack.c.l.b16 %v1669
  %v1933 = vunpack.c.h.b16 %v1669
  %v1934 = vunpack.c.l.b16 %v1670
  %v1935 = vunpack.c.h.b16 %v1670
  %v1936 = vunpack.c.l.b16 %v1671
  %v1937 = vunpack.c.h.b16 %v1671
  %v1938 = vunpack.c.l.b16 %v1672
  %v1939 = vunpack.c.h.b16 %v1672
  %v1940 = vunpack.c.l.b16 %v1673
  %v1941 = vunpack.c.h.b16 %v1673
  %v1942 = vunpack.c.l.b16 %v1674
  %v1943 = vunpack.c.h.b16 %v1674
  %v1944 = vunpack.c.l.b16 %v1675
  %v1945 = vunpack.c.h.b16 %v1675
  %v1946 = vunpack.c.l.b16 %v1676
  %v1947 = vunpack.c.h.b16 %v1676
  %v1948 = vunpack.c.l.b16 %v1677
  %v1949 = vunpack.c.h.b16 %v1677
  %v1950 = vunpack.c.l.b16 %v1678
  %v1951 = vunpack.c.h.b16 %v1678
  %v1952 = vunpack.c.l.b16 %v1679
  %v1953 = vunpack.c.h.b16 %v1679
  %v1954 = vunpack.c.l.b16 %v1680
  %v1955 = vunpack.c.h.b16 %v1680
  %v1956 = vunpack.c.l.b16 %v1681
  %v1957 = vunpack.c.h.b16 %v1681
  %v1958 = vunpack.c.l.b16 %v1682
  %v1959 = vunpack.c.h.b16 %v1682
  %v1960 = vunpack.c.l.b16 %v1683
  %v1961 = vunpack.c.h.b16 %v1683
  %v1962 = vunpack.c.l.b16 %v1684
  %v1963 = vunpack.c.h.b16 %v1684
  %v1964 = vunpack.c.l.b16 %v1685
  %v1965 = vunpack.c.h.b16 %v1685
  %v1966 = vpack.c.b16 %v1826, %v1822
  %v1967 = vpack.c.b16 %v1827, %v1823
  %v1968 = vpack.c.b16 %v1828, %v1824
  %v1969 = vpack.c.b16 %v1829, %v1825
  %v1970 = vpack.c.b16 %v1834, %v1830
  %v1971 = vpack.c.b16 %v1835, %v1831
  %v1972 = vpack.c.b16 %v1836, %v1832
  %v1973 = vpack.c.b16 %v1837, %v1833
  %v1974 = vpack.c.b16 %v1842, %v1838
  %v1975 = vpack.c.b16 %v1843, %v1839
  %v1976 = vpack.c.b16 %v1844, %v1840
  %v1977 = vpack.c.b16 %v1845, %v1841
  %v1978 = vpack.c.b16 %v1850, %v1846
  %v1979 = vpack.c.b16 %v1851, %v1847
  %v1980 = vpack.c.b16 %v1852, %v1848
  %v1981 = vpack.c.b16 %v1853, %v1849
  %v1982 = vpack.c.b16 %v1858, %v1854
  %v1983 = vpack.c.b16 %v1859, %v1855
  %v1984 = vpack.c.b16 %v1860, %v1856
  %v1985 = vpack.c.b16 %v1861, %v1857
  %v1986 = vpack.c.b16 %v1866, %v1862
  %v1987 = vpack.c.b16 %v1867, %v1863
  %v1988 = vpack.c.b16 %v1868, %v1864
  %v1989 = vpack.c.b16 %v1869, %v1865
  %v1990 = vpack.c.b16 %v1874, %v1870
  %v1991 = vpack.c.b16 %v1875, %v1871
  %v1992 = vpack.c.b16 %v1876, %v1872
  %v1993 = vpack.c.b16 %v1877, %v1873
  %v1994 = vpack.c.b16 %v1882, %v1878
  %v1995 = vpack.c.b16 %v1883, %v1879
  %v1996 = vpack.c.b16 %v1884, %v1880
  %v1997 = vpack.c.b16 %v1885, %v1881
  %v1998 = vpack.c.b16 %v1890, %v1886
  %v1999 = vpack.c.b16 %v1891, %v1887
  %v2000 = vpack.c.b16 %v1892, %v1888
  %v2001 = vpack.c.b16 %v1893, %v1889
  %v2002 = vpack.c.b16 %v1898, %v1894
  %v2003 = vpack.c.b16 %v1899, %v1895
  %v2004 = vpack.c.b16 %v1900, %v1896
  %v2005 = vpack.c.b16 %v1901, %v1897
  %v2006 = vpack.c.b16 %v1906, %v1902
  %v2007 = vpack.c.b16 %v1907, %v1903
  %v2008 = vpack.c.b16 %v1908, %v1904
  %v2009 = vpack.c.b16 %v1909, %v1905
  %v2010 = vpack.c.b16 %v1914, %v1910
  %v2011 = vpack.c.b16 %v1915, %v1911
  %v2012 = vpack.c.b16 %v1916, %v1912
  %v2013 = vpack.c.b16 %v1917, %v1913
  %v2014 = vpack.c.b16 %v1922, %v1918
  %v2015 = vpack.c.b16 %v1923, %v1919
  %v2016 = vpack.c.b16 %v1924, %v1920
  %v2017 = vpack.c.b16 %v1925, %v1921
  %v2018 = vpack.c.b16 %v1930, %v1926
  %v2019 = vpack.c.b16 %v1931, %v1927
  %v2020 = vpack.c.b16 %v1932, %v1928
  %v2021 = vpack.c.b16 %v1933, %v1929
  %v2022 = vpack.c.b16 %v1938, %v1934
  %v2023 = vpack.c.b16 %v1939, %v1935
  %v2024 = vpack.c.b16 %v1940, %v1936
  %v2025 = vpack.c.b16 %v1941, %v1937
  %v2026 = vpack.c.b16 %v1946, %v1942
  %v2027 = vpack.c.b16 %v1947, %v1943
  %v2028 = vpack.c.b16 %v1948, %v1944
  %v2029 = vpack.c.b16 %v1949, %v1945
  %v2030 = vpack.c.b16 %v1954, %v1950
  %v2031 = vpack.c.b16 %v1955, %v1951
  %v2032 = vpack.c.b16 %v1956, %v1952
  %v2033 = vpack.c.b16 %v1957, %v1953
  %v2034 = vpack.c.b16 %v1962, %v1958
  %v2035 = vpack.c.b16 %v1963, %v1959
  %v2036 = vpack.c.b16 %v1964, %v1960
  %v2037 = vpack.c.b16 %v1965, %v1961
  %v2145 = vunpack.c.l.b16 %v1686
  %v2146 = vunpack.c.h.b16 %v1686
  %v2147 = vunpack.c.l.b16 %v1687
  %v2148 = vunpack.c.h.b16 %v1687
  %v2149 = vunpack.c.l.b16 %v1688
  %v2150 = vunpack.c.h.b16 %v1688
  %v2151 = vunpack.c.l.b16 %v1689
  %v2152 = vunpack.c.h.b16 %v1689
  %v2153 = vunpack.c.l.b16 %v1690
  %v2154 = vunpack.c.h.b16 %v1690
  %v2155 = vunpack.c.l.b16 %v1691
  %v2156 = vunpack.c.h.b16 %v1691
  %v2157 = vunpack.c.l.b16 %v1692
  %v2158 = vunpack.c.h.b16 %v1692
  %v2159 = vunpack.c.l.b16 %v1693
  %v2160 = vunpack.c.h.b16 %v1693
  %v2161 = vunpack.c.l.b16 %v1694
  %v2162 = vunpack.c.h.b16 %v1694
  %v2163 = vunpack.c.l.b16 %v1695
  %v2164 = vunpack.c.h.b16 %v1695
  %v2165 = vunpack.c.l.b16 %v1696
  %v2166 = vunpack.c.h.b16 %v1696
  %v2167 = vunpack.c.l.b16 %v1697
  %v2168 = vunpack.c.h.b16 %v1697
  %v2169 = vunpack.c.l.b16 %v1698
  %v2170 = vunpack.c.h.b16 %v1698
  %v2171 = vunpack.c.l.b16 %v1699
  %v2172 = vunpack.c.h.b16 %v1699
  %v2173 = vunpack.c.l.b16 %v1700
  %v2174 = vunpack.c.h.b16 %v1700
  %v2175 = vunpack.c.l.b16 %v1701
  %v2176 = vunpack.c.h.b16 %v1701
  %v2177 = vunpack.c.l.b16 %v1702
  %v2178 = vunpack.c.h.b16 %v1702
  %v2179 = vunpack.c.l.b16 %v1703
  %v2180 = vunpack.c.h.b16 %v1703
  %v2181 = vunpack.c.l.b16 %v1704
  %v2182 = vunpack.c.h.b16 %v1704
  %v2183 = vunpack.c.l.b16 %v1705
  %v2184 = vunpack.c.h.b16 %v1705
  %v2185 = vunpack.c.l.b16 %v1706
  %v2186 = vunpack.c.h.b16 %v1706
  %v2187 = vunpack.c.l.b16 %v1707
  %v2188 = vunpack.c.h.b16 %v1707
  %v2189 = vunpack.c.l.b16 %v1708
  %v2190 = vunpack.c.h.b16 %v1708
  %v2191 = vunpack.c.l.b16 %v1709
  %v2192 = vunpack.c.h.b16 %v1709
  %v2193 = vunpack.c.l.b16 %v1710
  %v2194 = vunpack.c.h.b16 %v1710
  %v2195 = vunpack.c.l.b16 %v1711
  %v2196 = vunpack.c.h.b16 %v1711
  %v2197 = vunpack.c.l.b16 %v1712
  %v2198 = vunpack.c.h.b16 %v1712
  %v2199 = vunpack.c.l.b16 %v1713
  %v2200 = vunpack.c.h.b16 %v1713
  %v2201 = vunpack.c.l.b16 %v1714
  %v2202 = vunpack.c.h.b16 %v1714
  %v2203 = vunpack.c.l.b16 %v1715
  %v2204 = vunpack.c.h.b16 %v1715
  %v2205 = vunpack.c.l.b16 %v1716
  %v2206 = vunpack.c.h.b16 %v1716
  %v2207 = vunpack.c.l.b16 %v1717
  %v2208 = vunpack.c.h.b16 %v1717
  %v2209 = vunpack.c.l.b16 %v1718
  %v2210 = vunpack.c.h.b16 %v1718
  %v2211 = vunpack.c.l.b16 %v1719
  %v2212 = vunpack.c.h.b16 %v1719
  %v2213 = vunpack.c.l.b16 %v1720
  %v2214 = vunpack.c.h.b16 %v1720
  %v2215 = vunpack.c.l.b16 %v1721
  %v2216 = vunpack.c.h.b16 %v1721
  %v2217 = vunpack.c.l.b16 %v1722
  %v2218 = vunpack.c.h.b16 %v1722
  %v2219 = vunpack.c.l.b16 %v1723
  %v2220 = vunpack.c.h.b16 %v1723
  %v2221 = vunpack.c.l.b16 %v1724
  %v2222 = vunpack.c.h.b16 %v1724
  %v2223 = vunpack.c.l.b16 %v1725
  %v2224 = vunpack.c.h.b16 %v1725
  %v2225 = vunpack.c.l.b16 %v1726
  %v2226 = vunpack.c.h.b16 %v1726
  %v2227 = vunpack.c.l.b16 %v1727
  %v2228 = vunpack.c.h.b16 %v1727
  %v2229 = vunpack.c.l.b16 %v1728
  %v2230 = vunpack.c.h.b16 %v1728
  %v2231 = vunpack.c.l.b16 %v1729
  %v2232 = vunpack.c.h.b16 %v1729
  %v2233 = vunpack.c.l.b16 %v1730
  %v2234 = vunpack.c.h.b16 %v1730
  %v2235 = vunpack.c.l.b16 %v1731
  %v2236 = vunpack.c.h.b16 %v1731
  %v2237 = vunpack.c.l.b16 %v1732
  %v2238 = vunpack.c.h.b16 %v1732
  %v2239 = vunpack.c.l.b16 %v1733
  %v2240 = vunpack.c.h.b16 %v1733
  %v2241 = vunpack.c.l.b16 %v1734
  %v2242 = vunpack.c.h.b16 %v1734
  %v2243 = vunpack.c.l.b16 %v1735
  %v2244 = vunpack.c.h.b16 %v1735
  %v2245 = vunpack.c.l.b16 %v1736
  %v2246 = vunpack.c.h.b16 %v1736
  %v2247 = vunpack.c.l.b16 %v1737
  %v2248 = vunpack.c.h.b16 %v1737
  %v2249 = vunpack.c.l.b16 %v1738
  %v2250 = vunpack.c.h.b16 %v1738
  %v2251 = vpack.c.b16 %v2147, %v2145
  %v2252 = vpack.c.b16 %v2148, %v2146
  %v2253 = vpack.c.b16 %v2151, %v2149
  %v2254 = vpack.c.b16 %v2152, %v2150
  %v2255 = vpack.c.b16 %v2155, %v2153
  %v2256 = vpack.c.b16 %v2156, %v2154
  %v2257 = vpack.c.b16 %v2159, %v2157
  %v2258 = vpack.c.b16 %v2160, %v2158
  %v2259 = vpack.c.b16 %v2163, %v2161
  %v2260 = vpack.c.b16 %v2164, %v2162
  %v2261 = vpack.c.b16 %v2167, %v2165
  %v2262 = vpack.c.b16 %v2168, %v2166
  %v2263 = vpack.c.b16 %v2171, %v2169
  %v2264 = vpack.c.b16 %v2172, %v2170
  %v2265 = vpack.c.b16 %v2175, %v2173
  %v2266 = vpack.c.b16 %v2176, %v2174
  %v2267 = vpack.c.b16 %v2179, %v2177
  %v2268 = vpack.c.b16 %v2180, %v2178
  %v2269 = vpack.c.b16 %v2183, %v2181
  %v2270 = vpack.c.b16 %v2184, %v2182
  %v2271 = vpack.c.b16 %v2187, %v2185
  %v2272 = vpack.c.b16 %v2188, %v2186
  %v2273 = vpack.c.b16 %v2191, %v2189
  %v2274 = vpack.c.b16 %v2192, %v2190
  %v2275 = vpack.c.b16 %v2195, %v2193
  %v2276 = vpack.c.b16 %v2196, %v2194
  %v2277 = vpack.c.b16 %v2199, %v2197
  %v2278 = vpack.c.b16 %v2200, %v2198
  %v2279 = vpack.c.b16 %v2203, %v2201
  %v2280 = vpack.c.b16 %v2204, %v2202
  %v2281 = vpack.c.b16 %v2207, %v2205
  %v2282 = vpack.c.b16 %v2208, %v2206
  %v2283 = vpack.c.b16 %v2211, %v2209
  %v2284 = vpack.c.b16 %v2212, %v2210
  %v2285 = vpack.c.b16 %v2215, %v2213
  %v2286 = vpack.c.b16 %v2216, %v2214
  %v2287 = vpack.c.b16 %v2219, %v2217
  %v2288 = vpack.c.b16 %v2220, %v2218
  %v2289 = vpack.c.b16 %v2223, %v2221
  %v2290 = vpack.c.b16 %v2224, %v2222
  %v2291 = vpack.c.b16 %v2227, %v2225
  %v2292 = vpack.c.b16 %v2228, %v2226
  %v2293 = vpack.c.b16 %v2231, %v2229
  %v2294 = vpack.c.b16 %v2232, %v2230
  %v2295 = vpack.c.b16 %v2235, %v2233
  %v2296 = vpack.c.b16 %v2236, %v2234
  %v2297 = vpack.c.b16 %v2239, %v2237
  %v2298 = vpack.c.b16 %v2240, %v2238
  %v2299 = vpack.c.b16 %v2243, %v2241
  %v2300 = vpack.c.b16 %v2244, %v2242
  %v2301 = vpack.c.b16 %v2247, %v2245
  %v2302 = vpack.c.b16 %v2248, %v2246
  %v2303 = vpack.c.b16 %v2249, %v2249
  %v2304 = vpack.c.b16 %v2250, %v2250
  %vm2357 = vcmask 293888
  %v2359 = vsel %vm2357, %v1969, 0
  %v2362 = vsel %vm2357, %v1973, 0
  %v2365 = vsel %vm2357, %v1977, 0
  %v2368 = vsel %vm2357, %v1981, 0
  %v2371 = vsel %vm2357, %v1985, 0
  %v2374 = vsel %vm2357, %v1989, 0
  %v2377 = vsel %vm2357, %v1993, 0
  %v2380 = vsel %vm2357, %v1997, 0
  %v2383 = vsel %vm2357, %v2001, 0
  %v2386 = vsel %vm2357, %v2005, 0
  %v2389 = vsel %vm2357, %v2009, 0
  %v2392 = vsel %vm2357, %v2013, 0
  %v2395 = vsel %vm2357, %v2017, 0
  %v2398 = vsel %vm2357, %v2021, 0
  %v2401 = vsel %vm2357, %v2025, 0
  %v2404 = vsel %vm2357, %v2029, 0
  %v2407 = vsel %vm2357, %v2033, 0
  %v2410 = vsel %vm2357, %v2037, 0
  %vm2412 = vcmask 1041408
  %v2414 = vsel %vm2412, %v2303, 0
  %v2417 = vsel %vm2412, %v2304, 0
  %2419 = vmatprep.subr.bf16.mxu0 %v2252
  %2420 = vmatpush1.bf16.msra.mxu0 %v2251
  %2421 = vmatprep.subr.bf16.mxu0 %v2254
  %2422 = vmatpush1.bf16.msra.mxu0 %v2253
  %2423 = vmatprep.subr.bf16.mxu0 %v2256
  %2424 = vmatpush1.bf16.msra.mxu0 %v2255
  %2425 = vmatprep.subr.bf16.mxu0 %v2258
  %2426 = vmatpush1.bf16.msra.mxu0 %v2257
  %2427 = vmatprep.subr.bf16.mxu0 %v2260
  %2428 = vmatpush1.bf16.msra.mxu0 %v2259
  %2429 = vmatprep.subr.bf16.mxu0 %v2262
  %2430 = vmatpush1.bf16.msra.mxu0 %v2261
  %2431 = vmatprep.subr.bf16.mxu0 %v2264
  %2432 = vmatpush1.bf16.msra.mxu0 %v2263
  %2433 = vmatprep.subr.bf16.mxu0 %v2266
  %2434 = vmatpush1.bf16.msra.mxu0 %v2265
  %2435 = vmatprep.subr.bf16.mxu0 %v2268
  %2436 = vmatpush1.bf16.msra.mxu0 %v2267
  %2437 = vmatprep.subr.bf16.mxu0 %v2270
  %2438 = vmatpush1.bf16.msra.mxu0 %v2269
  %2439 = vmatprep.subr.bf16.mxu0 %v2272
  %2440 = vmatpush1.bf16.msra.mxu0 %v2271
  %2441 = vmatprep.subr.bf16.mxu0 %v2274
  %2442 = vmatpush1.bf16.msra.mxu0 %v2273
  %2443 = vmatprep.subr.bf16.mxu0 %v2276
  %2444 = vmatpush1.bf16.msra.mxu0 %v2275
  %2445 = vmatprep.subr.bf16.mxu0 %v2278
  %2446 = vmatpush1.bf16.msra.mxu0 %v2277
  %2447 = vmatprep.subr.bf16.mxu0 %v2280
  %2448 = vmatpush1.bf16.msra.mxu0 %v2279
  %2449 = vmatprep.subr.bf16.mxu0 %v2282
  %2450 = vmatpush1.bf16.msra.mxu0 %v2281
  %2451 = vmatprep.mubr.bf16.mxu0 %v1967
  %2452 = vmatmul.mubr.bf16.gmra.mrb[0].mxu0 %v1966
  %v2453 = vpop.f32.mrb[0].mxu0
  %v2454 = vadd.f32 %v1743, %v2453
  %v2455 = vpop.f32.mrb[0].mxu0
  %v2456 = vadd.f32 %v1747, %v2455
  %v2457 = vpop.f32.mrb[0].mxu0
  %v2458 = vadd.f32 %v1743, %v2457
  %v2459 = vpop.f32.mrb[0].mxu0
  %v2460 = vadd.f32 %v1747, %v2459
  %2461 = vmatprep.mubr.bf16.mxu0 %v1971
  %2462 = vmatmul.mubr.bf16.gmra.mrb[0].mxu0 %v1970
  %v2463 = vpop.f32.mrb[0].mxu0
  %v2464 = vadd.f32 %v1743, %v2463
  %v2465 = vpop.f32.mrb[0].mxu0
  %v2466 = vadd.f32 %v1747, %v2465
  %v2467 = vpop.f32.mrb[0].mxu0
  %v2468 = vadd.f32 %v1743, %v2467
  %v2469 = vpop.f32.mrb[0].mxu0
  %v2470 = vadd.f32 %v1747, %v2469
  %2471 = vmatprep.mubr.bf16.mxu0 %v1975
  %2472 = vmatmul.mubr.bf16.gmra.mrb[0].mxu0 %v1974
  %v2473 = vpop.f32.mrb[0].mxu0
  %v2474 = vadd.f32 %v1743, %v2473
  %v2475 = vpop.f32.mrb[0].mxu0
  %v2476 = vadd.f32 %v1747, %v2475
  %v2477 = vpop.f32.mrb[0].mxu0
  %v2478 = vadd.f32 %v1743, %v2477
  %v2479 = vpop.f32.mrb[0].mxu0
  %v2480 = vadd.f32 %v1747, %v2479
  %2481 = vmatprep.mubr.bf16.mxu0 %v1979
  %2482 = vmatmul.mubr.bf16.gmra.mrb[0].mxu0 %v1978
  %v2483 = vpop.f32.mrb[0].mxu0
  %v2484 = vadd.f32 %v1743, %v2483
  %v2485 = vpop.f32.mrb[0].mxu0
  %v2486 = vadd.f32 %v1747, %v2485
  %v2487 = vpop.f32.mrb[0].mxu0
  %v2488 = vadd.f32 %v1743, %v2487
  %v2489 = vpop.f32.mrb[0].mxu0
  %v2490 = vadd.f32 %v1747, %v2489
  %2491 = vmatprep.mubr.bf16.mxu0 %v1983
  %2492 = vmatmul.mubr.bf16.gmra.mrb[0].mxu0 %v1982
  %v2493 = vpop.f32.mrb[0].mxu0
  %v2494 = vadd.f32 %v1743, %v2493
  %v2495 = vpop.f32.mrb[0].mxu0
  %v2496 = vadd.f32 %v1747, %v2495
  %v2497 = vpop.f32.mrb[0].mxu0
  %v2498 = vadd.f32 %v1743, %v2497
  %v2499 = vpop.f32.mrb[0].mxu0
  %v2500 = vadd.f32 %v1747, %v2499
  %2501 = vmatprep.mubr.bf16.mxu0 %v1987
  %2502 = vmatmul.mubr.bf16.gmra.mrb[0].mxu0 %v1986
  %v2503 = vpop.f32.mrb[0].mxu0
  %v2504 = vadd.f32 %v1743, %v2503
  %v2505 = vpop.f32.mrb[0].mxu0
  %v2506 = vadd.f32 %v1747, %v2505
  %v2507 = vpop.f32.mrb[0].mxu0
  %v2508 = vadd.f32 %v1743, %v2507
  %v2509 = vpop.f32.mrb[0].mxu0
  %v2510 = vadd.f32 %v1747, %v2509
  %2511 = vmatprep.mubr.bf16.mxu0 %v1991
  %2512 = vmatmul.mubr.bf16.gmra.mrb[0].mxu0 %v1990
  %v2513 = vpop.f32.mrb[0].mxu0
  %v2514 = vadd.f32 %v1743, %v2513
  %v2515 = vpop.f32.mrb[0].mxu0
  %v2516 = vadd.f32 %v1747, %v2515
  %v2517 = vpop.f32.mrb[0].mxu0
  %v2518 = vadd.f32 %v1743, %v2517
  %v2519 = vpop.f32.mrb[0].mxu0
  %v2520 = vadd.f32 %v1747, %v2519
  %2521 = vmatprep.mubr.bf16.mxu0 %v1995
  %2522 = vmatmul.mubr.bf16.gmra.mrb[0].mxu0 %v1994
  %v2523 = vpop.f32.mrb[0].mxu0
  %v2524 = vadd.f32 %v1743, %v2523
  %v2525 = vpop.f32.mrb[0].mxu0
  %v2526 = vadd.f32 %v1747, %v2525
  %v2527 = vpop.f32.mrb[0].mxu0
  %v2528 = vadd.f32 %v1743, %v2527
  %v2529 = vpop.f32.mrb[0].mxu0
  %v2530 = vadd.f32 %v1747, %v2529
  %2531 = vmatprep.mubr.bf16.mxu0 %v1999
  %2532 = vmatmul.mubr.bf16.gmra.mrb[0].mxu0 %v1998
  %v2533 = vpop.f32.mrb[0].mxu0
  %v2534 = vadd.f32 %v1743, %v2533
  %v2535 = vpop.f32.mrb[0].mxu0
  %v2536 = vadd.f32 %v1747, %v2535
  %v2537 = vpop.f32.mrb[0].mxu0
  %v2538 = vadd.f32 %v1743, %v2537
  %v2539 = vpop.f32.mrb[0].mxu0
  %v2540 = vadd.f32 %v1747, %v2539
  %2541 = vmatprep.mubr.bf16.mxu0 %v2003
  %2542 = vmatmul.mubr.bf16.gmra.mrb[0].mxu0 %v2002
  %v2543 = vpop.f32.mrb[0].mxu0
  %v2544 = vadd.f32 %v1743, %v2543
  %v2545 = vpop.f32.mrb[0].mxu0
  %v2546 = vadd.f32 %v1747, %v2545
  %v2547 = vpop.f32.mrb[0].mxu0
  %v2548 = vadd.f32 %v1743, %v2547
  %v2549 = vpop.f32.mrb[0].mxu0
  %v2550 = vadd.f32 %v1747, %v2549
  %2551 = vmatprep.mubr.bf16.mxu0 %v2007
  %2552 = vmatmul.mubr.bf16.gmra.mrb[0].mxu0 %v2006
  %v2553 = vpop.f32.mrb[0].mxu0
  %v2554 = vadd.f32 %v1743, %v2553
  %v2555 = vpop.f32.mrb[0].mxu0
  %v2556 = vadd.f32 %v1747, %v2555
  %v2557 = vpop.f32.mrb[0].mxu0
  %v2558 = vadd.f32 %v1743, %v2557
  %v2559 = vpop.f32.mrb[0].mxu0
  %v2560 = vadd.f32 %v1747, %v2559
  %2561 = vmatprep.mubr.bf16.mxu0 %v2011
  %2562 = vmatmul.mubr.bf16.gmra.mrb[0].mxu0 %v2010
  %v2563 = vpop.f32.mrb[0].mxu0
  %v2564 = vadd.f32 %v1743, %v2563
  %v2565 = vpop.f32.mrb[0].mxu0
  %v2566 = vadd.f32 %v1747, %v2565
  %v2567 = vpop.f32.mrb[0].mxu0
  %v2568 = vadd.f32 %v1743, %v2567
  %v2569 = vpop.f32.mrb[0].mxu0
  %v2570 = vadd.f32 %v1747, %v2569
  %2571 = vmatprep.mubr.bf16.mxu0 %v2015
  %2572 = vmatmul.mubr.bf16.gmra.mrb[0].mxu0 %v2014
  %v2573 = vpop.f32.mrb[0].mxu0
  %v2574 = vadd.f32 %v1743, %v2573
  %v2575 = vpop.f32.mrb[0].mxu0
  %v2576 = vadd.f32 %v1747, %v2575
  %v2577 = vpop.f32.mrb[0].mxu0
  %v2578 = vadd.f32 %v1743, %v2577
  %v2579 = vpop.f32.mrb[0].mxu0
  %v2580 = vadd.f32 %v1747, %v2579
  %2581 = vmatprep.mubr.bf16.mxu0 %v2019
  %2582 = vmatmul.mubr.bf16.gmra.mrb[0].mxu0 %v2018
  %v2583 = vpop.f32.mrb[0].mxu0
  %v2584 = vadd.f32 %v1743, %v2583
  %v2585 = vpop.f32.mrb[0].mxu0
  %v2586 = vadd.f32 %v1747, %v2585
  %v2587 = vpop.f32.mrb[0].mxu0
  %v2588 = vadd.f32 %v1743, %v2587
  %v2589 = vpop.f32.mrb[0].mxu0
  %v2590 = vadd.f32 %v1747, %v2589
  %2591 = vmatprep.mubr.bf16.mxu0 %v2023
  %2592 = vmatmul.mubr.bf16.gmra.mrb[0].mxu0 %v2022
  %v2593 = vpop.f32.mrb[0].mxu0
  %v2594 = vadd.f32 %v1743, %v2593
  %v2595 = vpop.f32.mrb[0].mxu0
  %v2596 = vadd.f32 %v1747, %v2595
  %v2597 = vpop.f32.mrb[0].mxu0
  %v2598 = vadd.f32 %v1743, %v2597
  %v2599 = vpop.f32.mrb[0].mxu0
  %v2600 = vadd.f32 %v1747, %v2599
  %2601 = vmatprep.mubr.bf16.mxu0 %v2027
  %2602 = vmatmul.mubr.bf16.gmra.mrb[0].mxu0 %v2026
  %v2603 = vpop.f32.mrb[0].mxu0
  %v2604 = vadd.f32 %v1743, %v2603
  %v2605 = vpop.f32.mrb[0].mxu0
  %v2606 = vadd.f32 %v1747, %v2605
  %v2607 = vpop.f32.mrb[0].mxu0
  %v2608 = vadd.f32 %v1743, %v2607
  %v2609 = vpop.f32.mrb[0].mxu0
  %v2610 = vadd.f32 %v1747, %v2609
  %2611 = vmatprep.mubr.bf16.mxu0 %v2031
  %2612 = vmatmul.mubr.bf16.gmra.mrb[0].mxu0 %v2030
  %v2613 = vpop.f32.mrb[0].mxu0
  %v2614 = vadd.f32 %v1743, %v2613
  %v2615 = vpop.f32.mrb[0].mxu0
  %v2616 = vadd.f32 %v1747, %v2615
  %v2617 = vpop.f32.mrb[0].mxu0
  %v2618 = vadd.f32 %v1743, %v2617
  %v2619 = vpop.f32.mrb[0].mxu0
  %v2620 = vadd.f32 %v1747, %v2619
  %2621 = vmatprep.mubr.bf16.mxu0 %v2035
  %2622 = vmatmul.mubr.bf16.gmra.mrb[0].mxu0 %v2034
  %v2623 = vpop.f32.mrb[0].mxu0
  %v2624 = vadd.f32 %v1743, %v2623
  %v2625 = vpop.f32.mrb[0].mxu0
  %v2626 = vadd.f32 %v1747, %v2625
  %v2627 = vpop.f32.mrb[0].mxu0
  %v2628 = vadd.f32 %v1743, %v2627
  %v2629 = vpop.f32.mrb[0].mxu0
  %v2630 = vadd.f32 %v1747, %v2629
  %2631 = vdwg.mxu0
  %2632 = vmatprep.subr.bf16.mxu0 %v2284
  %2633 = vmatpush1.bf16.msra.mxu0 %v2283
  %2634 = vmatprep.subr.bf16.mxu0 %v2286
  %2635 = vmatpush1.bf16.msra.mxu0 %v2285
  %2636 = vmatprep.subr.bf16.mxu0 %v2288
  %2637 = vmatpush1.bf16.msra.mxu0 %v2287
  %2638 = vmatprep.subr.bf16.mxu0 %v2290
  %2639 = vmatpush1.bf16.msra.mxu0 %v2289
  %2640 = vmatprep.subr.bf16.mxu0 %v2292
  %2641 = vmatpush1.bf16.msra.mxu0 %v2291
  %2642 = vmatprep.subr.bf16.mxu0 %v2294
  %2643 = vmatpush1.bf16.msra.mxu0 %v2293
  %2644 = vmatprep.subr.bf16.mxu0 %v2296
  %2645 = vmatpush1.bf16.msra.mxu0 %v2295
  %2646 = vmatprep.subr.bf16.mxu0 %v2298
  %2647 = vmatpush1.bf16.msra.mxu0 %v2297
  %2648 = vmatprep.subr.bf16.mxu0 %v2300
  %2649 = vmatpush1.bf16.msra.mxu0 %v2299
  %2650 = vmatprep.subr.bf16.mxu0 %v2302
  %2651 = vmatpush1.bf16.msra.mxu0 %v2301
  %2652 = vmatprep.subr.bf16.mxu0 %v2417
  %2653 = vmatpush1.bf16.msra.mxu0 %v2414
  %2654 = vmatprep.subr.bf16.mxu0 0
  %2655 = vmatpush1.bf16.msra.mxu0 0
  %2656 = vmatprep.subr.bf16.mxu0 0
  %2657 = vmatpush1.bf16.msra.mxu0 0
  %2658 = vmatprep.subr.bf16.mxu0 0
  %2659 = vmatpush1.bf16.msra.mxu0 0
  %2660 = vmatprep.subr.bf16.mxu0 0
  %2661 = vmatpush1.bf16.msra.mxu0 0
  %2662 = vmatprep.subr.bf16.mxu0 0
  %2663 = vmatpush1.bf16.msra.mxu0 0
  %2664 = vmatprep.mubr.bf16.mxu0 %v2359
  %2665 = vmatmul.mubr.bf16.gmra.mrb[0].mxu0 %v1968
  %v2666 = vpop.f32.mrb[0].mxu0
  %v2667 = vadd.f32 %v2454, %v2666
  %v2668 = vpop.f32.mrb[0].mxu0
  %v2669 = vadd.f32 %v2456, %v2668
  %v2670 = vpop.f32.mrb[0].mxu0
  %v2671 = vadd.f32 %v2458, %v2670
  %v2672 = vpop.f32.mrb[0].mxu0
  %v2673 = vadd.f32 %v2460, %v2672
  %2674 = vmatprep.mubr.bf16.mxu0 %v2362
  %2675 = vmatmul.mubr.bf16.gmra.mrb[0].mxu0 %v1972
  %v2676 = vpop.f32.mrb[0].mxu0
  %v2677 = vadd.f32 %v2464, %v2676
  %v2678 = vpop.f32.mrb[0].mxu0
  %v2679 = vadd.f32 %v2466, %v2678
  %v2680 = vpop.f32.mrb[0].mxu0
  %v2681 = vadd.f32 %v2468, %v2680
  %v2682 = vpop.f32.mrb[0].mxu0
  %v2683 = vadd.f32 %v2470, %v2682
  %2684 = vmatprep.mubr.bf16.mxu0 %v2365
  %2685 = vmatmul.mubr.bf16.gmra.mrb[0].mxu0 %v1976
  %v2686 = vpop.f32.mrb[0].mxu0
  %v2687 = vadd.f32 %v2474, %v2686
  %v2688 = vpop.f32.mrb[0].mxu0
  %v2689 = vadd.f32 %v2476, %v2688
  %v2690 = vpop.f32.mrb[0].mxu0
  %v2691 = vadd.f32 %v2478, %v2690
  %v2692 = vpop.f32.mrb[0].mxu0
  %v2693 = vadd.f32 %v2480, %v2692
  %2694 = vmatprep.mubr.bf16.mxu0 %v2368
  %2695 = vmatmul.mubr.bf16.gmra.mrb[0].mxu0 %v1980
  %v2696 = vpop.f32.mrb[0].mxu0
  %v2697 = vadd.f32 %v2484, %v2696
  %v2698 = vpop.f32.mrb[0].mxu0
  %v2699 = vadd.f32 %v2486, %v2698
  %v2700 = vpop.f32.mrb[0].mxu0
  %v2701 = vadd.f32 %v2488, %v2700
  %v2702 = vpop.f32.mrb[0].mxu0
  %v2703 = vadd.f32 %v2490, %v2702
  %2704 = vmatprep.mubr.bf16.mxu0 %v2371
  %2705 = vmatmul.mubr.bf16.gmra.mrb[0].mxu0 %v1984
  %v2706 = vpop.f32.mrb[0].mxu0
  %v2707 = vadd.f32 %v2494, %v2706
  %v2708 = vpop.f32.mrb[0].mxu0
  %v2709 = vadd.f32 %v2496, %v2708
  %v2710 = vpop.f32.mrb[0].mxu0
  %v2711 = vadd.f32 %v2498, %v2710
  %v2712 = vpop.f32.mrb[0].mxu0
  %v2713 = vadd.f32 %v2500, %v2712
  %2714 = vmatprep.mubr.bf16.mxu0 %v2374
  %2715 = vmatmul.mubr.bf16.gmra.mrb[0].mxu0 %v1988
  %v2716 = vpop.f32.mrb[0].mxu0
  %v2717 = vadd.f32 %v2504, %v2716
  %v2718 = vpop.f32.mrb[0].mxu0
  %v2719 = vadd.f32 %v2506, %v2718
  %v2720 = vpop.f32.mrb[0].mxu0
  %v2721 = vadd.f32 %v2508, %v2720
  %v2722 = vpop.f32.mrb[0].mxu0
  %v2723 = vadd.f32 %v2510, %v2722
  %2724 = vmatprep.mubr.bf16.mxu0 %v2377
  %2725 = vmatmul.mubr.bf16.gmra.mrb[0].mxu0 %v1992
  %v2726 = vpop.f32.mrb[0].mxu0
  %v2727 = vadd.f32 %v2514, %v2726
  %v2728 = vpop.f32.mrb[0].mxu0
  %v2729 = vadd.f32 %v2516, %v2728
  %v2730 = vpop.f32.mrb[0].mxu0
  %v2731 = vadd.f32 %v2518, %v2730
  %v2732 = vpop.f32.mrb[0].mxu0
  %v2733 = vadd.f32 %v2520, %v2732
  %2734 = vmatprep.mubr.bf16.mxu0 %v2380
  %2735 = vmatmul.mubr.bf16.gmra.mrb[0].mxu0 %v1996
  %v2736 = vpop.f32.mrb[0].mxu0
  %v2737 = vadd.f32 %v2524, %v2736
  %v2738 = vpop.f32.mrb[0].mxu0
  %v2739 = vadd.f32 %v2526, %v2738
  %v2740 = vpop.f32.mrb[0].mxu0
  %v2741 = vadd.f32 %v2528, %v2740
  %v2742 = vpop.f32.mrb[0].mxu0
  %v2743 = vadd.f32 %v2530, %v2742
  %2744 = vmatprep.mubr.bf16.mxu0 %v2383
  %2745 = vmatmul.mubr.bf16.gmra.mrb[0].mxu0 %v2000
  %v2746 = vpop.f32.mrb[0].mxu0
  %v2747 = vadd.f32 %v2534, %v2746
  %v2748 = vpop.f32.mrb[0].mxu0
  %v2749 = vadd.f32 %v2536, %v2748
  %v2750 = vpop.f32.mrb[0].mxu0
  %v2751 = vadd.f32 %v2538, %v2750
  %v2752 = vpop.f32.mrb[0].mxu0
  %v2753 = vadd.f32 %v2540, %v2752
  %2754 = vmatprep.mubr.bf16.mxu0 %v2386
  %2755 = vmatmul.mubr.bf16.gmra.mrb[0].mxu0 %v2004
  %v2756 = vpop.f32.mrb[0].mxu0
  %v2757 = vadd.f32 %v2544, %v2756
  %v2758 = vpop.f32.mrb[0].mxu0
  %v2759 = vadd.f32 %v2546, %v2758
  %v2760 = vpop.f32.mrb[0].mxu0
  %v2761 = vadd.f32 %v2548, %v2760
  %v2762 = vpop.f32.mrb[0].mxu0
  %v2763 = vadd.f32 %v2550, %v2762
  %2764 = vmatprep.mubr.bf16.mxu0 %v2389
  %2765 = vmatmul.mubr.bf16.gmra.mrb[0].mxu0 %v2008
  %v2766 = vpop.f32.mrb[0].mxu0
  %v2767 = vadd.f32 %v2554, %v2766
  %v2768 = vpop.f32.mrb[0].mxu0
  %v2769 = vadd.f32 %v2556, %v2768
  %v2770 = vpop.f32.mrb[0].mxu0
  %v2771 = vadd.f32 %v2558, %v2770
  %v2772 = vpop.f32.mrb[0].mxu0
  %v2773 = vadd.f32 %v2560, %v2772
  %2774 = vmatprep.mubr.bf16.mxu0 %v2392
  %2775 = vmatmul.mubr.bf16.gmra.mrb[0].mxu0 %v2012
  %v2776 = vpop.f32.mrb[0].mxu0
  %v2777 = vadd.f32 %v2564, %v2776
  %v2778 = vpop.f32.mrb[0].mxu0
  %v2779 = vadd.f32 %v2566, %v2778
  %v2780 = vpop.f32.mrb[0].mxu0
  %v2781 = vadd.f32 %v2568, %v2780
  %v2782 = vpop.f32.mrb[0].mxu0
  %v2783 = vadd.f32 %v2570, %v2782
  %2784 = vmatprep.mubr.bf16.mxu0 %v2395
  %2785 = vmatmul.mubr.bf16.gmra.mrb[0].mxu0 %v2016
  %v2786 = vpop.f32.mrb[0].mxu0
  %v2787 = vadd.f32 %v2574, %v2786
  %v2788 = vpop.f32.mrb[0].mxu0
  %v2789 = vadd.f32 %v2576, %v2788
  %v2790 = vpop.f32.mrb[0].mxu0
  %v2791 = vadd.f32 %v2578, %v2790
  %v2792 = vpop.f32.mrb[0].mxu0
  %v2793 = vadd.f32 %v2580, %v2792
  %2794 = vmatprep.mubr.bf16.mxu0 %v2398
  %2795 = vmatmul.mubr.bf16.gmra.mrb[0].mxu0 %v2020
  %v2796 = vpop.f32.mrb[0].mxu0
  %v2797 = vadd.f32 %v2584, %v2796
  %v2798 = vpop.f32.mrb[0].mxu0
  %v2799 = vadd.f32 %v2586, %v2798
  %v2800 = vpop.f32.mrb[0].mxu0
  %v2801 = vadd.f32 %v2588, %v2800
  %v2802 = vpop.f32.mrb[0].mxu0
  %v2803 = vadd.f32 %v2590, %v2802
  %2804 = vmatprep.mubr.bf16.mxu0 %v2401
  %2805 = vmatmul.mubr.bf16.gmra.mrb[0].mxu0 %v2024
  %v2806 = vpop.f32.mrb[0].mxu0
  %v2807 = vadd.f32 %v2594, %v2806
  %v2808 = vpop.f32.mrb[0].mxu0
  %v2809 = vadd.f32 %v2596, %v2808
  %v2810 = vpop.f32.mrb[0].mxu0
  %v2811 = vadd.f32 %v2598, %v2810
  %v2812 = vpop.f32.mrb[0].mxu0
  %v2813 = vadd.f32 %v2600, %v2812
  %2814 = vmatprep.mubr.bf16.mxu0 %v2404
  %2815 = vmatmul.mubr.bf16.gmra.mrb[0].mxu0 %v2028
  %v2816 = vpop.f32.mrb[0].mxu0
  %v2817 = vadd.f32 %v2604, %v2816
  %v2818 = vpop.f32.mrb[0].mxu0
  %v2819 = vadd.f32 %v2606, %v2818
  %v2820 = vpop.f32.mrb[0].mxu0
  %v2821 = vadd.f32 %v2608, %v2820
  %v2822 = vpop.f32.mrb[0].mxu0
  %v2823 = vadd.f32 %v2610, %v2822
  %2824 = vmatprep.mubr.bf16.mxu0 %v2407
  %2825 = vmatmul.mubr.bf16.gmra.mrb[0].mxu0 %v2032
  %v2826 = vpop.f32.mrb[0].mxu0
  %v2827 = vadd.f32 %v2614, %v2826
  %v2828 = vpop.f32.mrb[0].mxu0
  %v2829 = vadd.f32 %v2616, %v2828
  %v2830 = vpop.f32.mrb[0].mxu0
  %v2831 = vadd.f32 %v2618, %v2830
  %v2832 = vpop.f32.mrb[0].mxu0
  %v2833 = vadd.f32 %v2620, %v2832
  %2834 = vmatprep.mubr.bf16.mxu0 %v2410
  %2835 = vmatmul.mubr.bf16.gmra.mrb[0].mxu0 %v2036
  %v2836 = vpop.f32.mrb[0].mxu0
  %v2837 = vadd.f32 %v2624, %v2836
  %v2838 = vpop.f32.mrb[0].mxu0
  %v2839 = vadd.f32 %v2626, %v2838
  %v2840 = vpop.f32.mrb[0].mxu0
  %v2841 = vadd.f32 %v2628, %v2840
  %v2842 = vpop.f32.mrb[0].mxu0
  %v2843 = vadd.f32 %v2630, %v2842
  %2844 = vdwg.mxu0
  %v2845 = vmax.f32 %v2667, 0.0
  %v2846 = vmax.f32 %v2669, 0.0
  %v2847 = vmax.f32 %v2671, 0.0
  %v2848 = vmax.f32 %v2673, 0.0
  %v2849 = vmax.f32 %v2677, 0.0
  %v2850 = vmax.f32 %v2679, 0.0
  %v2851 = vmax.f32 %v2681, 0.0
  %v2852 = vmax.f32 %v2683, 0.0
  %v2853 = vmax.f32 %v2687, 0.0
  %v2854 = vmax.f32 %v2689, 0.0
  %v2855 = vmax.f32 %v2691, 0.0
  %v2856 = vmax.f32 %v2693, 0.0
  %v2857 = vmax.f32 %v2697, 0.0
  %v2858 = vmax.f32 %v2699, 0.0
  %v2859 = vmax.f32 %v2701, 0.0
  %v2860 = vmax.f32 %v2703, 0.0
  %v2861 = vmax.f32 %v2707, 0.0
  %v2862 = vmax.f32 %v2709, 0.0
  %v2863 = vmax.f32 %v2711, 0.0
  %v2864 = vmax.f32 %v2713, 0.0
  %v2865 = vmax.f32 %v2717, 0.0
  %v2866 = vmax.f32 %v2719, 0.0
  %v2867 = vmax.f32 %v2721, 0.0
  %v2868 = vmax.f32 %v2723, 0.0
  %v2869 = vmax.f32 %v2727, 0.0
  %v2870 = vmax.f32 %v2729, 0.0
  %v2871 = vmax.f32 %v2731, 0.0
  %v2872 = vmax.f32 %v2733, 0.0
  %v2873 = vmax.f32 %v2737, 0.0
  %v2874 = vmax.f32 %v2739, 0.0
  %v2875 = vmax.f32 %v2741, 0.0
  %v2876 = vmax.f32 %v2743, 0.0
  %v2877 = vmax.f32 %v2747, 0.0
  %v2878 = vmax.f32 %v2749, 0.0
  %v2879 = vmax.f32 %v2751, 0.0
  %v2880 = vmax.f32 %v2753, 0.0
  %v2881 = vmax.f32 %v2757, 0.0
  %v2882 = vmax.f32 %v2759, 0.0
  %v2883 = vmax.f32 %v2761, 0.0
  %v2884 = vmax.f32 %v2763, 0.0
  %v2885 = vmax.f32 %v2767, 0.0
  %v2886 = vmax.f32 %v2769, 0.0
  %v2887 = vmax.f32 %v2771, 0.0
  %v2888 = vmax.f32 %v2773, 0.0
  %v2889 = vmax.f32 %v2777, 0.0
  %v2890 = vmax.f32 %v2779, 0.0
  %v2891 = vmax.f32 %v2781, 0.0
  %v2892 = vmax.f32 %v2783, 0.0
  %v2893 = vmax.f32 %v2787, 0.0
  %v2894 = vmax.f32 %v2789, 0.0
  %v2895 = vmax.f32 %v2791, 0.0
  %v2896 = vmax.f32 %v2793, 0.0
  %v2897 = vmax.f32 %v2797, 0.0
  %v2898 = vmax.f32 %v2799, 0.0
  %v2899 = vmax.f32 %v2801, 0.0
  %v2900 = vmax.f32 %v2803, 0.0
  %v2901 = vmax.f32 %v2807, 0.0
  %v2902 = vmax.f32 %v2809, 0.0
  %v2903 = vmax.f32 %v2811, 0.0
  %v2904 = vmax.f32 %v2813, 0.0
  %v2905 = vmax.f32 %v2817, 0.0
  %v2906 = vmax.f32 %v2819, 0.0
  %v2907 = vmax.f32 %v2821, 0.0
  %v2908 = vmax.f32 %v2823, 0.0
  %v2909 = vmax.f32 %v2827, 0.0
  %v2910 = vmax.f32 %v2829, 0.0
  %v2911 = vmax.f32 %v2831, 0.0
  %v2912 = vmax.f32 %v2833, 0.0
  %v2913 = vmax.f32 %v2837, 0.0
  %v2914 = vmax.f32 %v2839, 0.0
  %v2915 = vmax.f32 %v2841, 0.0
  %v2916 = vmax.f32 %v2843, 0.0
  %v2917 = vpack.c.bf16 %v2847, %v2845
  %v2918 = vpack.c.bf16 %v2848, %v2846
  %v2919 = vpack.c.bf16 %v2851, %v2849
  %v2920 = vpack.c.bf16 %v2852, %v2850
  %v2921 = vpack.c.bf16 %v2855, %v2853
  %v2922 = vpack.c.bf16 %v2856, %v2854
  %v2923 = vpack.c.bf16 %v2859, %v2857
  %v2924 = vpack.c.bf16 %v2860, %v2858
  %v2925 = vpack.c.bf16 %v2863, %v2861
  %v2926 = vpack.c.bf16 %v2864, %v2862
  %v2927 = vpack.c.bf16 %v2867, %v2865
  %v2928 = vpack.c.bf16 %v2868, %v2866
  %v2929 = vpack.c.bf16 %v2871, %v2869
  %v2930 = vpack.c.bf16 %v2872, %v2870
  %v2931 = vpack.c.bf16 %v2875, %v2873
  %v2932 = vpack.c.bf16 %v2876, %v2874
  %v2933 = vpack.c.bf16 %v2879, %v2877
  %v2934 = vpack.c.bf16 %v2880, %v2878
  %v2935 = vpack.c.bf16 %v2883, %v2881
  %v2936 = vpack.c.bf16 %v2884, %v2882
  %v2937 = vpack.c.bf16 %v2887, %v2885
  %v2938 = vpack.c.bf16 %v2888, %v2886
  %v2939 = vpack.c.bf16 %v2891, %v2889
  %v2940 = vpack.c.bf16 %v2892, %v2890
  %v2941 = vpack.c.bf16 %v2895, %v2893
  %v2942 = vpack.c.bf16 %v2896, %v2894
  %v2943 = vpack.c.bf16 %v2899, %v2897
  %v2944 = vpack.c.bf16 %v2900, %v2898
  %v2945 = vpack.c.bf16 %v2903, %v2901
  %v2946 = vpack.c.bf16 %v2904, %v2902
  %v2947 = vpack.c.bf16 %v2907, %v2905
  %v2948 = vpack.c.bf16 %v2908, %v2906
  %v2949 = vpack.c.bf16 %v2911, %v2909
  %v2950 = vpack.c.bf16 %v2912, %v2910
  %v2951 = vpack.c.bf16 %v2915, %v2913
  %v2952 = vpack.c.bf16 %v2916, %v2914
  %2953 = vst [vmem:[#allocation2] sm:$0xff] %v2917
  %2954 = vst [vmem:[#allocation2 + $0x8] sm:$0xff] %v2918
  %2955 = vst [vmem:[#allocation2 + $0x10] sm:$0xff] %v2919
  %2956 = vst [vmem:[#allocation2 + $0x18] sm:$0xff] %v2920
  %2957 = vst [vmem:[#allocation2 + $0x20] sm:$0xff] %v2921
  %2958 = vst [vmem:[#allocation2 + $0x28] sm:$0xff] %v2922
  %2959 = vst [vmem:[#allocation2 + $0x30] sm:$0xff] %v2923
  %2960 = vst [vmem:[#allocation2 + $0x38] sm:$0xff] %v2924
  %2961 = vst [vmem:[#allocation2 + $0x40] sm:$0xff] %v2925
  %2962 = vst [vmem:[#allocation2 + $0x48] sm:$0xff] %v2926
  %2963 = vst [vmem:[#allocation2 + $0x50] sm:$0xff] %v2927
  %2964 = vst [vmem:[#allocation2 + $0x58] sm:$0xff] %v2928
  %2965 = vst [vmem:[#allocation2 + $0x60] sm:$0xff] %v2929
  %2966 = vst [vmem:[#allocation2 + $0x68] sm:$0xff] %v2930
  %2967 = vst [vmem:[#allocation2 + $0x70] sm:$0xff] %v2931
  %2968 = vst [vmem:[#allocation2 + $0x78] sm:$0xff] %v2932
  %2969 = vst [vmem:[#allocation2 + $0x80] sm:$0xff] %v2933
  %2970 = vst [vmem:[#allocation2 + $0x88] sm:$0xff] %v2934
  %2971 = vst [vmem:[#allocation2 + $0x90] sm:$0xff] %v2935
  %2972 = vst [vmem:[#allocation2 + $0x98] sm:$0xff] %v2936
  %2973 = vst [vmem:[#allocation2 + $0xa0] sm:$0xff] %v2937
  %2974 = vst [vmem:[#allocation2 + $0xa8] sm:$0xff] %v2938
  %2975 = vst [vmem:[#allocation2 + $0xb0] sm:$0xff] %v2939
  %2976 = vst [vmem:[#allocation2 + $0xb8] sm:$0xff] %v2940
  %2977 = vst [vmem:[#allocation2 + $0xc0] sm:$0xff] %v2941
  %2978 = vst [vmem:[#allocation2 + $0xc8] sm:$0xff] %v2942
  %2979 = vst [vmem:[#allocation2 + $0xd0] sm:$0xff] %v2943
  %2980 = vst [vmem:[#allocation2 + $0xd8] sm:$0xff] %v2944
  %2981 = vst [vmem:[#allocation2 + $0xe0] sm:$0xff] %v2945
  %2982 = vst [vmem:[#allocation2 + $0xe8] sm:$0xff] %v2946
  %2983 = vst [vmem:[#allocation2 + $0xf0] sm:$0xff] %v2947
  %2984 = vst [vmem:[#allocation2 + $0xf8] sm:$0xff] %v2948
  %2985 = vst [vmem:[#allocation2 + $0x100] sm:$0xff] %v2949
  %2986 = vst [vmem:[#allocation2 + $0x108] sm:$0xff] %v2950
  %2987 = vst [vmem:[#allocation2 + $0x110] sm:$0xff] %v2951
  %2988 = vst [vmem:[#allocation2 + $0x118] sm:$0xff] %v2952
  %s2989 = smul.u32 4, 30
  %s2990 = smul.u32 %s2989, 16
  %s2991 = smul.u32 %s2990, 1
  %s2992 = sshll.u32 %s2991, 4
  %2993 = dma.done [#allocation5], %s2992
  %v2994 = vld [vmem:[#allocation2] sm:$0xff]
  %v2995 = vld [vmem:[#allocation2 + $0x8] sm:$0xff]
  %v2996 = vld [vmem:[#allocation2 + $0x10] sm:$0xff]
  %v2997 = vld [vmem:[#allocation2 + $0x18] sm:$0xff]
  %v2998 = vld [vmem:[#allocation3] sm:$0xff]
  %v2999 = vld [vmem:[#allocation3 + $0x8] sm:$0xff]
  %v3000 = vld [vmem:[#allocation3 + $0x10] sm:$0xff]
  %v3001 = vld [vmem:[#allocation3 + $0x18] sm:$0xff]
  %v3002 = vld [vmem:[#allocation3 + $0x20] sm:$0xff]
  %v3003 = vld [vmem:[#allocation3 + $0x28] sm:$0xff]
  %v3004 = vld [vmem:[#allocation3 + $0x30] sm:$0xff]
  %v3005 = vld [vmem:[#allocation3 + $0x38] sm:$0xff]
  %v3006 = vld [vmem:[#allocation2 + $0x90] sm:$0xff]
  %v3007 = vld [vmem:[#allocation2 + $0x98] sm:$0xff]
  %v3008 = vld [vmem:[#allocation2 + $0xa0] sm:$0xff]
  %v3009 = vld [vmem:[#allocation2 + $0xa8] sm:$0xff]
  %s3010 = scalar_lea.vmem [#allocation3], 64
  %v3011 = vld [vmem:[%s3010] sm:$0xff]
  %v3012 = vld [vmem:[%s3010 + $0x8] sm:$0xff]
  %v3013 = vld [vmem:[%s3010 + $0x10] sm:$0xff]
  %v3014 = vld [vmem:[%s3010 + $0x18] sm:$0xff]
  %v3015 = vld [vmem:[%s3010 + $0x20] sm:$0xff]
  %v3016 = vld [vmem:[%s3010 + $0x28] sm:$0xff]
  %v3017 = vld [vmem:[%s3010 + $0x30] sm:$0xff]
  %v3018 = vld [vmem:[%s3010 + $0x38] sm:$0xff]
  %v3019 = vld [vmem:[#allocation2] sm:$0xf0]
  %v3020 = vld [vmem:[#allocation2 + $0x8] sm:$0xf0]
  %v3021 = vld [vmem:[#allocation2 + $0x20] sm:$0xf]
  %v3022 = vld [vmem:[#allocation2 + $0x28] sm:$0xf]
  %s3023 = scalar_lea.vmem [#allocation3], 128
  %v3024 = vld [vmem:[%s3023] sm:$0xff]
  %v3025 = vld [vmem:[%s3023 + $0x8] sm:$0xff]
  %v3026 = vld [vmem:[%s3023 + $0x10] sm:$0xff]
  %v3027 = vld [vmem:[%s3023 + $0x18] sm:$0xff]
  %v3028 = vld [vmem:[%s3023 + $0x20] sm:$0xff]
  %v3029 = vld [vmem:[%s3023 + $0x28] sm:$0xff]
  %v3030 = vld [vmem:[%s3023 + $0x30] sm:$0xff]
  %v3031 = vld [vmem:[%s3023 + $0x38] sm:$0xff]
  %v3032 = vld [vmem:[#allocation2 + $0x90] sm:$0xf0]
  %v3033 = vld [vmem:[#allocation2 + $0x98] sm:$0xf0]
  %v3034 = vld [vmem:[#allocation2 + $0xb0] sm:$0xf]
  %v3035 = vld [vmem:[#allocation2 + $0xb8] sm:$0xf]
  %s3036 = scalar_lea.vmem [#allocation3], 192
  %v3037 = vld [vmem:[%s3036] sm:$0xff]
  %v3038 = vld [vmem:[%s3036 + $0x8] sm:$0xff]
  %v3039 = vld [vmem:[%s3036 + $0x10] sm:$0xff]
  %v3040 = vld [vmem:[%s3036 + $0x18] sm:$0xff]
  %v3041 = vld [vmem:[%s3036 + $0x20] sm:$0xff]
  %v3042 = vld [vmem:[%s3036 + $0x28] sm:$0xff]
  %v3043 = vld [vmem:[%s3036 + $0x30] sm:$0xff]
  %v3044 = vld [vmem:[%s3036 + $0x38] sm:$0xff]
  %v3045 = vld [vmem:[#allocation2 + $0x20] sm:$0xff]
  %v3046 = vld [vmem:[#allocation2 + $0x28] sm:$0xff]
  %s3047 = scalar_lea.vmem [#allocation3], 256
  %v3048 = vld [vmem:[%s3047] sm:$0xff]
  %v3049 = vld [vmem:[%s3047 + $0x8] sm:$0xff]
  %v3050 = vld [vmem:[%s3047 + $0x10] sm:$0xff]
  %v3051 = vld [vmem:[%s3047 + $0x18] sm:$0xff]
  %v3052 = vld [vmem:[%s3047 + $0x20] sm:$0xff]
  %v3053 = vld [vmem:[%s3047 + $0x28] sm:$0xff]
  %v3054 = vld [vmem:[%s3047 + $0x30] sm:$0xff]
  %v3055 = vld [vmem:[%s3047 + $0x38] sm:$0xff]
  %3056 = vmatprep.subr.bf16.mxu0 0
  %3057 = vmatpush1.bf16.msra.mxu0 %v3048
  %3058 = vmatprep.subr.bf16.mxu0 0
  %3059 = vmatpush1.bf16.msra.mxu0 %v3049
  %3060 = vmatprep.subr.bf16.mxu0 0
  %3061 = vmatpush1.bf16.msra.mxu0 %v3050
  %3062 = vmatprep.subr.bf16.mxu0 0
  %3063 = vmatpush1.bf16.msra.mxu0 %v3051
  %3064 = vmatprep.subr.bf16.mxu0 0
  %3065 = vmatpush1.bf16.msra.mxu0 %v3052
  %3066 = vmatprep.subr.bf16.mxu0 0
  %3067 = vmatpush1.bf16.msra.mxu0 %v3053
  %3068 = vmatprep.subr.bf16.mxu0 0
  %3069 = vmatpush1.bf16.msra.mxu0 %v3054
  %3070 = vmatprep.subr.bf16.mxu0 0
  %3071 = vmatpush1.bf16.msra.mxu0 %v3055
  %3072 = vmatprep.subr.bf16.mxu0 0
  %3073 = vmatpush1.bf16.msra.mxu0 0
  %3074 = vmatprep.subr.bf16.mxu0 0
  %3075 = vmatpush1.bf16.msra.mxu0 0
  %3076 = vmatprep.subr.bf16.mxu0 0
  %3077 = vmatpush1.bf16.msra.mxu0 0
  %3078 = vmatprep.subr.bf16.mxu0 0
  %3079 = vmatpush1.bf16.msra.mxu0 0
  %3080 = vmatprep.subr.bf16.mxu0 0
  %3081 = vmatpush1.bf16.msra.mxu0 0
  %3082 = vmatprep.subr.bf16.mxu0 0
  %3083 = vmatpush1.bf16.msra.mxu0 0
  %3084 = vmatprep.subr.bf16.mxu0 0
  %3085 = vmatpush1.bf16.msra.mxu0 0
  %3086 = vmatprep.subr.bf16.mxu0 0
  %3087 = vmatpush1.bf16.msra.mxu0 0
  %3088 = vmatprep.mubr.bf16.mxu0 0
  %3089 = vmatmul.mubr.bf16.gmra.mrb[0].mxu0 %v2996
  %v3090 = vpop.f32.mrb[0].mxu0
  %v3091 = vadd.f32 0.0, %v3090
  %v3092 = vpop.f32.mrb[0].mxu0
  %v3093 = vpop.f32.mrb[0].mxu0
  %v3094 = vadd.f32 0.0, %v3093
  %v3095 = vpop.f32.mrb[0].mxu0
  %3096 = vmatprep.mubr.bf16.mxu0 0
  %3097 = vmatmul.mubr.bf16.gmra.mrb[0].mxu0 %v3045
  %v3098 = vpop.f32.mrb[0].mxu0
  %v3099 = vadd.f32 0.0, %v3098
  %v3100 = vpop.f32.mrb[0].mxu0
  %v3101 = vpop.f32.mrb[0].mxu0
  %v3102 = vadd.f32 0.0, %v3101
  %v3103 = vpop.f32.mrb[0].mxu0
  %3104 = vdwg.mxu0
  %3105 = vmatprep.subr.bf16.mxu0 0
  %3106 = vmatpush1.bf16.msra.mxu0 %v2998
  %3107 = vmatprep.subr.bf16.mxu0 0
  %3108 = vmatpush1.bf16.msra.mxu0 %v2999
  %3109 = vmatprep.subr.bf16.mxu0 0
  %3110 = vmatpush1.bf16.msra.mxu0 %v3000
  %3111 = vmatprep.subr.bf16.mxu0 0
  %3112 = vmatpush1.bf16.msra.mxu0 %v3001
  %3113 = vmatprep.subr.bf16.mxu0 0
  %3114 = vmatpush1.bf16.msra.mxu0 %v3002
  %3115 = vmatprep.subr.bf16.mxu0 0
  %3116 = vmatpush1.bf16.msra.mxu0 %v3003
  %3117 = vmatprep.subr.bf16.mxu0 0
  %3118 = vmatpush1.bf16.msra.mxu0 %v3004
  %3119 = vmatprep.subr.bf16.mxu0 0
  %3120 = vmatpush1.bf16.msra.mxu0 %v3005
  %3121 = vmatprep.subr.bf16.mxu0 0
  %3122 = vmatpush1.bf16.msra.mxu0 0
  %3123 = vmatprep.subr.bf16.mxu0 0
  %3124 = vmatpush1.bf16.msra.mxu0 0
  %3125 = vmatprep.subr.bf16.mxu0 0
  %3126 = vmatpush1.bf16.msra.mxu0 0
  %3127 = vmatprep.subr.bf16.mxu0 0
  %3128 = vmatpush1.bf16.msra.mxu0 0
  %3129 = vmatprep.subr.bf16.mxu0 0
  %3130 = vmatpush1.bf16.msra.mxu0 0
  %3131 = vmatprep.subr.bf16.mxu0 0
  %3132 = vmatpush1.bf16.msra.mxu0 0
  %3133 = vmatprep.subr.bf16.mxu0 0
  %3134 = vmatpush1.bf16.msra.mxu0 0
  %3135 = vmatprep.subr.bf16.mxu0 0
  %3136 = vmatpush1.bf16.msra.mxu0 0
  %3137 = vmatprep.mubr.bf16.mxu0 0
  %3138 = vmatmul.mubr.bf16.gmra.mrb[0].mxu0 %v2994
  %v3139 = vpop.f32.mrb[0].mxu0
  %v3140 = vadd.f32 %v3091, %v3139
  %v3141 = vpop.f32.mrb[0].mxu0
  %v3142 = vpop.f32.mrb[0].mxu0
  %v3143 = vadd.f32 %v3094, %v3142
  %v3144 = vpop.f32.mrb[0].mxu0
  %3145 = vmatprep.mubr.bf16.mxu0 0
  %3146 = vmatmul.mubr.bf16.gmra.mrb[0].mxu0 %v2996
  %v3147 = vpop.f32.mrb[0].mxu0
  %v3148 = vadd.f32 %v3099, %v3147
  %v3149 = vpop.f32.mrb[0].mxu0
  %v3150 = vpop.f32.mrb[0].mxu0
  %v3151 = vadd.f32 %v3102, %v3150
  %v3152 = vpop.f32.mrb[0].mxu0
  %3153 = vdwg.mxu0
  %3154 = vmatprep.subr.bf16.mxu0 0
  %3155 = vmatpush1.bf16.msra.mxu0 %v3048
  %3156 = vmatprep.subr.bf16.mxu0 0
  %3157 = vmatpush1.bf16.msra.mxu0 %v3049
  %3158 = vmatprep.subr.bf16.mxu0 0
  %3159 = vmatpush1.bf16.msra.mxu0 %v3050
  %3160 = vmatprep.subr.bf16.mxu0 0
  %3161 = vmatpush1.bf16.msra.mxu0 %v3051
  %3162 = vmatprep.subr.bf16.mxu0 0
  %3163 = vmatpush1.bf16.msra.mxu0 %v3052
  %3164 = vmatprep.subr.bf16.mxu0 0
  %3165 = vmatpush1.bf16.msra.mxu0 %v3053
  %3166 = vmatprep.subr.bf16.mxu0 0
  %3167 = vmatpush1.bf16.msra.mxu0 %v3054
  %3168 = vmatprep.subr.bf16.mxu0 0
  %3169 = vmatpush1.bf16.msra.mxu0 %v3055
  %3170 = vmatprep.subr.bf16.mxu0 0
  %3171 = vmatpush1.bf16.msra.mxu0 0
  %3172 = vmatprep.subr.bf16.mxu0 0
  %3173 = vmatpush1.bf16.msra.mxu0 0
  %3174 = vmatprep.subr.bf16.mxu0 0
  %3175 = vmatpush1.bf16.msra.mxu0 0
  %3176 = vmatprep.subr.bf16.mxu0 0
  %3177 = vmatpush1.bf16.msra.mxu0 0
  %3178 = vmatprep.subr.bf16.mxu0 0
  %3179 = vmatpush1.bf16.msra.mxu0 0
  %3180 = vmatprep.subr.bf16.mxu0 0
  %3181 = vmatpush1.bf16.msra.mxu0 0
  %3182 = vmatprep.subr.bf16.mxu0 0
  %3183 = vmatpush1.bf16.msra.mxu0 0
  %3184 = vmatprep.subr.bf16.mxu0 0
  %3185 = vmatpush1.bf16.msra.mxu0 0
  %3186 = vmatprep.mubr.bf16.mxu0 0
  %3187 = vmatmul.mubr.bf16.gmra.mrb[0].mxu0 %v2997
  %v3188 = vpop.f32.mrb[0].mxu0
  %v3189 = vadd.f32 0.0, %v3188
  %v3190 = vpop.f32.mrb[0].mxu0
  %v3191 = vpop.f32.mrb[0].mxu0
  %v3192 = vadd.f32 0.0, %v3191
  %v3193 = vpop.f32.mrb[0].mxu0
  %3194 = vmatprep.mubr.bf16.mxu0 0
  %3195 = vmatmul.mubr.bf16.gmra.mrb[0].mxu0 %v3046
  %v3196 = vpop.f32.mrb[0].mxu0
  %v3197 = vadd.f32 0.0, %v3196
  %v3198 = vpop.f32.mrb[0].mxu0
  %v3199 = vpop.f32.mrb[0].mxu0
  %v3200 = vadd.f32 0.0, %v3199
  %v3201 = vpop.f32.mrb[0].mxu0
  %3202 = vdwg.mxu0
  %3203 = vmatprep.subr.bf16.mxu0 0
  %3204 = vmatpush1.bf16.msra.mxu0 %v2998
  %3205 = vmatprep.subr.bf16.mxu0 0
  %3206 = vmatpush1.bf16.msra.mxu0 %v2999
  %3207 = vmatprep.subr.bf16.mxu0 0
  %3208 = vmatpush1.bf16.msra.mxu0 %v3000
  %3209 = vmatprep.subr.bf16.mxu0 0
  %3210 = vmatpush1.bf16.msra.mxu0 %v3001
  %3211 = vmatprep.subr.bf16.mxu0 0
  %3212 = vmatpush1.bf16.msra.mxu0 %v3002
  %3213 = vmatprep.subr.bf16.mxu0 0
  %3214 = vmatpush1.bf16.msra.mxu0 %v3003
  %3215 = vmatprep.subr.bf16.mxu0 0
  %3216 = vmatpush1.bf16.msra.mxu0 %v3004
  %3217 = vmatprep.subr.bf16.mxu0 0
  %3218 = vmatpush1.bf16.msra.mxu0 %v3005
  %3219 = vmatprep.subr.bf16.mxu0 0
  %3220 = vmatpush1.bf16.msra.mxu0 0
  %3221 = vmatprep.subr.bf16.mxu0 0
  %3222 = vmatpush1.bf16.msra.mxu0 0
  %3223 = vmatprep.subr.bf16.mxu0 0
  %3224 = vmatpush1.bf16.msra.mxu0 0
  %3225 = vmatprep.subr.bf16.mxu0 0
  %3226 = vmatpush1.bf16.msra.mxu0 0
  %3227 = vmatprep.subr.bf16.mxu0 0
  %3228 = vmatpush1.bf16.msra.mxu0 0
  %3229 = vmatprep.subr.bf16.mxu0 0
  %3230 = vmatpush1.bf16.msra.mxu0 0
  %3231 = vmatprep.subr.bf16.mxu0 0
  %3232 = vmatpush1.bf16.msra.mxu0 0
  %3233 = vmatprep.subr.bf16.mxu0 0
  %3234 = vmatpush1.bf16.msra.mxu0 0
  %3235 = vmatprep.mubr.bf16.mxu0 0
  %3236 = vmatmul.mubr.bf16.gmra.mrb[0].mxu0 %v2995
  %v3237 = vpop.f32.mrb[0].mxu0
  %v3238 = vadd.f32 %v3189, %v3237
  %v3239 = vpop.f32.mrb[0].mxu0
  %v3240 = vpop.f32.mrb[0].mxu0
  %v3241 = vadd.f32 %v3192, %v3240
  %v3242 = vpop.f32.mrb[0].mxu0
  %3243 = vmatprep.mubr.bf16.mxu0 0
  %3244 = vmatmul.mubr.bf16.gmra.mrb[0].mxu0 %v2997
  %v3245 = vpop.f32.mrb[0].mxu0
  %v3246 = vadd.f32 %v3197, %v3245
  %v3247 = vpop.f32.mrb[0].mxu0
  %v3248 = vpop.f32.mrb[0].mxu0
  %v3249 = vadd.f32 %v3200, %v3248
  %v3250 = vpop.f32.mrb[0].mxu0
  %3251 = vdwg.mxu0
  %v3252 = vld [vmem:[#allocation2 + $0xb0] sm:$0xff]
  %v3253 = vld [vmem:[#allocation2 + $0xb8] sm:$0xff]
  %s3254 = scalar_lea.vmem [#allocation3], 320
  %v3255 = vld [vmem:[%s3254] sm:$0xff]
  %v3256 = vld [vmem:[%s3254 + $0x8] sm:$0xff]
  %v3257 = vld [vmem:[%s3254 + $0x10] sm:$0xff]
  %v3258 = vld [vmem:[%s3254 + $0x18] sm:$0xff]
  %v3259 = vld [vmem:[%s3254 + $0x20] sm:$0xff]
  %v3260 = vld [vmem:[%s3254 + $0x28] sm:$0xff]
  %v3261 = vld [vmem:[%s3254 + $0x30] sm:$0xff]
  %v3262 = vld [vmem:[%s3254 + $0x38] sm:$0xff]
  %3263 = vmatprep.subr.bf16.mxu0 0
  %3264 = vmatpush1.bf16.msra.mxu0 %v3255
  %3265 = vmatprep.subr.bf16.mxu0 0
  %3266 = vmatpush1.bf16.msra.mxu0 %v3256
  %3267 = vmatprep.subr.bf16.mxu0 0
  %3268 = vmatpush1.bf16.msra.mxu0 %v3257
  %3269 = vmatprep.subr.bf16.mxu0 0
  %3270 = vmatpush1.bf16.msra.mxu0 %v3258
  %3271 = vmatprep.subr.bf16.mxu0 0
  %3272 = vmatpush1.bf16.msra.mxu0 %v3259
  %3273 = vmatprep.subr.bf16.mxu0 0
  %3274 = vmatpush1.bf16.msra.mxu0 %v3260
  %3275 = vmatprep.subr.bf16.mxu0 0
  %3276 = vmatpush1.bf16.msra.mxu0 %v3261
  %3277 = vmatprep.subr.bf16.mxu0 0
  %3278 = vmatpush1.bf16.msra.mxu0 %v3262
  %3279 = vmatprep.subr.bf16.mxu0 0
  %3280 = vmatpush1.bf16.msra.mxu0 0
  %3281 = vmatprep.subr.bf16.mxu0 0
  %3282 = vmatpush1.bf16.msra.mxu0 0
  %3283 = vmatprep.subr.bf16.mxu0 0
  %3284 = vmatpush1.bf16.msra.mxu0 0
  %3285 = vmatprep.subr.bf16.mxu0 0
  %3286 = vmatpush1.bf16.msra.mxu0 0
  %3287 = vmatprep.subr.bf16.mxu0 0
  %3288 = vmatpush1.bf16.msra.mxu0 0
  %3289 = vmatprep.subr.bf16.mxu0 0
  %3290 = vmatpush1.bf16.msra.mxu0 0
  %3291 = vmatprep.subr.bf16.mxu0 0
  %3292 = vmatpush1.bf16.msra.mxu0 0
  %3293 = vmatprep.subr.bf16.mxu0 0
  %3294 = vmatpush1.bf16.msra.mxu0 0
  %3295 = vmatprep.mubr.bf16.mxu0 0
  %3296 = vmatmul.mubr.bf16.gmra.mrb[0].mxu0 %v3008
  %v3297 = vpop.f32.mrb[0].mxu0
  %v3298 = vadd.f32 0.0, %v3297
  %v3299 = vpop.f32.mrb[0].mxu0
  %v3300 = vpop.f32.mrb[0].mxu0
  %v3301 = vadd.f32 0.0, %v3300
  %v3302 = vpop.f32.mrb[0].mxu0
  %3303 = vmatprep.mubr.bf16.mxu0 0
  %3304 = vmatmul.mubr.bf16.gmra.mrb[0].mxu0 %v3252
  %v3305 = vpop.f32.mrb[0].mxu0
  %v3306 = vadd.f32 0.0, %v3305
  %v3307 = vpop.f32.mrb[0].mxu0
  %v3308 = vpop.f32.mrb[0].mxu0
  %v3309 = vadd.f32 0.0, %v3308
  %v3310 = vpop.f32.mrb[0].mxu0
  %3311 = vdwg.mxu0
  %3312 = vmatprep.subr.bf16.mxu0 0
  %3313 = vmatpush1.bf16.msra.mxu0 %v3011
  %3314 = vmatprep.subr.bf16.mxu0 0
  %3315 = vmatpush1.bf16.msra.mxu0 %v3012
  %3316 = vmatprep.subr.bf16.mxu0 0
  %3317 = vmatpush1.bf16.msra.mxu0 %v3013
  %3318 = vmatprep.subr.bf16.mxu0 0
  %3319 = vmatpush1.bf16.msra.mxu0 %v3014
  %3320 = vmatprep.subr.bf16.mxu0 0
  %3321 = vmatpush1.bf16.msra.mxu0 %v3015
  %3322 = vmatprep.subr.bf16.mxu0 0
  %3323 = vmatpush1.bf16.msra.mxu0 %v3016
  %3324 = vmatprep.subr.bf16.mxu0 0
  %3325 = vmatpush1.bf16.msra.mxu0 %v3017
  %3326 = vmatprep.subr.bf16.mxu0 0
  %3327 = vmatpush1.bf16.msra.mxu0 %v3018
  %3328 = vmatprep.subr.bf16.mxu0 0
  %3329 = vmatpush1.bf16.msra.mxu0 0
  %3330 = vmatprep.subr.bf16.mxu0 0
  %3331 = vmatpush1.bf16.msra.mxu0 0
  %3332 = vmatprep.subr.bf16.mxu0 0
  %3333 = vmatpush1.bf16.msra.mxu0 0
  %3334 = vmatprep.subr.bf16.mxu0 0
  %3335 = vmatpush1.bf16.msra.mxu0 0
  %3336 = vmatprep.subr.bf16.mxu0 0
  %3337 = vmatpush1.bf16.msra.mxu0 0
  %3338 = vmatprep.subr.bf16.mxu0 0
  %3339 = vmatpush1.bf16.msra.mxu0 0
  %3340 = vmatprep.subr.bf16.mxu0 0
  %3341 = vmatpush1.bf16.msra.mxu0 0
  %3342 = vmatprep.subr.bf16.mxu0 0
  %3343 = vmatpush1.bf16.msra.mxu0 0
  %3344 = vmatprep.mubr.bf16.mxu0 0
  %3345 = vmatmul.mubr.bf16.gmra.mrb[0].mxu0 %v3006
  %v3346 = vpop.f32.mrb[0].mxu0
  %v3347 = vadd.f32 %v3298, %v3346
  %v3348 = vpop.f32.mrb[0].mxu0
  %v3349 = vpop.f32.mrb[0].mxu0
  %v3350 = vadd.f32 %v3301, %v3349
  %v3351 = vpop.f32.mrb[0].mxu0
  %3352 = vmatprep.mubr.bf16.mxu0 0
  %3353 = vmatmul.mubr.bf16.gmra.mrb[0].mxu0 %v3008
  %v3354 = vpop.f32.mrb[0].mxu0
  %v3355 = vadd.f32 %v3306, %v3354
  %v3356 = vpop.f32.mrb[0].mxu0
  %v3357 = vpop.f32.mrb[0].mxu0
  %v3358 = vadd.f32 %v3309, %v3357
  %v3359 = vpop.f32.mrb[0].mxu0
  %3360 = vdwg.mxu0
  %3361 = vmatprep.subr.bf16.mxu0 0
  %3362 = vmatpush1.bf16.msra.mxu0 %v3255
  %3363 = vmatprep.subr.bf16.mxu0 0
  %3364 = vmatpush1.bf16.msra.mxu0 %v3256
  %3365 = vmatprep.subr.bf16.mxu0 0
  %3366 = vmatpush1.bf16.msra.mxu0 %v3257
  %3367 = vmatprep.subr.bf16.mxu0 0
  %3368 = vmatpush1.bf16.msra.mxu0 %v3258
  %3369 = vmatprep.subr.bf16.mxu0 0
  %3370 = vmatpush1.bf16.msra.mxu0 %v3259
  %3371 = vmatprep.subr.bf16.mxu0 0
  %3372 = vmatpush1.bf16.msra.mxu0 %v3260
  %3373 = vmatprep.subr.bf16.mxu0 0
  %3374 = vmatpush1.bf16.msra.mxu0 %v3261
  %3375 = vmatprep.subr.bf16.mxu0 0
  %3376 = vmatpush1.bf16.msra.mxu0 %v3262
  %3377 = vmatprep.subr.bf16.mxu0 0
  %3378 = vmatpush1.bf16.msra.mxu0 0
  %3379 = vmatprep.subr.bf16.mxu0 0
  %3380 = vmatpush1.bf16.msra.mxu0 0
  %3381 = vmatprep.subr.bf16.mxu0 0
  %3382 = vmatpush1.bf16.msra.mxu0 0
  %3383 = vmatprep.subr.bf16.mxu0 0
  %3384 = vmatpush1.bf16.msra.mxu0 0
  %3385 = vmatprep.subr.bf16.mxu0 0
  %3386 = vmatpush1.bf16.msra.mxu0 0
  %3387 = vmatprep.subr.bf16.mxu0 0
  %3388 = vmatpush1.bf16.msra.mxu0 0
  %3389 = vmatprep.subr.bf16.mxu0 0
  %3390 = vmatpush1.bf16.msra.mxu0 0
  %3391 = vmatprep.subr.bf16.mxu0 0
  %3392 = vmatpush1.bf16.msra.mxu0 0
  %3393 = vmatprep.mubr.bf16.mxu0 0
  %3394 = vmatmul.mubr.bf16.gmra.mrb[0].mxu0 %v3009
  %v3395 = vpop.f32.mrb[0].mxu0
  %v3396 = vadd.f32 0.0, %v3395
  %v3397 = vpop.f32.mrb[0].mxu0
  %v3398 = vpop.f32.mrb[0].mxu0
  %v3399 = vadd.f32 0.0, %v3398
  %v3400 = vpop.f32.mrb[0].mxu0
  %3401 = vmatprep.mubr.bf16.mxu0 0
  %3402 = vmatmul.mubr.bf16.gmra.mrb[0].mxu0 %v3253
  %v3403 = vpop.f32.mrb[0].mxu0
  %v3404 = vadd.f32 0.0, %v3403
  %v3405 = vpop.f32.mrb[0].mxu0
  %v3406 = vpop.f32.mrb[0].mxu0
  %v3407 = vadd.f32 0.0, %v3406
  %v3408 = vpop.f32.mrb[0].mxu0
  %3409 = vdwg.mxu0
  %3410 = vmatprep.subr.bf16.mxu0 0
  %3411 = vmatpush1.bf16.msra.mxu0 %v3011
  %3412 = vmatprep.subr.bf16.mxu0 0
  %3413 = vmatpush1.bf16.msra.mxu0 %v3012
  %3414 = vmatprep.subr.bf16.mxu0 0
  %3415 = vmatpush1.bf16.msra.mxu0 %v3013
  %3416 = vmatprep.subr.bf16.mxu0 0
  %3417 = vmatpush1.bf16.msra.mxu0 %v3014
  %3418 = vmatprep.subr.bf16.mxu0 0
  %3419 = vmatpush1.bf16.msra.mxu0 %v3015
  %3420 = vmatprep.subr.bf16.mxu0 0
  %3421 = vmatpush1.bf16.msra.mxu0 %v3016
  %3422 = vmatprep.subr.bf16.mxu0 0
  %3423 = vmatpush1.bf16.msra.mxu0 %v3017
  %3424 = vmatprep.subr.bf16.mxu0 0
  %3425 = vmatpush1.bf16.msra.mxu0 %v3018
  %3426 = vmatprep.subr.bf16.mxu0 0
  %3427 = vmatpush1.bf16.msra.mxu0 0
  %3428 = vmatprep.subr.bf16.mxu0 0
  %3429 = vmatpush1.bf16.msra.mxu0 0
  %3430 = vmatprep.subr.bf16.mxu0 0
  %3431 = vmatpush1.bf16.msra.mxu0 0
  %3432 = vmatprep.subr.bf16.mxu0 0
  %3433 = vmatpush1.bf16.msra.mxu0 0
  %3434 = vmatprep.subr.bf16.mxu0 0
  %3435 = vmatpush1.bf16.msra.mxu0 0
  %3436 = vmatprep.subr.bf16.mxu0 0
  %3437 = vmatpush1.bf16.msra.mxu0 0
  %3438 = vmatprep.subr.bf16.mxu0 0
  %3439 = vmatpush1.bf16.msra.mxu0 0
  %3440 = vmatprep.subr.bf16.mxu0 0
  %3441 = vmatpush1.bf16.msra.mxu0 0
  %3442 = vmatprep.mubr.bf16.mxu0 0
  %3443 = vmatmul.mubr.bf16.gmra.mrb[0].mxu0 %v3007
  %v3444 = vpop.f32.mrb[0].mxu0
  %v3445 = vadd.f32 %v3396, %v3444
  %v3446 = vpop.f32.mrb[0].mxu0
  %v3447 = vpop.f32.mrb[0].mxu0
  %v3448 = vadd.f32 %v3399, %v3447
  %v3449 = vpop.f32.mrb[0].mxu0
  %3450 = vmatprep.mubr.bf16.mxu0 0
  %3451 = vmatmul.mubr.bf16.gmra.mrb[0].mxu0 %v3009
  %v3452 = vpop.f32.mrb[0].mxu0
  %v3453 = vadd.f32 %v3404, %v3452
  %v3454 = vpop.f32.mrb[0].mxu0
  %v3455 = vpop.f32.mrb[0].mxu0
  %v3456 = vadd.f32 %v3407, %v3455
  %v3457 = vpop.f32.mrb[0].mxu0
  %3458 = vdwg.mxu0
  %v3459 = vld [vmem:[#allocation2 + $0x10] sm:$0xf0]
  %v3460 = vld [vmem:[#allocation2 + $0x18] sm:$0xf0]
  %v3461 = vld [vmem:[#allocation2 + $0x20] sm:$0xff]
  %v3462 = vld [vmem:[#allocation2 + $0x28] sm:$0xff]
  %v3463 = vld [vmem:[#allocation2 + $0x30] sm:$0xf]
  %v3464 = vld [vmem:[#allocation2 + $0x38] sm:$0xf]
  %s3465 = scalar_lea.vmem [#allocation3], 384
  %v3466 = vld [vmem:[%s3465] sm:$0xff]
  %v3467 = vld [vmem:[%s3465 + $0x8] sm:$0xff]
  %v3468 = vld [vmem:[%s3465 + $0x10] sm:$0xff]
  %v3469 = vld [vmem:[%s3465 + $0x18] sm:$0xff]
  %v3470 = vld [vmem:[%s3465 + $0x20] sm:$0xff]
  %v3471 = vld [vmem:[%s3465 + $0x28] sm:$0xff]
  %v3472 = vld [vmem:[%s3465 + $0x30] sm:$0xff]
  %v3473 = vld [vmem:[%s3465 + $0x38] sm:$0xff]
  %vm3477 = vcmask 1043456
  %v3478 = vrot.slane %v3459, 4
  %v3479 = vrot.slane %v3461, 4
  %v3480 = vsel %vm3477, %v3478, %v3479
  %v3481 = vrot.slane %v3463, 4
  %v3482 = vsel %vm3477, %v3479, %v3481
  %3485 = vmatprep.subr.bf16.mxu0 0
  %3486 = vmatpush1.bf16.msra.mxu0 %v3466
  %3487 = vmatprep.subr.bf16.mxu0 0
  %3488 = vmatpush1.bf16.msra.mxu0 %v3467
  %3489 = vmatprep.subr.bf16.mxu0 0
  %3490 = vmatpush1.bf16.msra.mxu0 %v3468
  %3491 = vmatprep.subr.bf16.mxu0 0
  %3492 = vmatpush1.bf16.msra.mxu0 %v3469
  %3493 = vmatprep.subr.bf16.mxu0 0
  %3494 = vmatpush1.bf16.msra.mxu0 %v3470
  %3495 = vmatprep.subr.bf16.mxu0 0
  %3496 = vmatpush1.bf16.msra.mxu0 %v3471
  %3497 = vmatprep.subr.bf16.mxu0 0
  %3498 = vmatpush1.bf16.msra.mxu0 %v3472
  %3499 = vmatprep.subr.bf16.mxu0 0
  %3500 = vmatpush1.bf16.msra.mxu0 %v3473
  %3501 = vmatprep.subr.bf16.mxu0 0
  %3502 = vmatpush1.bf16.msra.mxu0 0
  %3503 = vmatprep.subr.bf16.mxu0 0
  %3504 = vmatpush1.bf16.msra.mxu0 0
  %3505 = vmatprep.subr.bf16.mxu0 0
  %3506 = vmatpush1.bf16.msra.mxu0 0
  %3507 = vmatprep.subr.bf16.mxu0 0
  %3508 = vmatpush1.bf16.msra.mxu0 0
  %3509 = vmatprep.subr.bf16.mxu0 0
  %3510 = vmatpush1.bf16.msra.mxu0 0
  %3511 = vmatprep.subr.bf16.mxu0 0
  %3512 = vmatpush1.bf16.msra.mxu0 0
  %3513 = vmatprep.subr.bf16.mxu0 0
  %3514 = vmatpush1.bf16.msra.mxu0 0
  %3515 = vmatprep.subr.bf16.mxu0 0
  %3516 = vmatpush1.bf16.msra.mxu0 0
  %3517 = vmatprep.mubr.bf16.mxu0 0
  %3518 = vmatmul.mubr.bf16.gmra.mrb[0].mxu0 %v3480
  %v3519 = vpop.f32.mrb[0].mxu0
  %v3520 = vadd.f32 0.0, %v3519
  %v3521 = vpop.f32.mrb[0].mxu0
  %v3522 = vpop.f32.mrb[0].mxu0
  %v3523 = vadd.f32 0.0, %v3522
  %v3524 = vpop.f32.mrb[0].mxu0
  %3525 = vmatprep.mubr.bf16.mxu0 0
  %3526 = vmatmul.mubr.bf16.gmra.mrb[0].mxu0 %v3482
  %v3527 = vpop.f32.mrb[0].mxu0
  %v3528 = vadd.f32 0.0, %v3527
  %v3529 = vpop.f32.mrb[0].mxu0
  %v3530 = vpop.f32.mrb[0].mxu0
  %v3531 = vadd.f32 0.0, %v3530
  %v3532 = vpop.f32.mrb[0].mxu0
  %3533 = vdwg.mxu0
  %v3537 = vrot.slane %v3019, 4
  %v3538 = vrot.slane %v2996, 4
  %v3539 = vsel %vm3477, %v3537, %v3538
  %v3540 = vrot.slane %v3021, 4
  %v3541 = vsel %vm3477, %v3538, %v3540
  %3544 = vmatprep.subr.bf16.mxu0 0
  %3545 = vmatpush1.bf16.msra.mxu0 %v3024
  %3546 = vmatprep.subr.bf16.mxu0 0
  %3547 = vmatpush1.bf16.msra.mxu0 %v3025
  %3548 = vmatprep.subr.bf16.mxu0 0
  %3549 = vmatpush1.bf16.msra.mxu0 %v3026
  %3550 = vmatprep.subr.bf16.mxu0 0
  %3551 = vmatpush1.bf16.msra.mxu0 %v3027
  %3552 = vmatprep.subr.bf16.mxu0 0
  %3553 = vmatpush1.bf16.msra.mxu0 %v3028
  %3554 = vmatprep.subr.bf16.mxu0 0
  %3555 = vmatpush1.bf16.msra.mxu0 %v3029
  %3556 = vmatprep.subr.bf16.mxu0 0
  %3557 = vmatpush1.bf16.msra.mxu0 %v3030
  %3558 = vmatprep.subr.bf16.mxu0 0
  %3559 = vmatpush1.bf16.msra.mxu0 %v3031
  %3560 = vmatprep.subr.bf16.mxu0 0
  %3561 = vmatpush1.bf16.msra.mxu0 0
  %3562 = vmatprep.subr.bf16.mxu0 0
  %3563 = vmatpush1.bf16.msra.mxu0 0
  %3564 = vmatprep.subr.bf16.mxu0 0
  %3565 = vmatpush1.bf16.msra.mxu0 0
  %3566 = vmatprep.subr.bf16.mxu0 0
  %3567 = vmatpush1.bf16.msra.mxu0 0
  %3568 = vmatprep.subr.bf16.mxu0 0
  %3569 = vmatpush1.bf16.msra.mxu0 0
  %3570 = vmatprep.subr.bf16.mxu0 0
  %3571 = vmatpush1.bf16.msra.mxu0 0
  %3572 = vmatprep.subr.bf16.mxu0 0
  %3573 = vmatpush1.bf16.msra.mxu0 0
  %3574 = vmatprep.subr.bf16.mxu0 0
  %3575 = vmatpush1.bf16.msra.mxu0 0
  %3576 = vmatprep.mubr.bf16.mxu0 0
  %3577 = vmatmul.mubr.bf16.gmra.mrb[0].mxu0 %v3539
  %v3578 = vpop.f32.mrb[0].mxu0
  %v3579 = vadd.f32 %v3520, %v3578
  %v3580 = vpop.f32.mrb[0].mxu0
  %v3581 = vpop.f32.mrb[0].mxu0
  %v3582 = vadd.f32 %v3523, %v3581
  %v3583 = vpop.f32.mrb[0].mxu0
  %3584 = vmatprep.mubr.bf16.mxu0 0
  %3585 = vmatmul.mubr.bf16.gmra.mrb[0].mxu0 %v3541
  %v3586 = vpop.f32.mrb[0].mxu0
  %v3587 = vadd.f32 %v3528, %v3586
  %v3588 = vpop.f32.mrb[0].mxu0
  %v3589 = vpop.f32.mrb[0].mxu0
  %v3590 = vadd.f32 %v3531, %v3589
  %v3591 = vpop.f32.mrb[0].mxu0
  %3592 = vdwg.mxu0
  %v3596 = vrot.slane %v3460, 4
  %v3597 = vrot.slane %v3462, 4
  %v3598 = vsel %vm3477, %v3596, %v3597
  %v3599 = vrot.slane %v3464, 4
  %v3600 = vsel %vm3477, %v3597, %v3599
  %3603 = vmatprep.subr.bf16.mxu0 0
  %3604 = vmatpush1.bf16.msra.mxu0 %v3466
  %3605 = vmatprep.subr.bf16.mxu0 0
  %3606 = vmatpush1.bf16.msra.mxu0 %v3467
  %3607 = vmatprep.subr.bf16.mxu0 0
  %3608 = vmatpush1.bf16.msra.mxu0 %v3468
  %3609 = vmatprep.subr.bf16.mxu0 0
  %3610 = vmatpush1.bf16.msra.mxu0 %v3469
  %3611 = vmatprep.subr.bf16.mxu0 0
  %3612 = vmatpush1.bf16.msra.mxu0 %v3470
  %3613 = vmatprep.subr.bf16.mxu0 0
  %3614 = vmatpush1.bf16.msra.mxu0 %v3471
  %3615 = vmatprep.subr.bf16.mxu0 0
  %3616 = vmatpush1.bf16.msra.mxu0 %v3472
  %3617 = vmatprep.subr.bf16.mxu0 0
  %3618 = vmatpush1.bf16.msra.mxu0 %v3473
  %3619 = vmatprep.subr.bf16.mxu0 0
  %3620 = vmatpush1.bf16.msra.mxu0 0
  %3621 = vmatprep.subr.bf16.mxu0 0
  %3622 = vmatpush1.bf16.msra.mxu0 0
  %3623 = vmatprep.subr.bf16.mxu0 0
  %3624 = vmatpush1.bf16.msra.mxu0 0
  %3625 = vmatprep.subr.bf16.mxu0 0
  %3626 = vmatpush1.bf16.msra.mxu0 0
  %3627 = vmatprep.subr.bf16.mxu0 0
  %3628 = vmatpush1.bf16.msra.mxu0 0
  %3629 = vmatprep.subr.bf16.mxu0 0
  %3630 = vmatpush1.bf16.msra.mxu0 0
  %3631 = vmatprep.subr.bf16.mxu0 0
  %3632 = vmatpush1.bf16.msra.mxu0 0
  %3633 = vmatprep.subr.bf16.mxu0 0
  %3634 = vmatpush1.bf16.msra.mxu0 0
  %3635 = vmatprep.mubr.bf16.mxu0 0
  %3636 = vmatmul.mubr.bf16.gmra.mrb[0].mxu0 %v3598
  %v3637 = vpop.f32.mrb[0].mxu0
  %v3638 = vadd.f32 0.0, %v3637
  %v3639 = vpop.f32.mrb[0].mxu0
  %v3640 = vpop.f32.mrb[0].mxu0
  %v3641 = vadd.f32 0.0, %v3640
  %v3642 = vpop.f32.mrb[0].mxu0
  %3643 = vmatprep.mubr.bf16.mxu0 0
  %3644 = vmatmul.mubr.bf16.gmra.mrb[0].mxu0 %v3600
  %v3645 = vpop.f32.mrb[0].mxu0
  %v3646 = vadd.f32 0.0, %v3645
  %v3647 = vpop.f32.mrb[0].mxu0
  %v3648 = vpop.f32.mrb[0].mxu0
  %v3649 = vadd.f32 0.0, %v3648
  %v3650 = vpop.f32.mrb[0].mxu0
  %3651 = vdwg.mxu0
  %v3655 = vrot.slane %v3020, 4
  %v3656 = vrot.slane %v2997, 4
  %v3657 = vsel %vm3477, %v3655, %v3656
  %v3658 = vrot.slane %v3022, 4
  %v3659 = vsel %vm3477, %v3656, %v3658
  %3662 = vmatprep.subr.bf16.mxu0 0
  %3663 = vmatpush1.bf16.msra.mxu0 %v3024
  %3664 = vmatprep.subr.bf16.mxu0 0
  %3665 = vmatpush1.bf16.msra.mxu0 %v3025
  %3666 = vmatprep.subr.bf16.mxu0 0
  %3667 = vmatpush1.bf16.msra.mxu0 %v3026
  %3668 = vmatprep.subr.bf16.mxu0 0
  %3669 = vmatpush1.bf16.msra.mxu0 %v3027
  %3670 = vmatprep.subr.bf16.mxu0 0
  %3671 = vmatpush1.bf16.msra.mxu0 %v3028
  %3672 = vmatprep.subr.bf16.mxu0 0
  %3673 = vmatpush1.bf16.msra.mxu0 %v3029
  %3674 = vmatprep.subr.bf16.mxu0 0
  %3675 = vmatpush1.bf16.msra.mxu0 %v3030
  %3676 = vmatprep.subr.bf16.mxu0 0
  %3677 = vmatpush1.bf16.msra.mxu0 %v3031
  %3678 = vmatprep.subr.bf16.mxu0 0
  %3679 = vmatpush1.bf16.msra.mxu0 0
  %3680 = vmatprep.subr.bf16.mxu0 0
  %3681 = vmatpush1.bf16.msra.mxu0 0
  %3682 = vmatprep.subr.bf16.mxu0 0
  %3683 = vmatpush1.bf16.msra.mxu0 0
  %3684 = vmatprep.subr.bf16.mxu0 0
  %3685 = vmatpush1.bf16.msra.mxu0 0
  %3686 = vmatprep.subr.bf16.mxu0 0
  %3687 = vmatpush1.bf16.msra.mxu0 0
  %3688 = vmatprep.subr.bf16.mxu0 0
  %3689 = vmatpush1.bf16.msra.mxu0 0
  %3690 = vmatprep.subr.bf16.mxu0 0
  %3691 = vmatpush1.bf16.msra.mxu0 0
  %3692 = vmatprep.subr.bf16.mxu0 0
  %3693 = vmatpush1.bf16.msra.mxu0 0
  %3694 = vmatprep.mubr.bf16.mxu0 0
  %3695 = vmatmul.mubr.bf16.gmra.mrb[0].mxu0 %v3657
  %v3696 = vpop.f32.mrb[0].mxu0
  %v3697 = vadd.f32 %v3638, %v3696
  %v3698 = vpop.f32.mrb[0].mxu0
  %v3699 = vpop.f32.mrb[0].mxu0
  %v3700 = vadd.f32 %v3641, %v3699
  %v3701 = vpop.f32.mrb[0].mxu0
  %3702 = vmatprep.mubr.bf16.mxu0 0
  %3703 = vmatmul.mubr.bf16.gmra.mrb[0].mxu0 %v3659
  %v3704 = vpop.f32.mrb[0].mxu0
  %v3705 = vadd.f32 %v3646, %v3704
  %v3706 = vpop.f32.mrb[0].mxu0
  %v3707 = vpop.f32.mrb[0].mxu0
  %v3708 = vadd.f32 %v3649, %v3707
  %v3709 = vpop.f32.mrb[0].mxu0
  %3710 = vdwg.mxu0
  %v3711 = vld [vmem:[#allocation2 + $0xa0] sm:$0xf0]
  %v3712 = vld [vmem:[#allocation2 + $0xa8] sm:$0xf0]
  %v3713 = vld [vmem:[#allocation2 + $0xb0] sm:$0xff]
  %v3714 = vld [vmem:[#allocation2 + $0xb8] sm:$0xff]
  %v3715 = vld [vmem:[#allocation2 + $0xc0] sm:$0xf]
  %v3716 = vld [vmem:[#allocation2 + $0xc8] sm:$0xf]
  %s3717 = scalar_lea.vmem [#allocation3], 448
  %v3718 = vld [vmem:[%s3717] sm:$0xff]
  %v3719 = vld [vmem:[%s3717 + $0x8] sm:$0xff]
  %v3720 = vld [vmem:[%s3717 + $0x10] sm:$0xff]
  %v3721 = vld [vmem:[%s3717 + $0x18] sm:$0xff]
  %v3722 = vld [vmem:[%s3717 + $0x20] sm:$0xff]
  %v3723 = vld [vmem:[%s3717 + $0x28] sm:$0xff]
  %v3724 = vld [vmem:[%s3717 + $0x30] sm:$0xff]
  %v3725 = vld [vmem:[%s3717 + $0x38] sm:$0xff]
  %v3729 = vrot.slane %v3711, 4
  %v3730 = vrot.slane %v3713, 4
  %v3731 = vsel %vm3477, %v3729, %v3730
  %v3732 = vrot.slane %v3715, 4
  %v3733 = vsel %vm3477, %v3730, %v3732
  %3736 = vmatprep.subr.bf16.mxu0 0
  %3737 = vmatpush1.bf16.msra.mxu0 %v3718
  %3738 = vmatprep.subr.bf16.mxu0 0
  %3739 = vmatpush1.bf16.msra.mxu0 %v3719
  %3740 = vmatprep.subr.bf16.mxu0 0
  %3741 = vmatpush1.bf16.msra.mxu0 %v3720
  %3742 = vmatprep.subr.bf16.mxu0 0
  %3743 = vmatpush1.bf16.msra.mxu0 %v3721
  %3744 = vmatprep.subr.bf16.mxu0 0
  %3745 = vmatpush1.bf16.msra.mxu0 %v3722
  %3746 = vmatprep.subr.bf16.mxu0 0
  %3747 = vmatpush1.bf16.msra.mxu0 %v3723
  %3748 = vmatprep.subr.bf16.mxu0 0
  %3749 = vmatpush1.bf16.msra.mxu0 %v3724
  %3750 = vmatprep.subr.bf16.mxu0 0
  %3751 = vmatpush1.bf16.msra.mxu0 %v3725
  %3752 = vmatprep.subr.bf16.mxu0 0
  %3753 = vmatpush1.bf16.msra.mxu0 0
  %3754 = vmatprep.subr.bf16.mxu0 0
  %3755 = vmatpush1.bf16.msra.mxu0 0
  %3756 = vmatprep.subr.bf16.mxu0 0
  %3757 = vmatpush1.bf16.msra.mxu0 0
  %3758 = vmatprep.subr.bf16.mxu0 0
  %3759 = vmatpush1.bf16.msra.mxu0 0
  %3760 = vmatprep.subr.bf16.mxu0 0
  %3761 = vmatpush1.bf16.msra.mxu0 0
  %3762 = vmatprep.subr.bf16.mxu0 0
  %3763 = vmatpush1.bf16.msra.mxu0 0
  %3764 = vmatprep.subr.bf16.mxu0 0
  %3765 = vmatpush1.bf16.msra.mxu0 0
  %3766 = vmatprep.subr.bf16.mxu0 0
  %3767 = vmatpush1.bf16.msra.mxu0 0
  %3768 = vmatprep.mubr.bf16.mxu0 0
  %3769 = vmatmul.mubr.bf16.gmra.mrb[0].mxu0 %v3731
  %v3770 = vpop.f32.mrb[0].mxu0
  %v3771 = vadd.f32 0.0, %v3770
  %v3772 = vpop.f32.mrb[0].mxu0
  %v3773 = vpop.f32.mrb[0].mxu0
  %v3774 = vadd.f32 0.0, %v3773
  %v3775 = vpop.f32.mrb[0].mxu0
  %3776 = vmatprep.mubr.bf16.mxu0 0
  %3777 = vmatmul.mubr.bf16.gmra.mrb[0].mxu0 %v3733
  %v3778 = vpop.f32.mrb[0].mxu0
  %v3779 = vadd.f32 0.0, %v3778
  %v3780 = vpop.f32.mrb[0].mxu0
  %v3781 = vpop.f32.mrb[0].mxu0
  %v3782 = vadd.f32 0.0, %v3781
  %v3783 = vpop.f32.mrb[0].mxu0
  %3784 = vdwg.mxu0
  %v3788 = vrot.slane %v3032, 4
  %v3789 = vrot.slane %v3008, 4
  %v3790 = vsel %vm3477, %v3788, %v3789
  %v3791 = vrot.slane %v3034, 4
  %v3792 = vsel %vm3477, %v3789, %v3791
  %3795 = vmatprep.subr.bf16.mxu0 0
  %3796 = vmatpush1.bf16.msra.mxu0 %v3037
  %3797 = vmatprep.subr.bf16.mxu0 0
  %3798 = vmatpush1.bf16.msra.mxu0 %v3038
  %3799 = vmatprep.subr.bf16.mxu0 0
  %3800 = vmatpush1.bf16.msra.mxu0 %v3039
  %3801 = vmatprep.subr.bf16.mxu0 0
  %3802 = vmatpush1.bf16.msra.mxu0 %v3040
  %3803 = vmatprep.subr.bf16.mxu0 0
  %3804 = vmatpush1.bf16.msra.mxu0 %v3041
  %3805 = vmatprep.subr.bf16.mxu0 0
  %3806 = vmatpush1.bf16.msra.mxu0 %v3042
  %3807 = vmatprep.subr.bf16.mxu0 0
  %3808 = vmatpush1.bf16.msra.mxu0 %v3043
  %3809 = vmatprep.subr.bf16.mxu0 0
  %3810 = vmatpush1.bf16.msra.mxu0 %v3044
  %3811 = vmatprep.subr.bf16.mxu0 0
  %3812 = vmatpush1.bf16.msra.mxu0 0
  %3813 = vmatprep.subr.bf16.mxu0 0
  %3814 = vmatpush1.bf16.msra.mxu0 0
  %3815 = vmatprep.subr.bf16.mxu0 0
  %3816 = vmatpush1.bf16.msra.mxu0 0
  %3817 = vmatprep.subr.bf16.mxu0 0
  %3818 = vmatpush1.bf16.msra.mxu0 0
  %3819 = vmatprep.subr.bf16.mxu0 0
  %3820 = vmatpush1.bf16.msra.mxu0 0
  %3821 = vmatprep.subr.bf16.mxu0 0
  %3822 = vmatpush1.bf16.msra.mxu0 0
  %3823 = vmatprep.subr.bf16.mxu0 0
  %3824 = vmatpush1.bf16.msra.mxu0 0
  %3825 = vmatprep.subr.bf16.mxu0 0
  %3826 = vmatpush1.bf16.msra.mxu0 0
  %3827 = vmatprep.mubr.bf16.mxu0 0
  %3828 = vmatmul.mubr.bf16.gmra.mrb[0].mxu0 %v3790
  %v3829 = vpop.f32.mrb[0].mxu0
  %v3830 = vadd.f32 %v3771, %v3829
  %v3831 = vpop.f32.mrb[0].mxu0
  %v3832 = vpop.f32.mrb[0].mxu0
  %v3833 = vadd.f32 %v3774, %v3832
  %v3834 = vpop.f32.mrb[0].mxu0
  %3835 = vmatprep.mubr.bf16.mxu0 0
  %3836 = vmatmul.mubr.bf16.gmra.mrb[0].mxu0 %v3792
  %v3837 = vpop.f32.mrb[0].mxu0
  %v3838 = vadd.f32 %v3779, %v3837
  %v3839 = vpop.f32.mrb[0].mxu0
  %v3840 = vpop.f32.mrb[0].mxu0
  %v3841 = vadd.f32 %v3782, %v3840
  %v3842 = vpop.f32.mrb[0].mxu0
  %3843 = vdwg.mxu0
  %v3847 = vrot.slane %v3712, 4
  %v3848 = vrot.slane %v3714, 4
  %v3849 = vsel %vm3477, %v3847, %v3848
  %v3850 = vrot.slane %v3716, 4
  %v3851 = vsel %vm3477, %v3848, %v3850
  %3854 = vmatprep.subr.bf16.mxu0 0
  %3855 = vmatpush1.bf16.msra.mxu0 %v3718
  %3856 = vmatprep.subr.bf16.mxu0 0
  %3857 = vmatpush1.bf16.msra.mxu0 %v3719
  %3858 = vmatprep.subr.bf16.mxu0 0
  %3859 = vmatpush1.bf16.msra.mxu0 %v3720
  %3860 = vmatprep.subr.bf16.mxu0 0
  %3861 = vmatpush1.bf16.msra.mxu0 %v3721
  %3862 = vmatprep.subr.bf16.mxu0 0
  %3863 = vmatpush1.bf16.msra.mxu0 %v3722
  %3864 = vmatprep.subr.bf16.mxu0 0
  %3865 = vmatpush1.bf16.msra.mxu0 %v3723
  %3866 = vmatprep.subr.bf16.mxu0 0
  %3867 = vmatpush1.bf16.msra.mxu0 %v3724
  %3868 = vmatprep.subr.bf16.mxu0 0
  %3869 = vmatpush1.bf16.msra.mxu0 %v3725
  %3870 = vmatprep.subr.bf16.mxu0 0
  %3871 = vmatpush1.bf16.msra.mxu0 0
  %3872 = vmatprep.subr.bf16.mxu0 0
  %3873 = vmatpush1.bf16.msra.mxu0 0
  %3874 = vmatprep.subr.bf16.mxu0 0
  %3875 = vmatpush1.bf16.msra.mxu0 0
  %3876 = vmatprep.subr.bf16.mxu0 0
  %3877 = vmatpush1.bf16.msra.mxu0 0
  %3878 = vmatprep.subr.bf16.mxu0 0
  %3879 = vmatpush1.bf16.msra.mxu0 0
  %3880 = vmatprep.subr.bf16.mxu0 0
  %3881 = vmatpush1.bf16.msra.mxu0 0
  %3882 = vmatprep.subr.bf16.mxu0 0
  %3883 = vmatpush1.bf16.msra.mxu0 0
  %3884 = vmatprep.subr.bf16.mxu0 0
  %3885 = vmatpush1.bf16.msra.mxu0 0
  %3886 = vmatprep.mubr.bf16.mxu0 0
  %3887 = vmatmul.mubr.bf16.gmra.mrb[0].mxu0 %v3849
  %v3888 = vpop.f32.mrb[0].mxu0
  %v3889 = vadd.f32 0.0, %v3888
  %v3890 = vpop.f32.mrb[0].mxu0
  %v3891 = vpop.f32.mrb[0].mxu0
  %v3892 = vadd.f32 0.0, %v3891
  %v3893 = vpop.f32.mrb[0].mxu0
  %3894 = vmatprep.mubr.bf16.mxu0 0
  %3895 = vmatmul.mubr.bf16.gmra.mrb[0].mxu0 %v3851
  %v3896 = vpop.f32.mrb[0].mxu0
  %v3897 = vadd.f32 0.0, %v3896
  %v3898 = vpop.f32.mrb[0].mxu0
  %v3899 = vpop.f32.mrb[0].mxu0
  %v3900 = vadd.f32 0.0, %v3899
  %v3901 = vpop.f32.mrb[0].mxu0
  %3902 = vdwg.mxu0
  %v3906 = vrot.slane %v3033, 4
  %v3907 = vrot.slane %v3009, 4
  %v3908 = vsel %vm3477, %v3906, %v3907
  %v3909 = vrot.slane %v3035, 4
  %v3910 = vsel %vm3477, %v3907, %v3909
  %3913 = vmatprep.subr.bf16.mxu0 0
  %3914 = vmatpush1.bf16.msra.mxu0 %v3037
  %3915 = vmatprep.subr.bf16.mxu0 0
  %3916 = vmatpush1.bf16.msra.mxu0 %v3038
  %3917 = vmatprep.subr.bf16.mxu0 0
  %3918 = vmatpush1.bf16.msra.mxu0 %v3039
  %3919 = vmatprep.subr.bf16.mxu0 0
  %3920 = vmatpush1.bf16.msra.mxu0 %v3040
  %3921 = vmatprep.subr.bf16.mxu0 0
  %3922 = vmatpush1.bf16.msra.mxu0 %v3041
  %3923 = vmatprep.subr.bf16.mxu0 0
  %3924 = vmatpush1.bf16.msra.mxu0 %v3042
  %3925 = vmatprep.subr.bf16.mxu0 0
  %3926 = vmatpush1.bf16.msra.mxu0 %v3043
  %3927 = vmatprep.subr.bf16.mxu0 0
  %3928 = vmatpush1.bf16.msra.mxu0 %v3044
  %3929 = vmatprep.subr.bf16.mxu0 0
  %3930 = vmatpush1.bf16.msra.mxu0 0
  %3931 = vmatprep.subr.bf16.mxu0 0
  %3932 = vmatpush1.bf16.msra.mxu0 0
  %3933 = vmatprep.subr.bf16.mxu0 0
  %3934 = vmatpush1.bf16.msra.mxu0 0
  %3935 = vmatprep.subr.bf16.mxu0 0
  %3936 = vmatpush1.bf16.msra.mxu0 0
  %3937 = vmatprep.subr.bf16.mxu0 0
  %3938 = vmatpush1.bf16.msra.mxu0 0
  %3939 = vmatprep.subr.bf16.mxu0 0
  %3940 = vmatpush1.bf16.msra.mxu0 0
  %3941 = vmatprep.subr.bf16.mxu0 0
  %3942 = vmatpush1.bf16.msra.mxu0 0
  %3943 = vmatprep.subr.bf16.mxu0 0
  %3944 = vmatpush1.bf16.msra.mxu0 0
  %3945 = vmatprep.mubr.bf16.mxu0 0
  %3946 = vmatmul.mubr.bf16.gmra.mrb[0].mxu0 %v3908
  %v3947 = vpop.f32.mrb[0].mxu0
  %v3948 = vadd.f32 %v3889, %v3947
  %v3949 = vpop.f32.mrb[0].mxu0
  %v3950 = vpop.f32.mrb[0].mxu0
  %v3951 = vadd.f32 %v3892, %v3950
  %v3952 = vpop.f32.mrb[0].mxu0
  %3953 = vmatprep.mubr.bf16.mxu0 0
  %3954 = vmatmul.mubr.bf16.gmra.mrb[0].mxu0 %v3910
  %v3955 = vpop.f32.mrb[0].mxu0
  %v3956 = vadd.f32 %v3897, %v3955
  %v3957 = vpop.f32.mrb[0].mxu0
  %v3958 = vpop.f32.mrb[0].mxu0
  %v3959 = vadd.f32 %v3900, %v3958
  %v3960 = vpop.f32.mrb[0].mxu0
  %3961 = vdwg.mxu0
  %v3962 = vld [vmem:[#allocation2 + $0x30] sm:$0xff]
  %v3963 = vld [vmem:[#allocation2 + $0x38] sm:$0xff]
  %s3964 = scalar_lea.vmem [#allocation3], 512
  %v3965 = vld [vmem:[%s3964] sm:$0xff]
  %v3966 = vld [vmem:[%s3964 + $0x8] sm:$0xff]
  %v3967 = vld [vmem:[%s3964 + $0x10] sm:$0xff]
  %v3968 = vld [vmem:[%s3964 + $0x18] sm:$0xff]
  %v3969 = vld [vmem:[%s3964 + $0x20] sm:$0xff]
  %v3970 = vld [vmem:[%s3964 + $0x28] sm:$0xff]
  %v3971 = vld [vmem:[%s3964 + $0x30] sm:$0xff]
  %v3972 = vld [vmem:[%s3964 + $0x38] sm:$0xff]
  %3973 = vmatprep.subr.bf16.mxu0 0
  %3974 = vmatpush1.bf16.msra.mxu0 %v3965
  %3975 = vmatprep.subr.bf16.mxu0 0
  %3976 = vmatpush1.bf16.msra.mxu0 %v3966
  %3977 = vmatprep.subr.bf16.mxu0 0
  %3978 = vmatpush1.bf16.msra.mxu0 %v3967
  %3979 = vmatprep.subr.bf16.mxu0 0
  %3980 = vmatpush1.bf16.msra.mxu0 %v3968
  %3981 = vmatprep.subr.bf16.mxu0 0
  %3982 = vmatpush1.bf16.msra.mxu0 %v3969
  %3983 = vmatprep.subr.bf16.mxu0 0
  %3984 = vmatpush1.bf16.msra.mxu0 %v3970
  %3985 = vmatprep.subr.bf16.mxu0 0
  %3986 = vmatpush1.bf16.msra.mxu0 %v3971
  %3987 = vmatprep.subr.bf16.mxu0 0
  %3988 = vmatpush1.bf16.msra.mxu0 %v3972
  %3989 = vmatprep.subr.bf16.mxu0 0
  %3990 = vmatpush1.bf16.msra.mxu0 0
  %3991 = vmatprep.subr.bf16.mxu0 0
  %3992 = vmatpush1.bf16.msra.mxu0 0
  %3993 = vmatprep.subr.bf16.mxu0 0
  %3994 = vmatpush1.bf16.msra.mxu0 0
  %3995 = vmatprep.subr.bf16.mxu0 0
  %3996 = vmatpush1.bf16.msra.mxu0 0
  %3997 = vmatprep.subr.bf16.mxu0 0
  %3998 = vmatpush1.bf16.msra.mxu0 0
  %3999 = vmatprep.subr.bf16.mxu0 0
  %4000 = vmatpush1.bf16.msra.mxu0 0
  %4001 = vmatprep.subr.bf16.mxu0 0
  %4002 = vmatpush1.bf16.msra.mxu0 0
  %4003 = vmatprep.subr.bf16.mxu0 0
  %4004 = vmatpush1.bf16.msra.mxu0 0
  %4005 = vmatprep.mubr.bf16.mxu0 0
  %4006 = vmatmul.mubr.bf16.gmra.mrb[0].mxu0 %v3461
  %v4007 = vpop.f32.mrb[0].mxu0
  %v4008 = vadd.f32 0.0, %v4007
  %v4009 = vpop.f32.mrb[0].mxu0
  %v4010 = vpop.f32.mrb[0].mxu0
  %v4011 = vadd.f32 0.0, %v4010
  %v4012 = vpop.f32.mrb[0].mxu0
  %4013 = vmatprep.mubr.bf16.mxu0 0
  %4014 = vmatmul.mubr.bf16.gmra.mrb[0].mxu0 %v3962
  %v4015 = vpop.f32.mrb[0].mxu0
  %v4016 = vadd.f32 0.0, %v4015
  %v4017 = vpop.f32.mrb[0].mxu0
  %v4018 = vpop.f32.mrb[0].mxu0
  %v4019 = vadd.f32 0.0, %v4018
  %v4020 = vpop.f32.mrb[0].mxu0
  %4021 = vdwg.mxu0
  %v4022 = vadd.f32 %v3140, %v4008
  %v4023 = vadd.f32 %v3143, %v4011
  %v4024 = vadd.f32 %v3148, %v4016
  %v4025 = vadd.f32 %v3151, %v4019
  %4026 = vmatprep.subr.bf16.mxu0 0
  %4027 = vmatpush1.bf16.msra.mxu0 %v3965
  %4028 = vmatprep.subr.bf16.mxu0 0
  %4029 = vmatpush1.bf16.msra.mxu0 %v3966
  %4030 = vmatprep.subr.bf16.mxu0 0
  %4031 = vmatpush1.bf16.msra.mxu0 %v3967
  %4032 = vmatprep.subr.bf16.mxu0 0
  %4033 = vmatpush1.bf16.msra.mxu0 %v3968
  %4034 = vmatprep.subr.bf16.mxu0 0
  %4035 = vmatpush1.bf16.msra.mxu0 %v3969
  %4036 = vmatprep.subr.bf16.mxu0 0
  %4037 = vmatpush1.bf16.msra.mxu0 %v3970
  %4038 = vmatprep.subr.bf16.mxu0 0
  %4039 = vmatpush1.bf16.msra.mxu0 %v3971
  %4040 = vmatprep.subr.bf16.mxu0 0
  %4041 = vmatpush1.bf16.msra.mxu0 %v3972
  %4042 = vmatprep.subr.bf16.mxu0 0
  %4043 = vmatpush1.bf16.msra.mxu0 0
  %4044 = vmatprep.subr.bf16.mxu0 0
  %4045 = vmatpush1.bf16.msra.mxu0 0
  %4046 = vmatprep.subr.bf16.mxu0 0
  %4047 = vmatpush1.bf16.msra.mxu0 0
  %4048 = vmatprep.subr.bf16.mxu0 0
  %4049 = vmatpush1.bf16.msra.mxu0 0
  %4050 = vmatprep.subr.bf16.mxu0 0
  %4051 = vmatpush1.bf16.msra.mxu0 0
  %4052 = vmatprep.subr.bf16.mxu0 0
  %4053 = vmatpush1.bf16.msra.mxu0 0
  %4054 = vmatprep.subr.bf16.mxu0 0
  %4055 = vmatpush1.bf16.msra.mxu0 0
  %4056 = vmatprep.subr.bf16.mxu0 0
  %4057 = vmatpush1.bf16.msra.mxu0 0
  %4058 = vmatprep.mubr.bf16.mxu0 0
  %4059 = vmatmul.mubr.bf16.gmra.mrb[0].mxu0 %v3462
  %v4060 = vpop.f32.mrb[0].mxu0
  %v4061 = vadd.f32 0.0, %v4060
  %v4062 = vpop.f32.mrb[0].mxu0
  %v4063 = vpop.f32.mrb[0].mxu0
  %v4064 = vadd.f32 0.0, %v4063
  %v4065 = vpop.f32.mrb[0].mxu0
  %4066 = vmatprep.mubr.bf16.mxu0 0
  %4067 = vmatmul.mubr.bf16.gmra.mrb[0].mxu0 %v3963
  %v4068 = vpop.f32.mrb[0].mxu0
  %v4069 = vadd.f32 0.0, %v4068
  %v4070 = vpop.f32.mrb[0].mxu0
  %v4071 = vpop.f32.mrb[0].mxu0
  %v4072 = vadd.f32 0.0, %v4071
  %v4073 = vpop.f32.mrb[0].mxu0
  %4074 = vdwg.mxu0
  %v4075 = vadd.f32 %v3238, %v4061
  %v4076 = vadd.f32 %v3241, %v4064
  %v4077 = vadd.f32 %v3246, %v4069
  %v4078 = vadd.f32 %v3249, %v4072
  %v4079 = vld [vmem:[#allocation2 + $0xc0] sm:$0xff]
  %v4080 = vld [vmem:[#allocation2 + $0xc8] sm:$0xff]
  %s4081 = scalar_lea.vmem [#allocation3], 576
  %v4082 = vld [vmem:[%s4081] sm:$0xff]
  %v4083 = vld [vmem:[%s4081 + $0x8] sm:$0xff]
  %v4084 = vld [vmem:[%s4081 + $0x10] sm:$0xff]
  %v4085 = vld [vmem:[%s4081 + $0x18] sm:$0xff]
  %v4086 = vld [vmem:[%s4081 + $0x20] sm:$0xff]
  %v4087 = vld [vmem:[%s4081 + $0x28] sm:$0xff]
  %v4088 = vld [vmem:[%s4081 + $0x30] sm:$0xff]
  %v4089 = vld [vmem:[%s4081 + $0x38] sm:$0xff]
  %4090 = vmatprep.subr.bf16.mxu0 0
  %4091 = vmatpush1.bf16.msra.mxu0 %v4082
  %4092 = vmatprep.subr.bf16.mxu0 0
  %4093 = vmatpush1.bf16.msra.mxu0 %v4083
  %4094 = vmatprep.subr.bf16.mxu0 0
  %4095 = vmatpush1.bf16.msra.mxu0 %v4084
  %4096 = vmatprep.subr.bf16.mxu0 0
  %4097 = vmatpush1.bf16.msra.mxu0 %v4085
  %4098 = vmatprep.subr.bf16.mxu0 0
  %4099 = vmatpush1.bf16.msra.mxu0 %v4086
  %4100 = vmatprep.subr.bf16.mxu0 0
  %4101 = vmatpush1.bf16.msra.mxu0 %v4087
  %4102 = vmatprep.subr.bf16.mxu0 0
  %4103 = vmatpush1.bf16.msra.mxu0 %v4088
  %4104 = vmatprep.subr.bf16.mxu0 0
  %4105 = vmatpush1.bf16.msra.mxu0 %v4089
  %4106 = vmatprep.subr.bf16.mxu0 0
  %4107 = vmatpush1.bf16.msra.mxu0 0
  %4108 = vmatprep.subr.bf16.mxu0 0
  %4109 = vmatpush1.bf16.msra.mxu0 0
  %4110 = vmatprep.subr.bf16.mxu0 0
  %4111 = vmatpush1.bf16.msra.mxu0 0
  %4112 = vmatprep.subr.bf16.mxu0 0
  %4113 = vmatpush1.bf16.msra.mxu0 0
  %4114 = vmatprep.subr.bf16.mxu0 0
  %4115 = vmatpush1.bf16.msra.mxu0 0
  %4116 = vmatprep.subr.bf16.mxu0 0
  %4117 = vmatpush1.bf16.msra.mxu0 0
  %4118 = vmatprep.subr.bf16.mxu0 0
  %4119 = vmatpush1.bf16.msra.mxu0 0
  %4120 = vmatprep.subr.bf16.mxu0 0
  %4121 = vmatpush1.bf16.msra.mxu0 0
  %4122 = vmatprep.mubr.bf16.mxu0 0
  %4123 = vmatmul.mubr.bf16.gmra.mrb[0].mxu0 %v3713
  %v4124 = vpop.f32.mrb[0].mxu0
  %v4125 = vadd.f32 0.0, %v4124
  %v4126 = vpop.f32.mrb[0].mxu0
  %v4127 = vpop.f32.mrb[0].mxu0
  %v4128 = vadd.f32 0.0, %v4127
  %v4129 = vpop.f32.mrb[0].mxu0
  %4130 = vmatprep.mubr.bf16.mxu0 0
  %4131 = vmatmul.mubr.bf16.gmra.mrb[0].mxu0 %v4079
  %v4132 = vpop.f32.mrb[0].mxu0
  %v4133 = vadd.f32 0.0, %v4132
  %v4134 = vpop.f32.mrb[0].mxu0
  %v4135 = vpop.f32.mrb[0].mxu0
  %v4136 = vadd.f32 0.0, %v4135
  %v4137 = vpop.f32.mrb[0].mxu0
  %4138 = vdwg.mxu0
  %v4139 = vadd.f32 %v3347, %v4125
  %v4140 = vadd.f32 %v3350, %v4128
  %v4141 = vadd.f32 %v3355, %v4133
  %v4142 = vadd.f32 %v3358, %v4136
  %4143 = vmatprep.subr.bf16.mxu0 0
  %4144 = vmatpush1.bf16.msra.mxu0 %v4082
  %4145 = vmatprep.subr.bf16.mxu0 0
  %4146 = vmatpush1.bf16.msra.mxu0 %v4083
  %4147 = vmatprep.subr.bf16.mxu0 0
  %4148 = vmatpush1.bf16.msra.mxu0 %v4084
  %4149 = vmatprep.subr.bf16.mxu0 0
  %4150 = vmatpush1.bf16.msra.mxu0 %v4085
  %4151 = vmatprep.subr.bf16.mxu0 0
  %4152 = vmatpush1.bf16.msra.mxu0 %v4086
  %4153 = vmatprep.subr.bf16.mxu0 0
  %4154 = vmatpush1.bf16.msra.mxu0 %v4087
  %4155 = vmatprep.subr.bf16.mxu0 0
  %4156 = vmatpush1.bf16.msra.mxu0 %v4088
  %4157 = vmatprep.subr.bf16.mxu0 0
  %4158 = vmatpush1.bf16.msra.mxu0 %v4089
  %4159 = vmatprep.subr.bf16.mxu0 0
  %4160 = vmatpush1.bf16.msra.mxu0 0
  %4161 = vmatprep.subr.bf16.mxu0 0
  %4162 = vmatpush1.bf16.msra.mxu0 0
  %4163 = vmatprep.subr.bf16.mxu0 0
  %4164 = vmatpush1.bf16.msra.mxu0 0
  %4165 = vmatprep.subr.bf16.mxu0 0
  %4166 = vmatpush1.bf16.msra.mxu0 0
  %4167 = vmatprep.subr.bf16.mxu0 0
  %4168 = vmatpush1.bf16.msra.mxu0 0
  %4169 = vmatprep.subr.bf16.mxu0 0
  %4170 = vmatpush1.bf16.msra.mxu0 0
  %4171 = vmatprep.subr.bf16.mxu0 0
  %4172 = vmatpush1.bf16.msra.mxu0 0
  %4173 = vmatprep.subr.bf16.mxu0 0
  %4174 = vmatpush1.bf16.msra.mxu0 0
  %4175 = vmatprep.mubr.bf16.mxu0 0
  %4176 = vmatmul.mubr.bf16.gmra.mrb[0].mxu0 %v3714
  %v4177 = vpop.f32.mrb[0].mxu0
  %v4178 = vadd.f32 0.0, %v4177
  %v4179 = vpop.f32.mrb[0].mxu0
  %v4180 = vpop.f32.mrb[0].mxu0
  %v4181 = vadd.f32 0.0, %v4180
  %v4182 = vpop.f32.mrb[0].mxu0
  %4183 = vmatprep.mubr.bf16.mxu0 0
  %4184 = vmatmul.mubr.bf16.gmra.mrb[0].mxu0 %v4080
  %v4185 = vpop.f32.mrb[0].mxu0
  %v4186 = vadd.f32 0.0, %v4185
  %v4187 = vpop.f32.mrb[0].mxu0
  %v4188 = vpop.f32.mrb[0].mxu0
  %v4189 = vadd.f32 0.0, %v4188
  %v4190 = vpop.f32.mrb[0].mxu0
  %4191 = vdwg.mxu0
  %v4192 = vadd.f32 %v3445, %v4178
  %v4193 = vadd.f32 %v3448, %v4181
  %v4194 = vadd.f32 %v3453, %v4186
  %v4195 = vadd.f32 %v3456, %v4189
  %v4196 = vld [vmem:[#allocation2 + $0x20] sm:$0xf0]
  %v4197 = vld [vmem:[#allocation2 + $0x28] sm:$0xf0]
  %v4198 = vld [vmem:[#allocation2 + $0x30] sm:$0xff]
  %v4199 = vld [vmem:[#allocation2 + $0x38] sm:$0xff]
  %v4200 = vld [vmem:[#allocation2 + $0x40] sm:$0xf]
  %v4201 = vld [vmem:[#allocation2 + $0x48] sm:$0xf]
  %s4202 = scalar_lea.vmem [#allocation3], 640
  %v4203 = vld [vmem:[%s4202] sm:$0xff]
  %v4204 = vld [vmem:[%s4202 + $0x8] sm:$0xff]
  %v4205 = vld [vmem:[%s4202 + $0x10] sm:$0xff]
  %v4206 = vld [vmem:[%s4202 + $0x18] sm:$0xff]
  %v4207 = vld [vmem:[%s4202 + $0x20] sm:$0xff]
  %v4208 = vld [vmem:[%s4202 + $0x28] sm:$0xff]
  %v4209 = vld [vmem:[%s4202 + $0x30] sm:$0xff]
  %v4210 = vld [vmem:[%s4202 + $0x38] sm:$0xff]
  %v4214 = vrot.slane %v4196, 4
  %v4215 = vrot.slane %v4198, 4
  %v4216 = vsel %vm3477, %v4214, %v4215
  %v4217 = vrot.slane %v4200, 4
  %v4218 = vsel %vm3477, %v4215, %v4217
  %4221 = vmatprep.subr.bf16.mxu0 0
  %4222 = vmatpush1.bf16.msra.mxu0 %v4203
  %4223 = vmatprep.subr.bf16.mxu0 0
  %4224 = vmatpush1.bf16.msra.mxu0 %v4204
  %4225 = vmatprep.subr.bf16.mxu0 0
  %4226 = vmatpush1.bf16.msra.mxu0 %v4205
  %4227 = vmatprep.subr.bf16.mxu0 0
  %4228 = vmatpush1.bf16.msra.mxu0 %v4206
  %4229 = vmatprep.subr.bf16.mxu0 0
  %4230 = vmatpush1.bf16.msra.mxu0 %v4207
  %4231 = vmatprep.subr.bf16.mxu0 0
  %4232 = vmatpush1.bf16.msra.mxu0 %v4208
  %4233 = vmatprep.subr.bf16.mxu0 0
  %4234 = vmatpush1.bf16.msra.mxu0 %v4209
  %4235 = vmatprep.subr.bf16.mxu0 0
  %4236 = vmatpush1.bf16.msra.mxu0 %v4210
  %4237 = vmatprep.subr.bf16.mxu0 0
  %4238 = vmatpush1.bf16.msra.mxu0 0
  %4239 = vmatprep.subr.bf16.mxu0 0
  %4240 = vmatpush1.bf16.msra.mxu0 0
  %4241 = vmatprep.subr.bf16.mxu0 0
  %4242 = vmatpush1.bf16.msra.mxu0 0
  %4243 = vmatprep.subr.bf16.mxu0 0
  %4244 = vmatpush1.bf16.msra.mxu0 0
  %4245 = vmatprep.subr.bf16.mxu0 0
  %4246 = vmatpush1.bf16.msra.mxu0 0
  %4247 = vmatprep.subr.bf16.mxu0 0
  %4248 = vmatpush1.bf16.msra.mxu0 0
  %4249 = vmatprep.subr.bf16.mxu0 0
  %4250 = vmatpush1.bf16.msra.mxu0 0
  %4251 = vmatprep.subr.bf16.mxu0 0
  %4252 = vmatpush1.bf16.msra.mxu0 0
  %4253 = vmatprep.mubr.bf16.mxu0 0
  %4254 = vmatmul.mubr.bf16.gmra.mrb[0].mxu0 %v4216
  %v4255 = vpop.f32.mrb[0].mxu0
  %v4256 = vadd.f32 0.0, %v4255
  %v4257 = vpop.f32.mrb[0].mxu0
  %v4258 = vpop.f32.mrb[0].mxu0
  %v4259 = vadd.f32 0.0, %v4258
  %v4260 = vpop.f32.mrb[0].mxu0
  %4261 = vmatprep.mubr.bf16.mxu0 0
  %4262 = vmatmul.mubr.bf16.gmra.mrb[0].mxu0 %v4218
  %v4263 = vpop.f32.mrb[0].mxu0
  %v4264 = vadd.f32 0.0, %v4263
  %v4265 = vpop.f32.mrb[0].mxu0
  %v4266 = vpop.f32.mrb[0].mxu0
  %v4267 = vadd.f32 0.0, %v4266
  %v4268 = vpop.f32.mrb[0].mxu0
  %4269 = vdwg.mxu0
  %v4270 = vadd.f32 %v3579, %v4256
  %v4271 = vadd.f32 %v3582, %v4259
  %v4272 = vadd.f32 %v3587, %v4264
  %v4273 = vadd.f32 %v3590, %v4267
  %v4277 = vrot.slane %v4197, 4
  %v4278 = vrot.slane %v4199, 4
  %v4279 = vsel %vm3477, %v4277, %v4278
  %v4280 = vrot.slane %v4201, 4
  %v4281 = vsel %vm3477, %v4278, %v4280
  %4284 = vmatprep.subr.bf16.mxu0 0
  %4285 = vmatpush1.bf16.msra.mxu0 %v4203
  %4286 = vmatprep.subr.bf16.mxu0 0
  %4287 = vmatpush1.bf16.msra.mxu0 %v4204
  %4288 = vmatprep.subr.bf16.mxu0 0
  %4289 = vmatpush1.bf16.msra.mxu0 %v4205
  %4290 = vmatprep.subr.bf16.mxu0 0
  %4291 = vmatpush1.bf16.msra.mxu0 %v4206
  %4292 = vmatprep.subr.bf16.mxu0 0
  %4293 = vmatpush1.bf16.msra.mxu0 %v4207
  %4294 = vmatprep.subr.bf16.mxu0 0
  %4295 = vmatpush1.bf16.msra.mxu0 %v4208
  %4296 = vmatprep.subr.bf16.mxu0 0
  %4297 = vmatpush1.bf16.msra.mxu0 %v4209
  %4298 = vmatprep.subr.bf16.mxu0 0
  %4299 = vmatpush1.bf16.msra.mxu0 %v4210
  %4300 = vmatprep.subr.bf16.mxu0 0
  %4301 = vmatpush1.bf16.msra.mxu0 0
  %4302 = vmatprep.subr.bf16.mxu0 0
  %4303 = vmatpush1.bf16.msra.mxu0 0
  %4304 = vmatprep.subr.bf16.mxu0 0
  %4305 = vmatpush1.bf16.msra.mxu0 0
  %4306 = vmatprep.subr.bf16.mxu0 0
  %4307 = vmatpush1.bf16.msra.mxu0 0
  %4308 = vmatprep.subr.bf16.mxu0 0
  %4309 = vmatpush1.bf16.msra.mxu0 0
  %4310 = vmatprep.subr.bf16.mxu0 0
  %4311 = vmatpush1.bf16.msra.mxu0 0
  %4312 = vmatprep.subr.bf16.mxu0 0
  %4313 = vmatpush1.bf16.msra.mxu0 0
  %4314 = vmatprep.subr.bf16.mxu0 0
  %4315 = vmatpush1.bf16.msra.mxu0 0
  %4316 = vmatprep.mubr.bf16.mxu0 0
  %4317 = vmatmul.mubr.bf16.gmra.mrb[0].mxu0 %v4279
  %v4318 = vpop.f32.mrb[0].mxu0
  %v4319 = vadd.f32 0.0, %v4318
  %v4320 = vpop.f32.mrb[0].mxu0
  %v4321 = vpop.f32.mrb[0].mxu0
  %v4322 = vadd.f32 0.0, %v4321
  %v4323 = vpop.f32.mrb[0].mxu0
  %4324 = vmatprep.mubr.bf16.mxu0 0
  %4325 = vmatmul.mubr.bf16.gmra.mrb[0].mxu0 %v4281
  %v4326 = vpop.f32.mrb[0].mxu0
  %v4327 = vadd.f32 0.0, %v4326
  %v4328 = vpop.f32.mrb[0].mxu0
  %v4329 = vpop.f32.mrb[0].mxu0
  %v4330 = vadd.f32 0.0, %v4329
  %v4331 = vpop.f32.mrb[0].mxu0
  %4332 = vdwg.mxu0
  %v4333 = vadd.f32 %v3697, %v4319
  %v4334 = vadd.f32 %v3700, %v4322
  %v4335 = vadd.f32 %v3705, %v4327
  %v4336 = vadd.f32 %v3708, %v4330
  %v4337 = vld [vmem:[#allocation2 + $0xb0] sm:$0xf0]
  %v4338 = vld [vmem:[#allocation2 + $0xb8] sm:$0xf0]
  %v4339 = vld [vmem:[#allocation2 + $0xc0] sm:$0xff]
  %v4340 = vld [vmem:[#allocation2 + $0xc8] sm:$0xff]
  %v4341 = vld [vmem:[#allocation2 + $0xd0] sm:$0xf]
  %v4342 = vld [vmem:[#allocation2 + $0xd8] sm:$0xf]
  %s4343 = scalar_lea.vmem [#allocation3], 704
  %v4344 = vld [vmem:[%s4343] sm:$0xff]
  %v4345 = vld [vmem:[%s4343 + $0x8] sm:$0xff]
  %v4346 = vld [vmem:[%s4343 + $0x10] sm:$0xff]
  %v4347 = vld [vmem:[%s4343 + $0x18] sm:$0xff]
  %v4348 = vld [vmem:[%s4343 + $0x20] sm:$0xff]
  %v4349 = vld [vmem:[%s4343 + $0x28] sm:$0xff]
  %v4350 = vld [vmem:[%s4343 + $0x30] sm:$0xff]
  %v4351 = vld [vmem:[%s4343 + $0x38] sm:$0xff]
  %v4355 = vrot.slane %v4337, 4
  %v4356 = vrot.slane %v4339, 4
  %v4357 = vsel %vm3477, %v4355, %v4356
  %v4358 = vrot.slane %v4341, 4
  %v4359 = vsel %vm3477, %v4356, %v4358
  %4362 = vmatprep.subr.bf16.mxu0 0
  %4363 = vmatpush1.bf16.msra.mxu0 %v4344
  %4364 = vmatprep.subr.bf16.mxu0 0
  %4365 = vmatpush1.bf16.msra.mxu0 %v4345
  %4366 = vmatprep.subr.bf16.mxu0 0
  %4367 = vmatpush1.bf16.msra.mxu0 %v4346
  %4368 = vmatprep.subr.bf16.mxu0 0
  %4369 = vmatpush1.bf16.msra.mxu0 %v4347
  %4370 = vmatprep.subr.bf16.mxu0 0
  %4371 = vmatpush1.bf16.msra.mxu0 %v4348
  %4372 = vmatprep.subr.bf16.mxu0 0
  %4373 = vmatpush1.bf16.msra.mxu0 %v4349
  %4374 = vmatprep.subr.bf16.mxu0 0
  %4375 = vmatpush1.bf16.msra.mxu0 %v4350
  %4376 = vmatprep.subr.bf16.mxu0 0
  %4377 = vmatpush1.bf16.msra.mxu0 %v4351
  %4378 = vmatprep.subr.bf16.mxu0 0
  %4379 = vmatpush1.bf16.msra.mxu0 0
  %4380 = vmatprep.subr.bf16.mxu0 0
  %4381 = vmatpush1.bf16.msra.mxu0 0
  %4382 = vmatprep.subr.bf16.mxu0 0
  %4383 = vmatpush1.bf16.msra.mxu0 0
  %4384 = vmatprep.subr.bf16.mxu0 0
  %4385 = vmatpush1.bf16.msra.mxu0 0
  %4386 = vmatprep.subr.bf16.mxu0 0
  %4387 = vmatpush1.bf16.msra.mxu0 0
  %4388 = vmatprep.subr.bf16.mxu0 0
  %4389 = vmatpush1.bf16.msra.mxu0 0
  %4390 = vmatprep.subr.bf16.mxu0 0
  %4391 = vmatpush1.bf16.msra.mxu0 0
  %4392 = vmatprep.subr.bf16.mxu0 0
  %4393 = vmatpush1.bf16.msra.mxu0 0
  %4394 = vmatprep.mubr.bf16.mxu0 0
  %4395 = vmatmul.mubr.bf16.gmra.mrb[0].mxu0 %v4357
  %v4396 = vpop.f32.mrb[0].mxu0
  %v4397 = vadd.f32 0.0, %v4396
  %v4398 = vpop.f32.mrb[0].mxu0
  %v4399 = vpop.f32.mrb[0].mxu0
  %v4400 = vadd.f32 0.0, %v4399
  %v4401 = vpop.f32.mrb[0].mxu0
  %4402 = vmatprep.mubr.bf16.mxu0 0
  %4403 = vmatmul.mubr.bf16.gmra.mrb[0].mxu0 %v4359
  %v4404 = vpop.f32.mrb[0].mxu0
  %v4405 = vadd.f32 0.0, %v4404
  %v4406 = vpop.f32.mrb[0].mxu0
  %v4407 = vpop.f32.mrb[0].mxu0
  %v4408 = vadd.f32 0.0, %v4407
  %v4409 = vpop.f32.mrb[0].mxu0
  %4410 = vdwg.mxu0
  %v4411 = vadd.f32 %v3830, %v4397
  %v4412 = vadd.f32 %v3833, %v4400
  %v4413 = vadd.f32 %v3838, %v4405
  %v4414 = vadd.f32 %v3841, %v4408
  %v4418 = vrot.slane %v4338, 4
  %v4419 = vrot.slane %v4340, 4
  %v4420 = vsel %vm3477, %v4418, %v4419
  %v4421 = vrot.slane %v4342, 4
  %v4422 = vsel %vm3477, %v4419, %v4421
  %4425 = vmatprep.subr.bf16.mxu0 0
  %4426 = vmatpush1.bf16.msra.mxu0 %v4344
  %4427 = vmatprep.subr.bf16.mxu0 0
  %4428 = vmatpush1.bf16.msra.mxu0 %v4345
  %4429 = vmatprep.subr.bf16.mxu0 0
  %4430 = vmatpush1.bf16.msra.mxu0 %v4346
  %4431 = vmatprep.subr.bf16.mxu0 0
  %4432 = vmatpush1.bf16.msra.mxu0 %v4347
  %4433 = vmatprep.subr.bf16.mxu0 0
  %4434 = vmatpush1.bf16.msra.mxu0 %v4348
  %4435 = vmatprep.subr.bf16.mxu0 0
  %4436 = vmatpush1.bf16.msra.mxu0 %v4349
  %4437 = vmatprep.subr.bf16.mxu0 0
  %4438 = vmatpush1.bf16.msra.mxu0 %v4350
  %4439 = vmatprep.subr.bf16.mxu0 0
  %4440 = vmatpush1.bf16.msra.mxu0 %v4351
  %4441 = vmatprep.subr.bf16.mxu0 0
  %4442 = vmatpush1.bf16.msra.mxu0 0
  %4443 = vmatprep.subr.bf16.mxu0 0
  %4444 = vmatpush1.bf16.msra.mxu0 0
  %4445 = vmatprep.subr.bf16.mxu0 0
  %4446 = vmatpush1.bf16.msra.mxu0 0
  %4447 = vmatprep.subr.bf16.mxu0 0
  %4448 = vmatpush1.bf16.msra.mxu0 0
  %4449 = vmatprep.subr.bf16.mxu0 0
  %4450 = vmatpush1.bf16.msra.mxu0 0
  %4451 = vmatprep.subr.bf16.mxu0 0
  %4452 = vmatpush1.bf16.msra.mxu0 0
  %4453 = vmatprep.subr.bf16.mxu0 0
  %4454 = vmatpush1.bf16.msra.mxu0 0
  %4455 = vmatprep.subr.bf16.mxu0 0
  %4456 = vmatpush1.bf16.msra.mxu0 0
  %4457 = vmatprep.mubr.bf16.mxu0 0
  %4458 = vmatmul.mubr.bf16.gmra.mrb[0].mxu0 %v4420
  %v4459 = vpop.f32.mrb[0].mxu0
  %v4460 = vadd.f32 0.0, %v4459
  %v4461 = vpop.f32.mrb[0].mxu0
  %v4462 = vpop.f32.mrb[0].mxu0
  %v4463 = vadd.f32 0.0, %v4462
  %v4464 = vpop.f32.mrb[0].mxu0
  %4465 = vmatprep.mubr.bf16.mxu0 0
  %4466 = vmatmul.mubr.bf16.gmra.mrb[0].mxu0 %v4422
  %v4467 = vpop.f32.mrb[0].mxu0
  %v4468 = vadd.f32 0.0, %v4467
  %v4469 = vpop.f32.mrb[0].mxu0
  %v4470 = vpop.f32.mrb[0].mxu0
  %v4471 = vadd.f32 0.0, %v4470
  %v4472 = vpop.f32.mrb[0].mxu0
  %4473 = vdwg.mxu0
  %v4474 = vadd.f32 %v3948, %v4460
  %v4475 = vadd.f32 %v3951, %v4463
  %v4476 = vadd.f32 %v3956, %v4468
  %v4477 = vadd.f32 %v3959, %v4471
  %v4478 = vld [vmem:[#allocation2 + $0x40] sm:$0xff]
  %v4479 = vld [vmem:[#allocation2 + $0x48] sm:$0xff]
  %s4480 = scalar_lea.vmem [#allocation3], 768
  %v4481 = vld [vmem:[%s4480] sm:$0xff]
  %v4482 = vld [vmem:[%s4480 + $0x8] sm:$0xff]
  %v4483 = vld [vmem:[%s4480 + $0x10] sm:$0xff]
  %v4484 = vld [vmem:[%s4480 + $0x18] sm:$0xff]
  %v4485 = vld [vmem:[%s4480 + $0x20] sm:$0xff]
  %v4486 = vld [vmem:[%s4480 + $0x28] sm:$0xff]
  %v4487 = vld [vmem:[%s4480 + $0x30] sm:$0xff]
  %v4488 = vld [vmem:[%s4480 + $0x38] sm:$0xff]
  %4489 = vmatprep.subr.bf16.mxu0 0
  %4490 = vmatpush1.bf16.msra.mxu0 %v4481
  %4491 = vmatprep.subr.bf16.mxu0 0
  %4492 = vmatpush1.bf16.msra.mxu0 %v4482
  %4493 = vmatprep.subr.bf16.mxu0 0
  %4494 = vmatpush1.bf16.msra.mxu0 %v4483
  %4495 = vmatprep.subr.bf16.mxu0 0
  %4496 = vmatpush1.bf16.msra.mxu0 %v4484
  %4497 = vmatprep.subr.bf16.mxu0 0
  %4498 = vmatpush1.bf16.msra.mxu0 %v4485
  %4499 = vmatprep.subr.bf16.mxu0 0
  %4500 = vmatpush1.bf16.msra.mxu0 %v4486
  %4501 = vmatprep.subr.bf16.mxu0 0
  %4502 = vmatpush1.bf16.msra.mxu0 %v4487
  %4503 = vmatprep.subr.bf16.mxu0 0
  %4504 = vmatpush1.bf16.msra.mxu0 %v4488
  %4505 = vmatprep.subr.bf16.mxu0 0
  %4506 = vmatpush1.bf16.msra.mxu0 0
  %4507 = vmatprep.subr.bf16.mxu0 0
  %4508 = vmatpush1.bf16.msra.mxu0 0
  %4509 = vmatprep.subr.bf16.mxu0 0
  %4510 = vmatpush1.bf16.msra.mxu0 0
  %4511 = vmatprep.subr.bf16.mxu0 0
  %4512 = vmatpush1.bf16.msra.mxu0 0
  %4513 = vmatprep.subr.bf16.mxu0 0
  %4514 = vmatpush1.bf16.msra.mxu0 0
  %4515 = vmatprep.subr.bf16.mxu0 0
  %4516 = vmatpush1.bf16.msra.mxu0 0
  %4517 = vmatprep.subr.bf16.mxu0 0
  %4518 = vmatpush1.bf16.msra.mxu0 0
  %4519 = vmatprep.subr.bf16.mxu0 0
  %4520 = vmatpush1.bf16.msra.mxu0 0
  %4521 = vmatprep.mubr.bf16.mxu0 0
  %4522 = vmatmul.mubr.bf16.gmra.mrb[0].mxu0 %v4198
  %v4523 = vpop.f32.mrb[0].mxu0
  %v4524 = vadd.f32 0.0, %v4523
  %v4525 = vpop.f32.mrb[0].mxu0
  %v4526 = vpop.f32.mrb[0].mxu0
  %v4527 = vadd.f32 0.0, %v4526
  %v4528 = vpop.f32.mrb[0].mxu0
  %4529 = vmatprep.mubr.bf16.mxu0 0
  %4530 = vmatmul.mubr.bf16.gmra.mrb[0].mxu0 %v4478
  %v4531 = vpop.f32.mrb[0].mxu0
  %v4532 = vadd.f32 0.0, %v4531
  %v4533 = vpop.f32.mrb[0].mxu0
  %v4534 = vpop.f32.mrb[0].mxu0
  %v4535 = vadd.f32 0.0, %v4534
  %v4536 = vpop.f32.mrb[0].mxu0
  %4537 = vdwg.mxu0
  %v4538 = vadd.f32 %v4022, %v4524
  %v4539 = vadd.f32 %v4023, %v4527
  %v4540 = vadd.f32 %v4024, %v4532
  %v4541 = vadd.f32 %v4025, %v4535
  %4542 = vmatprep.subr.bf16.mxu0 0
  %4543 = vmatpush1.bf16.msra.mxu0 %v4481
  %4544 = vmatprep.subr.bf16.mxu0 0
  %4545 = vmatpush1.bf16.msra.mxu0 %v4482
  %4546 = vmatprep.subr.bf16.mxu0 0
  %4547 = vmatpush1.bf16.msra.mxu0 %v4483
  %4548 = vmatprep.subr.bf16.mxu0 0
  %4549 = vmatpush1.bf16.msra.mxu0 %v4484
  %4550 = vmatprep.subr.bf16.mxu0 0
  %4551 = vmatpush1.bf16.msra.mxu0 %v4485
  %4552 = vmatprep.subr.bf16.mxu0 0
  %4553 = vmatpush1.bf16.msra.mxu0 %v4486
  %4554 = vmatprep.subr.bf16.mxu0 0
  %4555 = vmatpush1.bf16.msra.mxu0 %v4487
  %4556 = vmatprep.subr.bf16.mxu0 0
  %4557 = vmatpush1.bf16.msra.mxu0 %v4488
  %4558 = vmatprep.subr.bf16.mxu0 0
  %4559 = vmatpush1.bf16.msra.mxu0 0
  %4560 = vmatprep.subr.bf16.mxu0 0
  %4561 = vmatpush1.bf16.msra.mxu0 0
  %4562 = vmatprep.subr.bf16.mxu0 0
  %4563 = vmatpush1.bf16.msra.mxu0 0
  %4564 = vmatprep.subr.bf16.mxu0 0
  %4565 = vmatpush1.bf16.msra.mxu0 0
  %4566 = vmatprep.subr.bf16.mxu0 0
  %4567 = vmatpush1.bf16.msra.mxu0 0
  %4568 = vmatprep.subr.bf16.mxu0 0
  %4569 = vmatpush1.bf16.msra.mxu0 0
  %4570 = vmatprep.subr.bf16.mxu0 0
  %4571 = vmatpush1.bf16.msra.mxu0 0
  %4572 = vmatprep.subr.bf16.mxu0 0
  %4573 = vmatpush1.bf16.msra.mxu0 0
  %4574 = vmatprep.mubr.bf16.mxu0 0
  %4575 = vmatmul.mubr.bf16.gmra.mrb[0].mxu0 %v4199
  %v4576 = vpop.f32.mrb[0].mxu0
  %v4577 = vadd.f32 0.0, %v4576
  %v4578 = vpop.f32.mrb[0].mxu0
  %v4579 = vpop.f32.mrb[0].mxu0
  %v4580 = vadd.f32 0.0, %v4579
  %v4581 = vpop.f32.mrb[0].mxu0
  %4582 = vmatprep.mubr.bf16.mxu0 0
  %4583 = vmatmul.mubr.bf16.gmra.mrb[0].mxu0 %v4479
  %v4584 = vpop.f32.mrb[0].mxu0
  %v4585 = vadd.f32 0.0, %v4584
  %v4586 = vpop.f32.mrb[0].mxu0
  %v4587 = vpop.f32.mrb[0].mxu0
  %v4588 = vadd.f32 0.0, %v4587
  %v4589 = vpop.f32.mrb[0].mxu0
  %4590 = vdwg.mxu0
  %v4591 = vadd.f32 %v4075, %v4577
  %v4592 = vadd.f32 %v4076, %v4580
  %v4593 = vadd.f32 %v4077, %v4585
  %v4594 = vadd.f32 %v4078, %v4588
  %v4595 = vld [vmem:[#allocation2 + $0xd0] sm:$0xff]
  %v4596 = vld [vmem:[#allocation2 + $0xd8] sm:$0xff]
  %s4597 = scalar_lea.vmem [#allocation3], 832
  %v4598 = vld [vmem:[%s4597] sm:$0xff]
  %v4599 = vld [vmem:[%s4597 + $0x8] sm:$0xff]
  %v4600 = vld [vmem:[%s4597 + $0x10] sm:$0xff]
  %v4601 = vld [vmem:[%s4597 + $0x18] sm:$0xff]
  %v4602 = vld [vmem:[%s4597 + $0x20] sm:$0xff]
  %v4603 = vld [vmem:[%s4597 + $0x28] sm:$0xff]
  %v4604 = vld [vmem:[%s4597 + $0x30] sm:$0xff]
  %v4605 = vld [vmem:[%s4597 + $0x38] sm:$0xff]
  %4606 = vmatprep.subr.bf16.mxu0 0
  %4607 = vmatpush1.bf16.msra.mxu0 %v4598
  %4608 = vmatprep.subr.bf16.mxu0 0
  %4609 = vmatpush1.bf16.msra.mxu0 %v4599
  %4610 = vmatprep.subr.bf16.mxu0 0
  %4611 = vmatpush1.bf16.msra.mxu0 %v4600
  %4612 = vmatprep.subr.bf16.mxu0 0
  %4613 = vmatpush1.bf16.msra.mxu0 %v4601
  %4614 = vmatprep.subr.bf16.mxu0 0
  %4615 = vmatpush1.bf16.msra.mxu0 %v4602
  %4616 = vmatprep.subr.bf16.mxu0 0
  %4617 = vmatpush1.bf16.msra.mxu0 %v4603
  %4618 = vmatprep.subr.bf16.mxu0 0
  %4619 = vmatpush1.bf16.msra.mxu0 %v4604
  %4620 = vmatprep.subr.bf16.mxu0 0
  %4621 = vmatpush1.bf16.msra.mxu0 %v4605
  %4622 = vmatprep.subr.bf16.mxu0 0
  %4623 = vmatpush1.bf16.msra.mxu0 0
  %4624 = vmatprep.subr.bf16.mxu0 0
  %4625 = vmatpush1.bf16.msra.mxu0 0
  %4626 = vmatprep.subr.bf16.mxu0 0
  %4627 = vmatpush1.bf16.msra.mxu0 0
  %4628 = vmatprep.subr.bf16.mxu0 0
  %4629 = vmatpush1.bf16.msra.mxu0 0
  %4630 = vmatprep.subr.bf16.mxu0 0
  %4631 = vmatpush1.bf16.msra.mxu0 0
  %4632 = vmatprep.subr.bf16.mxu0 0
  %4633 = vmatpush1.bf16.msra.mxu0 0
  %4634 = vmatprep.subr.bf16.mxu0 0
  %4635 = vmatpush1.bf16.msra.mxu0 0
  %4636 = vmatprep.subr.bf16.mxu0 0
  %4637 = vmatpush1.bf16.msra.mxu0 0
  %4638 = vmatprep.mubr.bf16.mxu0 0
  %4639 = vmatmul.mubr.bf16.gmra.mrb[0].mxu0 %v4339
  %v4640 = vpop.f32.mrb[0].mxu0
  %v4641 = vadd.f32 0.0, %v4640
  %v4642 = vpop.f32.mrb[0].mxu0
  %v4643 = vpop.f32.mrb[0].mxu0
  %v4644 = vadd.f32 0.0, %v4643
  %v4645 = vpop.f32.mrb[0].mxu0
  %4646 = vmatprep.mubr.bf16.mxu0 0
  %4647 = vmatmul.mubr.bf16.gmra.mrb[0].mxu0 %v4595
  %v4648 = vpop.f32.mrb[0].mxu0
  %v4649 = vadd.f32 0.0, %v4648
  %v4650 = vpop.f32.mrb[0].mxu0
  %v4651 = vpop.f32.mrb[0].mxu0
  %v4652 = vadd.f32 0.0, %v4651
  %v4653 = vpop.f32.mrb[0].mxu0
  %4654 = vdwg.mxu0
  %v4655 = vadd.f32 %v4139, %v4641
  %v4656 = vadd.f32 %v4140, %v4644
  %v4657 = vadd.f32 %v4141, %v4649
  %v4658 = vadd.f32 %v4142, %v4652
  %4659 = vmatprep.subr.bf16.mxu0 0
  %4660 = vmatpush1.bf16.msra.mxu0 %v4598
  %4661 = vmatprep.subr.bf16.mxu0 0
  %4662 = vmatpush1.bf16.msra.mxu0 %v4599
  %4663 = vmatprep.subr.bf16.mxu0 0
  %4664 = vmatpush1.bf16.msra.mxu0 %v4600
  %4665 = vmatprep.subr.bf16.mxu0 0
  %4666 = vmatpush1.bf16.msra.mxu0 %v4601
  %4667 = vmatprep.subr.bf16.mxu0 0
  %4668 = vmatpush1.bf16.msra.mxu0 %v4602
  %4669 = vmatprep.subr.bf16.mxu0 0
  %4670 = vmatpush1.bf16.msra.mxu0 %v4603
  %4671 = vmatprep.subr.bf16.mxu0 0
  %4672 = vmatpush1.bf16.msra.mxu0 %v4604
  %4673 = vmatprep.subr.bf16.mxu0 0
  %4674 = vmatpush1.bf16.msra.mxu0 %v4605
  %4675 = vmatprep.subr.bf16.mxu0 0
  %4676 = vmatpush1.bf16.msra.mxu0 0
  %4677 = vmatprep.subr.bf16.mxu0 0
  %4678 = vmatpush1.bf16.msra.mxu0 0
  %4679 = vmatprep.subr.bf16.mxu0 0
  %4680 = vmatpush1.bf16.msra.mxu0 0
  %4681 = vmatprep.subr.bf16.mxu0 0
  %4682 = vmatpush1.bf16.msra.mxu0 0
  %4683 = vmatprep.subr.bf16.mxu0 0
  %4684 = vmatpush1.bf16.msra.mxu0 0
  %4685 = vmatprep.subr.bf16.mxu0 0
  %4686 = vmatpush1.bf16.msra.mxu0 0
  %4687 = vmatprep.subr.bf16.mxu0 0
  %4688 = vmatpush1.bf16.msra.mxu0 0
  %4689 = vmatprep.subr.bf16.mxu0 0
  %4690 = vmatpush1.bf16.msra.mxu0 0
  %4691 = vmatprep.mubr.bf16.mxu0 0
  %4692 = vmatmul.mubr.bf16.gmra.mrb[0].mxu0 %v4340
  %v4693 = vpop.f32.mrb[0].mxu0
  %v4694 = vadd.f32 0.0, %v4693
  %v4695 = vpop.f32.mrb[0].mxu0
  %v4696 = vpop.f32.mrb[0].mxu0
  %v4697 = vadd.f32 0.0, %v4696
  %v4698 = vpop.f32.mrb[0].mxu0
  %4699 = vmatprep.mubr.bf16.mxu0 0
  %4700 = vmatmul.mubr.bf16.gmra.mrb[0].mxu0 %v4596
  %v4701 = vpop.f32.mrb[0].mxu0
  %v4702 = vadd.f32 0.0, %v4701
  %v4703 = vpop.f32.mrb[0].mxu0
  %v4704 = vpop.f32.mrb[0].mxu0
  %v4705 = vadd.f32 0.0, %v4704
  %v4706 = vpop.f32.mrb[0].mxu0
  %4707 = vdwg.mxu0
  %v4708 = vadd.f32 %v4192, %v4694
  %v4709 = vadd.f32 %v4193, %v4697
  %v4710 = vadd.f32 %v4194, %v4702
  %v4711 = vadd.f32 %v4195, %v4705
  %v4712 = vld [vmem:[#allocation2 + $0x30] sm:$0xf0]
  %v4713 = vld [vmem:[#allocation2 + $0x38] sm:$0xf0]
  %v4714 = vld [vmem:[#allocation2 + $0x40] sm:$0xff]
  %v4715 = vld [vmem:[#allocation2 + $0x48] sm:$0xff]
  %v4716 = vld [vmem:[#allocation2 + $0x50] sm:$0xf]
  %v4717 = vld [vmem:[#allocation2 + $0x58] sm:$0xf]
  %s4718 = scalar_lea.vmem [#allocation3], 896
  %v4719 = vld [vmem:[%s4718] sm:$0xff]
  %v4720 = vld [vmem:[%s4718 + $0x8] sm:$0xff]
  %v4721 = vld [vmem:[%s4718 + $0x10] sm:$0xff]
  %v4722 = vld [vmem:[%s4718 + $0x18] sm:$0xff]
  %v4723 = vld [vmem:[%s4718 + $0x20] sm:$0xff]
  %v4724 = vld [vmem:[%s4718 + $0x28] sm:$0xff]
  %v4725 = vld [vmem:[%s4718 + $0x30] sm:$0xff]
  %v4726 = vld [vmem:[%s4718 + $0x38] sm:$0xff]
  %v4730 = vrot.slane %v4712, 4
  %v4731 = vrot.slane %v4714, 4
  %v4732 = vsel %vm3477, %v4730, %v4731
  %v4733 = vrot.slane %v4716, 4
  %v4734 = vsel %vm3477, %v4731, %v4733
  %4737 = vmatprep.subr.bf16.mxu0 0
  %4738 = vmatpush1.bf16.msra.mxu0 %v4719
  %4739 = vmatprep.subr.bf16.mxu0 0
  %4740 = vmatpush1.bf16.msra.mxu0 %v4720
  %4741 = vmatprep.subr.bf16.mxu0 0
  %4742 = vmatpush1.bf16.msra.mxu0 %v4721
  %4743 = vmatprep.subr.bf16.mxu0 0
  %4744 = vmatpush1.bf16.msra.mxu0 %v4722
  %4745 = vmatprep.subr.bf16.mxu0 0
  %4746 = vmatpush1.bf16.msra.mxu0 %v4723
  %4747 = vmatprep.subr.bf16.mxu0 0
  %4748 = vmatpush1.bf16.msra.mxu0 %v4724
  %4749 = vmatprep.subr.bf16.mxu0 0
  %4750 = vmatpush1.bf16.msra.mxu0 %v4725
  %4751 = vmatprep.subr.bf16.mxu0 0
  %4752 = vmatpush1.bf16.msra.mxu0 %v4726
  %4753 = vmatprep.subr.bf16.mxu0 0
  %4754 = vmatpush1.bf16.msra.mxu0 0
  %4755 = vmatprep.subr.bf16.mxu0 0
  %4756 = vmatpush1.bf16.msra.mxu0 0
  %4757 = vmatprep.subr.bf16.mxu0 0
  %4758 = vmatpush1.bf16.msra.mxu0 0
  %4759 = vmatprep.subr.bf16.mxu0 0
  %4760 = vmatpush1.bf16.msra.mxu0 0
  %4761 = vmatprep.subr.bf16.mxu0 0
  %4762 = vmatpush1.bf16.msra.mxu0 0
  %4763 = vmatprep.subr.bf16.mxu0 0
  %4764 = vmatpush1.bf16.msra.mxu0 0
  %4765 = vmatprep.subr.bf16.mxu0 0
  %4766 = vmatpush1.bf16.msra.mxu0 0
  %4767 = vmatprep.subr.bf16.mxu0 0
  %4768 = vmatpush1.bf16.msra.mxu0 0
  %4769 = vmatprep.mubr.bf16.mxu0 0
  %4770 = vmatmul.mubr.bf16.gmra.mrb[0].mxu0 %v4732
  %v4771 = vpop.f32.mrb[0].mxu0
  %v4772 = vadd.f32 0.0, %v4771
  %v4773 = vpop.f32.mrb[0].mxu0
  %v4774 = vpop.f32.mrb[0].mxu0
  %v4775 = vadd.f32 0.0, %v4774
  %v4776 = vpop.f32.mrb[0].mxu0
  %4777 = vmatprep.mubr.bf16.mxu0 0
  %4778 = vmatmul.mubr.bf16.gmra.mrb[0].mxu0 %v4734
  %v4779 = vpop.f32.mrb[0].mxu0
  %v4780 = vadd.f32 0.0, %v4779
  %v4781 = vpop.f32.mrb[0].mxu0
  %v4782 = vpop.f32.mrb[0].mxu0
  %v4783 = vadd.f32 0.0, %v4782
  %v4784 = vpop.f32.mrb[0].mxu0
  %4785 = vdwg.mxu0
  %v4786 = vadd.f32 %v4270, %v4772
  %v4787 = vadd.f32 %v4271, %v4775
  %v4788 = vadd.f32 %v4272, %v4780
  %v4789 = vadd.f32 %v4273, %v4783
  %v4793 = vrot.slane %v4713, 4
  %v4794 = vrot.slane %v4715, 4
  %v4795 = vsel %vm3477, %v4793, %v4794
  %v4796 = vrot.slane %v4717, 4
  %v4797 = vsel %vm3477, %v4794, %v4796
  %4800 = vmatprep.subr.bf16.mxu0 0
  %4801 = vmatpush1.bf16.msra.mxu0 %v4719
  %4802 = vmatprep.subr.bf16.mxu0 0
  %4803 = vmatpush1.bf16.msra.mxu0 %v4720
  %4804 = vmatprep.subr.bf16.mxu0 0
  %4805 = vmatpush1.bf16.msra.mxu0 %v4721
  %4806 = vmatprep.subr.bf16.mxu0 0
  %4807 = vmatpush1.bf16.msra.mxu0 %v4722
  %4808 = vmatprep.subr.bf16.mxu0 0
  %4809 = vmatpush1.bf16.msra.mxu0 %v4723
  %4810 = vmatprep.subr.bf16.mxu0 0
  %4811 = vmatpush1.bf16.msra.mxu0 %v4724
  %4812 = vmatprep.subr.bf16.mxu0 0
  %4813 = vmatpush1.bf16.msra.mxu0 %v4725
  %4814 = vmatprep.subr.bf16.mxu0 0
  %4815 = vmatpush1.bf16.msra.mxu0 %v4726
  %4816 = vmatprep.subr.bf16.mxu0 0
  %4817 = vmatpush1.bf16.msra.mxu0 0
  %4818 = vmatprep.subr.bf16.mxu0 0
  %4819 = vmatpush1.bf16.msra.mxu0 0
  %4820 = vmatprep.subr.bf16.mxu0 0
  %4821 = vmatpush1.bf16.msra.mxu0 0
  %4822 = vmatprep.subr.bf16.mxu0 0
  %4823 = vmatpush1.bf16.msra.mxu0 0
  %4824 = vmatprep.subr.bf16.mxu0 0
  %4825 = vmatpush1.bf16.msra.mxu0 0
  %4826 = vmatprep.subr.bf16.mxu0 0
  %4827 = vmatpush1.bf16.msra.mxu0 0
  %4828 = vmatprep.subr.bf16.mxu0 0
  %4829 = vmatpush1.bf16.msra.mxu0 0
  %4830 = vmatprep.subr.bf16.mxu0 0
  %4831 = vmatpush1.bf16.msra.mxu0 0
  %4832 = vmatprep.mubr.bf16.mxu0 0
  %4833 = vmatmul.mubr.bf16.gmra.mrb[0].mxu0 %v4795
  %v4834 = vpop.f32.mrb[0].mxu0
  %v4835 = vadd.f32 0.0, %v4834
  %v4836 = vpop.f32.mrb[0].mxu0
  %v4837 = vpop.f32.mrb[0].mxu0
  %v4838 = vadd.f32 0.0, %v4837
  %v4839 = vpop.f32.mrb[0].mxu0
  %4840 = vmatprep.mubr.bf16.mxu0 0
  %4841 = vmatmul.mubr.bf16.gmra.mrb[0].mxu0 %v4797
  %v4842 = vpop.f32.mrb[0].mxu0
  %v4843 = vadd.f32 0.0, %v4842
  %v4844 = vpop.f32.mrb[0].mxu0
  %v4845 = vpop.f32.mrb[0].mxu0
  %v4846 = vadd.f32 0.0, %v4845
  %v4847 = vpop.f32.mrb[0].mxu0
  %4848 = vdwg.mxu0
  %v4849 = vadd.f32 %v4333, %v4835
  %v4850 = vadd.f32 %v4334, %v4838
  %v4851 = vadd.f32 %v4335, %v4843
  %v4852 = vadd.f32 %v4336, %v4846
  %v4853 = vld [vmem:[#allocation2 + $0xc0] sm:$0xf0]
  %v4854 = vld [vmem:[#allocation2 + $0xc8] sm:$0xf0]
  %v4855 = vld [vmem:[#allocation2 + $0xd0] sm:$0xff]
  %v4856 = vld [vmem:[#allocation2 + $0xd8] sm:$0xff]
  %v4857 = vld [vmem:[#allocation2 + $0xe0] sm:$0xf]
  %v4858 = vld [vmem:[#allocation2 + $0xe8] sm:$0xf]
  %s4859 = scalar_lea.vmem [#allocation3], 960
  %v4860 = vld [vmem:[%s4859] sm:$0xff]
  %v4861 = vld [vmem:[%s4859 + $0x8] sm:$0xff]
  %v4862 = vld [vmem:[%s4859 + $0x10] sm:$0xff]
  %v4863 = vld [vmem:[%s4859 + $0x18] sm:$0xff]
  %v4864 = vld [vmem:[%s4859 + $0x20] sm:$0xff]
  %v4865 = vld [vmem:[%s4859 + $0x28] sm:$0xff]
  %v4866 = vld [vmem:[%s4859 + $0x30] sm:$0xff]
  %v4867 = vld [vmem:[%s4859 + $0x38] sm:$0xff]
  %v4871 = vrot.slane %v4853, 4
  %v4872 = vrot.slane %v4855, 4
  %v4873 = vsel %vm3477, %v4871, %v4872
  %v4874 = vrot.slane %v4857, 4
  %v4875 = vsel %vm3477, %v4872, %v4874
  %4878 = vmatprep.subr.bf16.mxu0 0
  %4879 = vmatpush1.bf16.msra.mxu0 %v4860
  %4880 = vmatprep.subr.bf16.mxu0 0
  %4881 = vmatpush1.bf16.msra.mxu0 %v4861
  %4882 = vmatprep.subr.bf16.mxu0 0
  %4883 = vmatpush1.bf16.msra.mxu0 %v4862
  %4884 = vmatprep.subr.bf16.mxu0 0
  %4885 = vmatpush1.bf16.msra.mxu0 %v4863
  %4886 = vmatprep.subr.bf16.mxu0 0
  %4887 = vmatpush1.bf16.msra.mxu0 %v4864
  %4888 = vmatprep.subr.bf16.mxu0 0
  %4889 = vmatpush1.bf16.msra.mxu0 %v4865
  %4890 = vmatprep.subr.bf16.mxu0 0
  %4891 = vmatpush1.bf16.msra.mxu0 %v4866
  %4892 = vmatprep.subr.bf16.mxu0 0
  %4893 = vmatpush1.bf16.msra.mxu0 %v4867
  %4894 = vmatprep.subr.bf16.mxu0 0
  %4895 = vmatpush1.bf16.msra.mxu0 0
  %4896 = vmatprep.subr.bf16.mxu0 0
  %4897 = vmatpush1.bf16.msra.mxu0 0
  %4898 = vmatprep.subr.bf16.mxu0 0
  %4899 = vmatpush1.bf16.msra.mxu0 0
  %4900 = vmatprep.subr.bf16.mxu0 0
  %4901 = vmatpush1.bf16.msra.mxu0 0
  %4902 = vmatprep.subr.bf16.mxu0 0
  %4903 = vmatpush1.bf16.msra.mxu0 0
  %4904 = vmatprep.subr.bf16.mxu0 0
  %4905 = vmatpush1.bf16.msra.mxu0 0
  %4906 = vmatprep.subr.bf16.mxu0 0
  %4907 = vmatpush1.bf16.msra.mxu0 0
  %4908 = vmatprep.subr.bf16.mxu0 0
  %4909 = vmatpush1.bf16.msra.mxu0 0
  %4910 = vmatprep.mubr.bf16.mxu0 0
  %4911 = vmatmul.mubr.bf16.gmra.mrb[0].mxu0 %v4873
  %v4912 = vpop.f32.mrb[0].mxu0
  %v4913 = vadd.f32 0.0, %v4912
  %v4914 = vpop.f32.mrb[0].mxu0
  %v4915 = vpop.f32.mrb[0].mxu0
  %v4916 = vadd.f32 0.0, %v4915
  %v4917 = vpop.f32.mrb[0].mxu0
  %4918 = vmatprep.mubr.bf16.mxu0 0
  %4919 = vmatmul.mubr.bf16.gmra.mrb[0].mxu0 %v4875
  %v4920 = vpop.f32.mrb[0].mxu0
  %v4921 = vadd.f32 0.0, %v4920
  %v4922 = vpop.f32.mrb[0].mxu0
  %v4923 = vpop.f32.mrb[0].mxu0
  %v4924 = vadd.f32 0.0, %v4923
  %v4925 = vpop.f32.mrb[0].mxu0
  %4926 = vdwg.mxu0
  %v4927 = vadd.f32 %v4411, %v4913
  %v4928 = vadd.f32 %v4412, %v4916
  %v4929 = vadd.f32 %v4413, %v4921
  %v4930 = vadd.f32 %v4414, %v4924
  %v4934 = vrot.slane %v4854, 4
  %v4935 = vrot.slane %v4856, 4
  %v4936 = vsel %vm3477, %v4934, %v4935
  %v4937 = vrot.slane %v4858, 4
  %v4938 = vsel %vm3477, %v4935, %v4937
  %4941 = vmatprep.subr.bf16.mxu0 0
  %4942 = vmatpush1.bf16.msra.mxu0 %v4860
  %4943 = vmatprep.subr.bf16.mxu0 0
  %4944 = vmatpush1.bf16.msra.mxu0 %v4861
  %4945 = vmatprep.subr.bf16.mxu0 0
  %4946 = vmatpush1.bf16.msra.mxu0 %v4862
  %4947 = vmatprep.subr.bf16.mxu0 0
  %4948 = vmatpush1.bf16.msra.mxu0 %v4863
  %4949 = vmatprep.subr.bf16.mxu0 0
  %4950 = vmatpush1.bf16.msra.mxu0 %v4864
  %4951 = vmatprep.subr.bf16.mxu0 0
  %4952 = vmatpush1.bf16.msra.mxu0 %v4865
  %4953 = vmatprep.subr.bf16.mxu0 0
  %4954 = vmatpush1.bf16.msra.mxu0 %v4866
  %4955 = vmatprep.subr.bf16.mxu0 0
  %4956 = vmatpush1.bf16.msra.mxu0 %v4867
  %4957 = vmatprep.subr.bf16.mxu0 0
  %4958 = vmatpush1.bf16.msra.mxu0 0
  %4959 = vmatprep.subr.bf16.mxu0 0
  %4960 = vmatpush1.bf16.msra.mxu0 0
  %4961 = vmatprep.subr.bf16.mxu0 0
  %4962 = vmatpush1.bf16.msra.mxu0 0
  %4963 = vmatprep.subr.bf16.mxu0 0
  %4964 = vmatpush1.bf16.msra.mxu0 0
  %4965 = vmatprep.subr.bf16.mxu0 0
  %4966 = vmatpush1.bf16.msra.mxu0 0
  %4967 = vmatprep.subr.bf16.mxu0 0
  %4968 = vmatpush1.bf16.msra.mxu0 0
  %4969 = vmatprep.subr.bf16.mxu0 0
  %4970 = vmatpush1.bf16.msra.mxu0 0
  %4971 = vmatprep.subr.bf16.mxu0 0
  %4972 = vmatpush1.bf16.msra.mxu0 0
  %4973 = vmatprep.mubr.bf16.mxu0 0
  %4974 = vmatmul.mubr.bf16.gmra.mrb[0].mxu0 %v4936
  %v4975 = vpop.f32.mrb[0].mxu0
  %v4976 = vadd.f32 0.0, %v4975
  %v4977 = vpop.f32.mrb[0].mxu0
  %v4978 = vpop.f32.mrb[0].mxu0
  %v4979 = vadd.f32 0.0, %v4978
  %v4980 = vpop.f32.mrb[0].mxu0
  %4981 = vmatprep.mubr.bf16.mxu0 0
  %4982 = vmatmul.mubr.bf16.gmra.mrb[0].mxu0 %v4938
  %v4983 = vpop.f32.mrb[0].mxu0
  %v4984 = vadd.f32 0.0, %v4983
  %v4985 = vpop.f32.mrb[0].mxu0
  %v4986 = vpop.f32.mrb[0].mxu0
  %v4987 = vadd.f32 0.0, %v4986
  %v4988 = vpop.f32.mrb[0].mxu0
  %4989 = vdwg.mxu0
  %v4990 = vadd.f32 %v4474, %v4976
  %v4991 = vadd.f32 %v4475, %v4979
  %v4992 = vadd.f32 %v4476, %v4984
  %v4993 = vadd.f32 %v4477, %v4987
  %v4994 = vld [vmem:[#allocation2 + $0x50] sm:$0xff]
  %v4995 = vld [vmem:[#allocation2 + $0x58] sm:$0xff]
  %s4996 = scalar_lea.vmem [#allocation3], 1024
  %v4997 = vld [vmem:[%s4996] sm:$0xff]
  %v4998 = vld [vmem:[%s4996 + $0x8] sm:$0xff]
  %v4999 = vld [vmem:[%s4996 + $0x10] sm:$0xff]
  %v5000 = vld [vmem:[%s4996 + $0x18] sm:$0xff]
  %v5001 = vld [vmem:[%s4996 + $0x20] sm:$0xff]
  %v5002 = vld [vmem:[%s4996 + $0x28] sm:$0xff]
  %v5003 = vld [vmem:[%s4996 + $0x30] sm:$0xff]
  %v5004 = vld [vmem:[%s4996 + $0x38] sm:$0xff]
  %5005 = vmatprep.subr.bf16.mxu0 0
  %5006 = vmatpush1.bf16.msra.mxu0 %v4997
  %5007 = vmatprep.subr.bf16.mxu0 0
  %5008 = vmatpush1.bf16.msra.mxu0 %v4998
  %5009 = vmatprep.subr.bf16.mxu0 0
  %5010 = vmatpush1.bf16.msra.mxu0 %v4999
  %5011 = vmatprep.subr.bf16.mxu0 0
  %5012 = vmatpush1.bf16.msra.mxu0 %v5000
  %5013 = vmatprep.subr.bf16.mxu0 0
  %5014 = vmatpush1.bf16.msra.mxu0 %v5001
  %5015 = vmatprep.subr.bf16.mxu0 0
  %5016 = vmatpush1.bf16.msra.mxu0 %v5002
  %5017 = vmatprep.subr.bf16.mxu0 0
  %5018 = vmatpush1.bf16.msra.mxu0 %v5003
  %5019 = vmatprep.subr.bf16.mxu0 0
  %5020 = vmatpush1.bf16.msra.mxu0 %v5004
  %5021 = vmatprep.subr.bf16.mxu0 0
  %5022 = vmatpush1.bf16.msra.mxu0 0
  %5023 = vmatprep.subr.bf16.mxu0 0
  %5024 = vmatpush1.bf16.msra.mxu0 0
  %5025 = vmatprep.subr.bf16.mxu0 0
  %5026 = vmatpush1.bf16.msra.mxu0 0
  %5027 = vmatprep.subr.bf16.mxu0 0
  %5028 = vmatpush1.bf16.msra.mxu0 0
  %5029 = vmatprep.subr.bf16.mxu0 0
  %5030 = vmatpush1.bf16.msra.mxu0 0
  %5031 = vmatprep.subr.bf16.mxu0 0
  %5032 = vmatpush1.bf16.msra.mxu0 0
  %5033 = vmatprep.subr.bf16.mxu0 0
  %5034 = vmatpush1.bf16.msra.mxu0 0
  %5035 = vmatprep.subr.bf16.mxu0 0
  %5036 = vmatpush1.bf16.msra.mxu0 0
  %5037 = vmatprep.mubr.bf16.mxu0 0
  %5038 = vmatmul.mubr.bf16.gmra.mrb[0].mxu0 %v4714
  %v5039 = vpop.f32.mrb[0].mxu0
  %v5040 = vadd.f32 0.0, %v5039
  %v5041 = vpop.f32.mrb[0].mxu0
  %v5042 = vpop.f32.mrb[0].mxu0
  %v5043 = vadd.f32 0.0, %v5042
  %v5044 = vpop.f32.mrb[0].mxu0
  %5045 = vmatprep.mubr.bf16.mxu0 0
  %5046 = vmatmul.mubr.bf16.gmra.mrb[0].mxu0 %v4994
  %v5047 = vpop.f32.mrb[0].mxu0
  %v5048 = vadd.f32 0.0, %v5047
  %v5049 = vpop.f32.mrb[0].mxu0
  %v5050 = vpop.f32.mrb[0].mxu0
  %v5051 = vadd.f32 0.0, %v5050
  %v5052 = vpop.f32.mrb[0].mxu0
  %5053 = vdwg.mxu0
  %v5054 = vadd.f32 %v4538, %v5040
  %v5055 = vadd.f32 %v4539, %v5043
  %v5056 = vadd.f32 %v4540, %v5048
  %v5057 = vadd.f32 %v4541, %v5051
  %5058 = vmatprep.subr.bf16.mxu0 0
  %5059 = vmatpush1.bf16.msra.mxu0 %v4997
  %5060 = vmatprep.subr.bf16.mxu0 0
  %5061 = vmatpush1.bf16.msra.mxu0 %v4998
  %5062 = vmatprep.subr.bf16.mxu0 0
  %5063 = vmatpush1.bf16.msra.mxu0 %v4999
  %5064 = vmatprep.subr.bf16.mxu0 0
  %5065 = vmatpush1.bf16.msra.mxu0 %v5000
  %5066 = vmatprep.subr.bf16.mxu0 0
  %5067 = vmatpush1.bf16.msra.mxu0 %v5001
  %5068 = vmatprep.subr.bf16.mxu0 0
  %5069 = vmatpush1.bf16.msra.mxu0 %v5002
  %5070 = vmatprep.subr.bf16.mxu0 0
  %5071 = vmatpush1.bf16.msra.mxu0 %v5003
  %5072 = vmatprep.subr.bf16.mxu0 0
  %5073 = vmatpush1.bf16.msra.mxu0 %v5004
  %5074 = vmatprep.subr.bf16.mxu0 0
  %5075 = vmatpush1.bf16.msra.mxu0 0
  %5076 = vmatprep.subr.bf16.mxu0 0
  %5077 = vmatpush1.bf16.msra.mxu0 0
  %5078 = vmatprep.subr.bf16.mxu0 0
  %5079 = vmatpush1.bf16.msra.mxu0 0
  %5080 = vmatprep.subr.bf16.mxu0 0
  %5081 = vmatpush1.bf16.msra.mxu0 0
  %5082 = vmatprep.subr.bf16.mxu0 0
  %5083 = vmatpush1.bf16.msra.mxu0 0
  %5084 = vmatprep.subr.bf16.mxu0 0
  %5085 = vmatpush1.bf16.msra.mxu0 0
  %5086 = vmatprep.subr.bf16.mxu0 0
  %5087 = vmatpush1.bf16.msra.mxu0 0
  %5088 = vmatprep.subr.bf16.mxu0 0
  %5089 = vmatpush1.bf16.msra.mxu0 0
  %5090 = vmatprep.mubr.bf16.mxu0 0
  %5091 = vmatmul.mubr.bf16.gmra.mrb[0].mxu0 %v4715
  %v5092 = vpop.f32.mrb[0].mxu0
  %v5093 = vadd.f32 0.0, %v5092
  %v5094 = vpop.f32.mrb[0].mxu0
  %v5095 = vpop.f32.mrb[0].mxu0
  %v5096 = vadd.f32 0.0, %v5095
  %v5097 = vpop.f32.mrb[0].mxu0
  %5098 = vmatprep.mubr.bf16.mxu0 0
  %5099 = vmatmul.mubr.bf16.gmra.mrb[0].mxu0 %v4995
  %v5100 = vpop.f32.mrb[0].mxu0
  %v5101 = vadd.f32 0.0, %v5100
  %v5102 = vpop.f32.mrb[0].mxu0
  %v5103 = vpop.f32.mrb[0].mxu0
  %v5104 = vadd.f32 0.0, %v5103
  %v5105 = vpop.f32.mrb[0].mxu0
  %5106 = vdwg.mxu0
  %v5107 = vadd.f32 %v4591, %v5093
  %v5108 = vadd.f32 %v4592, %v5096
  %v5109 = vadd.f32 %v4593, %v5101
  %v5110 = vadd.f32 %v4594, %v5104
  %v5111 = vld [vmem:[#allocation2 + $0xe0] sm:$0xff]
  %v5112 = vld [vmem:[#allocation2 + $0xe8] sm:$0xff]
  %s5113 = scalar_lea.vmem [#allocation3], 1088
  %v5114 = vld [vmem:[%s5113] sm:$0xff]
  %v5115 = vld [vmem:[%s5113 + $0x8] sm:$0xff]
  %v5116 = vld [vmem:[%s5113 + $0x10] sm:$0xff]
  %v5117 = vld [vmem:[%s5113 + $0x18] sm:$0xff]
  %v5118 = vld [vmem:[%s5113 + $0x20] sm:$0xff]
  %v5119 = vld [vmem:[%s5113 + $0x28] sm:$0xff]
  %v5120 = vld [vmem:[%s5113 + $0x30] sm:$0xff]
  %v5121 = vld [vmem:[%s5113 + $0x38] sm:$0xff]
  %5122 = vmatprep.subr.bf16.mxu0 0
  %5123 = vmatpush1.bf16.msra.mxu0 %v5114
  %5124 = vmatprep.subr.bf16.mxu0 0
  %5125 = vmatpush1.bf16.msra.mxu0 %v5115
  %5126 = vmatprep.subr.bf16.mxu0 0
  %5127 = vmatpush1.bf16.msra.mxu0 %v5116
  %5128 = vmatprep.subr.bf16.mxu0 0
  %5129 = vmatpush1.bf16.msra.mxu0 %v5117
  %5130 = vmatprep.subr.bf16.mxu0 0
  %5131 = vmatpush1.bf16.msra.mxu0 %v5118
  %5132 = vmatprep.subr.bf16.mxu0 0
  %5133 = vmatpush1.bf16.msra.mxu0 %v5119
  %5134 = vmatprep.subr.bf16.mxu0 0
  %5135 = vmatpush1.bf16.msra.mxu0 %v5120
  %5136 = vmatprep.subr.bf16.mxu0 0
  %5137 = vmatpush1.bf16.msra.mxu0 %v5121
  %5138 = vmatprep.subr.bf16.mxu0 0
  %5139 = vmatpush1.bf16.msra.mxu0 0
  %5140 = vmatprep.subr.bf16.mxu0 0
  %5141 = vmatpush1.bf16.msra.mxu0 0
  %5142 = vmatprep.subr.bf16.mxu0 0
  %5143 = vmatpush1.bf16.msra.mxu0 0
  %5144 = vmatprep.subr.bf16.mxu0 0
  %5145 = vmatpush1.bf16.msra.mxu0 0
  %5146 = vmatprep.subr.bf16.mxu0 0
  %5147 = vmatpush1.bf16.msra.mxu0 0
  %5148 = vmatprep.subr.bf16.mxu0 0
  %5149 = vmatpush1.bf16.msra.mxu0 0
  %5150 = vmatprep.subr.bf16.mxu0 0
  %5151 = vmatpush1.bf16.msra.mxu0 0
  %5152 = vmatprep.subr.bf16.mxu0 0
  %5153 = vmatpush1.bf16.msra.mxu0 0
  %5154 = vmatprep.mubr.bf16.mxu0 0
  %5155 = vmatmul.mubr.bf16.gmra.mrb[0].mxu0 %v4855
  %v5156 = vpop.f32.mrb[0].mxu0
  %v5157 = vadd.f32 0.0, %v5156
  %v5158 = vpop.f32.mrb[0].mxu0
  %v5159 = vpop.f32.mrb[0].mxu0
  %v5160 = vadd.f32 0.0, %v5159
  %v5161 = vpop.f32.mrb[0].mxu0
  %5162 = vmatprep.mubr.bf16.mxu0 0
  %5163 = vmatmul.mubr.bf16.gmra.mrb[0].mxu0 %v5111
  %v5164 = vpop.f32.mrb[0].mxu0
  %v5165 = vadd.f32 0.0, %v5164
  %v5166 = vpop.f32.mrb[0].mxu0
  %v5167 = vpop.f32.mrb[0].mxu0
  %v5168 = vadd.f32 0.0, %v5167
  %v5169 = vpop.f32.mrb[0].mxu0
  %5170 = vdwg.mxu0
  %v5171 = vadd.f32 %v4655, %v5157
  %v5172 = vadd.f32 %v4656, %v5160
  %v5173 = vadd.f32 %v4657, %v5165
  %v5174 = vadd.f32 %v4658, %v5168
  %5175 = vmatprep.subr.bf16.mxu0 0
  %5176 = vmatpush1.bf16.msra.mxu0 %v5114
  %5177 = vmatprep.subr.bf16.mxu0 0
  %5178 = vmatpush1.bf16.msra.mxu0 %v5115
  %5179 = vmatprep.subr.bf16.mxu0 0
  %5180 = vmatpush1.bf16.msra.mxu0 %v5116
  %5181 = vmatprep.subr.bf16.mxu0 0
  %5182 = vmatpush1.bf16.msra.mxu0 %v5117
  %5183 = vmatprep.subr.bf16.mxu0 0
  %5184 = vmatpush1.bf16.msra.mxu0 %v5118
  %5185 = vmatprep.subr.bf16.mxu0 0
  %5186 = vmatpush1.bf16.msra.mxu0 %v5119
  %5187 = vmatprep.subr.bf16.mxu0 0
  %5188 = vmatpush1.bf16.msra.mxu0 %v5120
  %5189 = vmatprep.subr.bf16.mxu0 0
  %5190 = vmatpush1.bf16.msra.mxu0 %v5121
  %5191 = vmatprep.subr.bf16.mxu0 0
  %5192 = vmatpush1.bf16.msra.mxu0 0
  %5193 = vmatprep.subr.bf16.mxu0 0
  %5194 = vmatpush1.bf16.msra.mxu0 0
  %5195 = vmatprep.subr.bf16.mxu0 0
  %5196 = vmatpush1.bf16.msra.mxu0 0
  %5197 = vmatprep.subr.bf16.mxu0 0
  %5198 = vmatpush1.bf16.msra.mxu0 0
  %5199 = vmatprep.subr.bf16.mxu0 0
  %5200 = vmatpush1.bf16.msra.mxu0 0
  %5201 = vmatprep.subr.bf16.mxu0 0
  %5202 = vmatpush1.bf16.msra.mxu0 0
  %5203 = vmatprep.subr.bf16.mxu0 0
  %5204 = vmatpush1.bf16.msra.mxu0 0
  %5205 = vmatprep.subr.bf16.mxu0 0
  %5206 = vmatpush1.bf16.msra.mxu0 0
  %5207 = vmatprep.mubr.bf16.mxu0 0
  %5208 = vmatmul.mubr.bf16.gmra.mrb[0].mxu0 %v4856
  %v5209 = vpop.f32.mrb[0].mxu0
  %v5210 = vadd.f32 0.0, %v5209
  %v5211 = vpop.f32.mrb[0].mxu0
  %v5212 = vpop.f32.mrb[0].mxu0
  %v5213 = vadd.f32 0.0, %v5212
  %v5214 = vpop.f32.mrb[0].mxu0
  %5215 = vmatprep.mubr.bf16.mxu0 0
  %5216 = vmatmul.mubr.bf16.gmra.mrb[0].mxu0 %v5112
  %v5217 = vpop.f32.mrb[0].mxu0
  %v5218 = vadd.f32 0.0, %v5217
  %v5219 = vpop.f32.mrb[0].mxu0
  %v5220 = vpop.f32.mrb[0].mxu0
  %v5221 = vadd.f32 0.0, %v5220
  %v5222 = vpop.f32.mrb[0].mxu0
  %5223 = vdwg.mxu0
  %v5224 = vadd.f32 %v4708, %v5210
  %v5225 = vadd.f32 %v4709, %v5213
  %v5226 = vadd.f32 %v4710, %v5218
  %v5227 = vadd.f32 %v4711, %v5221
  %v5228 = vld [vmem:[#allocation2 + $0x40] sm:$0xf0]
  %v5229 = vld [vmem:[#allocation2 + $0x48] sm:$0xf0]
  %v5230 = vld [vmem:[#allocation2 + $0x50] sm:$0xff]
  %v5231 = vld [vmem:[#allocation2 + $0x58] sm:$0xff]
  %v5232 = vld [vmem:[#allocation2 + $0x60] sm:$0xf]
  %v5233 = vld [vmem:[#allocation2 + $0x68] sm:$0xf]
  %s5234 = scalar_lea.vmem [#allocation3], 1152
  %v5235 = vld [vmem:[%s5234] sm:$0xff]
  %v5236 = vld [vmem:[%s5234 + $0x8] sm:$0xff]
  %v5237 = vld [vmem:[%s5234 + $0x10] sm:$0xff]
  %v5238 = vld [vmem:[%s5234 + $0x18] sm:$0xff]
  %v5239 = vld [vmem:[%s5234 + $0x20] sm:$0xff]
  %v5240 = vld [vmem:[%s5234 + $0x28] sm:$0xff]
  %v5241 = vld [vmem:[%s5234 + $0x30] sm:$0xff]
  %v5242 = vld [vmem:[%s5234 + $0x38] sm:$0xff]
  %v5246 = vrot.slane %v5228, 4
  %v5247 = vrot.slane %v5230, 4
  %v5248 = vsel %vm3477, %v5246, %v5247
  %v5249 = vrot.slane %v5232, 4
  %v5250 = vsel %vm3477, %v5247, %v5249
  %5253 = vmatprep.subr.bf16.mxu0 0
  %5254 = vmatpush1.bf16.msra.mxu0 %v5235
  %5255 = vmatprep.subr.bf16.mxu0 0
  %5256 = vmatpush1.bf16.msra.mxu0 %v5236
  %5257 = vmatprep.subr.bf16.mxu0 0
  %5258 = vmatpush1.bf16.msra.mxu0 %v5237
  %5259 = vmatprep.subr.bf16.mxu0 0
  %5260 = vmatpush1.bf16.msra.mxu0 %v5238
  %5261 = vmatprep.subr.bf16.mxu0 0
  %5262 = vmatpush1.bf16.msra.mxu0 %v5239
  %5263 = vmatprep.subr.bf16.mxu0 0
  %5264 = vmatpush1.bf16.msra.mxu0 %v5240
  %5265 = vmatprep.subr.bf16.mxu0 0
  %5266 = vmatpush1.bf16.msra.mxu0 %v5241
  %5267 = vmatprep.subr.bf16.mxu0 0
  %5268 = vmatpush1.bf16.msra.mxu0 %v5242
  %5269 = vmatprep.subr.bf16.mxu0 0
  %5270 = vmatpush1.bf16.msra.mxu0 0
  %5271 = vmatprep.subr.bf16.mxu0 0
  %5272 = vmatpush1.bf16.msra.mxu0 0
  %5273 = vmatprep.subr.bf16.mxu0 0
  %5274 = vmatpush1.bf16.msra.mxu0 0
  %5275 = vmatprep.subr.bf16.mxu0 0
  %5276 = vmatpush1.bf16.msra.mxu0 0
  %5277 = vmatprep.subr.bf16.mxu0 0
  %5278 = vmatpush1.bf16.msra.mxu0 0
  %5279 = vmatprep.subr.bf16.mxu0 0
  %5280 = vmatpush1.bf16.msra.mxu0 0
  %5281 = vmatprep.subr.bf16.mxu0 0
  %5282 = vmatpush1.bf16.msra.mxu0 0
  %5283 = vmatprep.subr.bf16.mxu0 0
  %5284 = vmatpush1.bf16.msra.mxu0 0
  %5285 = vmatprep.mubr.bf16.mxu0 0
  %5286 = vmatmul.mubr.bf16.gmra.mrb[0].mxu0 %v5248
  %v5287 = vpop.f32.mrb[0].mxu0
  %v5288 = vadd.f32 0.0, %v5287
  %v5289 = vpop.f32.mrb[0].mxu0
  %v5290 = vpop.f32.mrb[0].mxu0
  %v5291 = vadd.f32 0.0, %v5290
  %v5292 = vpop.f32.mrb[0].mxu0
  %5293 = vmatprep.mubr.bf16.mxu0 0
  %5294 = vmatmul.mubr.bf16.gmra.mrb[0].mxu0 %v5250
  %v5295 = vpop.f32.mrb[0].mxu0
  %v5296 = vadd.f32 0.0, %v5295
  %v5297 = vpop.f32.mrb[0].mxu0
  %v5298 = vpop.f32.mrb[0].mxu0
  %v5299 = vadd.f32 0.0, %v5298
  %v5300 = vpop.f32.mrb[0].mxu0
  %5301 = vdwg.mxu0
  %v5302 = vadd.f32 %v4786, %v5288
  %v5303 = vadd.f32 %v4787, %v5291
  %v5304 = vadd.f32 %v4788, %v5296
  %v5305 = vadd.f32 %v4789, %v5299
  %v5309 = vrot.slane %v5229, 4
  %v5310 = vrot.slane %v5231, 4
  %v5311 = vsel %vm3477, %v5309, %v5310
  %v5312 = vrot.slane %v5233, 4
  %v5313 = vsel %vm3477, %v5310, %v5312
  %5316 = vmatprep.subr.bf16.mxu0 0
  %5317 = vmatpush1.bf16.msra.mxu0 %v5235
  %5318 = vmatprep.subr.bf16.mxu0 0
  %5319 = vmatpush1.bf16.msra.mxu0 %v5236
  %5320 = vmatprep.subr.bf16.mxu0 0
  %5321 = vmatpush1.bf16.msra.mxu0 %v5237
  %5322 = vmatprep.subr.bf16.mxu0 0
  %5323 = vmatpush1.bf16.msra.mxu0 %v5238
  %5324 = vmatprep.subr.bf16.mxu0 0
  %5325 = vmatpush1.bf16.msra.mxu0 %v5239
  %5326 = vmatprep.subr.bf16.mxu0 0
  %5327 = vmatpush1.bf16.msra.mxu0 %v5240
  %5328 = vmatprep.subr.bf16.mxu0 0
  %5329 = vmatpush1.bf16.msra.mxu0 %v5241
  %5330 = vmatprep.subr.bf16.mxu0 0
  %5331 = vmatpush1.bf16.msra.mxu0 %v5242
  %5332 = vmatprep.subr.bf16.mxu0 0
  %5333 = vmatpush1.bf16.msra.mxu0 0
  %5334 = vmatprep.subr.bf16.mxu0 0
  %5335 = vmatpush1.bf16.msra.mxu0 0
  %5336 = vmatprep.subr.bf16.mxu0 0
  %5337 = vmatpush1.bf16.msra.mxu0 0
  %5338 = vmatprep.subr.bf16.mxu0 0
  %5339 = vmatpush1.bf16.msra.mxu0 0
  %5340 = vmatprep.subr.bf16.mxu0 0
  %5341 = vmatpush1.bf16.msra.mxu0 0
  %5342 = vmatprep.subr.bf16.mxu0 0
  %5343 = vmatpush1.bf16.msra.mxu0 0
  %5344 = vmatprep.subr.bf16.mxu0 0
  %5345 = vmatpush1.bf16.msra.mxu0 0
  %5346 = vmatprep.subr.bf16.mxu0 0
  %5347 = vmatpush1.bf16.msra.mxu0 0
  %5348 = vmatprep.mubr.bf16.mxu0 0
  %5349 = vmatmul.mubr.bf16.gmra.mrb[0].mxu0 %v5311
  %v5350 = vpop.f32.mrb[0].mxu0
  %v5351 = vadd.f32 0.0, %v5350
  %v5352 = vpop.f32.mrb[0].mxu0
  %v5353 = vpop.f32.mrb[0].mxu0
  %v5354 = vadd.f32 0.0, %v5353
  %v5355 = vpop.f32.mrb[0].mxu0
  %5356 = vmatprep.mubr.bf16.mxu0 0
  %5357 = vmatmul.mubr.bf16.gmra.mrb[0].mxu0 %v5313
  %v5358 = vpop.f32.mrb[0].mxu0
  %v5359 = vadd.f32 0.0, %v5358
  %v5360 = vpop.f32.mrb[0].mxu0
  %v5361 = vpop.f32.mrb[0].mxu0
  %v5362 = vadd.f32 0.0, %v5361
  %v5363 = vpop.f32.mrb[0].mxu0
  %5364 = vdwg.mxu0
  %v5365 = vadd.f32 %v4849, %v5351
  %v5366 = vadd.f32 %v4850, %v5354
  %v5367 = vadd.f32 %v4851, %v5359
  %v5368 = vadd.f32 %v4852, %v5362
  %v5369 = vld [vmem:[#allocation2 + $0xd0] sm:$0xf0]
  %v5370 = vld [vmem:[#allocation2 + $0xd8] sm:$0xf0]
  %v5371 = vld [vmem:[#allocation2 + $0xe0] sm:$0xff]
  %v5372 = vld [vmem:[#allocation2 + $0xe8] sm:$0xff]
  %v5373 = vld [vmem:[#allocation2 + $0xf0] sm:$0xf]
  %v5374 = vld [vmem:[#allocation2 + $0xf8] sm:$0xf]
  %s5375 = scalar_lea.vmem [#allocation3], 1216
  %v5376 = vld [vmem:[%s5375] sm:$0xff]
  %v5377 = vld [vmem:[%s5375 + $0x8] sm:$0xff]
  %v5378 = vld [vmem:[%s5375 + $0x10] sm:$0xff]
  %v5379 = vld [vmem:[%s5375 + $0x18] sm:$0xff]
  %v5380 = vld [vmem:[%s5375 + $0x20] sm:$0xff]
  %v5381 = vld [vmem:[%s5375 + $0x28] sm:$0xff]
  %v5382 = vld [vmem:[%s5375 + $0x30] sm:$0xff]
  %v5383 = vld [vmem:[%s5375 + $0x38] sm:$0xff]
  %v5387 = vrot.slane %v5369, 4
  %v5388 = vrot.slane %v5371, 4
  %v5389 = vsel %vm3477, %v5387, %v5388
  %v5390 = vrot.slane %v5373, 4
  %v5391 = vsel %vm3477, %v5388, %v5390
  %5394 = vmatprep.subr.bf16.mxu0 0
  %5395 = vmatpush1.bf16.msra.mxu0 %v5376
  %5396 = vmatprep.subr.bf16.mxu0 0
  %5397 = vmatpush1.bf16.msra.mxu0 %v5377
  %5398 = vmatprep.subr.bf16.mxu0 0
  %5399 = vmatpush1.bf16.msra.mxu0 %v5378
  %5400 = vmatprep.subr.bf16.mxu0 0
  %5401 = vmatpush1.bf16.msra.mxu0 %v5379
  %5402 = vmatprep.subr.bf16.mxu0 0
  %5403 = vmatpush1.bf16.msra.mxu0 %v5380
  %5404 = vmatprep.subr.bf16.mxu0 0
  %5405 = vmatpush1.bf16.msra.mxu0 %v5381
  %5406 = vmatprep.subr.bf16.mxu0 0
  %5407 = vmatpush1.bf16.msra.mxu0 %v5382
  %5408 = vmatprep.subr.bf16.mxu0 0
  %5409 = vmatpush1.bf16.msra.mxu0 %v5383
  %5410 = vmatprep.subr.bf16.mxu0 0
  %5411 = vmatpush1.bf16.msra.mxu0 0
  %5412 = vmatprep.subr.bf16.mxu0 0
  %5413 = vmatpush1.bf16.msra.mxu0 0
  %5414 = vmatprep.subr.bf16.mxu0 0
  %5415 = vmatpush1.bf16.msra.mxu0 0
  %5416 = vmatprep.subr.bf16.mxu0 0
  %5417 = vmatpush1.bf16.msra.mxu0 0
  %5418 = vmatprep.subr.bf16.mxu0 0
  %5419 = vmatpush1.bf16.msra.mxu0 0
  %5420 = vmatprep.subr.bf16.mxu0 0
  %5421 = vmatpush1.bf16.msra.mxu0 0
  %5422 = vmatprep.subr.bf16.mxu0 0
  %5423 = vmatpush1.bf16.msra.mxu0 0
  %5424 = vmatprep.subr.bf16.mxu0 0
  %5425 = vmatpush1.bf16.msra.mxu0 0
  %5426 = vmatprep.mubr.bf16.mxu0 0
  %5427 = vmatmul.mubr.bf16.gmra.mrb[0].mxu0 %v5389
  %v5428 = vpop.f32.mrb[0].mxu0
  %v5429 = vadd.f32 0.0, %v5428
  %v5430 = vpop.f32.mrb[0].mxu0
  %v5431 = vpop.f32.mrb[0].mxu0
  %v5432 = vadd.f32 0.0, %v5431
  %v5433 = vpop.f32.mrb[0].mxu0
  %5434 = vmatprep.mubr.bf16.mxu0 0
  %5435 = vmatmul.mubr.bf16.gmra.mrb[0].mxu0 %v5391
  %v5436 = vpop.f32.mrb[0].mxu0
  %v5437 = vadd.f32 0.0, %v5436
  %v5438 = vpop.f32.mrb[0].mxu0
  %v5439 = vpop.f32.mrb[0].mxu0
  %v5440 = vadd.f32 0.0, %v5439
  %v5441 = vpop.f32.mrb[0].mxu0
  %5442 = vdwg.mxu0
  %v5443 = vadd.f32 %v4927, %v5429
  %v5444 = vadd.f32 %v4928, %v5432
  %v5445 = vadd.f32 %v4929, %v5437
  %v5446 = vadd.f32 %v4930, %v5440
  %v5450 = vrot.slane %v5370, 4
  %v5451 = vrot.slane %v5372, 4
  %v5452 = vsel %vm3477, %v5450, %v5451
  %v5453 = vrot.slane %v5374, 4
  %v5454 = vsel %vm3477, %v5451, %v5453
  %5457 = vmatprep.subr.bf16.mxu0 0
  %5458 = vmatpush1.bf16.msra.mxu0 %v5376
  %5459 = vmatprep.subr.bf16.mxu0 0
  %5460 = vmatpush1.bf16.msra.mxu0 %v5377
  %5461 = vmatprep.subr.bf16.mxu0 0
  %5462 = vmatpush1.bf16.msra.mxu0 %v5378
  %5463 = vmatprep.subr.bf16.mxu0 0
  %5464 = vmatpush1.bf16.msra.mxu0 %v5379
  %5465 = vmatprep.subr.bf16.mxu0 0
  %5466 = vmatpush1.bf16.msra.mxu0 %v5380
  %5467 = vmatprep.subr.bf16.mxu0 0
  %5468 = vmatpush1.bf16.msra.mxu0 %v5381
  %5469 = vmatprep.subr.bf16.mxu0 0
  %5470 = vmatpush1.bf16.msra.mxu0 %v5382
  %5471 = vmatprep.subr.bf16.mxu0 0
  %5472 = vmatpush1.bf16.msra.mxu0 %v5383
  %5473 = vmatprep.subr.bf16.mxu0 0
  %5474 = vmatpush1.bf16.msra.mxu0 0
  %5475 = vmatprep.subr.bf16.mxu0 0
  %5476 = vmatpush1.bf16.msra.mxu0 0
  %5477 = vmatprep.subr.bf16.mxu0 0
  %5478 = vmatpush1.bf16.msra.mxu0 0
  %5479 = vmatprep.subr.bf16.mxu0 0
  %5480 = vmatpush1.bf16.msra.mxu0 0
  %5481 = vmatprep.subr.bf16.mxu0 0
  %5482 = vmatpush1.bf16.msra.mxu0 0
  %5483 = vmatprep.subr.bf16.mxu0 0
  %5484 = vmatpush1.bf16.msra.mxu0 0
  %5485 = vmatprep.subr.bf16.mxu0 0
  %5486 = vmatpush1.bf16.msra.mxu0 0
  %5487 = vmatprep.subr.bf16.mxu0 0
  %5488 = vmatpush1.bf16.msra.mxu0 0
  %5489 = vmatprep.mubr.bf16.mxu0 0
  %5490 = vmatmul.mubr.bf16.gmra.mrb[0].mxu0 %v5452
  %v5491 = vpop.f32.mrb[0].mxu0
  %v5492 = vadd.f32 0.0, %v5491
  %v5493 = vpop.f32.mrb[0].mxu0
  %v5494 = vpop.f32.mrb[0].mxu0
  %v5495 = vadd.f32 0.0, %v5494
  %v5496 = vpop.f32.mrb[0].mxu0
  %5497 = vmatprep.mubr.bf16.mxu0 0
  %5498 = vmatmul.mubr.bf16.gmra.mrb[0].mxu0 %v5454
  %v5499 = vpop.f32.mrb[0].mxu0
  %v5500 = vadd.f32 0.0, %v5499
  %v5501 = vpop.f32.mrb[0].mxu0
  %v5502 = vpop.f32.mrb[0].mxu0
  %v5503 = vadd.f32 0.0, %v5502
  %v5504 = vpop.f32.mrb[0].mxu0
  %5505 = vdwg.mxu0
  %v5506 = vadd.f32 %v4990, %v5492
  %v5507 = vadd.f32 %v4991, %v5495
  %v5508 = vadd.f32 %v4992, %v5500
  %v5509 = vadd.f32 %v4993, %v5503
  %v5510 = vld [vmem:[#allocation2 + $0x60] sm:$0xff]
  %v5511 = vld [vmem:[#allocation2 + $0x68] sm:$0xff]
  %s5512 = scalar_lea.vmem [#allocation3], 1280
  %v5513 = vld [vmem:[%s5512] sm:$0xff]
  %v5514 = vld [vmem:[%s5512 + $0x8] sm:$0xff]
  %v5515 = vld [vmem:[%s5512 + $0x10] sm:$0xff]
  %v5516 = vld [vmem:[%s5512 + $0x18] sm:$0xff]
  %v5517 = vld [vmem:[%s5512 + $0x20] sm:$0xff]
  %v5518 = vld [vmem:[%s5512 + $0x28] sm:$0xff]
  %v5519 = vld [vmem:[%s5512 + $0x30] sm:$0xff]
  %v5520 = vld [vmem:[%s5512 + $0x38] sm:$0xff]
  %5521 = vmatprep.subr.bf16.mxu0 0
  %5522 = vmatpush1.bf16.msra.mxu0 %v5513
  %5523 = vmatprep.subr.bf16.mxu0 0
  %5524 = vmatpush1.bf16.msra.mxu0 %v5514
  %5525 = vmatprep.subr.bf16.mxu0 0
  %5526 = vmatpush1.bf16.msra.mxu0 %v5515
  %5527 = vmatprep.subr.bf16.mxu0 0
  %5528 = vmatpush1.bf16.msra.mxu0 %v5516
  %5529 = vmatprep.subr.bf16.mxu0 0
  %5530 = vmatpush1.bf16.msra.mxu0 %v5517
  %5531 = vmatprep.subr.bf16.mxu0 0
  %5532 = vmatpush1.bf16.msra.mxu0 %v5518
  %5533 = vmatprep.subr.bf16.mxu0 0
  %5534 = vmatpush1.bf16.msra.mxu0 %v5519
  %5535 = vmatprep.subr.bf16.mxu0 0
  %5536 = vmatpush1.bf16.msra.mxu0 %v5520
  %5537 = vmatprep.subr.bf16.mxu0 0
  %5538 = vmatpush1.bf16.msra.mxu0 0
  %5539 = vmatprep.subr.bf16.mxu0 0
  %5540 = vmatpush1.bf16.msra.mxu0 0
  %5541 = vmatprep.subr.bf16.mxu0 0
  %5542 = vmatpush1.bf16.msra.mxu0 0
  %5543 = vmatprep.subr.bf16.mxu0 0
  %5544 = vmatpush1.bf16.msra.mxu0 0
  %5545 = vmatprep.subr.bf16.mxu0 0
  %5546 = vmatpush1.bf16.msra.mxu0 0
  %5547 = vmatprep.subr.bf16.mxu0 0
  %5548 = vmatpush1.bf16.msra.mxu0 0
  %5549 = vmatprep.subr.bf16.mxu0 0
  %5550 = vmatpush1.bf16.msra.mxu0 0
  %5551 = vmatprep.subr.bf16.mxu0 0
  %5552 = vmatpush1.bf16.msra.mxu0 0
  %5553 = vmatprep.mubr.bf16.mxu0 0
  %5554 = vmatmul.mubr.bf16.gmra.mrb[0].mxu0 %v5230
  %v5555 = vpop.f32.mrb[0].mxu0
  %v5556 = vadd.f32 0.0, %v5555
  %v5557 = vpop.f32.mrb[0].mxu0
  %v5558 = vpop.f32.mrb[0].mxu0
  %v5559 = vadd.f32 0.0, %v5558
  %v5560 = vpop.f32.mrb[0].mxu0
  %5561 = vmatprep.mubr.bf16.mxu0 0
  %5562 = vmatmul.mubr.bf16.gmra.mrb[0].mxu0 %v5510
  %v5563 = vpop.f32.mrb[0].mxu0
  %v5564 = vadd.f32 0.0, %v5563
  %v5565 = vpop.f32.mrb[0].mxu0
  %v5566 = vpop.f32.mrb[0].mxu0
  %v5567 = vadd.f32 0.0, %v5566
  %v5568 = vpop.f32.mrb[0].mxu0
  %5569 = vdwg.mxu0
  %v5570 = vadd.f32 %v5054, %v5556
  %v5571 = vadd.f32 %v5055, %v5559
  %v5572 = vadd.f32 %v5056, %v5564
  %v5573 = vadd.f32 %v5057, %v5567
  %5574 = vmatprep.subr.bf16.mxu0 0
  %5575 = vmatpush1.bf16.msra.mxu0 %v5513
  %5576 = vmatprep.subr.bf16.mxu0 0
  %5577 = vmatpush1.bf16.msra.mxu0 %v5514
  %5578 = vmatprep.subr.bf16.mxu0 0
  %5579 = vmatpush1.bf16.msra.mxu0 %v5515
  %5580 = vmatprep.subr.bf16.mxu0 0
  %5581 = vmatpush1.bf16.msra.mxu0 %v5516
  %5582 = vmatprep.subr.bf16.mxu0 0
  %5583 = vmatpush1.bf16.msra.mxu0 %v5517
  %5584 = vmatprep.subr.bf16.mxu0 0
  %5585 = vmatpush1.bf16.msra.mxu0 %v5518
  %5586 = vmatprep.subr.bf16.mxu0 0
  %5587 = vmatpush1.bf16.msra.mxu0 %v5519
  %5588 = vmatprep.subr.bf16.mxu0 0
  %5589 = vmatpush1.bf16.msra.mxu0 %v5520
  %5590 = vmatprep.subr.bf16.mxu0 0
  %5591 = vmatpush1.bf16.msra.mxu0 0
  %5592 = vmatprep.subr.bf16.mxu0 0
  %5593 = vmatpush1.bf16.msra.mxu0 0
  %5594 = vmatprep.subr.bf16.mxu0 0
  %5595 = vmatpush1.bf16.msra.mxu0 0
  %5596 = vmatprep.subr.bf16.mxu0 0
  %5597 = vmatpush1.bf16.msra.mxu0 0
  %5598 = vmatprep.subr.bf16.mxu0 0
  %5599 = vmatpush1.bf16.msra.mxu0 0
  %5600 = vmatprep.subr.bf16.mxu0 0
  %5601 = vmatpush1.bf16.msra.mxu0 0
  %5602 = vmatprep.subr.bf16.mxu0 0
  %5603 = vmatpush1.bf16.msra.mxu0 0
  %5604 = vmatprep.subr.bf16.mxu0 0
  %5605 = vmatpush1.bf16.msra.mxu0 0
  %5606 = vmatprep.mubr.bf16.mxu0 0
  %5607 = vmatmul.mubr.bf16.gmra.mrb[0].mxu0 %v5231
  %v5608 = vpop.f32.mrb[0].mxu0
  %v5609 = vadd.f32 0.0, %v5608
  %v5610 = vpop.f32.mrb[0].mxu0
  %v5611 = vpop.f32.mrb[0].mxu0
  %v5612 = vadd.f32 0.0, %v5611
  %v5613 = vpop.f32.mrb[0].mxu0
  %5614 = vmatprep.mubr.bf16.mxu0 0
  %5615 = vmatmul.mubr.bf16.gmra.mrb[0].mxu0 %v5511
  %v5616 = vpop.f32.mrb[0].mxu0
  %v5617 = vadd.f32 0.0, %v5616
  %v5618 = vpop.f32.mrb[0].mxu0
  %v5619 = vpop.f32.mrb[0].mxu0
  %v5620 = vadd.f32 0.0, %v5619
  %v5621 = vpop.f32.mrb[0].mxu0
  %5622 = vdwg.mxu0
  %v5623 = vadd.f32 %v5107, %v5609
  %v5624 = vadd.f32 %v5108, %v5612
  %v5625 = vadd.f32 %v5109, %v5617
  %v5626 = vadd.f32 %v5110, %v5620
  %v5627 = vld [vmem:[#allocation2 + $0xf0] sm:$0xff]
  %v5628 = vld [vmem:[#allocation2 + $0xf8] sm:$0xff]
  %s5629 = scalar_lea.vmem [#allocation3], 1344
  %v5630 = vld [vmem:[%s5629] sm:$0xff]
  %v5631 = vld [vmem:[%s5629 + $0x8] sm:$0xff]
  %v5632 = vld [vmem:[%s5629 + $0x10] sm:$0xff]
  %v5633 = vld [vmem:[%s5629 + $0x18] sm:$0xff]
  %v5634 = vld [vmem:[%s5629 + $0x20] sm:$0xff]
  %v5635 = vld [vmem:[%s5629 + $0x28] sm:$0xff]
  %v5636 = vld [vmem:[%s5629 + $0x30] sm:$0xff]
  %v5637 = vld [vmem:[%s5629 + $0x38] sm:$0xff]
  %5638 = vmatprep.subr.bf16.mxu0 0
  %5639 = vmatpush1.bf16.msra.mxu0 %v5630
  %5640 = vmatprep.subr.bf16.mxu0 0
  %5641 = vmatpush1.bf16.msra.mxu0 %v5631
  %5642 = vmatprep.subr.bf16.mxu0 0
  %5643 = vmatpush1.bf16.msra.mxu0 %v5632
  %5644 = vmatprep.subr.bf16.mxu0 0
  %5645 = vmatpush1.bf16.msra.mxu0 %v5633
  %5646 = vmatprep.subr.bf16.mxu0 0
  %5647 = vmatpush1.bf16.msra.mxu0 %v5634
  %5648 = vmatprep.subr.bf16.mxu0 0
  %5649 = vmatpush1.bf16.msra.mxu0 %v5635
  %5650 = vmatprep.subr.bf16.mxu0 0
  %5651 = vmatpush1.bf16.msra.mxu0 %v5636
  %5652 = vmatprep.subr.bf16.mxu0 0
  %5653 = vmatpush1.bf16.msra.mxu0 %v5637
  %5654 = vmatprep.subr.bf16.mxu0 0
  %5655 = vmatpush1.bf16.msra.mxu0 0
  %5656 = vmatprep.subr.bf16.mxu0 0
  %5657 = vmatpush1.bf16.msra.mxu0 0
  %5658 = vmatprep.subr.bf16.mxu0 0
  %5659 = vmatpush1.bf16.msra.mxu0 0
  %5660 = vmatprep.subr.bf16.mxu0 0
  %5661 = vmatpush1.bf16.msra.mxu0 0
  %5662 = vmatprep.subr.bf16.mxu0 0
  %5663 = vmatpush1.bf16.msra.mxu0 0
  %5664 = vmatprep.subr.bf16.mxu0 0
  %5665 = vmatpush1.bf16.msra.mxu0 0
  %5666 = vmatprep.subr.bf16.mxu0 0
  %5667 = vmatpush1.bf16.msra.mxu0 0
  %5668 = vmatprep.subr.bf16.mxu0 0
  %5669 = vmatpush1.bf16.msra.mxu0 0
  %5670 = vmatprep.mubr.bf16.mxu0 0
  %5671 = vmatmul.mubr.bf16.gmra.mrb[0].mxu0 %v5371
  %v5672 = vpop.f32.mrb[0].mxu0
  %v5673 = vadd.f32 0.0, %v5672
  %v5674 = vpop.f32.mrb[0].mxu0
  %v5675 = vpop.f32.mrb[0].mxu0
  %v5676 = vadd.f32 0.0, %v5675
  %v5677 = vpop.f32.mrb[0].mxu0
  %5678 = vmatprep.mubr.bf16.mxu0 0
  %5679 = vmatmul.mubr.bf16.gmra.mrb[0].mxu0 %v5627
  %v5680 = vpop.f32.mrb[0].mxu0
  %v5681 = vadd.f32 0.0, %v5680
  %v5682 = vpop.f32.mrb[0].mxu0
  %v5683 = vpop.f32.mrb[0].mxu0
  %v5684 = vadd.f32 0.0, %v5683
  %v5685 = vpop.f32.mrb[0].mxu0
  %5686 = vdwg.mxu0
  %v5687 = vadd.f32 %v5171, %v5673
  %v5688 = vadd.f32 %v5172, %v5676
  %v5689 = vadd.f32 %v5173, %v5681
  %v5690 = vadd.f32 %v5174, %v5684
  %5691 = vmatprep.subr.bf16.mxu0 0
  %5692 = vmatpush1.bf16.msra.mxu0 %v5630
  %5693 = vmatprep.subr.bf16.mxu0 0
  %5694 = vmatpush1.bf16.msra.mxu0 %v5631
  %5695 = vmatprep.subr.bf16.mxu0 0
  %5696 = vmatpush1.bf16.msra.mxu0 %v5632
  %5697 = vmatprep.subr.bf16.mxu0 0
  %5698 = vmatpush1.bf16.msra.mxu0 %v5633
  %5699 = vmatprep.subr.bf16.mxu0 0
  %5700 = vmatpush1.bf16.msra.mxu0 %v5634
  %5701 = vmatprep.subr.bf16.mxu0 0
  %5702 = vmatpush1.bf16.msra.mxu0 %v5635
  %5703 = vmatprep.subr.bf16.mxu0 0
  %5704 = vmatpush1.bf16.msra.mxu0 %v5636
  %5705 = vmatprep.subr.bf16.mxu0 0
  %5706 = vmatpush1.bf16.msra.mxu0 %v5637
  %5707 = vmatprep.subr.bf16.mxu0 0
  %5708 = vmatpush1.bf16.msra.mxu0 0
  %5709 = vmatprep.subr.bf16.mxu0 0
  %5710 = vmatpush1.bf16.msra.mxu0 0
  %5711 = vmatprep.subr.bf16.mxu0 0
  %5712 = vmatpush1.bf16.msra.mxu0 0
  %5713 = vmatprep.subr.bf16.mxu0 0
  %5714 = vmatpush1.bf16.msra.mxu0 0
  %5715 = vmatprep.subr.bf16.mxu0 0
  %5716 = vmatpush1.bf16.msra.mxu0 0
  %5717 = vmatprep.subr.bf16.mxu0 0
  %5718 = vmatpush1.bf16.msra.mxu0 0
  %5719 = vmatprep.subr.bf16.mxu0 0
  %5720 = vmatpush1.bf16.msra.mxu0 0
  %5721 = vmatprep.subr.bf16.mxu0 0
  %5722 = vmatpush1.bf16.msra.mxu0 0
  %5723 = vmatprep.mubr.bf16.mxu0 0
  %5724 = vmatmul.mubr.bf16.gmra.mrb[0].mxu0 %v5372
  %v5725 = vpop.f32.mrb[0].mxu0
  %v5726 = vadd.f32 0.0, %v5725
  %v5727 = vpop.f32.mrb[0].mxu0
  %v5728 = vpop.f32.mrb[0].mxu0
  %v5729 = vadd.f32 0.0, %v5728
  %v5730 = vpop.f32.mrb[0].mxu0
  %5731 = vmatprep.mubr.bf16.mxu0 0
  %5732 = vmatmul.mubr.bf16.gmra.mrb[0].mxu0 %v5628
  %v5733 = vpop.f32.mrb[0].mxu0
  %v5734 = vadd.f32 0.0, %v5733
  %v5735 = vpop.f32.mrb[0].mxu0
  %v5736 = vpop.f32.mrb[0].mxu0
  %v5737 = vadd.f32 0.0, %v5736
  %v5738 = vpop.f32.mrb[0].mxu0
  %5739 = vdwg.mxu0
  %v5740 = vadd.f32 %v5224, %v5726
  %v5741 = vadd.f32 %v5225, %v5729
  %v5742 = vadd.f32 %v5226, %v5734
  %v5743 = vadd.f32 %v5227, %v5737
  %v5744 = vld [vmem:[#allocation2 + $0x50] sm:$0xf0]
  %v5745 = vld [vmem:[#allocation2 + $0x58] sm:$0xf0]
  %v5746 = vld [vmem:[#allocation2 + $0x60] sm:$0xff]
  %v5747 = vld [vmem:[#allocation2 + $0x68] sm:$0xff]
  %v5748 = vld [vmem:[#allocation2 + $0x70] sm:$0xf]
  %v5749 = vld [vmem:[#allocation2 + $0x78] sm:$0xf]
  %s5750 = scalar_lea.vmem [#allocation3], 1408
  %v5751 = vld [vmem:[%s5750] sm:$0xff]
  %v5752 = vld [vmem:[%s5750 + $0x8] sm:$0xff]
  %v5753 = vld [vmem:[%s5750 + $0x10] sm:$0xff]
  %v5754 = vld [vmem:[%s5750 + $0x18] sm:$0xff]
  %v5755 = vld [vmem:[%s5750 + $0x20] sm:$0xff]
  %v5756 = vld [vmem:[%s5750 + $0x28] sm:$0xff]
  %v5757 = vld [vmem:[%s5750 + $0x30] sm:$0xff]
  %v5758 = vld [vmem:[%s5750 + $0x38] sm:$0xff]
  %v5762 = vrot.slane %v5744, 4
  %v5763 = vrot.slane %v5746, 4
  %v5764 = vsel %vm3477, %v5762, %v5763
  %v5765 = vrot.slane %v5748, 4
  %v5766 = vsel %vm3477, %v5763, %v5765
  %5769 = vmatprep.subr.bf16.mxu0 0
  %5770 = vmatpush1.bf16.msra.mxu0 %v5751
  %5771 = vmatprep.subr.bf16.mxu0 0
  %5772 = vmatpush1.bf16.msra.mxu0 %v5752
  %5773 = vmatprep.subr.bf16.mxu0 0
  %5774 = vmatpush1.bf16.msra.mxu0 %v5753
  %5775 = vmatprep.subr.bf16.mxu0 0
  %5776 = vmatpush1.bf16.msra.mxu0 %v5754
  %5777 = vmatprep.subr.bf16.mxu0 0
  %5778 = vmatpush1.bf16.msra.mxu0 %v5755
  %5779 = vmatprep.subr.bf16.mxu0 0
  %5780 = vmatpush1.bf16.msra.mxu0 %v5756
  %5781 = vmatprep.subr.bf16.mxu0 0
  %5782 = vmatpush1.bf16.msra.mxu0 %v5757
  %5783 = vmatprep.subr.bf16.mxu0 0
  %5784 = vmatpush1.bf16.msra.mxu0 %v5758
  %5785 = vmatprep.subr.bf16.mxu0 0
  %5786 = vmatpush1.bf16.msra.mxu0 0
  %5787 = vmatprep.subr.bf16.mxu0 0
  %5788 = vmatpush1.bf16.msra.mxu0 0
  %5789 = vmatprep.subr.bf16.mxu0 0
  %5790 = vmatpush1.bf16.msra.mxu0 0
  %5791 = vmatprep.subr.bf16.mxu0 0
  %5792 = vmatpush1.bf16.msra.mxu0 0
  %5793 = vmatprep.subr.bf16.mxu0 0
  %5794 = vmatpush1.bf16.msra.mxu0 0
  %5795 = vmatprep.subr.bf16.mxu0 0
  %5796 = vmatpush1.bf16.msra.mxu0 0
  %5797 = vmatprep.subr.bf16.mxu0 0
  %5798 = vmatpush1.bf16.msra.mxu0 0
  %5799 = vmatprep.subr.bf16.mxu0 0
  %5800 = vmatpush1.bf16.msra.mxu0 0
  %5801 = vmatprep.mubr.bf16.mxu0 0
  %5802 = vmatmul.mubr.bf16.gmra.mrb[0].mxu0 %v5764
  %v5803 = vpop.f32.mrb[0].mxu0
  %v5804 = vadd.f32 0.0, %v5803
  %v5805 = vpop.f32.mrb[0].mxu0
  %v5806 = vpop.f32.mrb[0].mxu0
  %v5807 = vadd.f32 0.0, %v5806
  %v5808 = vpop.f32.mrb[0].mxu0
  %5809 = vmatprep.mubr.bf16.mxu0 0
  %5810 = vmatmul.mubr.bf16.gmra.mrb[0].mxu0 %v5766
  %v5811 = vpop.f32.mrb[0].mxu0
  %v5812 = vadd.f32 0.0, %v5811
  %v5813 = vpop.f32.mrb[0].mxu0
  %v5814 = vpop.f32.mrb[0].mxu0
  %v5815 = vadd.f32 0.0, %v5814
  %v5816 = vpop.f32.mrb[0].mxu0
  %5817 = vdwg.mxu0
  %v5818 = vadd.f32 %v5302, %v5804
  %v5819 = vadd.f32 %v5303, %v5807
  %v5820 = vadd.f32 %v5304, %v5812
  %v5821 = vadd.f32 %v5305, %v5815
  %v5825 = vrot.slane %v5745, 4
  %v5826 = vrot.slane %v5747, 4
  %v5827 = vsel %vm3477, %v5825, %v5826
  %v5828 = vrot.slane %v5749, 4
  %v5829 = vsel %vm3477, %v5826, %v5828
  %5832 = vmatprep.subr.bf16.mxu0 0
  %5833 = vmatpush1.bf16.msra.mxu0 %v5751
  %5834 = vmatprep.subr.bf16.mxu0 0
  %5835 = vmatpush1.bf16.msra.mxu0 %v5752
  %5836 = vmatprep.subr.bf16.mxu0 0
  %5837 = vmatpush1.bf16.msra.mxu0 %v5753
  %5838 = vmatprep.subr.bf16.mxu0 0
  %5839 = vmatpush1.bf16.msra.mxu0 %v5754
  %5840 = vmatprep.subr.bf16.mxu0 0
  %5841 = vmatpush1.bf16.msra.mxu0 %v5755
  %5842 = vmatprep.subr.bf16.mxu0 0
  %5843 = vmatpush1.bf16.msra.mxu0 %v5756
  %5844 = vmatprep.subr.bf16.mxu0 0
  %5845 = vmatpush1.bf16.msra.mxu0 %v5757
  %5846 = vmatprep.subr.bf16.mxu0 0
  %5847 = vmatpush1.bf16.msra.mxu0 %v5758
  %5848 = vmatprep.subr.bf16.mxu0 0
  %5849 = vmatpush1.bf16.msra.mxu0 0
  %5850 = vmatprep.subr.bf16.mxu0 0
  %5851 = vmatpush1.bf16.msra.mxu0 0
  %5852 = vmatprep.subr.bf16.mxu0 0
  %5853 = vmatpush1.bf16.msra.mxu0 0
  %5854 = vmatprep.subr.bf16.mxu0 0
  %5855 = vmatpush1.bf16.msra.mxu0 0
  %5856 = vmatprep.subr.bf16.mxu0 0
  %5857 = vmatpush1.bf16.msra.mxu0 0
  %5858 = vmatprep.subr.bf16.mxu0 0
  %5859 = vmatpush1.bf16.msra.mxu0 0
  %5860 = vmatprep.subr.bf16.mxu0 0
  %5861 = vmatpush1.bf16.msra.mxu0 0
  %5862 = vmatprep.subr.bf16.mxu0 0
  %5863 = vmatpush1.bf16.msra.mxu0 0
  %5864 = vmatprep.mubr.bf16.mxu0 0
  %5865 = vmatmul.mubr.bf16.gmra.mrb[0].mxu0 %v5827
  %v5866 = vpop.f32.mrb[0].mxu0
  %v5867 = vadd.f32 0.0, %v5866
  %v5868 = vpop.f32.mrb[0].mxu0
  %v5869 = vpop.f32.mrb[0].mxu0
  %v5870 = vadd.f32 0.0, %v5869
  %v5871 = vpop.f32.mrb[0].mxu0
  %5872 = vmatprep.mubr.bf16.mxu0 0
  %5873 = vmatmul.mubr.bf16.gmra.mrb[0].mxu0 %v5829
  %v5874 = vpop.f32.mrb[0].mxu0
  %v5875 = vadd.f32 0.0, %v5874
  %v5876 = vpop.f32.mrb[0].mxu0
  %v5877 = vpop.f32.mrb[0].mxu0
  %v5878 = vadd.f32 0.0, %v5877
  %v5879 = vpop.f32.mrb[0].mxu0
  %5880 = vdwg.mxu0
  %v5881 = vadd.f32 %v5365, %v5867
  %v5882 = vadd.f32 %v5366, %v5870
  %v5883 = vadd.f32 %v5367, %v5875
  %v5884 = vadd.f32 %v5368, %v5878
  %v5885 = vld [vmem:[#allocation2 + $0xe0] sm:$0xf0]
  %v5886 = vld [vmem:[#allocation2 + $0xe8] sm:$0xf0]
  %v5887 = vld [vmem:[#allocation2 + $0xf0] sm:$0xff]
  %v5888 = vld [vmem:[#allocation2 + $0xf8] sm:$0xff]
  %v5889 = vld [vmem:[#allocation2 + $0x100] sm:$0xf]
  %v5890 = vld [vmem:[#allocation2 + $0x108] sm:$0xf]
  %s5891 = scalar_lea.vmem [#allocation3], 1472
  %v5892 = vld [vmem:[%s5891] sm:$0xff]
  %v5893 = vld [vmem:[%s5891 + $0x8] sm:$0xff]
  %v5894 = vld [vmem:[%s5891 + $0x10] sm:$0xff]
  %v5895 = vld [vmem:[%s5891 + $0x18] sm:$0xff]
  %v5896 = vld [vmem:[%s5891 + $0x20] sm:$0xff]
  %v5897 = vld [vmem:[%s5891 + $0x28] sm:$0xff]
  %v5898 = vld [vmem:[%s5891 + $0x30] sm:$0xff]
  %v5899 = vld [vmem:[%s5891 + $0x38] sm:$0xff]
  %v5903 = vrot.slane %v5885, 4
  %v5904 = vrot.slane %v5887, 4
  %v5905 = vsel %vm3477, %v5903, %v5904
  %v5906 = vrot.slane %v5889, 4
  %v5907 = vsel %vm3477, %v5904, %v5906
  %5910 = vmatprep.subr.bf16.mxu0 0
  %5911 = vmatpush1.bf16.msra.mxu0 %v5892
  %5912 = vmatprep.subr.bf16.mxu0 0
  %5913 = vmatpush1.bf16.msra.mxu0 %v5893
  %5914 = vmatprep.subr.bf16.mxu0 0
  %5915 = vmatpush1.bf16.msra.mxu0 %v5894
  %5916 = vmatprep.subr.bf16.mxu0 0
  %5917 = vmatpush1.bf16.msra.mxu0 %v5895
  %5918 = vmatprep.subr.bf16.mxu0 0
  %5919 = vmatpush1.bf16.msra.mxu0 %v5896
  %5920 = vmatprep.subr.bf16.mxu0 0
  %5921 = vmatpush1.bf16.msra.mxu0 %v5897
  %5922 = vmatprep.subr.bf16.mxu0 0
  %5923 = vmatpush1.bf16.msra.mxu0 %v5898
  %5924 = vmatprep.subr.bf16.mxu0 0
  %5925 = vmatpush1.bf16.msra.mxu0 %v5899
  %5926 = vmatprep.subr.bf16.mxu0 0
  %5927 = vmatpush1.bf16.msra.mxu0 0
  %5928 = vmatprep.subr.bf16.mxu0 0
  %5929 = vmatpush1.bf16.msra.mxu0 0
  %5930 = vmatprep.subr.bf16.mxu0 0
  %5931 = vmatpush1.bf16.msra.mxu0 0
  %5932 = vmatprep.subr.bf16.mxu0 0
  %5933 = vmatpush1.bf16.msra.mxu0 0
  %5934 = vmatprep.subr.bf16.mxu0 0
  %5935 = vmatpush1.bf16.msra.mxu0 0
  %5936 = vmatprep.subr.bf16.mxu0 0
  %5937 = vmatpush1.bf16.msra.mxu0 0
  %5938 = vmatprep.subr.bf16.mxu0 0
  %5939 = vmatpush1.bf16.msra.mxu0 0
  %5940 = vmatprep.subr.bf16.mxu0 0
  %5941 = vmatpush1.bf16.msra.mxu0 0
  %5942 = vmatprep.mubr.bf16.mxu0 0
  %5943 = vmatmul.mubr.bf16.gmra.mrb[0].mxu0 %v5905
  %v5944 = vpop.f32.mrb[0].mxu0
  %v5945 = vadd.f32 0.0, %v5944
  %v5946 = vpop.f32.mrb[0].mxu0
  %v5947 = vpop.f32.mrb[0].mxu0
  %v5948 = vadd.f32 0.0, %v5947
  %v5949 = vpop.f32.mrb[0].mxu0
  %5950 = vmatprep.mubr.bf16.mxu0 0
  %5951 = vmatmul.mubr.bf16.gmra.mrb[0].mxu0 %v5907
  %v5952 = vpop.f32.mrb[0].mxu0
  %v5953 = vadd.f32 0.0, %v5952
  %v5954 = vpop.f32.mrb[0].mxu0
  %v5955 = vpop.f32.mrb[0].mxu0
  %v5956 = vadd.f32 0.0, %v5955
  %v5957 = vpop.f32.mrb[0].mxu0
  %5958 = vdwg.mxu0
  %v5959 = vadd.f32 %v5443, %v5945
  %v5960 = vadd.f32 %v5444, %v5948
  %v5961 = vadd.f32 %v5445, %v5953
  %v5962 = vadd.f32 %v5446, %v5956
  %v5966 = vrot.slane %v5886, 4
  %v5967 = vrot.slane %v5888, 4
  %v5968 = vsel %vm3477, %v5966, %v5967
  %v5969 = vrot.slane %v5890, 4
  %v5970 = vsel %vm3477, %v5967, %v5969
  %5973 = vmatprep.subr.bf16.mxu0 0
  %5974 = vmatpush1.bf16.msra.mxu0 %v5892
  %5975 = vmatprep.subr.bf16.mxu0 0
  %5976 = vmatpush1.bf16.msra.mxu0 %v5893
  %5977 = vmatprep.subr.bf16.mxu0 0
  %5978 = vmatpush1.bf16.msra.mxu0 %v5894
  %5979 = vmatprep.subr.bf16.mxu0 0
  %5980 = vmatpush1.bf16.msra.mxu0 %v5895
  %5981 = vmatprep.subr.bf16.mxu0 0
  %5982 = vmatpush1.bf16.msra.mxu0 %v5896
  %5983 = vmatprep.subr.bf16.mxu0 0
  %5984 = vmatpush1.bf16.msra.mxu0 %v5897
  %5985 = vmatprep.subr.bf16.mxu0 0
  %5986 = vmatpush1.bf16.msra.mxu0 %v5898
  %5987 = vmatprep.subr.bf16.mxu0 0
  %5988 = vmatpush1.bf16.msra.mxu0 %v5899
  %5989 = vmatprep.subr.bf16.mxu0 0
  %5990 = vmatpush1.bf16.msra.mxu0 0
  %5991 = vmatprep.subr.bf16.mxu0 0
  %5992 = vmatpush1.bf16.msra.mxu0 0
  %5993 = vmatprep.subr.bf16.mxu0 0
  %5994 = vmatpush1.bf16.msra.mxu0 0
  %5995 = vmatprep.subr.bf16.mxu0 0
  %5996 = vmatpush1.bf16.msra.mxu0 0
  %5997 = vmatprep.subr.bf16.mxu0 0
  %5998 = vmatpush1.bf16.msra.mxu0 0
  %5999 = vmatprep.subr.bf16.mxu0 0
  %6000 = vmatpush1.bf16.msra.mxu0 0
  %6001 = vmatprep.subr.bf16.mxu0 0
  %6002 = vmatpush1.bf16.msra.mxu0 0
  %6003 = vmatprep.subr.bf16.mxu0 0
  %6004 = vmatpush1.bf16.msra.mxu0 0
  %6005 = vmatprep.mubr.bf16.mxu0 0
  %6006 = vmatmul.mubr.bf16.gmra.mrb[0].mxu0 %v5968
  %v6007 = vpop.f32.mrb[0].mxu0
  %v6008 = vadd.f32 0.0, %v6007
  %v6009 = vpop.f32.mrb[0].mxu0
  %v6010 = vpop.f32.mrb[0].mxu0
  %v6011 = vadd.f32 0.0, %v6010
  %v6012 = vpop.f32.mrb[0].mxu0
  %6013 = vmatprep.mubr.bf16.mxu0 0
  %6014 = vmatmul.mubr.bf16.gmra.mrb[0].mxu0 %v5970
  %v6015 = vpop.f32.mrb[0].mxu0
  %v6016 = vadd.f32 0.0, %v6015
  %v6017 = vpop.f32.mrb[0].mxu0
  %v6018 = vpop.f32.mrb[0].mxu0
  %v6019 = vadd.f32 0.0, %v6018
  %v6020 = vpop.f32.mrb[0].mxu0
  %6021 = vdwg.mxu0
  %v6022 = vadd.f32 %v5506, %v6008
  %v6023 = vadd.f32 %v5507, %v6011
  %v6024 = vadd.f32 %v5508, %v6016
  %v6025 = vadd.f32 %v5509, %v6019
  %v6026 = vld [vmem:[#allocation2 + $0x70] sm:$0xff]
  %v6027 = vld [vmem:[#allocation2 + $0x78] sm:$0xff]
  %s6028 = scalar_lea.vmem [#allocation3], 1536
  %v6029 = vld [vmem:[%s6028] sm:$0xff]
  %v6030 = vld [vmem:[%s6028 + $0x8] sm:$0xff]
  %v6031 = vld [vmem:[%s6028 + $0x10] sm:$0xff]
  %v6032 = vld [vmem:[%s6028 + $0x18] sm:$0xff]
  %v6033 = vld [vmem:[%s6028 + $0x20] sm:$0xff]
  %v6034 = vld [vmem:[%s6028 + $0x28] sm:$0xff]
  %v6035 = vld [vmem:[%s6028 + $0x30] sm:$0xff]
  %v6036 = vld [vmem:[%s6028 + $0x38] sm:$0xff]
  %6037 = vmatprep.subr.bf16.mxu0 0
  %6038 = vmatpush1.bf16.msra.mxu0 %v6029
  %6039 = vmatprep.subr.bf16.mxu0 0
  %6040 = vmatpush1.bf16.msra.mxu0 %v6030
  %6041 = vmatprep.subr.bf16.mxu0 0
  %6042 = vmatpush1.bf16.msra.mxu0 %v6031
  %6043 = vmatprep.subr.bf16.mxu0 0
  %6044 = vmatpush1.bf16.msra.mxu0 %v6032
  %6045 = vmatprep.subr.bf16.mxu0 0
  %6046 = vmatpush1.bf16.msra.mxu0 %v6033
  %6047 = vmatprep.subr.bf16.mxu0 0
  %6048 = vmatpush1.bf16.msra.mxu0 %v6034
  %6049 = vmatprep.subr.bf16.mxu0 0
  %6050 = vmatpush1.bf16.msra.mxu0 %v6035
  %6051 = vmatprep.subr.bf16.mxu0 0
  %6052 = vmatpush1.bf16.msra.mxu0 %v6036
  %6053 = vmatprep.subr.bf16.mxu0 0
  %6054 = vmatpush1.bf16.msra.mxu0 0
  %6055 = vmatprep.subr.bf16.mxu0 0
  %6056 = vmatpush1.bf16.msra.mxu0 0
  %6057 = vmatprep.subr.bf16.mxu0 0
  %6058 = vmatpush1.bf16.msra.mxu0 0
  %6059 = vmatprep.subr.bf16.mxu0 0
  %6060 = vmatpush1.bf16.msra.mxu0 0
  %6061 = vmatprep.subr.bf16.mxu0 0
  %6062 = vmatpush1.bf16.msra.mxu0 0
  %6063 = vmatprep.subr.bf16.mxu0 0
  %6064 = vmatpush1.bf16.msra.mxu0 0
  %6065 = vmatprep.subr.bf16.mxu0 0
  %6066 = vmatpush1.bf16.msra.mxu0 0
  %6067 = vmatprep.subr.bf16.mxu0 0
  %6068 = vmatpush1.bf16.msra.mxu0 0
  %6069 = vmatprep.mubr.bf16.mxu0 0
  %6070 = vmatmul.mubr.bf16.gmra.mrb[0].mxu0 %v5746
  %v6071 = vpop.f32.mrb[0].mxu0
  %v6072 = vadd.f32 0.0, %v6071
  %v6073 = vpop.f32.mrb[0].mxu0
  %v6074 = vpop.f32.mrb[0].mxu0
  %v6075 = vadd.f32 0.0, %v6074
  %v6076 = vpop.f32.mrb[0].mxu0
  %6077 = vmatprep.mubr.bf16.mxu0 0
  %6078 = vmatmul.mubr.bf16.gmra.mrb[0].mxu0 %v6026
  %v6079 = vpop.f32.mrb[0].mxu0
  %v6080 = vadd.f32 0.0, %v6079
  %v6081 = vpop.f32.mrb[0].mxu0
  %v6082 = vpop.f32.mrb[0].mxu0
  %v6083 = vadd.f32 0.0, %v6082
  %v6084 = vpop.f32.mrb[0].mxu0
  %6085 = vdwg.mxu0
  %v6086 = vadd.f32 %v5570, %v6072
  %v6087 = vadd.f32 %v5571, %v6075
  %v6088 = vadd.f32 %v5572, %v6080
  %v6089 = vadd.f32 %v5573, %v6083
  %6090 = vmatprep.subr.bf16.mxu0 0
  %6091 = vmatpush1.bf16.msra.mxu0 %v6029
  %6092 = vmatprep.subr.bf16.mxu0 0
  %6093 = vmatpush1.bf16.msra.mxu0 %v6030
  %6094 = vmatprep.subr.bf16.mxu0 0
  %6095 = vmatpush1.bf16.msra.mxu0 %v6031
  %6096 = vmatprep.subr.bf16.mxu0 0
  %6097 = vmatpush1.bf16.msra.mxu0 %v6032
  %6098 = vmatprep.subr.bf16.mxu0 0
  %6099 = vmatpush1.bf16.msra.mxu0 %v6033
  %6100 = vmatprep.subr.bf16.mxu0 0
  %6101 = vmatpush1.bf16.msra.mxu0 %v6034
  %6102 = vmatprep.subr.bf16.mxu0 0
  %6103 = vmatpush1.bf16.msra.mxu0 %v6035
  %6104 = vmatprep.subr.bf16.mxu0 0
  %6105 = vmatpush1.bf16.msra.mxu0 %v6036
  %6106 = vmatprep.subr.bf16.mxu0 0
  %6107 = vmatpush1.bf16.msra.mxu0 0
  %6108 = vmatprep.subr.bf16.mxu0 0
  %6109 = vmatpush1.bf16.msra.mxu0 0
  %6110 = vmatprep.subr.bf16.mxu0 0
  %6111 = vmatpush1.bf16.msra.mxu0 0
  %6112 = vmatprep.subr.bf16.mxu0 0
  %6113 = vmatpush1.bf16.msra.mxu0 0
  %6114 = vmatprep.subr.bf16.mxu0 0
  %6115 = vmatpush1.bf16.msra.mxu0 0
  %6116 = vmatprep.subr.bf16.mxu0 0
  %6117 = vmatpush1.bf16.msra.mxu0 0
  %6118 = vmatprep.subr.bf16.mxu0 0
  %6119 = vmatpush1.bf16.msra.mxu0 0
  %6120 = vmatprep.subr.bf16.mxu0 0
  %6121 = vmatpush1.bf16.msra.mxu0 0
  %6122 = vmatprep.mubr.bf16.mxu0 0
  %6123 = vmatmul.mubr.bf16.gmra.mrb[0].mxu0 %v5747
  %v6124 = vpop.f32.mrb[0].mxu0
  %v6125 = vadd.f32 0.0, %v6124
  %v6126 = vpop.f32.mrb[0].mxu0
  %v6127 = vpop.f32.mrb[0].mxu0
  %v6128 = vadd.f32 0.0, %v6127
  %v6129 = vpop.f32.mrb[0].mxu0
  %6130 = vmatprep.mubr.bf16.mxu0 0
  %6131 = vmatmul.mubr.bf16.gmra.mrb[0].mxu0 %v6027
  %v6132 = vpop.f32.mrb[0].mxu0
  %v6133 = vadd.f32 0.0, %v6132
  %v6134 = vpop.f32.mrb[0].mxu0
  %v6135 = vpop.f32.mrb[0].mxu0
  %v6136 = vadd.f32 0.0, %v6135
  %v6137 = vpop.f32.mrb[0].mxu0
  %6138 = vdwg.mxu0
  %v6139 = vadd.f32 %v5623, %v6125
  %v6140 = vadd.f32 %v5624, %v6128
  %v6141 = vadd.f32 %v5625, %v6133
  %v6142 = vadd.f32 %v5626, %v6136
  %v6143 = vld [vmem:[#allocation2 + $0x100] sm:$0xff]
  %v6144 = vld [vmem:[#allocation2 + $0x108] sm:$0xff]
  %s6145 = scalar_lea.vmem [#allocation3], 1600
  %v6146 = vld [vmem:[%s6145] sm:$0xff]
  %v6147 = vld [vmem:[%s6145 + $0x8] sm:$0xff]
  %v6148 = vld [vmem:[%s6145 + $0x10] sm:$0xff]
  %v6149 = vld [vmem:[%s6145 + $0x18] sm:$0xff]
  %v6150 = vld [vmem:[%s6145 + $0x20] sm:$0xff]
  %v6151 = vld [vmem:[%s6145 + $0x28] sm:$0xff]
  %v6152 = vld [vmem:[%s6145 + $0x30] sm:$0xff]
  %v6153 = vld [vmem:[%s6145 + $0x38] sm:$0xff]
  %6154 = vmatprep.subr.bf16.mxu0 0
  %6155 = vmatpush1.bf16.msra.mxu0 %v6146
  %6156 = vmatprep.subr.bf16.mxu0 0
  %6157 = vmatpush1.bf16.msra.mxu0 %v6147
  %6158 = vmatprep.subr.bf16.mxu0 0
  %6159 = vmatpush1.bf16.msra.mxu0 %v6148
  %6160 = vmatprep.subr.bf16.mxu0 0
  %6161 = vmatpush1.bf16.msra.mxu0 %v6149
  %6162 = vmatprep.subr.bf16.mxu0 0
  %6163 = vmatpush1.bf16.msra.mxu0 %v6150
  %6164 = vmatprep.subr.bf16.mxu0 0
  %6165 = vmatpush1.bf16.msra.mxu0 %v6151
  %6166 = vmatprep.subr.bf16.mxu0 0
  %6167 = vmatpush1.bf16.msra.mxu0 %v6152
  %6168 = vmatprep.subr.bf16.mxu0 0
  %6169 = vmatpush1.bf16.msra.mxu0 %v6153
  %6170 = vmatprep.subr.bf16.mxu0 0
  %6171 = vmatpush1.bf16.msra.mxu0 0
  %6172 = vmatprep.subr.bf16.mxu0 0
  %6173 = vmatpush1.bf16.msra.mxu0 0
  %6174 = vmatprep.subr.bf16.mxu0 0
  %6175 = vmatpush1.bf16.msra.mxu0 0
  %6176 = vmatprep.subr.bf16.mxu0 0
  %6177 = vmatpush1.bf16.msra.mxu0 0
  %6178 = vmatprep.subr.bf16.mxu0 0
  %6179 = vmatpush1.bf16.msra.mxu0 0
  %6180 = vmatprep.subr.bf16.mxu0 0
  %6181 = vmatpush1.bf16.msra.mxu0 0
  %6182 = vmatprep.subr.bf16.mxu0 0
  %6183 = vmatpush1.bf16.msra.mxu0 0
  %6184 = vmatprep.subr.bf16.mxu0 0
  %6185 = vmatpush1.bf16.msra.mxu0 0
  %6186 = vmatprep.mubr.bf16.mxu0 0
  %6187 = vmatmul.mubr.bf16.gmra.mrb[0].mxu0 %v5887
  %v6188 = vpop.f32.mrb[0].mxu0
  %v6189 = vadd.f32 0.0, %v6188
  %v6190 = vpop.f32.mrb[0].mxu0
  %v6191 = vpop.f32.mrb[0].mxu0
  %v6192 = vadd.f32 0.0, %v6191
  %v6193 = vpop.f32.mrb[0].mxu0
  %6194 = vmatprep.mubr.bf16.mxu0 0
  %6195 = vmatmul.mubr.bf16.gmra.mrb[0].mxu0 %v6143
  %v6196 = vpop.f32.mrb[0].mxu0
  %v6197 = vadd.f32 0.0, %v6196
  %v6198 = vpop.f32.mrb[0].mxu0
  %v6199 = vpop.f32.mrb[0].mxu0
  %v6200 = vadd.f32 0.0, %v6199
  %v6201 = vpop.f32.mrb[0].mxu0
  %6202 = vdwg.mxu0
  %v6203 = vadd.f32 %v5687, %v6189
  %v6204 = vadd.f32 %v5688, %v6192
  %v6205 = vadd.f32 %v5689, %v6197
  %v6206 = vadd.f32 %v5690, %v6200
  %6207 = vmatprep.subr.bf16.mxu0 0
  %6208 = vmatpush1.bf16.msra.mxu0 %v6146
  %6209 = vmatprep.subr.bf16.mxu0 0
  %6210 = vmatpush1.bf16.msra.mxu0 %v6147
  %6211 = vmatprep.subr.bf16.mxu0 0
  %6212 = vmatpush1.bf16.msra.mxu0 %v6148
  %6213 = vmatprep.subr.bf16.mxu0 0
  %6214 = vmatpush1.bf16.msra.mxu0 %v6149
  %6215 = vmatprep.subr.bf16.mxu0 0
  %6216 = vmatpush1.bf16.msra.mxu0 %v6150
  %6217 = vmatprep.subr.bf16.mxu0 0
  %6218 = vmatpush1.bf16.msra.mxu0 %v6151
  %6219 = vmatprep.subr.bf16.mxu0 0
  %6220 = vmatpush1.bf16.msra.mxu0 %v6152
  %6221 = vmatprep.subr.bf16.mxu0 0
  %6222 = vmatpush1.bf16.msra.mxu0 %v6153
  %6223 = vmatprep.subr.bf16.mxu0 0
  %6224 = vmatpush1.bf16.msra.mxu0 0
  %6225 = vmatprep.subr.bf16.mxu0 0
  %6226 = vmatpush1.bf16.msra.mxu0 0
  %6227 = vmatprep.subr.bf16.mxu0 0
  %6228 = vmatpush1.bf16.msra.mxu0 0
  %6229 = vmatprep.subr.bf16.mxu0 0
  %6230 = vmatpush1.bf16.msra.mxu0 0
  %6231 = vmatprep.subr.bf16.mxu0 0
  %6232 = vmatpush1.bf16.msra.mxu0 0
  %6233 = vmatprep.subr.bf16.mxu0 0
  %6234 = vmatpush1.bf16.msra.mxu0 0
  %6235 = vmatprep.subr.bf16.mxu0 0
  %6236 = vmatpush1.bf16.msra.mxu0 0
  %6237 = vmatprep.subr.bf16.mxu0 0
  %6238 = vmatpush1.bf16.msra.mxu0 0
  %6239 = vmatprep.mubr.bf16.mxu0 0
  %6240 = vmatmul.mubr.bf16.gmra.mrb[0].mxu0 %v5888
  %v6241 = vpop.f32.mrb[0].mxu0
  %v6242 = vadd.f32 0.0, %v6241
  %v6243 = vpop.f32.mrb[0].mxu0
  %v6244 = vpop.f32.mrb[0].mxu0
  %v6245 = vadd.f32 0.0, %v6244
  %v6246 = vpop.f32.mrb[0].mxu0
  %6247 = vmatprep.mubr.bf16.mxu0 0
  %6248 = vmatmul.mubr.bf16.gmra.mrb[0].mxu0 %v6144
  %v6249 = vpop.f32.mrb[0].mxu0
  %v6250 = vadd.f32 0.0, %v6249
  %v6251 = vpop.f32.mrb[0].mxu0
  %v6252 = vpop.f32.mrb[0].mxu0
  %v6253 = vadd.f32 0.0, %v6252
  %v6254 = vpop.f32.mrb[0].mxu0
  %6255 = vdwg.mxu0
  %v6256 = vadd.f32 %v5740, %v6242
  %v6257 = vadd.f32 %v5741, %v6245
  %v6258 = vadd.f32 %v5742, %v6250
  %v6259 = vadd.f32 %v5743, %v6253
  %v6260 = vld [vmem:[#allocation2 + $0x60] sm:$0xf0]
  %v6261 = vld [vmem:[#allocation2 + $0x68] sm:$0xf0]
  %v6262 = vld [vmem:[#allocation2 + $0x70] sm:$0xff]
  %v6263 = vld [vmem:[#allocation2 + $0x78] sm:$0xff]
  %v6264 = vld [vmem:[#allocation2 + $0x80] sm:$0xf]
  %v6265 = vld [vmem:[#allocation2 + $0x88] sm:$0xf]
  %s6266 = scalar_lea.vmem [#allocation3], 1664
  %v6267 = vld [vmem:[%s6266] sm:$0xff]
  %v6268 = vld [vmem:[%s6266 + $0x8] sm:$0xff]
  %v6269 = vld [vmem:[%s6266 + $0x10] sm:$0xff]
  %v6270 = vld [vmem:[%s6266 + $0x18] sm:$0xff]
  %v6271 = vld [vmem:[%s6266 + $0x20] sm:$0xff]
  %v6272 = vld [vmem:[%s6266 + $0x28] sm:$0xff]
  %v6273 = vld [vmem:[%s6266 + $0x30] sm:$0xff]
  %v6274 = vld [vmem:[%s6266 + $0x38] sm:$0xff]
  %v6278 = vrot.slane %v6260, 4
  %v6279 = vrot.slane %v6262, 4
  %v6280 = vsel %vm3477, %v6278, %v6279
  %v6281 = vrot.slane %v6264, 4
  %v6282 = vsel %vm3477, %v6279, %v6281
  %6285 = vmatprep.subr.bf16.mxu0 0
  %6286 = vmatpush1.bf16.msra.mxu0 %v6267
  %6287 = vmatprep.subr.bf16.mxu0 0
  %6288 = vmatpush1.bf16.msra.mxu0 %v6268
  %6289 = vmatprep.subr.bf16.mxu0 0
  %6290 = vmatpush1.bf16.msra.mxu0 %v6269
  %6291 = vmatprep.subr.bf16.mxu0 0
  %6292 = vmatpush1.bf16.msra.mxu0 %v6270
  %6293 = vmatprep.subr.bf16.mxu0 0
  %6294 = vmatpush1.bf16.msra.mxu0 %v6271
  %6295 = vmatprep.subr.bf16.mxu0 0
  %6296 = vmatpush1.bf16.msra.mxu0 %v6272
  %6297 = vmatprep.subr.bf16.mxu0 0
  %6298 = vmatpush1.bf16.msra.mxu0 %v6273
  %6299 = vmatprep.subr.bf16.mxu0 0
  %6300 = vmatpush1.bf16.msra.mxu0 %v6274
  %6301 = vmatprep.subr.bf16.mxu0 0
  %6302 = vmatpush1.bf16.msra.mxu0 0
  %6303 = vmatprep.subr.bf16.mxu0 0
  %6304 = vmatpush1.bf16.msra.mxu0 0
  %6305 = vmatprep.subr.bf16.mxu0 0
  %6306 = vmatpush1.bf16.msra.mxu0 0
  %6307 = vmatprep.subr.bf16.mxu0 0
  %6308 = vmatpush1.bf16.msra.mxu0 0
  %6309 = vmatprep.subr.bf16.mxu0 0
  %6310 = vmatpush1.bf16.msra.mxu0 0
  %6311 = vmatprep.subr.bf16.mxu0 0
  %6312 = vmatpush1.bf16.msra.mxu0 0
  %6313 = vmatprep.subr.bf16.mxu0 0
  %6314 = vmatpush1.bf16.msra.mxu0 0
  %6315 = vmatprep.subr.bf16.mxu0 0
  %6316 = vmatpush1.bf16.msra.mxu0 0
  %6317 = vmatprep.mubr.bf16.mxu0 0
  %6318 = vmatmul.mubr.bf16.gmra.mrb[0].mxu0 %v6280
  %v6319 = vpop.f32.mrb[0].mxu0
  %v6320 = vadd.f32 0.0, %v6319
  %v6321 = vpop.f32.mrb[0].mxu0
  %v6322 = vpop.f32.mrb[0].mxu0
  %v6323 = vadd.f32 0.0, %v6322
  %v6324 = vpop.f32.mrb[0].mxu0
  %6325 = vmatprep.mubr.bf16.mxu0 0
  %6326 = vmatmul.mubr.bf16.gmra.mrb[0].mxu0 %v6282
  %v6327 = vpop.f32.mrb[0].mxu0
  %v6328 = vadd.f32 0.0, %v6327
  %v6329 = vpop.f32.mrb[0].mxu0
  %v6330 = vpop.f32.mrb[0].mxu0
  %v6331 = vadd.f32 0.0, %v6330
  %v6332 = vpop.f32.mrb[0].mxu0
  %6333 = vdwg.mxu0
  %v6334 = vadd.f32 %v5818, %v6320
  %v6335 = vadd.f32 %v5819, %v6323
  %v6336 = vadd.f32 %v5820, %v6328
  %v6337 = vadd.f32 %v5821, %v6331
  %v6341 = vrot.slane %v6261, 4
  %v6342 = vrot.slane %v6263, 4
  %v6343 = vsel %vm3477, %v6341, %v6342
  %v6344 = vrot.slane %v6265, 4
  %v6345 = vsel %vm3477, %v6342, %v6344
  %6348 = vmatprep.subr.bf16.mxu0 0
  %6349 = vmatpush1.bf16.msra.mxu0 %v6267
  %6350 = vmatprep.subr.bf16.mxu0 0
  %6351 = vmatpush1.bf16.msra.mxu0 %v6268
  %6352 = vmatprep.subr.bf16.mxu0 0
  %6353 = vmatpush1.bf16.msra.mxu0 %v6269
  %6354 = vmatprep.subr.bf16.mxu0 0
  %6355 = vmatpush1.bf16.msra.mxu0 %v6270
  %6356 = vmatprep.subr.bf16.mxu0 0
  %6357 = vmatpush1.bf16.msra.mxu0 %v6271
  %6358 = vmatprep.subr.bf16.mxu0 0
  %6359 = vmatpush1.bf16.msra.mxu0 %v6272
  %6360 = vmatprep.subr.bf16.mxu0 0
  %6361 = vmatpush1.bf16.msra.mxu0 %v6273
  %6362 = vmatprep.subr.bf16.mxu0 0
  %6363 = vmatpush1.bf16.msra.mxu0 %v6274
  %6364 = vmatprep.subr.bf16.mxu0 0
  %6365 = vmatpush1.bf16.msra.mxu0 0
  %6366 = vmatprep.subr.bf16.mxu0 0
  %6367 = vmatpush1.bf16.msra.mxu0 0
  %6368 = vmatprep.subr.bf16.mxu0 0
  %6369 = vmatpush1.bf16.msra.mxu0 0
  %6370 = vmatprep.subr.bf16.mxu0 0
  %6371 = vmatpush1.bf16.msra.mxu0 0
  %6372 = vmatprep.subr.bf16.mxu0 0
  %6373 = vmatpush1.bf16.msra.mxu0 0
  %6374 = vmatprep.subr.bf16.mxu0 0
  %6375 = vmatpush1.bf16.msra.mxu0 0
  %6376 = vmatprep.subr.bf16.mxu0 0
  %6377 = vmatpush1.bf16.msra.mxu0 0
  %6378 = vmatprep.subr.bf16.mxu0 0
  %6379 = vmatpush1.bf16.msra.mxu0 0
  %6380 = vmatprep.mubr.bf16.mxu0 0
  %6381 = vmatmul.mubr.bf16.gmra.mrb[0].mxu0 %v6343
  %v6382 = vpop.f32.mrb[0].mxu0
  %v6383 = vadd.f32 0.0, %v6382
  %v6384 = vpop.f32.mrb[0].mxu0
  %v6385 = vpop.f32.mrb[0].mxu0
  %v6386 = vadd.f32 0.0, %v6385
  %v6387 = vpop.f32.mrb[0].mxu0
  %6388 = vmatprep.mubr.bf16.mxu0 0
  %6389 = vmatmul.mubr.bf16.gmra.mrb[0].mxu0 %v6345
  %v6390 = vpop.f32.mrb[0].mxu0
  %v6391 = vadd.f32 0.0, %v6390
  %v6392 = vpop.f32.mrb[0].mxu0
  %v6393 = vpop.f32.mrb[0].mxu0
  %v6394 = vadd.f32 0.0, %v6393
  %v6395 = vpop.f32.mrb[0].mxu0
  %6396 = vdwg.mxu0
  %v6397 = vadd.f32 %v5881, %v6383
  %v6398 = vadd.f32 %v5882, %v6386
  %v6399 = vadd.f32 %v5883, %v6391
  %v6400 = vadd.f32 %v5884, %v6394
  %v6401 = vld [vmem:[#allocation2 + $0xf0] sm:$0xf0]
  %v6402 = vld [vmem:[#allocation2 + $0xf8] sm:$0xf0]
  %v6403 = vld [vmem:[#allocation2 + $0x100] sm:$0xff]
  %v6404 = vld [vmem:[#allocation2 + $0x108] sm:$0xff]
  %v6405 = vld [vmem:[#allocation2 + $0x110] sm:$0xf]
  %v6406 = vld [vmem:[#allocation2 + $0x118] sm:$0xf]
  %s6407 = scalar_lea.vmem [#allocation3], 1728
  %v6408 = vld [vmem:[%s6407] sm:$0xff]
  %v6409 = vld [vmem:[%s6407 + $0x8] sm:$0xff]
  %v6410 = vld [vmem:[%s6407 + $0x10] sm:$0xff]
  %v6411 = vld [vmem:[%s6407 + $0x18] sm:$0xff]
  %v6412 = vld [vmem:[%s6407 + $0x20] sm:$0xff]
  %v6413 = vld [vmem:[%s6407 + $0x28] sm:$0xff]
  %v6414 = vld [vmem:[%s6407 + $0x30] sm:$0xff]
  %v6415 = vld [vmem:[%s6407 + $0x38] sm:$0xff]
  %v6419 = vrot.slane %v6401, 4
  %v6420 = vrot.slane %v6403, 4
  %v6421 = vsel %vm3477, %v6419, %v6420
  %v6422 = vrot.slane %v6405, 4
  %v6423 = vsel %vm3477, %v6420, %v6422
  %6426 = vmatprep.subr.bf16.mxu0 0
  %6427 = vmatpush1.bf16.msra.mxu0 %v6408
  %6428 = vmatprep.subr.bf16.mxu0 0
  %6429 = vmatpush1.bf16.msra.mxu0 %v6409
  %6430 = vmatprep.subr.bf16.mxu0 0
  %6431 = vmatpush1.bf16.msra.mxu0 %v6410
  %6432 = vmatprep.subr.bf16.mxu0 0
  %6433 = vmatpush1.bf16.msra.mxu0 %v6411
  %6434 = vmatprep.subr.bf16.mxu0 0
  %6435 = vmatpush1.bf16.msra.mxu0 %v6412
  %6436 = vmatprep.subr.bf16.mxu0 0
  %6437 = vmatpush1.bf16.msra.mxu0 %v6413
  %6438 = vmatprep.subr.bf16.mxu0 0
  %6439 = vmatpush1.bf16.msra.mxu0 %v6414
  %6440 = vmatprep.subr.bf16.mxu0 0
  %6441 = vmatpush1.bf16.msra.mxu0 %v6415
  %6442 = vmatprep.subr.bf16.mxu0 0
  %6443 = vmatpush1.bf16.msra.mxu0 0
  %6444 = vmatprep.subr.bf16.mxu0 0
  %6445 = vmatpush1.bf16.msra.mxu0 0
  %6446 = vmatprep.subr.bf16.mxu0 0
  %6447 = vmatpush1.bf16.msra.mxu0 0
  %6448 = vmatprep.subr.bf16.mxu0 0
  %6449 = vmatpush1.bf16.msra.mxu0 0
  %6450 = vmatprep.subr.bf16.mxu0 0
  %6451 = vmatpush1.bf16.msra.mxu0 0
  %6452 = vmatprep.subr.bf16.mxu0 0
  %6453 = vmatpush1.bf16.msra.mxu0 0
  %6454 = vmatprep.subr.bf16.mxu0 0
  %6455 = vmatpush1.bf16.msra.mxu0 0
  %6456 = vmatprep.subr.bf16.mxu0 0
  %6457 = vmatpush1.bf16.msra.mxu0 0
  %6458 = vmatprep.mubr.bf16.mxu0 0
  %6459 = vmatmul.mubr.bf16.gmra.mrb[0].mxu0 %v6421
  %v6460 = vpop.f32.mrb[0].mxu0
  %v6461 = vadd.f32 0.0, %v6460
  %v6462 = vpop.f32.mrb[0].mxu0
  %v6463 = vpop.f32.mrb[0].mxu0
  %v6464 = vadd.f32 0.0, %v6463
  %v6465 = vpop.f32.mrb[0].mxu0
  %6466 = vmatprep.mubr.bf16.mxu0 0
  %6467 = vmatmul.mubr.bf16.gmra.mrb[0].mxu0 %v6423
  %v6468 = vpop.f32.mrb[0].mxu0
  %v6469 = vadd.f32 0.0, %v6468
  %v6470 = vpop.f32.mrb[0].mxu0
  %v6471 = vpop.f32.mrb[0].mxu0
  %v6472 = vadd.f32 0.0, %v6471
  %v6473 = vpop.f32.mrb[0].mxu0
  %6474 = vdwg.mxu0
  %v6475 = vadd.f32 %v5959, %v6461
  %v6476 = vadd.f32 %v5960, %v6464
  %v6477 = vadd.f32 %v5961, %v6469
  %v6478 = vadd.f32 %v5962, %v6472
  %v6482 = vrot.slane %v6402, 4
  %v6483 = vrot.slane %v6404, 4
  %v6484 = vsel %vm3477, %v6482, %v6483
  %v6485 = vrot.slane %v6406, 4
  %v6486 = vsel %vm3477, %v6483, %v6485
  %6489 = vmatprep.subr.bf16.mxu0 0
  %6490 = vmatpush1.bf16.msra.mxu0 %v6408
  %6491 = vmatprep.subr.bf16.mxu0 0
  %6492 = vmatpush1.bf16.msra.mxu0 %v6409
  %6493 = vmatprep.subr.bf16.mxu0 0
  %6494 = vmatpush1.bf16.msra.mxu0 %v6410
  %6495 = vmatprep.subr.bf16.mxu0 0
  %6496 = vmatpush1.bf16.msra.mxu0 %v6411
  %6497 = vmatprep.subr.bf16.mxu0 0
  %6498 = vmatpush1.bf16.msra.mxu0 %v6412
  %6499 = vmatprep.subr.bf16.mxu0 0
  %6500 = vmatpush1.bf16.msra.mxu0 %v6413
  %6501 = vmatprep.subr.bf16.mxu0 0
  %6502 = vmatpush1.bf16.msra.mxu0 %v6414
  %6503 = vmatprep.subr.bf16.mxu0 0
  %6504 = vmatpush1.bf16.msra.mxu0 %v6415
  %6505 = vmatprep.subr.bf16.mxu0 0
  %6506 = vmatpush1.bf16.msra.mxu0 0
  %6507 = vmatprep.subr.bf16.mxu0 0
  %6508 = vmatpush1.bf16.msra.mxu0 0
  %6509 = vmatprep.subr.bf16.mxu0 0
  %6510 = vmatpush1.bf16.msra.mxu0 0
  %6511 = vmatprep.subr.bf16.mxu0 0
  %6512 = vmatpush1.bf16.msra.mxu0 0
  %6513 = vmatprep.subr.bf16.mxu0 0
  %6514 = vmatpush1.bf16.msra.mxu0 0
  %6515 = vmatprep.subr.bf16.mxu0 0
  %6516 = vmatpush1.bf16.msra.mxu0 0
  %6517 = vmatprep.subr.bf16.mxu0 0
  %6518 = vmatpush1.bf16.msra.mxu0 0
  %6519 = vmatprep.subr.bf16.mxu0 0
  %6520 = vmatpush1.bf16.msra.mxu0 0
  %6521 = vmatprep.mubr.bf16.mxu0 0
  %6522 = vmatmul.mubr.bf16.gmra.mrb[0].mxu0 %v6484
  %v6523 = vpop.f32.mrb[0].mxu0
  %v6524 = vadd.f32 0.0, %v6523
  %v6525 = vpop.f32.mrb[0].mxu0
  %v6526 = vpop.f32.mrb[0].mxu0
  %v6527 = vadd.f32 0.0, %v6526
  %v6528 = vpop.f32.mrb[0].mxu0
  %6529 = vmatprep.mubr.bf16.mxu0 0
  %6530 = vmatmul.mubr.bf16.gmra.mrb[0].mxu0 %v6486
  %v6531 = vpop.f32.mrb[0].mxu0
  %v6532 = vadd.f32 0.0, %v6531
  %v6533 = vpop.f32.mrb[0].mxu0
  %v6534 = vpop.f32.mrb[0].mxu0
  %v6535 = vadd.f32 0.0, %v6534
  %v6536 = vpop.f32.mrb[0].mxu0
  %6537 = vdwg.mxu0
  %v6538 = vadd.f32 %v6022, %v6524
  %v6539 = vadd.f32 %v6023, %v6527
  %v6540 = vadd.f32 %v6024, %v6532
  %v6541 = vadd.f32 %v6025, %v6535
  %v6542 = vld [vmem:[#allocation2 + $0x80] sm:$0xff]
  %v6543 = vld [vmem:[#allocation2 + $0x88] sm:$0xff]
  %s6544 = scalar_lea.vmem [#allocation3], 1792
  %v6545 = vld [vmem:[%s6544] sm:$0xff]
  %v6546 = vld [vmem:[%s6544 + $0x8] sm:$0xff]
  %v6547 = vld [vmem:[%s6544 + $0x10] sm:$0xff]
  %v6548 = vld [vmem:[%s6544 + $0x18] sm:$0xff]
  %v6549 = vld [vmem:[%s6544 + $0x20] sm:$0xff]
  %v6550 = vld [vmem:[%s6544 + $0x28] sm:$0xff]
  %v6551 = vld [vmem:[%s6544 + $0x30] sm:$0xff]
  %v6552 = vld [vmem:[%s6544 + $0x38] sm:$0xff]
  %6553 = vmatprep.subr.bf16.mxu0 0
  %6554 = vmatpush1.bf16.msra.mxu0 %v6545
  %6555 = vmatprep.subr.bf16.mxu0 0
  %6556 = vmatpush1.bf16.msra.mxu0 %v6546
  %6557 = vmatprep.subr.bf16.mxu0 0
  %6558 = vmatpush1.bf16.msra.mxu0 %v6547
  %6559 = vmatprep.subr.bf16.mxu0 0
  %6560 = vmatpush1.bf16.msra.mxu0 %v6548
  %6561 = vmatprep.subr.bf16.mxu0 0
  %6562 = vmatpush1.bf16.msra.mxu0 %v6549
  %6563 = vmatprep.subr.bf16.mxu0 0
  %6564 = vmatpush1.bf16.msra.mxu0 %v6550
  %6565 = vmatprep.subr.bf16.mxu0 0
  %6566 = vmatpush1.bf16.msra.mxu0 %v6551
  %6567 = vmatprep.subr.bf16.mxu0 0
  %6568 = vmatpush1.bf16.msra.mxu0 %v6552
  %6569 = vmatprep.subr.bf16.mxu0 0
  %6570 = vmatpush1.bf16.msra.mxu0 0
  %6571 = vmatprep.subr.bf16.mxu0 0
  %6572 = vmatpush1.bf16.msra.mxu0 0
  %6573 = vmatprep.subr.bf16.mxu0 0
  %6574 = vmatpush1.bf16.msra.mxu0 0
  %6575 = vmatprep.subr.bf16.mxu0 0
  %6576 = vmatpush1.bf16.msra.mxu0 0
  %6577 = vmatprep.subr.bf16.mxu0 0
  %6578 = vmatpush1.bf16.msra.mxu0 0
  %6579 = vmatprep.subr.bf16.mxu0 0
  %6580 = vmatpush1.bf16.msra.mxu0 0
  %6581 = vmatprep.subr.bf16.mxu0 0
  %6582 = vmatpush1.bf16.msra.mxu0 0
  %6583 = vmatprep.subr.bf16.mxu0 0
  %6584 = vmatpush1.bf16.msra.mxu0 0
  %6585 = vmatprep.mubr.bf16.mxu0 0
  %6586 = vmatmul.mubr.bf16.gmra.mrb[0].mxu0 %v6262
  %v6587 = vpop.f32.mrb[0].mxu0
  %v6588 = vadd.f32 0.0, %v6587
  %v6589 = vpop.f32.mrb[0].mxu0
  %v6590 = vpop.f32.mrb[0].mxu0
  %v6591 = vadd.f32 0.0, %v6590
  %v6592 = vpop.f32.mrb[0].mxu0
  %6593 = vmatprep.mubr.bf16.mxu0 0
  %6594 = vmatmul.mubr.bf16.gmra.mrb[0].mxu0 %v6542
  %v6595 = vpop.f32.mrb[0].mxu0
  %v6596 = vadd.f32 0.0, %v6595
  %v6597 = vpop.f32.mrb[0].mxu0
  %v6598 = vpop.f32.mrb[0].mxu0
  %v6599 = vadd.f32 0.0, %v6598
  %v6600 = vpop.f32.mrb[0].mxu0
  %6601 = vdwg.mxu0
  %v6602 = vadd.f32 %v6086, %v6588
  %v6603 = vadd.f32 %v6087, %v6591
  %v6604 = vadd.f32 %v6088, %v6596
  %v6605 = vadd.f32 %v6089, %v6599
  %6606 = vmatprep.subr.bf16.mxu0 0
  %6607 = vmatpush1.bf16.msra.mxu0 %v6545
  %6608 = vmatprep.subr.bf16.mxu0 0
  %6609 = vmatpush1.bf16.msra.mxu0 %v6546
  %6610 = vmatprep.subr.bf16.mxu0 0
  %6611 = vmatpush1.bf16.msra.mxu0 %v6547
  %6612 = vmatprep.subr.bf16.mxu0 0
  %6613 = vmatpush1.bf16.msra.mxu0 %v6548
  %6614 = vmatprep.subr.bf16.mxu0 0
  %6615 = vmatpush1.bf16.msra.mxu0 %v6549
  %6616 = vmatprep.subr.bf16.mxu0 0
  %6617 = vmatpush1.bf16.msra.mxu0 %v6550
  %6618 = vmatprep.subr.bf16.mxu0 0
  %6619 = vmatpush1.bf16.msra.mxu0 %v6551
  %6620 = vmatprep.subr.bf16.mxu0 0
  %6621 = vmatpush1.bf16.msra.mxu0 %v6552
  %6622 = vmatprep.subr.bf16.mxu0 0
  %6623 = vmatpush1.bf16.msra.mxu0 0
  %6624 = vmatprep.subr.bf16.mxu0 0
  %6625 = vmatpush1.bf16.msra.mxu0 0
  %6626 = vmatprep.subr.bf16.mxu0 0
  %6627 = vmatpush1.bf16.msra.mxu0 0
  %6628 = vmatprep.subr.bf16.mxu0 0
  %6629 = vmatpush1.bf16.msra.mxu0 0
  %6630 = vmatprep.subr.bf16.mxu0 0
  %6631 = vmatpush1.bf16.msra.mxu0 0
  %6632 = vmatprep.subr.bf16.mxu0 0
  %6633 = vmatpush1.bf16.msra.mxu0 0
  %6634 = vmatprep.subr.bf16.mxu0 0
  %6635 = vmatpush1.bf16.msra.mxu0 0
  %6636 = vmatprep.subr.bf16.mxu0 0
  %6637 = vmatpush1.bf16.msra.mxu0 0
  %6638 = vmatprep.mubr.bf16.mxu0 0
  %6639 = vmatmul.mubr.bf16.gmra.mrb[0].mxu0 %v6263
  %v6640 = vpop.f32.mrb[0].mxu0
  %v6641 = vadd.f32 0.0, %v6640
  %v6642 = vpop.f32.mrb[0].mxu0
  %v6643 = vpop.f32.mrb[0].mxu0
  %v6644 = vadd.f32 0.0, %v6643
  %v6645 = vpop.f32.mrb[0].mxu0
  %6646 = vmatprep.mubr.bf16.mxu0 0
  %6647 = vmatmul.mubr.bf16.gmra.mrb[0].mxu0 %v6543
  %v6648 = vpop.f32.mrb[0].mxu0
  %v6649 = vadd.f32 0.0, %v6648
  %v6650 = vpop.f32.mrb[0].mxu0
  %v6651 = vpop.f32.mrb[0].mxu0
  %v6652 = vadd.f32 0.0, %v6651
  %v6653 = vpop.f32.mrb[0].mxu0
  %6654 = vdwg.mxu0
  %v6655 = vadd.f32 %v6139, %v6641
  %v6656 = vadd.f32 %v6140, %v6644
  %v6657 = vadd.f32 %v6141, %v6649
  %v6658 = vadd.f32 %v6142, %v6652
  %v6659 = vld [vmem:[#allocation2 + $0x110] sm:$0xff]
  %v6660 = vld [vmem:[#allocation2 + $0x118] sm:$0xff]
  %s6661 = scalar_lea.vmem [#allocation3], 1856
  %v6662 = vld [vmem:[%s6661] sm:$0xff]
  %v6663 = vld [vmem:[%s6661 + $0x8] sm:$0xff]
  %v6664 = vld [vmem:[%s6661 + $0x10] sm:$0xff]
  %v6665 = vld [vmem:[%s6661 + $0x18] sm:$0xff]
  %v6666 = vld [vmem:[%s6661 + $0x20] sm:$0xff]
  %v6667 = vld [vmem:[%s6661 + $0x28] sm:$0xff]
  %v6668 = vld [vmem:[%s6661 + $0x30] sm:$0xff]
  %v6669 = vld [vmem:[%s6661 + $0x38] sm:$0xff]
  %6670 = vmatprep.subr.bf16.mxu0 0
  %6671 = vmatpush1.bf16.msra.mxu0 %v6662
  %6672 = vmatprep.subr.bf16.mxu0 0
  %6673 = vmatpush1.bf16.msra.mxu0 %v6663
  %6674 = vmatprep.subr.bf16.mxu0 0
  %6675 = vmatpush1.bf16.msra.mxu0 %v6664
  %6676 = vmatprep.subr.bf16.mxu0 0
  %6677 = vmatpush1.bf16.msra.mxu0 %v6665
  %6678 = vmatprep.subr.bf16.mxu0 0
  %6679 = vmatpush1.bf16.msra.mxu0 %v6666
  %6680 = vmatprep.subr.bf16.mxu0 0
  %6681 = vmatpush1.bf16.msra.mxu0 %v6667
  %6682 = vmatprep.subr.bf16.mxu0 0
  %6683 = vmatpush1.bf16.msra.mxu0 %v6668
  %6684 = vmatprep.subr.bf16.mxu0 0
  %6685 = vmatpush1.bf16.msra.mxu0 %v6669
  %6686 = vmatprep.subr.bf16.mxu0 0
  %6687 = vmatpush1.bf16.msra.mxu0 0
  %6688 = vmatprep.subr.bf16.mxu0 0
  %6689 = vmatpush1.bf16.msra.mxu0 0
  %6690 = vmatprep.subr.bf16.mxu0 0
  %6691 = vmatpush1.bf16.msra.mxu0 0
  %6692 = vmatprep.subr.bf16.mxu0 0
  %6693 = vmatpush1.bf16.msra.mxu0 0
  %6694 = vmatprep.subr.bf16.mxu0 0
  %6695 = vmatpush1.bf16.msra.mxu0 0
  %6696 = vmatprep.subr.bf16.mxu0 0
  %6697 = vmatpush1.bf16.msra.mxu0 0
  %6698 = vmatprep.subr.bf16.mxu0 0
  %6699 = vmatpush1.bf16.msra.mxu0 0
  %6700 = vmatprep.subr.bf16.mxu0 0
  %6701 = vmatpush1.bf16.msra.mxu0 0
  %6702 = vmatprep.mubr.bf16.mxu0 0
  %6703 = vmatmul.mubr.bf16.gmra.mrb[0].mxu0 %v6403
  %v6704 = vpop.f32.mrb[0].mxu0
  %v6705 = vadd.f32 0.0, %v6704
  %v6706 = vpop.f32.mrb[0].mxu0
  %v6707 = vpop.f32.mrb[0].mxu0
  %v6708 = vadd.f32 0.0, %v6707
  %v6709 = vpop.f32.mrb[0].mxu0
  %6710 = vmatprep.mubr.bf16.mxu0 0
  %6711 = vmatmul.mubr.bf16.gmra.mrb[0].mxu0 %v6659
  %v6712 = vpop.f32.mrb[0].mxu0
  %v6713 = vadd.f32 0.0, %v6712
  %v6714 = vpop.f32.mrb[0].mxu0
  %v6715 = vpop.f32.mrb[0].mxu0
  %v6716 = vadd.f32 0.0, %v6715
  %v6717 = vpop.f32.mrb[0].mxu0
  %6718 = vdwg.mxu0
  %v6719 = vadd.f32 %v6203, %v6705
  %v6720 = vadd.f32 %v6204, %v6708
  %v6721 = vadd.f32 %v6205, %v6713
  %v6722 = vadd.f32 %v6206, %v6716
  %6723 = vmatprep.subr.bf16.mxu0 0
  %6724 = vmatpush1.bf16.msra.mxu0 %v6662
  %6725 = vmatprep.subr.bf16.mxu0 0
  %6726 = vmatpush1.bf16.msra.mxu0 %v6663
  %6727 = vmatprep.subr.bf16.mxu0 0
  %6728 = vmatpush1.bf16.msra.mxu0 %v6664
  %6729 = vmatprep.subr.bf16.mxu0 0
  %6730 = vmatpush1.bf16.msra.mxu0 %v6665
  %6731 = vmatprep.subr.bf16.mxu0 0
  %6732 = vmatpush1.bf16.msra.mxu0 %v6666
  %6733 = vmatprep.subr.bf16.mxu0 0
  %6734 = vmatpush1.bf16.msra.mxu0 %v6667
  %6735 = vmatprep.subr.bf16.mxu0 0
  %6736 = vmatpush1.bf16.msra.mxu0 %v6668
  %6737 = vmatprep.subr.bf16.mxu0 0
  %6738 = vmatpush1.bf16.msra.mxu0 %v6669
  %6739 = vmatprep.subr.bf16.mxu0 0
  %6740 = vmatpush1.bf16.msra.mxu0 0
  %6741 = vmatprep.subr.bf16.mxu0 0
  %6742 = vmatpush1.bf16.msra.mxu0 0
  %6743 = vmatprep.subr.bf16.mxu0 0
  %6744 = vmatpush1.bf16.msra.mxu0 0
  %6745 = vmatprep.subr.bf16.mxu0 0
  %6746 = vmatpush1.bf16.msra.mxu0 0
  %6747 = vmatprep.subr.bf16.mxu0 0
  %6748 = vmatpush1.bf16.msra.mxu0 0
  %6749 = vmatprep.subr.bf16.mxu0 0
  %6750 = vmatpush1.bf16.msra.mxu0 0
  %6751 = vmatprep.subr.bf16.mxu0 0
  %6752 = vmatpush1.bf16.msra.mxu0 0
  %6753 = vmatprep.subr.bf16.mxu0 0
  %6754 = vmatpush1.bf16.msra.mxu0 0
  %6755 = vmatprep.mubr.bf16.mxu0 0
  %6756 = vmatmul.mubr.bf16.gmra.mrb[0].mxu0 %v6404
  %v6757 = vpop.f32.mrb[0].mxu0
  %v6758 = vadd.f32 0.0, %v6757
  %v6759 = vpop.f32.mrb[0].mxu0
  %v6760 = vpop.f32.mrb[0].mxu0
  %v6761 = vadd.f32 0.0, %v6760
  %v6762 = vpop.f32.mrb[0].mxu0
  %6763 = vmatprep.mubr.bf16.mxu0 0
  %6764 = vmatmul.mubr.bf16.gmra.mrb[0].mxu0 %v6660
  %v6765 = vpop.f32.mrb[0].mxu0
  %v6766 = vadd.f32 0.0, %v6765
  %v6767 = vpop.f32.mrb[0].mxu0
  %v6768 = vpop.f32.mrb[0].mxu0
  %v6769 = vadd.f32 0.0, %v6768
  %v6770 = vpop.f32.mrb[0].mxu0
  %6771 = vdwg.mxu0
  %v6772 = vadd.f32 %v6256, %v6758
  %v6773 = vadd.f32 %v6257, %v6761
  %v6774 = vadd.f32 %v6258, %v6766
  %v6775 = vadd.f32 %v6259, %v6769
  %v6776 = vld [vmem:[%s2 + $0x2] sm:$0x1]
  %v6777 = vadd.f32 %v6602, %v6719
  %v6778 = vadd.f32 %v6603, %v6720
  %v6779 = vadd.f32 %v6604, %v6721
  %v6780 = vadd.f32 %v6605, %v6722
  %v6781 = vadd.f32 %v6334, %v6475
  %v6782 = vadd.f32 %v6335, %v6476
  %v6783 = vadd.f32 %v6336, %v6477
  %v6784 = vadd.f32 %v6337, %v6478
  %v6785 = vadd.f32 %v6777, %v6781
  %v6786 = vadd.f32 %v6778, %v6782
  %v6787 = vadd.f32 %v6779, %v6783
  %v6788 = vadd.f32 %v6780, %v6784
  %v6789 = vadd.f32 %v6655, %v6772
  %v6790 = vadd.f32 %v6656, %v6773
  %v6791 = vadd.f32 %v6657, %v6774
  %v6792 = vadd.f32 %v6658, %v6775
  %v6793 = vadd.f32 %v6397, %v6538
  %v6794 = vadd.f32 %v6398, %v6539
  %v6795 = vadd.f32 %v6399, %v6540
  %v6796 = vadd.f32 %v6400, %v6541
  %v6797 = vadd.f32 %v6789, %v6793
  %v6798 = vadd.f32 %v6790, %v6794
  %v6799 = vadd.f32 %v6791, %v6795
  %v6800 = vadd.f32 %v6792, %v6796
  %6805 = vrot.lane.b32.xlu0 %v6797, 64
  %v6806 = vpop.permute.xlu0 %6805
  %6807 = vrot.lane.b32.xlu0 %v6798, 64
  %v6808 = vpop.permute.xlu0 %6807
  %6809 = vrot.lane.b32.xlu0 %v6799, 64
  %v6810 = vpop.permute.xlu0 %6809
  %6811 = vrot.lane.b32.xlu0 %v6800, 64
  %v6812 = vpop.permute.xlu0 %6811
  %vm6817 = vcmask 523264
  %v6818 = vsel %vm6817, %v6785, %v6806
  %v6819 = vsel %vm6817, %v6786, %v6808
  %v6820 = vsel %vm6817, %v6787, %v6810
  %v6821 = vsel %vm6817, %v6788, %v6812
  %v6823 = vlaneseq
  %v6824 = vshrl.u32 %v6823, 7
  %v6825 = vsub.s32 0, %v6824
  %v6826 = vrot.slane %v6776, %v6825
  %v6828 = vadd.f32 %v6818, %v6826
  %v6829 = vadd.f32 %v6819, %v6826
  %v6830 = vadd.f32 %v6820, %v6826
  %v6831 = vadd.f32 %v6821, %v6826
  %v6832 = vmax.f32 %v6828, 0.0
  %v6833 = vmax.f32 %v6829, 0.0
  %v6834 = vmax.f32 %v6830, 0.0
  %v6835 = vmax.f32 %v6831, 0.0
  %v6836 = vpack.c.bf16 %v6833, %v6832
  %v6837 = vpack.c.bf16 %v6835, %v6834
  %s6838 = smul.u32 4, 64
  %s6839 = smul.u32 %s6838, 4
  %s6840 = sshll.u32 %s6839, 4
  %6841 = dma.done %s540, %s6840
  %v6842 = vld [vmem:[%s2 + $0x3] sm:$0xf]
  %v6843 = vld [vmem:[%s2 + $0x7] sm:$0xf]
  %v6844 = vld [vmem:[#allocation4] sm:$0xff]
  %v6845 = vld [vmem:[#allocation4 + $0x8] sm:$0xff]
  %v6846 = vld [vmem:[#allocation4 + $0x10] sm:$0xff]
  %v6847 = vld [vmem:[#allocation4 + $0x18] sm:$0xff]
  %v6848 = vld [vmem:[#allocation4 + $0x20] sm:$0xff]
  %v6849 = vld [vmem:[#allocation4 + $0x28] sm:$0xff]
  %v6850 = vld [vmem:[#allocation4 + $0x30] sm:$0xff]
  %v6851 = vld [vmem:[#allocation4 + $0x38] sm:$0xff]
  %v6852 = vld [vmem:[#allocation4 + $0x40] sm:$0xff]
  %v6853 = vld [vmem:[#allocation4 + $0x48] sm:$0xff]
  %v6854 = vld [vmem:[#allocation4 + $0x50] sm:$0xff]
  %v6855 = vld [vmem:[#allocation4 + $0x58] sm:$0xff]
  %v6856 = vld [vmem:[#allocation4 + $0x60] sm:$0xff]
  %v6857 = vld [vmem:[#allocation4 + $0x68] sm:$0xff]
  %v6858 = vld [vmem:[#allocation4 + $0x70] sm:$0xff]
  %v6859 = vld [vmem:[#allocation4 + $0x78] sm:$0xff]
  %v6860 = vld [vmem:[#allocation4 + $0x80] sm:$0xff]
  %v6861 = vld [vmem:[#allocation4 + $0x88] sm:$0xff]
  %v6862 = vld [vmem:[#allocation4 + $0x90] sm:$0xff]
  %v6863 = vld [vmem:[#allocation4 + $0x98] sm:$0xff]
  %v6864 = vld [vmem:[#allocation4 + $0xa0] sm:$0xff]
  %v6865 = vld [vmem:[#allocation4 + $0xa8] sm:$0xff]
  %v6866 = vld [vmem:[#allocation4 + $0xb0] sm:$0xff]
  %v6867 = vld [vmem:[#allocation4 + $0xb8] sm:$0xff]
  %v6868 = vld [vmem:[#allocation4 + $0xc0] sm:$0xff]
  %v6869 = vld [vmem:[#allocation4 + $0xc8] sm:$0xff]
  %v6870 = vld [vmem:[#allocation4 + $0xd0] sm:$0xff]
  %v6871 = vld [vmem:[#allocation4 + $0xd8] sm:$0xff]
  %v6872 = vld [vmem:[#allocation4 + $0xe0] sm:$0xff]
  %v6873 = vld [vmem:[#allocation4 + $0xe8] sm:$0xff]
  %v6874 = vld [vmem:[#allocation4 + $0xf0] sm:$0xff]
  %v6875 = vld [vmem:[#allocation4 + $0xf8] sm:$0xff]
  %v6877 = vlaneseq
  %v6878 = vshrl.u32 %v6877, 7
  %v6879 = vsub.s32 0, %v6878
  %v6880 = vrot.slane %v6842, %v6879
  %v6881 = vlaneseq
  %v6882 = vshrl.u32 %v6881, 7
  %v6883 = vsub.s32 1, %v6882
  %v6884 = vrot.slane %v6842, %v6883
  %v6885 = vlaneseq
  %v6886 = vshrl.u32 %v6885, 7
  %v6887 = vsub.s32 2, %v6886
  %v6888 = vrot.slane %v6842, %v6887
  %v6889 = vlaneseq
  %v6890 = vshrl.u32 %v6889, 7
  %v6891 = vsub.s32 3, %v6890
  %v6892 = vrot.slane %v6842, %v6891
  %6897 = vmatprep.subr.bf16.mxu0 %v6845
  %6898 = vmatpush1.bf16.msra.mxu0 %v6844
  %6899 = vmatprep.subr.bf16.mxu0 %v6849
  %6900 = vmatpush1.bf16.msra.mxu0 %v6848
  %6901 = vmatprep.subr.bf16.mxu0 %v6853
  %6902 = vmatpush1.bf16.msra.mxu0 %v6852
  %6903 = vmatprep.subr.bf16.mxu0 %v6857
  %6904 = vmatpush1.bf16.msra.mxu0 %v6856
  %6905 = vmatprep.subr.bf16.mxu0 %v6861
  %6906 = vmatpush1.bf16.msra.mxu0 %v6860
  %6907 = vmatprep.subr.bf16.mxu0 %v6865
  %6908 = vmatpush1.bf16.msra.mxu0 %v6864
  %6909 = vmatprep.subr.bf16.mxu0 %v6869
  %6910 = vmatpush1.bf16.msra.mxu0 %v6868
  %6911 = vmatprep.subr.bf16.mxu0 %v6873
  %6912 = vmatpush1.bf16.msra.mxu0 %v6872
  %6913 = vmatprep.subr.bf16.mxu0 0
  %6914 = vmatpush1.bf16.msra.mxu0 0
  %6915 = vmatprep.subr.bf16.mxu0 0
  %6916 = vmatpush1.bf16.msra.mxu0 0
  %6917 = vmatprep.subr.bf16.mxu0 0
  %6918 = vmatpush1.bf16.msra.mxu0 0
  %6919 = vmatprep.subr.bf16.mxu0 0
  %6920 = vmatpush1.bf16.msra.mxu0 0
  %6921 = vmatprep.subr.bf16.mxu0 0
  %6922 = vmatpush1.bf16.msra.mxu0 0
  %6923 = vmatprep.subr.bf16.mxu0 0
  %6924 = vmatpush1.bf16.msra.mxu0 0
  %6925 = vmatprep.subr.bf16.mxu0 0
  %6926 = vmatpush1.bf16.msra.mxu0 0
  %6927 = vmatprep.subr.bf16.mxu0 0
  %6928 = vmatpush1.bf16.msra.mxu0 0
  %6929 = vmatprep.mubr.bf16.mxu0 0
  %6930 = vmatmul.mubr.bf16.gmra.mrb[0].mxu0 %v6836
  %v6931 = vpop.f32.mrb[0].mxu0
  %v6932 = vadd.f32 %v6880, %v6931
  %v6933 = vpop.f32.mrb[0].mxu0
  %v6934 = vadd.f32 %v6884, %v6933
  %v6935 = vpop.f32.mrb[0].mxu0
  %v6936 = vadd.f32 %v6880, %v6935
  %v6937 = vpop.f32.mrb[0].mxu0
  %v6938 = vadd.f32 %v6884, %v6937
  %6939 = vmatprep.mubr.bf16.mxu0 0
  %6940 = vmatmul.mubr.bf16.gmra.mrb[0].mxu0 %v6837
  %v6941 = vpop.f32.mrb[0].mxu0
  %v6942 = vadd.f32 %v6880, %v6941
  %v6943 = vpop.f32.mrb[0].mxu0
  %v6944 = vadd.f32 %v6884, %v6943
  %v6945 = vpop.f32.mrb[0].mxu0
  %v6946 = vadd.f32 %v6880, %v6945
  %v6947 = vpop.f32.mrb[0].mxu0
  %v6948 = vadd.f32 %v6884, %v6947
  %6949 = vdwg.mxu0
  %6950 = vmatprep.subr.bf16.mxu0 %v6847
  %6951 = vmatpush1.bf16.msra.mxu0 %v6846
  %6952 = vmatprep.subr.bf16.mxu0 %v6851
  %6953 = vmatpush1.bf16.msra.mxu0 %v6850
  %6954 = vmatprep.subr.bf16.mxu0 %v6855
  %6955 = vmatpush1.bf16.msra.mxu0 %v6854
  %6956 = vmatprep.subr.bf16.mxu0 %v6859
  %6957 = vmatpush1.bf16.msra.mxu0 %v6858
  %6958 = vmatprep.subr.bf16.mxu0 %v6863
  %6959 = vmatpush1.bf16.msra.mxu0 %v6862
  %6960 = vmatprep.subr.bf16.mxu0 %v6867
  %6961 = vmatpush1.bf16.msra.mxu0 %v6866
  %6962 = vmatprep.subr.bf16.mxu0 %v6871
  %6963 = vmatpush1.bf16.msra.mxu0 %v6870
  %6964 = vmatprep.subr.bf16.mxu0 %v6875
  %6965 = vmatpush1.bf16.msra.mxu0 %v6874
  %6966 = vmatprep.subr.bf16.mxu0 0
  %6967 = vmatpush1.bf16.msra.mxu0 0
  %6968 = vmatprep.subr.bf16.mxu0 0
  %6969 = vmatpush1.bf16.msra.mxu0 0
  %6970 = vmatprep.subr.bf16.mxu0 0
  %6971 = vmatpush1.bf16.msra.mxu0 0
  %6972 = vmatprep.subr.bf16.mxu0 0
  %6973 = vmatpush1.bf16.msra.mxu0 0
  %6974 = vmatprep.subr.bf16.mxu0 0
  %6975 = vmatpush1.bf16.msra.mxu0 0
  %6976 = vmatprep.subr.bf16.mxu0 0
  %6977 = vmatpush1.bf16.msra.mxu0 0
  %6978 = vmatprep.subr.bf16.mxu0 0
  %6979 = vmatpush1.bf16.msra.mxu0 0
  %6980 = vmatprep.subr.bf16.mxu0 0
  %6981 = vmatpush1.bf16.msra.mxu0 0
  %6982 = vmatprep.mubr.bf16.mxu0 0
  %6983 = vmatmul.mubr.bf16.gmra.mrb[0].mxu0 %v6836
  %v6984 = vpop.f32.mrb[0].mxu0
  %v6985 = vadd.f32 %v6888, %v6984
  %v6986 = vpop.f32.mrb[0].mxu0
  %v6987 = vadd.f32 %v6892, %v6986
  %v6988 = vpop.f32.mrb[0].mxu0
  %v6989 = vadd.f32 %v6888, %v6988
  %v6990 = vpop.f32.mrb[0].mxu0
  %v6991 = vadd.f32 %v6892, %v6990
  %6992 = vmatprep.mubr.bf16.mxu0 0
  %6993 = vmatmul.mubr.bf16.gmra.mrb[0].mxu0 %v6837
  %v6994 = vpop.f32.mrb[0].mxu0
  %v6995 = vadd.f32 %v6888, %v6994
  %v6996 = vpop.f32.mrb[0].mxu0
  %v6997 = vadd.f32 %v6892, %v6996
  %v6998 = vpop.f32.mrb[0].mxu0
  %v6999 = vadd.f32 %v6888, %v6998
  %v7000 = vpop.f32.mrb[0].mxu0
  %v7001 = vadd.f32 %v6892, %v7000
  %7002 = vdwg.mxu0
  %v7003 = vld [vmem:[#allocation4 + $0x100] sm:$0xff]
  %v7004 = vld [vmem:[#allocation4 + $0x108] sm:$0xff]
  %v7005 = vld [vmem:[#allocation4 + $0x110] sm:$0xff]
  %v7006 = vld [vmem:[#allocation4 + $0x118] sm:$0xff]
  %v7007 = vld [vmem:[#allocation4 + $0x120] sm:$0xff]
  %v7008 = vld [vmem:[#allocation4 + $0x128] sm:$0xff]
  %v7009 = vld [vmem:[#allocation4 + $0x130] sm:$0xff]
  %v7010 = vld [vmem:[#allocation4 + $0x138] sm:$0xff]
  %v7011 = vld [vmem:[#allocation4 + $0x140] sm:$0xff]
  %v7012 = vld [vmem:[#allocation4 + $0x148] sm:$0xff]
  %v7013 = vld [vmem:[#allocation4 + $0x150] sm:$0xff]
  %v7014 = vld [vmem:[#allocation4 + $0x158] sm:$0xff]
  %v7015 = vld [vmem:[#allocation4 + $0x160] sm:$0xff]
  %v7016 = vld [vmem:[#allocation4 + $0x168] sm:$0xff]
  %v7017 = vld [vmem:[#allocation4 + $0x170] sm:$0xff]
  %v7018 = vld [vmem:[#allocation4 + $0x178] sm:$0xff]
  %v7019 = vld [vmem:[#allocation4 + $0x180] sm:$0xff]
  %v7020 = vld [vmem:[#allocation4 + $0x188] sm:$0xff]
  %v7021 = vld [vmem:[#allocation4 + $0x190] sm:$0xff]
  %v7022 = vld [vmem:[#allocation4 + $0x198] sm:$0xff]
  %v7023 = vld [vmem:[#allocation4 + $0x1a0] sm:$0xff]
  %v7024 = vld [vmem:[#allocation4 + $0x1a8] sm:$0xff]
  %v7025 = vld [vmem:[#allocation4 + $0x1b0] sm:$0xff]
  %v7026 = vld [vmem:[#allocation4 + $0x1b8] sm:$0xff]
  %v7027 = vld [vmem:[#allocation4 + $0x1c0] sm:$0xff]
  %v7028 = vld [vmem:[#allocation4 + $0x1c8] sm:$0xff]
  %v7029 = vld [vmem:[#allocation4 + $0x1d0] sm:$0xff]
  %v7030 = vld [vmem:[#allocation4 + $0x1d8] sm:$0xff]
  %v7031 = vld [vmem:[#allocation4 + $0x1e0] sm:$0xff]
  %v7032 = vld [vmem:[#allocation4 + $0x1e8] sm:$0xff]
  %v7033 = vld [vmem:[#allocation4 + $0x1f0] sm:$0xff]
  %v7034 = vld [vmem:[#allocation4 + $0x1f8] sm:$0xff]
  %7035 = vmatprep.subr.bf16.mxu0 %v7004
  %7036 = vmatpush1.bf16.msra.mxu0 %v7003
  %7037 = vmatprep.subr.bf16.mxu0 %v7008
  %7038 = vmatpush1.bf16.msra.mxu0 %v7007
  %7039 = vmatprep.subr.bf16.mxu0 %v7012
  %7040 = vmatpush1.bf16.msra.mxu0 %v7011
  %7041 = vmatprep.subr.bf16.mxu0 %v7016
  %7042 = vmatpush1.bf16.msra.mxu0 %v7015
  %7043 = vmatprep.subr.bf16.mxu0 %v7020
  %7044 = vmatpush1.bf16.msra.mxu0 %v7019
  %7045 = vmatprep.subr.bf16.mxu0 %v7024
  %7046 = vmatpush1.bf16.msra.mxu0 %v7023
  %7047 = vmatprep.subr.bf16.mxu0 %v7028
  %7048 = vmatpush1.bf16.msra.mxu0 %v7027
  %7049 = vmatprep.subr.bf16.mxu0 %v7032
  %7050 = vmatpush1.bf16.msra.mxu0 %v7031
  %7051 = vmatprep.subr.bf16.mxu0 0
  %7052 = vmatpush1.bf16.msra.mxu0 0
  %7053 = vmatprep.subr.bf16.mxu0 0
  %7054 = vmatpush1.bf16.msra.mxu0 0
  %7055 = vmatprep.subr.bf16.mxu0 0
  %7056 = vmatpush1.bf16.msra.mxu0 0
  %7057 = vmatprep.subr.bf16.mxu0 0
  %7058 = vmatpush1.bf16.msra.mxu0 0
  %7059 = vmatprep.subr.bf16.mxu0 0
  %7060 = vmatpush1.bf16.msra.mxu0 0
  %7061 = vmatprep.subr.bf16.mxu0 0
  %7062 = vmatpush1.bf16.msra.mxu0 0
  %7063 = vmatprep.subr.bf16.mxu0 0
  %7064 = vmatpush1.bf16.msra.mxu0 0
  %7065 = vmatprep.subr.bf16.mxu0 0
  %7066 = vmatpush1.bf16.msra.mxu0 0
  %7067 = vmatprep.mubr.bf16.mxu0 0
  %7068 = vmatmul.mubr.bf16.gmra.mrb[0].mxu0 0
  %v7069 = vpop.f32.mrb[0].mxu0
  %v7070 = vadd.f32 0.0, %v7069
  %v7071 = vpop.f32.mrb[0].mxu0
  %v7072 = vadd.f32 0.0, %v7071
  %v7073 = vpop.f32.mrb[0].mxu0
  %v7074 = vpop.f32.mrb[0].mxu0
  %7075 = vdwg.mxu0
  %7076 = vmatprep.subr.bf16.mxu0 %v7006
  %7077 = vmatpush1.bf16.msra.mxu0 %v7005
  %7078 = vmatprep.subr.bf16.mxu0 %v7010
  %7079 = vmatpush1.bf16.msra.mxu0 %v7009
  %7080 = vmatprep.subr.bf16.mxu0 %v7014
  %7081 = vmatpush1.bf16.msra.mxu0 %v7013
  %7082 = vmatprep.subr.bf16.mxu0 %v7018
  %7083 = vmatpush1.bf16.msra.mxu0 %v7017
  %7084 = vmatprep.subr.bf16.mxu0 %v7022
  %7085 = vmatpush1.bf16.msra.mxu0 %v7021
  %7086 = vmatprep.subr.bf16.mxu0 %v7026
  %7087 = vmatpush1.bf16.msra.mxu0 %v7025
  %7088 = vmatprep.subr.bf16.mxu0 %v7030
  %7089 = vmatpush1.bf16.msra.mxu0 %v7029
  %7090 = vmatprep.subr.bf16.mxu0 %v7034
  %7091 = vmatpush1.bf16.msra.mxu0 %v7033
  %7092 = vmatprep.subr.bf16.mxu0 0
  %7093 = vmatpush1.bf16.msra.mxu0 0
  %7094 = vmatprep.subr.bf16.mxu0 0
  %7095 = vmatpush1.bf16.msra.mxu0 0
  %7096 = vmatprep.subr.bf16.mxu0 0
  %7097 = vmatpush1.bf16.msra.mxu0 0
  %7098 = vmatprep.subr.bf16.mxu0 0
  %7099 = vmatpush1.bf16.msra.mxu0 0
  %7100 = vmatprep.subr.bf16.mxu0 0
  %7101 = vmatpush1.bf16.msra.mxu0 0
  %7102 = vmatprep.subr.bf16.mxu0 0
  %7103 = vmatpush1.bf16.msra.mxu0 0
  %7104 = vmatprep.subr.bf16.mxu0 0
  %7105 = vmatpush1.bf16.msra.mxu0 0
  %7106 = vmatprep.subr.bf16.mxu0 0
  %7107 = vmatpush1.bf16.msra.mxu0 0
  %7108 = vmatprep.mubr.bf16.mxu0 0
  %7109 = vmatmul.mubr.bf16.gmra.mrb[0].mxu0 0
  %v7110 = vpop.f32.mrb[0].mxu0
  %v7111 = vadd.f32 0.0, %v7110
  %v7112 = vpop.f32.mrb[0].mxu0
  %v7113 = vadd.f32 0.0, %v7112
  %v7114 = vpop.f32.mrb[0].mxu0
  %v7115 = vpop.f32.mrb[0].mxu0
  %7116 = vdwg.mxu0
  %v7117 = vadd.f32 %v6932, %v7070
  %v7118 = vadd.f32 %v6934, %v7072
  %v7119 = vadd.f32 %v6985, %v7111
  %v7120 = vadd.f32 %v6987, %v7113
  %v7121 = vxor.u32 %v7117, 2147483648
  %v7122 = vmul.f32 %v7121, 1.442695
  %v7123 = vpow.pop %v7122
  %v7124 = vadd.f32 %v7123, 1.0
  %v7125 = vrcp.pop %v7124
  %v7126 = vmul.f32 1.0, %v7125
  %v7127 = vxor.u32 %v7118, 2147483648
  %v7128 = vmul.f32 %v7127, 1.442695
  %v7129 = vpow.pop %v7128
  %v7130 = vadd.f32 %v7129, 1.0
  %v7131 = vrcp.pop %v7130
  %v7132 = vmul.f32 1.0, %v7131
  %v7133 = vtanh.pop %v7119
  %v7134 = vxor.u32 %v7120, 2147483648
  %v7135 = vmul.f32 %v7134, 1.442695
  %v7136 = vpow.pop %v7135
  %v7137 = vadd.f32 %v7136, 1.0
  %v7138 = vrcp.pop %v7137
  %v7139 = vmul.f32 1.0, %v7138
  %v7140 = vmul.f32 %v7132, 0.0
  %v7141 = vmul.f32 %v7126, %v7133
  %v7142 = vadd.f32 %v7140, %v7141
  %v7143 = vtanh.pop %v7142
  %v7144 = vmul.f32 %v7139, %v7143
  %v7145 = vpack.c.bf16 %v7144, %v7144
  %v7146 = vld [vmem:[#allocation4 + $0x200] sm:$0xff]
  %v7147 = vld [vmem:[#allocation4 + $0x208] sm:$0xff]
  %v7148 = vld [vmem:[#allocation4 + $0x210] sm:$0xff]
  %v7149 = vld [vmem:[#allocation4 + $0x218] sm:$0xff]
  %v7150 = vld [vmem:[#allocation4 + $0x220] sm:$0xff]
  %v7151 = vld [vmem:[#allocation4 + $0x228] sm:$0xff]
  %v7152 = vld [vmem:[#allocation4 + $0x230] sm:$0xff]
  %v7153 = vld [vmem:[#allocation4 + $0x238] sm:$0xff]
  %v7154 = vld [vmem:[#allocation4 + $0x240] sm:$0xff]
  %v7155 = vld [vmem:[#allocation4 + $0x248] sm:$0xff]
  %v7156 = vld [vmem:[#allocation4 + $0x250] sm:$0xff]
  %v7157 = vld [vmem:[#allocation4 + $0x258] sm:$0xff]
  %v7158 = vld [vmem:[#allocation4 + $0x260] sm:$0xff]
  %v7159 = vld [vmem:[#allocation4 + $0x268] sm:$0xff]
  %v7160 = vld [vmem:[#allocation4 + $0x270] sm:$0xff]
  %v7161 = vld [vmem:[#allocation4 + $0x278] sm:$0xff]
  %v7162 = vld [vmem:[#allocation4 + $0x280] sm:$0xff]
  %v7163 = vld [vmem:[#allocation4 + $0x288] sm:$0xff]
  %v7164 = vld [vmem:[#allocation4 + $0x290] sm:$0xff]
  %v7165 = vld [vmem:[#allocation4 + $0x298] sm:$0xff]
  %v7166 = vld [vmem:[#allocation4 + $0x2a0] sm:$0xff]
  %v7167 = vld [vmem:[#allocation4 + $0x2a8] sm:$0xff]
  %v7168 = vld [vmem:[#allocation4 + $0x2b0] sm:$0xff]
  %v7169 = vld [vmem:[#allocation4 + $0x2b8] sm:$0xff]
  %v7170 = vld [vmem:[#allocation4 + $0x2c0] sm:$0xff]
  %v7171 = vld [vmem:[#allocation4 + $0x2c8] sm:$0xff]
  %v7172 = vld [vmem:[#allocation4 + $0x2d0] sm:$0xff]
  %v7173 = vld [vmem:[#allocation4 + $0x2d8] sm:$0xff]
  %v7174 = vld [vmem:[#allocation4 + $0x2e0] sm:$0xff]
  %v7175 = vld [vmem:[#allocation4 + $0x2e8] sm:$0xff]
  %v7176 = vld [vmem:[#allocation4 + $0x2f0] sm:$0xff]
  %v7177 = vld [vmem:[#allocation4 + $0x2f8] sm:$0xff]
  %v7178 = vld [vmem:[#allocation4 + $0x300] sm:$0xff]
  %v7179 = vld [vmem:[#allocation4 + $0x308] sm:$0xff]
  %v7180 = vld [vmem:[#allocation4 + $0x310] sm:$0xff]
  %v7181 = vld [vmem:[#allocation4 + $0x318] sm:$0xff]
  %v7182 = vld [vmem:[#allocation4 + $0x320] sm:$0xff]
  %v7183 = vld [vmem:[#allocation4 + $0x328] sm:$0xff]
  %v7184 = vld [vmem:[#allocation4 + $0x330] sm:$0xff]
  %v7185 = vld [vmem:[#allocation4 + $0x338] sm:$0xff]
  %v7186 = vld [vmem:[#allocation4 + $0x340] sm:$0xff]
  %v7187 = vld [vmem:[#allocation4 + $0x348] sm:$0xff]
  %v7188 = vld [vmem:[#allocation4 + $0x350] sm:$0xff]
  %v7189 = vld [vmem:[#allocation4 + $0x358] sm:$0xff]
  %v7190 = vld [vmem:[#allocation4 + $0x360] sm:$0xff]
  %v7191 = vld [vmem:[#allocation4 + $0x368] sm:$0xff]
  %v7192 = vld [vmem:[#allocation4 + $0x370] sm:$0xff]
  %v7193 = vld [vmem:[#allocation4 + $0x378] sm:$0xff]
  %v7194 = vld [vmem:[#allocation4 + $0x380] sm:$0xff]
  %v7195 = vld [vmem:[#allocation4 + $0x388] sm:$0xff]
  %v7196 = vld [vmem:[#allocation4 + $0x390] sm:$0xff]
  %v7197 = vld [vmem:[#allocation4 + $0x398] sm:$0xff]
  %v7198 = vld [vmem:[#allocation4 + $0x3a0] sm:$0xff]
  %v7199 = vld [vmem:[#allocation4 + $0x3a8] sm:$0xff]
  %v7200 = vld [vmem:[#allocation4 + $0x3b0] sm:$0xff]
  %v7201 = vld [vmem:[#allocation4 + $0x3b8] sm:$0xff]
  %v7202 = vld [vmem:[#allocation4 + $0x3c0] sm:$0xff]
  %v7203 = vld [vmem:[#allocation4 + $0x3c8] sm:$0xff]
  %v7204 = vld [vmem:[#allocation4 + $0x3d0] sm:$0xff]
  %v7205 = vld [vmem:[#allocation4 + $0x3d8] sm:$0xff]
  %v7206 = vld [vmem:[#allocation4 + $0x3e0] sm:$0xff]
  %v7207 = vld [vmem:[#allocation4 + $0x3e8] sm:$0xff]
  %v7208 = vld [vmem:[#allocation4 + $0x3f0] sm:$0xff]
  %v7209 = vld [vmem:[#allocation4 + $0x3f8] sm:$0xff]
  %v7211 = vlaneseq
  %v7212 = vshrl.u32 %v7211, 7
  %v7213 = vsub.s32 0, %v7212
  %v7214 = vrot.slane %v6843, %v7213
  %v7215 = vlaneseq
  %v7216 = vshrl.u32 %v7215, 7
  %v7217 = vsub.s32 1, %v7216
  %v7218 = vrot.slane %v6843, %v7217
  %v7219 = vlaneseq
  %v7220 = vshrl.u32 %v7219, 7
  %v7221 = vsub.s32 2, %v7220
  %v7222 = vrot.slane %v6843, %v7221
  %v7223 = vlaneseq
  %v7224 = vshrl.u32 %v7223, 7
  %v7225 = vsub.s32 3, %v7224
  %v7226 = vrot.slane %v6843, %v7225
  %7231 = vmatprep.subr.bf16.mxu0 %v7147
  %7232 = vmatpush1.bf16.msra.mxu0 %v7146
  %7233 = vmatprep.subr.bf16.mxu0 %v7151
  %7234 = vmatpush1.bf16.msra.mxu0 %v7150
  %7235 = vmatprep.subr.bf16.mxu0 %v7155
  %7236 = vmatpush1.bf16.msra.mxu0 %v7154
  %7237 = vmatprep.subr.bf16.mxu0 %v7159
  %7238 = vmatpush1.bf16.msra.mxu0 %v7158
  %7239 = vmatprep.subr.bf16.mxu0 %v7163
  %7240 = vmatpush1.bf16.msra.mxu0 %v7162
  %7241 = vmatprep.subr.bf16.mxu0 %v7167
  %7242 = vmatpush1.bf16.msra.mxu0 %v7166
  %7243 = vmatprep.subr.bf16.mxu0 %v7171
  %7244 = vmatpush1.bf16.msra.mxu0 %v7170
  %7245 = vmatprep.subr.bf16.mxu0 %v7175
  %7246 = vmatpush1.bf16.msra.mxu0 %v7174
  %7247 = vmatprep.subr.bf16.mxu0 %v7179
  %7248 = vmatpush1.bf16.msra.mxu0 %v7178
  %7249 = vmatprep.subr.bf16.mxu0 %v7183
  %7250 = vmatpush1.bf16.msra.mxu0 %v7182
  %7251 = vmatprep.subr.bf16.mxu0 %v7187
  %7252 = vmatpush1.bf16.msra.mxu0 %v7186
  %7253 = vmatprep.subr.bf16.mxu0 %v7191
  %7254 = vmatpush1.bf16.msra.mxu0 %v7190
  %7255 = vmatprep.subr.bf16.mxu0 %v7195
  %7256 = vmatpush1.bf16.msra.mxu0 %v7194
  %7257 = vmatprep.subr.bf16.mxu0 %v7199
  %7258 = vmatpush1.bf16.msra.mxu0 %v7198
  %7259 = vmatprep.subr.bf16.mxu0 %v7203
  %7260 = vmatpush1.bf16.msra.mxu0 %v7202
  %7261 = vmatprep.subr.bf16.mxu0 %v7207
  %7262 = vmatpush1.bf16.msra.mxu0 %v7206
  %7263 = vmatprep.mubr.bf16.mxu0 0
  %7264 = vmatmul.mubr.bf16.gmra.mrb[0].mxu0 %v7145
  %v7265 = vpop.f32.mrb[0].mxu0
  %v7266 = vadd.f32 %v7214, %v7265
  %v7267 = vpop.f32.mrb[0].mxu0
  %v7268 = vadd.f32 %v7218, %v7267
  %v7269 = vpop.f32.mrb[0].mxu0
  %v7270 = vpop.f32.mrb[0].mxu0
  %7271 = vdwg.mxu0
  %7272 = vmatprep.subr.bf16.mxu0 %v7149
  %7273 = vmatpush1.bf16.msra.mxu0 %v7148
  %7274 = vmatprep.subr.bf16.mxu0 %v7153
  %7275 = vmatpush1.bf16.msra.mxu0 %v7152
  %7276 = vmatprep.subr.bf16.mxu0 %v7157
  %7277 = vmatpush1.bf16.msra.mxu0 %v7156
  %7278 = vmatprep.subr.bf16.mxu0 %v7161
  %7279 = vmatpush1.bf16.msra.mxu0 %v7160
  %7280 = vmatprep.subr.bf16.mxu0 %v7165
  %7281 = vmatpush1.bf16.msra.mxu0 %v7164
  %7282 = vmatprep.subr.bf16.mxu0 %v7169
  %7283 = vmatpush1.bf16.msra.mxu0 %v7168
  %7284 = vmatprep.subr.bf16.mxu0 %v7173
  %7285 = vmatpush1.bf16.msra.mxu0 %v7172
  %7286 = vmatprep.subr.bf16.mxu0 %v7177
  %7287 = vmatpush1.bf16.msra.mxu0 %v7176
  %7288 = vmatprep.subr.bf16.mxu0 %v7181
  %7289 = vmatpush1.bf16.msra.mxu0 %v7180
  %7290 = vmatprep.subr.bf16.mxu0 %v7185
  %7291 = vmatpush1.bf16.msra.mxu0 %v7184
  %7292 = vmatprep.subr.bf16.mxu0 %v7189
  %7293 = vmatpush1.bf16.msra.mxu0 %v7188
  %7294 = vmatprep.subr.bf16.mxu0 %v7193
  %7295 = vmatpush1.bf16.msra.mxu0 %v7192
  %7296 = vmatprep.subr.bf16.mxu0 %v7197
  %7297 = vmatpush1.bf16.msra.mxu0 %v7196
  %7298 = vmatprep.subr.bf16.mxu0 %v7201
  %7299 = vmatpush1.bf16.msra.mxu0 %v7200
  %7300 = vmatprep.subr.bf16.mxu0 %v7205
  %7301 = vmatpush1.bf16.msra.mxu0 %v7204
  %7302 = vmatprep.subr.bf16.mxu0 %v7209
  %7303 = vmatpush1.bf16.msra.mxu0 %v7208
  %7304 = vmatprep.mubr.bf16.mxu0 0
  %7305 = vmatmul.mubr.bf16.gmra.mrb[0].mxu0 %v7145
  %v7306 = vpop.f32.mrb[0].mxu0
  %v7307 = vadd.f32 %v7222, %v7306
  %v7308 = vpop.f32.mrb[0].mxu0
  %v7309 = vadd.f32 %v7226, %v7308
  %v7310 = vpop.f32.mrb[0].mxu0
  %v7311 = vpop.f32.mrb[0].mxu0
  %7312 = vdwg.mxu0
  %v7313 = vxor.u32 %v7266, 2147483648
  %v7314 = vmul.f32 %v7313, 1.442695
  %v7315 = vpow.pop %v7314
  %v7316 = vadd.f32 %v7315, 1.0
  %v7317 = vrcp.pop %v7316
  %v7318 = vmul.f32 1.0, %v7317
  %v7319 = vxor.u32 %v7268, 2147483648
  %v7320 = vmul.f32 %v7319, 1.442695
  %v7321 = vpow.pop %v7320
  %v7322 = vadd.f32 %v7321, 1.0
  %v7323 = vrcp.pop %v7322
  %v7324 = vmul.f32 1.0, %v7323
  %v7325 = vtanh.pop %v7307
  %v7326 = vxor.u32 %v7309, 2147483648
  %v7327 = vmul.f32 %v7326, 1.442695
  %v7328 = vpow.pop %v7327
  %v7329 = vadd.f32 %v7328, 1.0
  %v7330 = vrcp.pop %v7329
  %v7331 = vmul.f32 1.0, %v7330
  %v7332 = vmul.f32 %v7324, 0.0
  %v7333 = vmul.f32 %v7318, %v7325
  %v7334 = vadd.f32 %v7332, %v7333
  %v7335 = vtanh.pop %v7334
  %v7336 = vmul.f32 %v7331, %v7335
  %v7337 = vpack.c.bf16 %v7336, %v7336
  %v7338 = vadd.f32 %v7336, 0.0
  %7339 = vmatprep.subr.bf16.mxu0 %v7004
  %7340 = vmatpush1.bf16.msra.mxu0 %v7003
  %7341 = vmatprep.subr.bf16.mxu0 %v7008
  %7342 = vmatpush1.bf16.msra.mxu0 %v7007
  %7343 = vmatprep.subr.bf16.mxu0 %v7012
  %7344 = vmatpush1.bf16.msra.mxu0 %v7011
  %7345 = vmatprep.subr.bf16.mxu0 %v7016
  %7346 = vmatpush1.bf16.msra.mxu0 %v7015
  %7347 = vmatprep.subr.bf16.mxu0 %v7020
  %7348 = vmatpush1.bf16.msra.mxu0 %v7019
  %7349 = vmatprep.subr.bf16.mxu0 %v7024
  %7350 = vmatpush1.bf16.msra.mxu0 %v7023
  %7351 = vmatprep.subr.bf16.mxu0 %v7028
  %7352 = vmatpush1.bf16.msra.mxu0 %v7027
  %7353 = vmatprep.subr.bf16.mxu0 %v7032
  %7354 = vmatpush1.bf16.msra.mxu0 %v7031
  %7355 = vmatprep.subr.bf16.mxu0 0
  %7356 = vmatpush1.bf16.msra.mxu0 0
  %7357 = vmatprep.subr.bf16.mxu0 0
  %7358 = vmatpush1.bf16.msra.mxu0 0
  %7359 = vmatprep.subr.bf16.mxu0 0
  %7360 = vmatpush1.bf16.msra.mxu0 0
  %7361 = vmatprep.subr.bf16.mxu0 0
  %7362 = vmatpush1.bf16.msra.mxu0 0
  %7363 = vmatprep.subr.bf16.mxu0 0
  %7364 = vmatpush1.bf16.msra.mxu0 0
  %7365 = vmatprep.subr.bf16.mxu0 0
  %7366 = vmatpush1.bf16.msra.mxu0 0
  %7367 = vmatprep.subr.bf16.mxu0 0
  %7368 = vmatpush1.bf16.msra.mxu0 0
  %7369 = vmatprep.subr.bf16.mxu0 0
  %7370 = vmatpush1.bf16.msra.mxu0 0
  %7371 = vmatprep.mubr.bf16.mxu0 0
  %7372 = vmatmul.mubr.bf16.gmra.mrb[0].mxu0 %v7145
  %v7373 = vpop.f32.mrb[0].mxu0
  %v7374 = vadd.f32 0.0, %v7373
  %v7375 = vpop.f32.mrb[0].mxu0
  %v7376 = vadd.f32 0.0, %v7375
  %v7377 = vpop.f32.mrb[0].mxu0
  %v7378 = vpop.f32.mrb[0].mxu0
  %7379 = vdwg.mxu0
  %7380 = vmatprep.subr.bf16.mxu0 %v7006
  %7381 = vmatpush1.bf16.msra.mxu0 %v7005
  %7382 = vmatprep.subr.bf16.mxu0 %v7010
  %7383 = vmatpush1.bf16.msra.mxu0 %v7009
  %7384 = vmatprep.subr.bf16.mxu0 %v7014
  %7385 = vmatpush1.bf16.msra.mxu0 %v7013
  %7386 = vmatprep.subr.bf16.mxu0 %v7018
  %7387 = vmatpush1.bf16.msra.mxu0 %v7017
  %7388 = vmatprep.subr.bf16.mxu0 %v7022
  %7389 = vmatpush1.bf16.msra.mxu0 %v7021
  %7390 = vmatprep.subr.bf16.mxu0 %v7026
  %7391 = vmatpush1.bf16.msra.mxu0 %v7025
  %7392 = vmatprep.subr.bf16.mxu0 %v7030
  %7393 = vmatpush1.bf16.msra.mxu0 %v7029
  %7394 = vmatprep.subr.bf16.mxu0 %v7034
  %7395 = vmatpush1.bf16.msra.mxu0 %v7033
  %7396 = vmatprep.subr.bf16.mxu0 0
  %7397 = vmatpush1.bf16.msra.mxu0 0
  %7398 = vmatprep.subr.bf16.mxu0 0
  %7399 = vmatpush1.bf16.msra.mxu0 0
  %7400 = vmatprep.subr.bf16.mxu0 0
  %7401 = vmatpush1.bf16.msra.mxu0 0
  %7402 = vmatprep.subr.bf16.mxu0 0
  %7403 = vmatpush1.bf16.msra.mxu0 0
  %7404 = vmatprep.subr.bf16.mxu0 0
  %7405 = vmatpush1.bf16.msra.mxu0 0
  %7406 = vmatprep.subr.bf16.mxu0 0
  %7407 = vmatpush1.bf16.msra.mxu0 0
  %7408 = vmatprep.subr.bf16.mxu0 0
  %7409 = vmatpush1.bf16.msra.mxu0 0
  %7410 = vmatprep.subr.bf16.mxu0 0
  %7411 = vmatpush1.bf16.msra.mxu0 0
  %7412 = vmatprep.mubr.bf16.mxu0 0
  %7413 = vmatmul.mubr.bf16.gmra.mrb[0].mxu0 %v7145
  %v7414 = vpop.f32.mrb[0].mxu0
  %v7415 = vadd.f32 0.0, %v7414
  %v7416 = vpop.f32.mrb[0].mxu0
  %v7417 = vadd.f32 0.0, %v7416
  %v7418 = vpop.f32.mrb[0].mxu0
  %v7419 = vpop.f32.mrb[0].mxu0
  %7420 = vdwg.mxu0
  %v7421 = vadd.f32 %v6936, %v7374
  %v7422 = vadd.f32 %v6938, %v7376
  %v7423 = vadd.f32 %v6989, %v7415
  %v7424 = vadd.f32 %v6991, %v7417
  %v7425 = vxor.u32 %v7421, 2147483648
  %v7426 = vmul.f32 %v7425, 1.442695
  %v7427 = vpow.pop %v7426
  %v7428 = vadd.f32 %v7427, 1.0
  %v7429 = vrcp.pop %v7428
  %v7430 = vmul.f32 1.0, %v7429
  %v7431 = vxor.u32 %v7422, 2147483648
  %v7432 = vmul.f32 %v7431, 1.442695
  %v7433 = vpow.pop %v7432
  %v7434 = vadd.f32 %v7433, 1.0
  %v7435 = vrcp.pop %v7434
  %v7436 = vmul.f32 1.0, %v7435
  %v7437 = vtanh.pop %v7423
  %v7438 = vxor.u32 %v7424, 2147483648
  %v7439 = vmul.f32 %v7438, 1.442695
  %v7440 = vpow.pop %v7439
  %v7441 = vadd.f32 %v7440, 1.0
  %v7442 = vrcp.pop %v7441
  %v7443 = vmul.f32 1.0, %v7442
  %v7444 = vmul.f32 %v7436, %v7142
  %v7445 = vmul.f32 %v7430, %v7437
  %v7446 = vadd.f32 %v7444, %v7445
  %v7447 = vtanh.pop %v7446
  %v7448 = vmul.f32 %v7443, %v7447
  %v7449 = vpack.c.bf16 %v7448, %v7448
  %7450 = vmatprep.subr.bf16.mxu0 %v7147
  %7451 = vmatpush1.bf16.msra.mxu0 %v7146
  %7452 = vmatprep.subr.bf16.mxu0 %v7151
  %7453 = vmatpush1.bf16.msra.mxu0 %v7150
  %7454 = vmatprep.subr.bf16.mxu0 %v7155
  %7455 = vmatpush1.bf16.msra.mxu0 %v7154
  %7456 = vmatprep.subr.bf16.mxu0 %v7159
  %7457 = vmatpush1.bf16.msra.mxu0 %v7158
  %7458 = vmatprep.subr.bf16.mxu0 %v7163
  %7459 = vmatpush1.bf16.msra.mxu0 %v7162
  %7460 = vmatprep.subr.bf16.mxu0 %v7167
  %7461 = vmatpush1.bf16.msra.mxu0 %v7166
  %7462 = vmatprep.subr.bf16.mxu0 %v7171
  %7463 = vmatpush1.bf16.msra.mxu0 %v7170
  %7464 = vmatprep.subr.bf16.mxu0 %v7175
  %7465 = vmatpush1.bf16.msra.mxu0 %v7174
  %7466 = vmatprep.subr.bf16.mxu0 %v7179
  %7467 = vmatpush1.bf16.msra.mxu0 %v7178
  %7468 = vmatprep.subr.bf16.mxu0 %v7183
  %7469 = vmatpush1.bf16.msra.mxu0 %v7182
  %7470 = vmatprep.subr.bf16.mxu0 %v7187
  %7471 = vmatpush1.bf16.msra.mxu0 %v7186
  %7472 = vmatprep.subr.bf16.mxu0 %v7191
  %7473 = vmatpush1.bf16.msra.mxu0 %v7190
  %7474 = vmatprep.subr.bf16.mxu0 %v7195
  %7475 = vmatpush1.bf16.msra.mxu0 %v7194
  %7476 = vmatprep.subr.bf16.mxu0 %v7199
  %7477 = vmatpush1.bf16.msra.mxu0 %v7198
  %7478 = vmatprep.subr.bf16.mxu0 %v7203
  %7479 = vmatpush1.bf16.msra.mxu0 %v7202
  %7480 = vmatprep.subr.bf16.mxu0 %v7207
  %7481 = vmatpush1.bf16.msra.mxu0 %v7206
  %7482 = vmatprep.mubr.bf16.mxu0 %v7337
  %7483 = vmatmul.mubr.bf16.gmra.mrb[0].mxu0 %v7449
  %v7484 = vpop.f32.mrb[0].mxu0
  %v7485 = vadd.f32 %v7214, %v7484
  %v7486 = vpop.f32.mrb[0].mxu0
  %v7487 = vadd.f32 %v7218, %v7486
  %v7488 = vpop.f32.mrb[0].mxu0
  %v7489 = vpop.f32.mrb[0].mxu0
  %7490 = vdwg.mxu0
  %7491 = vmatprep.subr.bf16.mxu0 %v7149
  %7492 = vmatpush1.bf16.msra.mxu0 %v7148
  %7493 = vmatprep.subr.bf16.mxu0 %v7153
  %7494 = vmatpush1.bf16.msra.mxu0 %v7152
  %7495 = vmatprep.subr.bf16.mxu0 %v7157
  %7496 = vmatpush1.bf16.msra.mxu0 %v7156
  %7497 = vmatprep.subr.bf16.mxu0 %v7161
  %7498 = vmatpush1.bf16.msra.mxu0 %v7160
  %7499 = vmatprep.subr.bf16.mxu0 %v7165
  %7500 = vmatpush1.bf16.msra.mxu0 %v7164
  %7501 = vmatprep.subr.bf16.mxu0 %v7169
  %7502 = vmatpush1.bf16.msra.mxu0 %v7168
  %7503 = vmatprep.subr.bf16.mxu0 %v7173
  %7504 = vmatpush1.bf16.msra.mxu0 %v7172
  %7505 = vmatprep.subr.bf16.mxu0 %v7177
  %7506 = vmatpush1.bf16.msra.mxu0 %v7176
  %7507 = vmatprep.subr.bf16.mxu0 %v7181
  %7508 = vmatpush1.bf16.msra.mxu0 %v7180
  %7509 = vmatprep.subr.bf16.mxu0 %v7185
  %7510 = vmatpush1.bf16.msra.mxu0 %v7184
  %7511 = vmatprep.subr.bf16.mxu0 %v7189
  %7512 = vmatpush1.bf16.msra.mxu0 %v7188
  %7513 = vmatprep.subr.bf16.mxu0 %v7193
  %7514 = vmatpush1.bf16.msra.mxu0 %v7192
  %7515 = vmatprep.subr.bf16.mxu0 %v7197
  %7516 = vmatpush1.bf16.msra.mxu0 %v7196
  %7517 = vmatprep.subr.bf16.mxu0 %v7201
  %7518 = vmatpush1.bf16.msra.mxu0 %v7200
  %7519 = vmatprep.subr.bf16.mxu0 %v7205
  %7520 = vmatpush1.bf16.msra.mxu0 %v7204
  %7521 = vmatprep.subr.bf16.mxu0 %v7209
  %7522 = vmatpush1.bf16.msra.mxu0 %v7208
  %7523 = vmatprep.mubr.bf16.mxu0 %v7337
  %7524 = vmatmul.mubr.bf16.gmra.mrb[0].mxu0 %v7449
  %v7525 = vpop.f32.mrb[0].mxu0
  %v7526 = vadd.f32 %v7222, %v7525
  %v7527 = vpop.f32.mrb[0].mxu0
  %v7528 = vadd.f32 %v7226, %v7527
  %v7529 = vpop.f32.mrb[0].mxu0
  %v7530 = vpop.f32.mrb[0].mxu0
  %7531 = vdwg.mxu0
  %v7532 = vxor.u32 %v7485, 2147483648
  %v7533 = vmul.f32 %v7532, 1.442695
  %v7534 = vpow.pop %v7533
  %v7535 = vadd.f32 %v7534, 1.0
  %v7536 = vrcp.pop %v7535
  %v7537 = vmul.f32 1.0, %v7536
  %v7538 = vxor.u32 %v7487, 2147483648
  %v7539 = vmul.f32 %v7538, 1.442695
  %v7540 = vpow.pop %v7539
  %v7541 = vadd.f32 %v7540, 1.0
  %v7542 = vrcp.pop %v7541
  %v7543 = vmul.f32 1.0, %v7542
  %v7544 = vtanh.pop %v7526
  %v7545 = vxor.u32 %v7528, 2147483648
  %v7546 = vmul.f32 %v7545, 1.442695
  %v7547 = vpow.pop %v7546
  %v7548 = vadd.f32 %v7547, 1.0
  %v7549 = vrcp.pop %v7548
  %v7550 = vmul.f32 1.0, %v7549
  %v7551 = vmul.f32 %v7543, %v7334
  %v7552 = vmul.f32 %v7537, %v7544
  %v7553 = vadd.f32 %v7551, %v7552
  %v7554 = vtanh.pop %v7553
  %v7555 = vmul.f32 %v7550, %v7554
  %v7556 = vpack.c.bf16 %v7555, %v7555
  %v7557 = vadd.f32 %v7338, %v7555
  %7558 = vmatprep.subr.bf16.mxu0 %v7004
  %7559 = vmatpush1.bf16.msra.mxu0 %v7003
  %7560 = vmatprep.subr.bf16.mxu0 %v7008
  %7561 = vmatpush1.bf16.msra.mxu0 %v7007
  %7562 = vmatprep.subr.bf16.mxu0 %v7012
  %7563 = vmatpush1.bf16.msra.mxu0 %v7011
  %7564 = vmatprep.subr.bf16.mxu0 %v7016
  %7565 = vmatpush1.bf16.msra.mxu0 %v7015
  %7566 = vmatprep.subr.bf16.mxu0 %v7020
  %7567 = vmatpush1.bf16.msra.mxu0 %v7019
  %7568 = vmatprep.subr.bf16.mxu0 %v7024
  %7569 = vmatpush1.bf16.msra.mxu0 %v7023
  %7570 = vmatprep.subr.bf16.mxu0 %v7028
  %7571 = vmatpush1.bf16.msra.mxu0 %v7027
  %7572 = vmatprep.subr.bf16.mxu0 %v7032
  %7573 = vmatpush1.bf16.msra.mxu0 %v7031
  %7574 = vmatprep.subr.bf16.mxu0 0
  %7575 = vmatpush1.bf16.msra.mxu0 0
  %7576 = vmatprep.subr.bf16.mxu0 0
  %7577 = vmatpush1.bf16.msra.mxu0 0
  %7578 = vmatprep.subr.bf16.mxu0 0
  %7579 = vmatpush1.bf16.msra.mxu0 0
  %7580 = vmatprep.subr.bf16.mxu0 0
  %7581 = vmatpush1.bf16.msra.mxu0 0
  %7582 = vmatprep.subr.bf16.mxu0 0
  %7583 = vmatpush1.bf16.msra.mxu0 0
  %7584 = vmatprep.subr.bf16.mxu0 0
  %7585 = vmatpush1.bf16.msra.mxu0 0
  %7586 = vmatprep.subr.bf16.mxu0 0
  %7587 = vmatpush1.bf16.msra.mxu0 0
  %7588 = vmatprep.subr.bf16.mxu0 0
  %7589 = vmatpush1.bf16.msra.mxu0 0
  %7590 = vmatprep.mubr.bf16.mxu0 0
  %7591 = vmatmul.mubr.bf16.gmra.mrb[0].mxu0 %v7449
  %v7592 = vpop.f32.mrb[0].mxu0
  %v7593 = vadd.f32 0.0, %v7592
  %v7594 = vpop.f32.mrb[0].mxu0
  %v7595 = vadd.f32 0.0, %v7594
  %v7596 = vpop.f32.mrb[0].mxu0
  %v7597 = vpop.f32.mrb[0].mxu0
  %7598 = vdwg.mxu0
  %7599 = vmatprep.subr.bf16.mxu0 %v7006
  %7600 = vmatpush1.bf16.msra.mxu0 %v7005
  %7601 = vmatprep.subr.bf16.mxu0 %v7010
  %7602 = vmatpush1.bf16.msra.mxu0 %v7009
  %7603 = vmatprep.subr.bf16.mxu0 %v7014
  %7604 = vmatpush1.bf16.msra.mxu0 %v7013
  %7605 = vmatprep.subr.bf16.mxu0 %v7018
  %7606 = vmatpush1.bf16.msra.mxu0 %v7017
  %7607 = vmatprep.subr.bf16.mxu0 %v7022
  %7608 = vmatpush1.bf16.msra.mxu0 %v7021
  %7609 = vmatprep.subr.bf16.mxu0 %v7026
  %7610 = vmatpush1.bf16.msra.mxu0 %v7025
  %7611 = vmatprep.subr.bf16.mxu0 %v7030
  %7612 = vmatpush1.bf16.msra.mxu0 %v7029
  %7613 = vmatprep.subr.bf16.mxu0 %v7034
  %7614 = vmatpush1.bf16.msra.mxu0 %v7033
  %7615 = vmatprep.subr.bf16.mxu0 0
  %7616 = vmatpush1.bf16.msra.mxu0 0
  %7617 = vmatprep.subr.bf16.mxu0 0
  %7618 = vmatpush1.bf16.msra.mxu0 0
  %7619 = vmatprep.subr.bf16.mxu0 0
  %7620 = vmatpush1.bf16.msra.mxu0 0
  %7621 = vmatprep.subr.bf16.mxu0 0
  %7622 = vmatpush1.bf16.msra.mxu0 0
  %7623 = vmatprep.subr.bf16.mxu0 0
  %7624 = vmatpush1.bf16.msra.mxu0 0
  %7625 = vmatprep.subr.bf16.mxu0 0
  %7626 = vmatpush1.bf16.msra.mxu0 0
  %7627 = vmatprep.subr.bf16.mxu0 0
  %7628 = vmatpush1.bf16.msra.mxu0 0
  %7629 = vmatprep.subr.bf16.mxu0 0
  %7630 = vmatpush1.bf16.msra.mxu0 0
  %7631 = vmatprep.mubr.bf16.mxu0 0
  %7632 = vmatmul.mubr.bf16.gmra.mrb[0].mxu0 %v7449
  %v7633 = vpop.f32.mrb[0].mxu0
  %v7634 = vadd.f32 0.0, %v7633
  %v7635 = vpop.f32.mrb[0].mxu0
  %v7636 = vadd.f32 0.0, %v7635
  %v7637 = vpop.f32.mrb[0].mxu0
  %v7638 = vpop.f32.mrb[0].mxu0
  %7639 = vdwg.mxu0
  %v7640 = vadd.f32 %v6942, %v7593
  %v7641 = vadd.f32 %v6944, %v7595
  %v7642 = vadd.f32 %v6995, %v7634
  %v7643 = vadd.f32 %v6997, %v7636
  %v7644 = vxor.u32 %v7640, 2147483648
  %v7645 = vmul.f32 %v7644, 1.442695
  %v7646 = vpow.pop %v7645
  %v7647 = vadd.f32 %v7646, 1.0
  %v7648 = vrcp.pop %v7647
  %v7649 = vmul.f32 1.0, %v7648
  %v7650 = vxor.u32 %v7641, 2147483648
  %v7651 = vmul.f32 %v7650, 1.442695
  %v7652 = vpow.pop %v7651
  %v7653 = vadd.f32 %v7652, 1.0
  %v7654 = vrcp.pop %v7653
  %v7655 = vmul.f32 1.0, %v7654
  %v7656 = vtanh.pop %v7642
  %v7657 = vxor.u32 %v7643, 2147483648
  %v7658 = vmul.f32 %v7657, 1.442695
  %v7659 = vpow.pop %v7658
  %v7660 = vadd.f32 %v7659, 1.0
  %v7661 = vrcp.pop %v7660
  %v7662 = vmul.f32 1.0, %v7661
  %v7663 = vmul.f32 %v7655, %v7446
  %v7664 = vmul.f32 %v7649, %v7656
  %v7665 = vadd.f32 %v7663, %v7664
  %v7666 = vtanh.pop %v7665
  %v7667 = vmul.f32 %v7662, %v7666
  %v7668 = vpack.c.bf16 %v7667, %v7667
  %7669 = vmatprep.subr.bf16.mxu0 %v7147
  %7670 = vmatpush1.bf16.msra.mxu0 %v7146
  %7671 = vmatprep.subr.bf16.mxu0 %v7151
  %7672 = vmatpush1.bf16.msra.mxu0 %v7150
  %7673 = vmatprep.subr.bf16.mxu0 %v7155
  %7674 = vmatpush1.bf16.msra.mxu0 %v7154
  %7675 = vmatprep.subr.bf16.mxu0 %v7159
  %7676 = vmatpush1.bf16.msra.mxu0 %v7158
  %7677 = vmatprep.subr.bf16.mxu0 %v7163
  %7678 = vmatpush1.bf16.msra.mxu0 %v7162
  %7679 = vmatprep.subr.bf16.mxu0 %v7167
  %7680 = vmatpush1.bf16.msra.mxu0 %v7166
  %7681 = vmatprep.subr.bf16.mxu0 %v7171
  %7682 = vmatpush1.bf16.msra.mxu0 %v7170
  %7683 = vmatprep.subr.bf16.mxu0 %v7175
  %7684 = vmatpush1.bf16.msra.mxu0 %v7174
  %7685 = vmatprep.subr.bf16.mxu0 %v7179
  %7686 = vmatpush1.bf16.msra.mxu0 %v7178
  %7687 = vmatprep.subr.bf16.mxu0 %v7183
  %7688 = vmatpush1.bf16.msra.mxu0 %v7182
  %7689 = vmatprep.subr.bf16.mxu0 %v7187
  %7690 = vmatpush1.bf16.msra.mxu0 %v7186
  %7691 = vmatprep.subr.bf16.mxu0 %v7191
  %7692 = vmatpush1.bf16.msra.mxu0 %v7190
  %7693 = vmatprep.subr.bf16.mxu0 %v7195
  %7694 = vmatpush1.bf16.msra.mxu0 %v7194
  %7695 = vmatprep.subr.bf16.mxu0 %v7199
  %7696 = vmatpush1.bf16.msra.mxu0 %v7198
  %7697 = vmatprep.subr.bf16.mxu0 %v7203
  %7698 = vmatpush1.bf16.msra.mxu0 %v7202
  %7699 = vmatprep.subr.bf16.mxu0 %v7207
  %7700 = vmatpush1.bf16.msra.mxu0 %v7206
  %7701 = vmatprep.mubr.bf16.mxu0 %v7556
  %7702 = vmatmul.mubr.bf16.gmra.mrb[0].mxu0 %v7668
  %v7703 = vpop.f32.mrb[0].mxu0
  %v7704 = vadd.f32 %v7214, %v7703
  %v7705 = vpop.f32.mrb[0].mxu0
  %v7706 = vadd.f32 %v7218, %v7705
  %v7707 = vpop.f32.mrb[0].mxu0
  %v7708 = vpop.f32.mrb[0].mxu0
  %7709 = vdwg.mxu0
  %7710 = vmatprep.subr.bf16.mxu0 %v7149
  %7711 = vmatpush1.bf16.msra.mxu0 %v7148
  %7712 = vmatprep.subr.bf16.mxu0 %v7153
  %7713 = vmatpush1.bf16.msra.mxu0 %v7152
  %7714 = vmatprep.subr.bf16.mxu0 %v7157
  %7715 = vmatpush1.bf16.msra.mxu0 %v7156
  %7716 = vmatprep.subr.bf16.mxu0 %v7161
  %7717 = vmatpush1.bf16.msra.mxu0 %v7160
  %7718 = vmatprep.subr.bf16.mxu0 %v7165
  %7719 = vmatpush1.bf16.msra.mxu0 %v7164
  %7720 = vmatprep.subr.bf16.mxu0 %v7169
  %7721 = vmatpush1.bf16.msra.mxu0 %v7168
  %7722 = vmatprep.subr.bf16.mxu0 %v7173
  %7723 = vmatpush1.bf16.msra.mxu0 %v7172
  %7724 = vmatprep.subr.bf16.mxu0 %v7177
  %7725 = vmatpush1.bf16.msra.mxu0 %v7176
  %7726 = vmatprep.subr.bf16.mxu0 %v7181
  %7727 = vmatpush1.bf16.msra.mxu0 %v7180
  %7728 = vmatprep.subr.bf16.mxu0 %v7185
  %7729 = vmatpush1.bf16.msra.mxu0 %v7184
  %7730 = vmatprep.subr.bf16.mxu0 %v7189
  %7731 = vmatpush1.bf16.msra.mxu0 %v7188
  %7732 = vmatprep.subr.bf16.mxu0 %v7193
  %7733 = vmatpush1.bf16.msra.mxu0 %v7192
  %7734 = vmatprep.subr.bf16.mxu0 %v7197
  %7735 = vmatpush1.bf16.msra.mxu0 %v7196
  %7736 = vmatprep.subr.bf16.mxu0 %v7201
  %7737 = vmatpush1.bf16.msra.mxu0 %v7200
  %7738 = vmatprep.subr.bf16.mxu0 %v7205
  %7739 = vmatpush1.bf16.msra.mxu0 %v7204
  %7740 = vmatprep.subr.bf16.mxu0 %v7209
  %7741 = vmatpush1.bf16.msra.mxu0 %v7208
  %7742 = vmatprep.mubr.bf16.mxu0 %v7556
  %7743 = vmatmul.mubr.bf16.gmra.mrb[0].mxu0 %v7668
  %v7744 = vpop.f32.mrb[0].mxu0
  %v7745 = vadd.f32 %v7222, %v7744
  %v7746 = vpop.f32.mrb[0].mxu0
  %v7747 = vadd.f32 %v7226, %v7746
  %v7748 = vpop.f32.mrb[0].mxu0
  %v7749 = vpop.f32.mrb[0].mxu0
  %7750 = vdwg.mxu0
  %v7751 = vxor.u32 %v7704, 2147483648
  %v7752 = vmul.f32 %v7751, 1.442695
  %v7753 = vpow.pop %v7752
  %v7754 = vadd.f32 %v7753, 1.0
  %v7755 = vrcp.pop %v7754
  %v7756 = vmul.f32 1.0, %v7755
  %v7757 = vxor.u32 %v7706, 2147483648
  %v7758 = vmul.f32 %v7757, 1.442695
  %v7759 = vpow.pop %v7758
  %v7760 = vadd.f32 %v7759, 1.0
  %v7761 = vrcp.pop %v7760
  %v7762 = vmul.f32 1.0, %v7761
  %v7763 = vtanh.pop %v7745
  %v7764 = vxor.u32 %v7747, 2147483648
  %v7765 = vmul.f32 %v7764, 1.442695
  %v7766 = vpow.pop %v7765
  %v7767 = vadd.f32 %v7766, 1.0
  %v7768 = vrcp.pop %v7767
  %v7769 = vmul.f32 1.0, %v7768
  %v7770 = vmul.f32 %v7762, %v7553
  %v7771 = vmul.f32 %v7756, %v7763
  %v7772 = vadd.f32 %v7770, %v7771
  %v7773 = vtanh.pop %v7772
  %v7774 = vmul.f32 %v7769, %v7773
  %v7775 = vpack.c.bf16 %v7774, %v7774
  %v7776 = vadd.f32 %v7557, %v7774
  %7777 = vmatprep.subr.bf16.mxu0 %v7004
  %7778 = vmatpush1.bf16.msra.mxu0 %v7003
  %7779 = vmatprep.subr.bf16.mxu0 %v7008
  %7780 = vmatpush1.bf16.msra.mxu0 %v7007
  %7781 = vmatprep.subr.bf16.mxu0 %v7012
  %7782 = vmatpush1.bf16.msra.mxu0 %v7011
  %7783 = vmatprep.subr.bf16.mxu0 %v7016
  %7784 = vmatpush1.bf16.msra.mxu0 %v7015
  %7785 = vmatprep.subr.bf16.mxu0 %v7020
  %7786 = vmatpush1.bf16.msra.mxu0 %v7019
  %7787 = vmatprep.subr.bf16.mxu0 %v7024
  %7788 = vmatpush1.bf16.msra.mxu0 %v7023
  %7789 = vmatprep.subr.bf16.mxu0 %v7028
  %7790 = vmatpush1.bf16.msra.mxu0 %v7027
  %7791 = vmatprep.subr.bf16.mxu0 %v7032
  %7792 = vmatpush1.bf16.msra.mxu0 %v7031
  %7793 = vmatprep.subr.bf16.mxu0 0
  %7794 = vmatpush1.bf16.msra.mxu0 0
  %7795 = vmatprep.subr.bf16.mxu0 0
  %7796 = vmatpush1.bf16.msra.mxu0 0
  %7797 = vmatprep.subr.bf16.mxu0 0
  %7798 = vmatpush1.bf16.msra.mxu0 0
  %7799 = vmatprep.subr.bf16.mxu0 0
  %7800 = vmatpush1.bf16.msra.mxu0 0
  %7801 = vmatprep.subr.bf16.mxu0 0
  %7802 = vmatpush1.bf16.msra.mxu0 0
  %7803 = vmatprep.subr.bf16.mxu0 0
  %7804 = vmatpush1.bf16.msra.mxu0 0
  %7805 = vmatprep.subr.bf16.mxu0 0
  %7806 = vmatpush1.bf16.msra.mxu0 0
  %7807 = vmatprep.subr.bf16.mxu0 0
  %7808 = vmatpush1.bf16.msra.mxu0 0
  %7809 = vmatprep.mubr.bf16.mxu0 0
  %7810 = vmatmul.mubr.bf16.gmra.mrb[0].mxu0 %v7668
  %v7811 = vpop.f32.mrb[0].mxu0
  %v7812 = vadd.f32 0.0, %v7811
  %v7813 = vpop.f32.mrb[0].mxu0
  %v7814 = vadd.f32 0.0, %v7813
  %v7815 = vpop.f32.mrb[0].mxu0
  %v7816 = vpop.f32.mrb[0].mxu0
  %7817 = vdwg.mxu0
  %7818 = vmatprep.subr.bf16.mxu0 %v7006
  %7819 = vmatpush1.bf16.msra.mxu0 %v7005
  %7820 = vmatprep.subr.bf16.mxu0 %v7010
  %7821 = vmatpush1.bf16.msra.mxu0 %v7009
  %7822 = vmatprep.subr.bf16.mxu0 %v7014
  %7823 = vmatpush1.bf16.msra.mxu0 %v7013
  %7824 = vmatprep.subr.bf16.mxu0 %v7018
  %7825 = vmatpush1.bf16.msra.mxu0 %v7017
  %7826 = vmatprep.subr.bf16.mxu0 %v7022
  %7827 = vmatpush1.bf16.msra.mxu0 %v7021
  %7828 = vmatprep.subr.bf16.mxu0 %v7026
  %7829 = vmatpush1.bf16.msra.mxu0 %v7025
  %7830 = vmatprep.subr.bf16.mxu0 %v7030
  %7831 = vmatpush1.bf16.msra.mxu0 %v7029
  %7832 = vmatprep.subr.bf16.mxu0 %v7034
  %7833 = vmatpush1.bf16.msra.mxu0 %v7033
  %7834 = vmatprep.subr.bf16.mxu0 0
  %7835 = vmatpush1.bf16.msra.mxu0 0
  %7836 = vmatprep.subr.bf16.mxu0 0
  %7837 = vmatpush1.bf16.msra.mxu0 0
  %7838 = vmatprep.subr.bf16.mxu0 0
  %7839 = vmatpush1.bf16.msra.mxu0 0
  %7840 = vmatprep.subr.bf16.mxu0 0
  %7841 = vmatpush1.bf16.msra.mxu0 0
  %7842 = vmatprep.subr.bf16.mxu0 0
  %7843 = vmatpush1.bf16.msra.mxu0 0
  %7844 = vmatprep.subr.bf16.mxu0 0
  %7845 = vmatpush1.bf16.msra.mxu0 0
  %7846 = vmatprep.subr.bf16.mxu0 0
  %7847 = vmatpush1.bf16.msra.mxu0 0
  %7848 = vmatprep.subr.bf16.mxu0 0
  %7849 = vmatpush1.bf16.msra.mxu0 0
  %7850 = vmatprep.mubr.bf16.mxu0 0
  %7851 = vmatmul.mubr.bf16.gmra.mrb[0].mxu0 %v7668
  %v7852 = vpop.f32.mrb[0].mxu0
  %v7853 = vadd.f32 0.0, %v7852
  %v7854 = vpop.f32.mrb[0].mxu0
  %v7855 = vadd.f32 0.0, %v7854
  %v7856 = vpop.f32.mrb[0].mxu0
  %v7857 = vpop.f32.mrb[0].mxu0
  %7858 = vdwg.mxu0
  %v7859 = vadd.f32 %v6946, %v7812
  %v7860 = vadd.f32 %v6948, %v7814
  %v7861 = vadd.f32 %v6999, %v7853
  %v7862 = vadd.f32 %v7001, %v7855
  %v7863 = vxor.u32 %v7859, 2147483648
  %v7864 = vmul.f32 %v7863, 1.442695
  %v7865 = vpow.pop %v7864
  %v7866 = vadd.f32 %v7865, 1.0
  %v7867 = vrcp.pop %v7866
  %v7868 = vmul.f32 1.0, %v7867
  %v7869 = vxor.u32 %v7860, 2147483648
  %v7870 = vmul.f32 %v7869, 1.442695
  %v7871 = vpow.pop %v7870
  %v7872 = vadd.f32 %v7871, 1.0
  %v7873 = vrcp.pop %v7872
  %v7874 = vmul.f32 1.0, %v7873
  %v7875 = vtanh.pop %v7861
  %v7876 = vxor.u32 %v7862, 2147483648
  %v7877 = vmul.f32 %v7876, 1.442695
  %v7878 = vpow.pop %v7877
  %v7879 = vadd.f32 %v7878, 1.0
  %v7880 = vrcp.pop %v7879
  %v7881 = vmul.f32 1.0, %v7880
  %v7882 = vmul.f32 %v7874, %v7665
  %v7883 = vmul.f32 %v7868, %v7875
  %v7884 = vadd.f32 %v7882, %v7883
  %v7885 = vtanh.pop %v7884
  %v7886 = vmul.f32 %v7881, %v7885
  %v7887 = vpack.c.bf16 %v7886, %v7886
  %7888 = vmatprep.subr.bf16.mxu0 %v7147
  %7889 = vmatpush1.bf16.msra.mxu0 %v7146
  %7890 = vmatprep.subr.bf16.mxu0 %v7151
  %7891 = vmatpush1.bf16.msra.mxu0 %v7150
  %7892 = vmatprep.subr.bf16.mxu0 %v7155
  %7893 = vmatpush1.bf16.msra.mxu0 %v7154
  %7894 = vmatprep.subr.bf16.mxu0 %v7159
  %7895 = vmatpush1.bf16.msra.mxu0 %v7158
  %7896 = vmatprep.subr.bf16.mxu0 %v7163
  %7897 = vmatpush1.bf16.msra.mxu0 %v7162
  %7898 = vmatprep.subr.bf16.mxu0 %v7167
  %7899 = vmatpush1.bf16.msra.mxu0 %v7166
  %7900 = vmatprep.subr.bf16.mxu0 %v7171
  %7901 = vmatpush1.bf16.msra.mxu0 %v7170
  %7902 = vmatprep.subr.bf16.mxu0 %v7175
  %7903 = vmatpush1.bf16.msra.mxu0 %v7174
  %7904 = vmatprep.subr.bf16.mxu0 %v7179
  %7905 = vmatpush1.bf16.msra.mxu0 %v7178
  %7906 = vmatprep.subr.bf16.mxu0 %v7183
  %7907 = vmatpush1.bf16.msra.mxu0 %v7182
  %7908 = vmatprep.subr.bf16.mxu0 %v7187
  %7909 = vmatpush1.bf16.msra.mxu0 %v7186
  %7910 = vmatprep.subr.bf16.mxu0 %v7191
  %7911 = vmatpush1.bf16.msra.mxu0 %v7190
  %7912 = vmatprep.subr.bf16.mxu0 %v7195
  %7913 = vmatpush1.bf16.msra.mxu0 %v7194
  %7914 = vmatprep.subr.bf16.mxu0 %v7199
  %7915 = vmatpush1.bf16.msra.mxu0 %v7198
  %7916 = vmatprep.subr.bf16.mxu0 %v7203
  %7917 = vmatpush1.bf16.msra.mxu0 %v7202
  %7918 = vmatprep.subr.bf16.mxu0 %v7207
  %7919 = vmatpush1.bf16.msra.mxu0 %v7206
  %7920 = vmatprep.mubr.bf16.mxu0 %v7775
  %7921 = vmatmul.mubr.bf16.gmra.mrb[0].mxu0 %v7887
  %v7922 = vpop.f32.mrb[0].mxu0
  %v7923 = vadd.f32 %v7214, %v7922
  %v7924 = vpop.f32.mrb[0].mxu0
  %v7925 = vadd.f32 %v7218, %v7924
  %v7926 = vpop.f32.mrb[0].mxu0
  %v7927 = vpop.f32.mrb[0].mxu0
  %7928 = vdwg.mxu0
  %7929 = vmatprep.subr.bf16.mxu0 %v7149
  %7930 = vmatpush1.bf16.msra.mxu0 %v7148
  %7931 = vmatprep.subr.bf16.mxu0 %v7153
  %7932 = vmatpush1.bf16.msra.mxu0 %v7152
  %7933 = vmatprep.subr.bf16.mxu0 %v7157
  %7934 = vmatpush1.bf16.msra.mxu0 %v7156
  %7935 = vmatprep.subr.bf16.mxu0 %v7161
  %7936 = vmatpush1.bf16.msra.mxu0 %v7160
  %7937 = vmatprep.subr.bf16.mxu0 %v7165
  %7938 = vmatpush1.bf16.msra.mxu0 %v7164
  %7939 = vmatprep.subr.bf16.mxu0 %v7169
  %7940 = vmatpush1.bf16.msra.mxu0 %v7168
  %7941 = vmatprep.subr.bf16.mxu0 %v7173
  %7942 = vmatpush1.bf16.msra.mxu0 %v7172
  %7943 = vmatprep.subr.bf16.mxu0 %v7177
  %7944 = vmatpush1.bf16.msra.mxu0 %v7176
  %7945 = vmatprep.subr.bf16.mxu0 %v7181
  %7946 = vmatpush1.bf16.msra.mxu0 %v7180
  %7947 = vmatprep.subr.bf16.mxu0 %v7185
  %7948 = vmatpush1.bf16.msra.mxu0 %v7184
  %7949 = vmatprep.subr.bf16.mxu0 %v7189
  %7950 = vmatpush1.bf16.msra.mxu0 %v7188
  %7951 = vmatprep.subr.bf16.mxu0 %v7193
  %7952 = vmatpush1.bf16.msra.mxu0 %v7192
  %7953 = vmatprep.subr.bf16.mxu0 %v7197
  %7954 = vmatpush1.bf16.msra.mxu0 %v7196
  %7955 = vmatprep.subr.bf16.mxu0 %v7201
  %7956 = vmatpush1.bf16.msra.mxu0 %v7200
  %7957 = vmatprep.subr.bf16.mxu0 %v7205
  %7958 = vmatpush1.bf16.msra.mxu0 %v7204
  %7959 = vmatprep.subr.bf16.mxu0 %v7209
  %7960 = vmatpush1.bf16.msra.mxu0 %v7208
  %7961 = vmatprep.mubr.bf16.mxu0 %v7775
  %7962 = vmatmul.mubr.bf16.gmra.mrb[0].mxu0 %v7887
  %v7963 = vpop.f32.mrb[0].mxu0
  %v7964 = vadd.f32 %v7222, %v7963
  %v7965 = vpop.f32.mrb[0].mxu0
  %v7966 = vadd.f32 %v7226, %v7965
  %v7967 = vpop.f32.mrb[0].mxu0
  %v7968 = vpop.f32.mrb[0].mxu0
  %7969 = vdwg.mxu0
  %v7970 = vxor.u32 %v7923, 2147483648
  %v7971 = vmul.f32 %v7970, 1.442695
  %v7972 = vpow.pop %v7971
  %v7973 = vadd.f32 %v7972, 1.0
  %v7974 = vrcp.pop %v7973
  %v7975 = vmul.f32 1.0, %v7974
  %v7976 = vxor.u32 %v7925, 2147483648
  %v7977 = vmul.f32 %v7976, 1.442695
  %v7978 = vpow.pop %v7977
  %v7979 = vadd.f32 %v7978, 1.0
  %v7980 = vrcp.pop %v7979
  %v7981 = vmul.f32 1.0, %v7980
  %v7982 = vtanh.pop %v7964
  %v7983 = vxor.u32 %v7966, 2147483648
  %v7984 = vmul.f32 %v7983, 1.442695
  %v7985 = vpow.pop %v7984
  %v7986 = vadd.f32 %v7985, 1.0
  %v7987 = vrcp.pop %v7986
  %v7988 = vmul.f32 1.0, %v7987
  %v7989 = vmul.f32 %v7981, %v7772
  %v7990 = vmul.f32 %v7975, %v7982
  %v7991 = vadd.f32 %v7989, %v7990
  %v7992 = vtanh.pop %v7991
  %v7993 = vmul.f32 %v7988, %v7992
  %v7994 = vadd.f32 %v7776, %v7993
  %v7995 = vmul.f32 %v7994, 0.25
  %v7996 = vpack.c.bf16 %v7995, %v7995
  %v7997 = vld [vmem:[%s2 + $0xb] sm:$0x1]
  %v7998 = vld [vmem:[%s2 + $0xc] sm:$0x1]
  %v7999 = vld [vmem:[%s3] sm:$0xf]
  %v8000 = vld [vmem:[%s3 + $0x4] sm:$0xf]
  %v8001 = vld [vmem:[%s3 + $0x8] sm:$0xf]
  %v8002 = vld [vmem:[%s3 + $0xc] sm:$0xf]
  %v8003 = vld [vmem:[%s3 + $0x10] sm:$0xf]
  %v8004 = vld [vmem:[%s3 + $0x14] sm:$0xf]
  %v8005 = vld [vmem:[%s3 + $0x18] sm:$0xf]
  %v8006 = vld [vmem:[%s3 + $0x1c] sm:$0xf]
  %v8007 = vld [vmem:[%s3 + $0x20] sm:$0xf]
  %v8008 = vld [vmem:[%s3 + $0x24] sm:$0xf]
  %v8009 = vld [vmem:[%s3 + $0x28] sm:$0xf]
  %v8010 = vld [vmem:[%s3 + $0x2c] sm:$0xf]
  %v8011 = vld [vmem:[%s3 + $0x30] sm:$0xf]
  %v8012 = vld [vmem:[%s3 + $0x34] sm:$0xf]
  %v8013 = vld [vmem:[%s3 + $0x38] sm:$0xf]
  %v8014 = vld [vmem:[%s3 + $0x3c] sm:$0xf]
  %v8016 = vlaneseq
  %v8017 = vshrl.u32 %v8016, 7
  %v8018 = vsub.s32 0, %v8017
  %v8019 = vrot.slane %v7997, %v8018
  %v8037 = vunpack.c.l.b16 %v7999
  %v8038 = vunpack.c.l.b16 %v8000
  %v8039 = vunpack.c.l.b16 %v8001
  %v8040 = vunpack.c.l.b16 %v8002
  %v8041 = vunpack.c.l.b16 %v8003
  %v8042 = vunpack.c.l.b16 %v8004
  %v8043 = vunpack.c.l.b16 %v8005
  %v8044 = vunpack.c.l.b16 %v8006
  %v8045 = vunpack.c.l.b16 %v8007
  %v8046 = vunpack.c.l.b16 %v8008
  %v8047 = vunpack.c.l.b16 %v8009
  %v8048 = vunpack.c.l.b16 %v8010
  %v8049 = vunpack.c.l.b16 %v8011
  %v8050 = vunpack.c.l.b16 %v8012
  %v8051 = vunpack.c.l.b16 %v8013
  %v8052 = vunpack.c.l.b16 %v8014
  %v8053 = vpack.c.b16 %v8038, %v8037
  %v8054 = vpack.c.b16 %v8040, %v8039
  %v8055 = vpack.c.b16 %v8042, %v8041
  %v8056 = vpack.c.b16 %v8044, %v8043
  %v8057 = vpack.c.b16 %v8046, %v8045
  %v8058 = vpack.c.b16 %v8048, %v8047
  %v8059 = vpack.c.b16 %v8050, %v8049
  %v8060 = vpack.c.b16 %v8052, %v8051
  %8069 = vmatprep.subr.bf16.mxu0 0
  %8070 = vmatpush1.bf16.msra.mxu0 %v8053
  %8071 = vmatprep.subr.bf16.mxu0 0
  %8072 = vmatpush1.bf16.msra.mxu0 %v8054
  %8073 = vmatprep.subr.bf16.mxu0 0
  %8074 = vmatpush1.bf16.msra.mxu0 %v8055
  %8075 = vmatprep.subr.bf16.mxu0 0
  %8076 = vmatpush1.bf16.msra.mxu0 %v8056
  %8077 = vmatprep.subr.bf16.mxu0 0
  %8078 = vmatpush1.bf16.msra.mxu0 %v8057
  %8079 = vmatprep.subr.bf16.mxu0 0
  %8080 = vmatpush1.bf16.msra.mxu0 %v8058
  %8081 = vmatprep.subr.bf16.mxu0 0
  %8082 = vmatpush1.bf16.msra.mxu0 %v8059
  %8083 = vmatprep.subr.bf16.mxu0 0
  %8084 = vmatpush1.bf16.msra.mxu0 %v8060
  %8085 = vmatprep.subr.bf16.mxu0 0
  %8086 = vmatpush1.bf16.msra.mxu0 0
  %8087 = vmatprep.subr.bf16.mxu0 0
  %8088 = vmatpush1.bf16.msra.mxu0 0
  %8089 = vmatprep.subr.bf16.mxu0 0
  %8090 = vmatpush1.bf16.msra.mxu0 0
  %8091 = vmatprep.subr.bf16.mxu0 0
  %8092 = vmatpush1.bf16.msra.mxu0 0
  %8093 = vmatprep.subr.bf16.mxu0 0
  %8094 = vmatpush1.bf16.msra.mxu0 0
  %8095 = vmatprep.subr.bf16.mxu0 0
  %8096 = vmatpush1.bf16.msra.mxu0 0
  %8097 = vmatprep.subr.bf16.mxu0 0
  %8098 = vmatpush1.bf16.msra.mxu0 0
  %8099 = vmatprep.subr.bf16.mxu0 0
  %8100 = vmatpush1.bf16.msra.mxu0 0
  %8101 = vmatprep.mubr.bf16.mxu0 0
  %8102 = vmatmul.mubr.bf16.gmra.mrb[0].mxu0 %v7996
  %v8103 = vpop.f32.mrb[0].mxu0
  %v8104 = vadd.f32 %v8019, %v8103
  %v8105 = vpop.f32.mrb[0].mxu0
  %v8106 = vpop.f32.mrb[0].mxu0
  %v8107 = vpop.f32.mrb[0].mxu0
  %8108 = vdwg.mxu0
  %v8109 = vpack.c.bf16 %v8104, %v8104
  %v8110 = vld [vmem:[%s3 + $0x40] sm:$0xf]
  %v8111 = vld [vmem:[%s3 + $0x44] sm:$0xf]
  %v8112 = vld [vmem:[%s3 + $0x48] sm:$0xf]
  %v8113 = vld [vmem:[%s3 + $0x4c] sm:$0xf]
  %v8114 = vld [vmem:[%s3 + $0x50] sm:$0xf]
  %v8115 = vld [vmem:[%s3 + $0x54] sm:$0xf]
  %v8116 = vld [vmem:[%s3 + $0x58] sm:$0xf]
  %v8117 = vld [vmem:[%s3 + $0x5c] sm:$0xf]
  %v8126 = vunpack.c.l.b16 %v8110
  %v8127 = vunpack.c.l.b16 %v8111
  %v8128 = vunpack.c.l.b16 %v8112
  %v8129 = vunpack.c.l.b16 %v8113
  %v8130 = vunpack.c.l.b16 %v8114
  %v8131 = vunpack.c.l.b16 %v8115
  %v8132 = vunpack.c.l.b16 %v8116
  %v8133 = vunpack.c.l.b16 %v8117
  %v8134 = vpack.c.b16 %v8127, %v8126
  %v8135 = vpack.c.b16 %v8129, %v8128
  %v8136 = vpack.c.b16 %v8131, %v8130
  %v8137 = vpack.c.b16 %v8133, %v8132
  %v8143 = vsel %vm6817, %v8109, 0
  %8145 = vmatprep.subr.bf16.mxu0 0
  %8146 = vmatpush1.bf16.msra.mxu0 %v8134
  %8147 = vmatprep.subr.bf16.mxu0 0
  %8148 = vmatpush1.bf16.msra.mxu0 %v8135
  %8149 = vmatprep.subr.bf16.mxu0 0
  %8150 = vmatpush1.bf16.msra.mxu0 %v8136
  %8151 = vmatprep.subr.bf16.mxu0 0
  %8152 = vmatpush1.bf16.msra.mxu0 %v8137
  %8153 = vmatprep.subr.bf16.mxu0 0
  %8154 = vmatpush1.bf16.msra.mxu0 0
  %8155 = vmatprep.subr.bf16.mxu0 0
  %8156 = vmatpush1.bf16.msra.mxu0 0
  %8157 = vmatprep.subr.bf16.mxu0 0
  %8158 = vmatpush1.bf16.msra.mxu0 0
  %8159 = vmatprep.subr.bf16.mxu0 0
  %8160 = vmatpush1.bf16.msra.mxu0 0
  %8161 = vmatprep.subr.bf16.mxu0 0
  %8162 = vmatpush1.bf16.msra.mxu0 0
  %8163 = vmatprep.subr.bf16.mxu0 0
  %8164 = vmatpush1.bf16.msra.mxu0 0
  %8165 = vmatprep.subr.bf16.mxu0 0
  %8166 = vmatpush1.bf16.msra.mxu0 0
  %8167 = vmatprep.subr.bf16.mxu0 0
  %8168 = vmatpush1.bf16.msra.mxu0 0
  %8169 = vmatprep.subr.bf16.mxu0 0
  %8170 = vmatpush1.bf16.msra.mxu0 0
  %8171 = vmatprep.subr.bf16.mxu0 0
  %8172 = vmatpush1.bf16.msra.mxu0 0
  %8173 = vmatprep.subr.bf16.mxu0 0
  %8174 = vmatpush1.bf16.msra.mxu0 0
  %8175 = vmatprep.subr.bf16.mxu0 0
  %8176 = vmatpush1.bf16.msra.mxu0 0
  %8177 = vmatprep.mubr.bf16.mxu0 0
  %8178 = vmatmul.mubr.bf16.gmra.mrb[0].mxu0 %v8143
  %v8179 = vpop.f32.mrb[0].mxu0
  %v8180 = vadd.f32 0.0, %v8179
  %v8181 = vpop.f32.mrb[0].mxu0
  %v8182 = vpop.f32.mrb[0].mxu0
  %v8183 = vpop.f32.mrb[0].mxu0
  %8184 = vdwg.mxu0
  %v8186 = vlaneseq
  %v8187 = vshrl.u32 %v8186, 7
  %v8188 = vsub.s32 0, %v8187
  %v8189 = vrot.slane %v7998, %v8188
  %v8191 = vadd.f32 %v8180, %v8189
  %vm8192 = vcmask 97280
  %8193 = vst.msk [vmem:[%s6] sm:$0xff] %vm8192, %v8191
  // Predicated region
  $region89: #{_lambda_.1} parent=0 // pred_check
    _
  $region90: #{_lambda_.1} parent=0 // pred_check_branch
    %8195 = sbr.rel (0) target = $region92
  $region91: #{_lambda_.1} parent=0 // pred_region
    _
  $region92: #{_lambda_.1} parent=0 // pred_fallthru
    _
  // Predicated region
  $region93: #{_lambda_.1} parent=0 // pred_check
    _
  $region94: #{_lambda_.1} parent=0 // pred_check_branch
    %8197 = sbr.rel (0) target = $region96
  $region95: #{_lambda_.1} parent=0 // pred_region
    _
  $region96: #{_lambda_.1} parent=0 // pred_fallthru
    _
  %8198 = vsyncmov [#allocation5]
  %s8199 = vpop.sfrf %8198
  %p8200 = scmp.eq.s32.totalorder %s8199, 0
  %p8201 = pneg %p8200
  %8203 = shalt.err (%p8201)
  %s8204 = scalar_lea.sflag [#allocation5], 1
  %8205 = vsyncmov %s8204
  %s8206 = vpop.sfrf %8205
  %p8207 = scmp.eq.s32.totalorder %s8206, 0
  %p8208 = pneg %p8207
  %8210 = shalt.err (%p8208)

</llo_original>
